<compile_context>
chip_gen: v6e
topology: v6e:2x2x1
jax: 0.10.0
libtpu: 0.0.40
codegen_flags: <defaults>
</compile_context>

<pallas_src>
import functools

import jax
import jax.numpy as jnp
from jax.experimental import pallas as pl
from jax.experimental.pallas import tpu as pltpu

INPUT_LAYER = 300    # real module dims
HIDDEN_LAYER = 100
MAX_BATCH_TILE = 512


# --------------------------------------------------------------------------- #
# Chip introspection (best-effort; falls back to conservative defaults).
# --------------------------------------------------------------------------- #
def _device_kind():
    try:
        return jax.devices()[0].device_kind.lower()
    except Exception:
        return ""


def _is_v7x():
    k = _device_kind()
    return "v7" in k or "7x" in k


def _has_bf16_vector_units():
    # v6e / v7x have bf16 VPU + EUP paths; v5e and older do not.
    k = _device_kind()
    return any(t in k for t in ("v6", "v7", "7x"))


def _round_up(n, m=128):
    return -(-n // m) * m


def _choose_batch_tile(B, max_tile=MAX_BATCH_TILE):
    """Largest 8-aligned divisor of B <= max_tile; on v7x keep >= 2 grid steps."""
    if B < 16:
        return B                                   # tiny batch: gridless single tile
    target = min(max_tile, B)
    if _is_v7x() and B % 16 == 0:
        target = min(target, B // 2)               # >= 2 grid steps for megacore
    tile = target - (target % 8)
    while tile >= 8 and B % tile != 0:
        tile -= 8
    return tile if tile >= 8 else B


# --------------------------------------------------------------------------- #
# Kernel
# --------------------------------------------------------------------------- #
def _lstm_fc_ae_kernel(x_ref,
                       w_enc_ref, b_enc_ref,        # encoder LSTM: (I_real, 3H) bf16, (1, 3H) f32
                       w_efc_ref, b_efc_ref,        # encoder FC:   (H, H)      bf16, (1, H)  f32
                       w_dfc_ref, b_dfc_ref,        # decoder FC:   (H, H)      bf16, (1, H)  f32
                       w_dec_ref, b_dec_ref,        # decoder LSTM: (H, 3I)     bf16, (1, 3I) f32
                       out_ref,                     # (rows, I_pad)
                       *, hidden, inp_pad, num_chunks, bf16_acts):
    H, I = hidden, inp_pad
    act_dt = jnp.bfloat16 if bf16_acts else jnp.float32
    rows = x_ref.shape[0]
    chunk = rows // num_chunks

    # Static unroll over batch sub-chunks: lets the scheduler overlap one chunk's
    # MXU matmuls with the other chunk's EUP/VPU sigmoid/tanh work.
    for c in range(num_chunks):
        r0 = c * chunk

        # ---- encoder LSTM, single step, zero state (pruned gate order: i, g, o) ----
        x = x_ref[pl.ds(r0, chunk), :].astype(jnp.bfloat16)
        g = (jnp.dot(x, w_enc_ref[...], preferred_element_type=jnp.float32)
             + b_enc_ref[...]).astype(act_dt)
        i_e = jax.nn.sigmoid(g[:, 0 * H:1 * H])
        g_e = jnp.tanh(g[:, 1 * H:2 * H])
        o_e = jax.nn.sigmoid(g[:, 2 * H:3 * H])
        h_e = (o_e * jnp.tanh(i_e * g_e)).astype(jnp.bfloat16)          # (chunk, H)

        # ---- encoder FC + ReLU ----
        enc = (jnp.dot(h_e, w_efc_ref[...], preferred_element_type=jnp.float32)
               + b_efc_ref[...]).astype(act_dt)
        enc = jnp.maximum(enc, 0).astype(jnp.bfloat16)

        # ---- decoder FC + ReLU ----
        dec = (jnp.dot(enc, w_dfc_ref[...], preferred_element_type=jnp.float32)
               + b_dfc_ref[...]).astype(act_dt)
        dec = jnp.maximum(dec, 0).astype(jnp.bfloat16)                  # (chunk, H)

        # ---- decoder LSTM, single step, zero state ----
        gd = (jnp.dot(dec, w_dec_ref[...], preferred_element_type=jnp.float32)
              + b_dec_ref[...]).astype(act_dt)
        i_d = jax.nn.sigmoid(gd[:, 0 * I:1 * I])
        g_d = jnp.tanh(gd[:, 1 * I:2 * I])
        o_d = jax.nn.sigmoid(gd[:, 2 * I:3 * I])
        out_ref[pl.ds(r0, chunk), :] = (o_d * jnp.tanh(i_d * g_d)).astype(out_ref.dtype)


# --------------------------------------------------------------------------- #
# Wrapper
# --------------------------------------------------------------------------- #
def lstm_fc_autoencoder(x, params, *, out_dtype=None, bf16_acts=None,
                        max_batch_tile=MAX_BATCH_TILE):
    """x: (B, input_layer) f32 or bf16.  Returns (B, input_layer)."""
    B, I_real = x.shape
    I_pad = params["w_dec"].shape[1] // 3
    H_pad = params["w_efc"].shape[1]
    assert params["w_enc"].shape[0] == I_real, "x width must match encoder weights"

    out_dtype = x.dtype if out_dtype is None else out_dtype
    bf16_acts = _has_bf16_vector_units() if bf16_acts is None else bf16_acts

    weight_args = (
        params["w_enc"], params["b_enc"],
        params["w_efc"], params["b_efc"],
        params["w_dfc"], params["b_dfc"],
        params["w_dec"], params["b_dec"],
    )

    tile = _choose_batch_tile(B, max_batch_tile)
    num_chunks = 2 if tile % 16 == 0 else 1
    kernel = functools.partial(_lstm_fc_ae_kernel, hidden=H_pad, inp_pad=I_pad,
                               num_chunks=num_chunks, bf16_acts=bf16_acts)
    out_shape = jax.ShapeDtypeStruct((B, I_pad), out_dtype)

    weight_bytes = sum(int(a.size) * a.dtype.itemsize for a in weight_args)
    cost = pl.CostEstimate(
        flops=2 * B * (I_real * 3 * H_pad + 2 * H_pad * H_pad + H_pad * 3 * I_pad),
        transcendentals=B * (4 * H_pad + 4 * I_pad),
        bytes_accessed=int(x.size) * x.dtype.itemsize
                       + B * I_pad * jnp.dtype(out_dtype).itemsize
                       + weight_bytes,
    )

    if tile >= B:
        # Single tile: gridless call (no pipeline machinery), explicit VMEM placement.
        out = pl.pallas_call(
            kernel,
            out_shape=out_shape,
            in_specs=[pl.BlockSpec(memory_space=pltpu.MemorySpace.VMEM)] * 9,
            out_specs=pl.BlockSpec(memory_space=pltpu.MemorySpace.VMEM),
            cost_estimate=cost,
        )(x, *weight_args)
    else:
        grid = (B // tile,)
        in_specs = [pl.BlockSpec((tile, I_real), lambda i: (i, 0))]       # x: tiled over batch
        in_specs += [pl.BlockSpec(a.shape, lambda i: (0, 0))              # weights: VMEM-resident
                     for a in weight_args]
        out_specs = pl.BlockSpec((tile, I_pad), lambda i: (i, 0))
        out = pl.pallas_call(
            kernel,
            out_shape=out_shape,
            grid=grid,
            in_specs=in_specs,
            out_specs=out_specs,
            cost_estimate=cost,
            compiler_params=pltpu.CompilerParams(
                dimension_semantics=("parallel",)),   # v7x: shard batch tiles across both TCs
        )(x, *weight_args)

    return out[:, :I_real] if I_pad != I_real else out


# --------------------------------------------------------------------------- #
# Parameter preparation (prune dead forget gate, fold b_hh, pad to 128 lanes).
# --------------------------------------------------------------------------- #
def _fold_pad_lstm(w_ih, b_ih, b_hh, out_real, out_pad, in_pad):
    """PyTorch gate order (i, f, g, o); c0 == 0 kills f -> keep (i, g, o).
    Returns ((in_pad, 3*out_pad) weight, (1, 3*out_pad) bias), zero-padded."""
    in_real = w_ih.shape[1]
    keep = jnp.array([0, 2, 3])
    w = w_ih.reshape(4, out_real, in_real)[keep]                    # (3, out_real, in_real)
    b = (b_ih + b_hh).reshape(4, out_real)[keep]                    # (3, out_real)
    w = jnp.pad(w, ((0, 0), (0, out_pad - out_real), (0, in_pad - in_real)))
    b = jnp.pad(b, ((0, 0), (0, out_pad - out_real)))
    return jnp.transpose(w.reshape(3 * out_pad, in_pad)), b.reshape(1, 3 * out_pad)


def _pad_linear(w, b, in_pad, out_pad):
    """torch nn.Linear weight (out, in) -> (in_pad, out_pad) for x @ W, zero-padded."""
    out_real, in_real = w.shape
    w = jnp.pad(w, ((0, out_pad - out_real), (0, in_pad - in_real)))
    b = jnp.pad(b, (0, out_pad - out_real))
    return jnp.transpose(w), b.reshape(1, out_pad)


def init_params(key, inp=INPUT_LAYER, hidden=HIDDEN_LAYER):
    """Deterministic synthetic params matching nn.LSTM / nn.Linear shapes, then
    pruned (dead forget gate), transposed and zero-padded to lane-aligned dims."""
    inp_pad, hid_pad = _round_up(inp), _round_up(hidden)
    ks = jax.random.split(key, 10)
    u = lambda k, shape, scale: jax.random.uniform(k, shape, jnp.float32, -scale, scale)
    se = hidden ** -0.5   # encoder LSTM & both Linear layers (in_features = hidden)
    sd = inp ** -0.5      # decoder LSTM (hidden_size = inp)

    w_enc, b_enc = _fold_pad_lstm(u(ks[0], (4 * hidden, inp), se),
                                  u(ks[1], (4 * hidden,), se),
                                  u(ks[2], (4 * hidden,), se),
                                  out_real=hidden, out_pad=hid_pad, in_pad=inp)
    w_efc, b_efc = _pad_linear(u(ks[3], (hidden, hidden), se), u(ks[4], (hidden,), se),
                               in_pad=hid_pad, out_pad=hid_pad)
    w_dfc, b_dfc = _pad_linear(u(ks[5], (hidden, hidden), se), u(ks[6], (hidden,), se),
                               in_pad=hid_pad, out_pad=hid_pad)
    w_dec, b_dec = _fold_pad_lstm(u(ks[7], (4 * inp, hidden), sd),
                                  u(ks[8], (4 * inp,), sd),
                                  u(ks[9], (4 * inp,), sd),
                                  out_real=inp, out_pad=inp_pad, in_pad=hid_pad)

    bf16 = jnp.bfloat16
    return {
        "w_enc": w_enc.astype(bf16), "b_enc": b_enc,   # (300, 384),  (1, 384)
        "w_efc": w_efc.astype(bf16), "b_efc": b_efc,   # (128, 128),  (1, 128)
        "w_dfc": w_dfc.astype(bf16), "b_dfc": b_dfc,   # (128, 128),  (1, 128)
        "w_dec": w_dec.astype(bf16), "b_dec": b_dec,   # (128, 1152), (1, 1152)
    }


# --------------------------------------------------------------------------- #
# Pure-JAX reference (same math / precision path as the kernel).
# --------------------------------------------------------------------------- #
def reference_forward(x, params, *, bf16_acts):
    H = params["w_efc"].shape[1]
    I_pad = params["w_dec"].shape[1] // 3
    I_real = x.shape[1]
    act_dt = jnp.bfloat16 if bf16_acts else jnp.float32
    mm = lambda a, w: jnp.dot(a.astype(jnp.bfloat16), w,
                              preferred_element_type=jnp.float32)

    g = (mm(x, params["w_enc"]) + params["b_enc"]).astype(act_dt)
    h = jax.nn.sigmoid(g[:, 2 * H:]) * jnp.tanh(
        jax.nn.sigmoid(g[:, :H]) * jnp.tanh(g[:, H:2 * H]))
    e = jnp.maximum((mm(h, params["w_efc"]) + params["b_efc"]).astype(act_dt), 0)
    d = jnp.maximum((mm(e, params["w_dfc"]) + params["b_dfc"]).astype(act_dt), 0)
    gd = (mm(d, params["w_dec"]) + params["b_dec"]).astype(act_dt)
    out = jax.nn.sigmoid(gd[:, 2 * I_pad:]) * jnp.tanh(
        jax.nn.sigmoid(gd[:, :I_pad]) * jnp.tanh(gd[:, I_pad:2 * I_pad]))
    return out[:, :I_real].astype(jnp.float32)


# --------------------------------------------------------------------------- #
if __name__ == "__main__":
    key = jax.random.PRNGKey(0)
    k_x, k_p = jax.random.split(key)

    params = init_params(k_p, inp=INPUT_LAYER, hidden=HIDDEN_LAYER)
    bf16_acts = _has_bf16_vector_units()
    tol = dict(atol=2e-2, rtol=2e-2) if bf16_acts else dict(atol=2e-3, rtol=2e-3)

    # Large batch -> tiled grid path (512-row tiles, weights VMEM-resident, batch "parallel").
    B_big = 1024
    x_big = jax.random.normal(k_x, (B_big, INPUT_LAYER), jnp.float32)
    out_big = jax.block_until_ready(
        lstm_fc_autoencoder(x_big, params, bf16_acts=bf16_acts))
    ref_big = reference_forward(x_big, params, bf16_acts=bf16_acts)
    assert out_big.shape == (B_big, INPUT_LAYER)
    assert jnp.allclose(out_big, ref_big, **tol), "tiled path mismatch"

    # Module-default small batch (batch_size=20) -> gridless single-tile path.
    x_small = x_big[:20]
    out_small = jax.block_until_ready(
        lstm_fc_autoencoder(x_small, params, bf16_acts=bf16_acts))
    assert out_small.shape == (20, INPUT_LAYER)
    assert jnp.allclose(out_small, ref_big[:20], **tol), "gridless path mismatch"

    # bf16-in / bf16-out variant: halves the only streamed HBM tensors (x, out).
    out_bf16 = jax.block_until_ready(
        lstm_fc_autoencoder(x_big.astype(jnp.bfloat16), params,
                            out_dtype=jnp.bfloat16, bf16_acts=bf16_acts))
    assert out_bf16.shape == (B_big, INPUT_LAYER) and out_bf16.dtype == jnp.bfloat16
    assert jnp.allclose(out_bf16.astype(jnp.float32), ref_big, atol=3e-2, rtol=3e-2), \
        "bf16 I/O path mismatch"

    print("KERNEL_OK")
</pallas_src>

<mosaic_0001>
module attributes {stable_mosaic.version = 11 : i64} {
  func.func @_lstm_fc_ae_kernel(%arg0: i32, %arg1: memref<512x300xf32, #tpu.memory_space<vmem>>, %arg2: memref<300x384xbf16, #tpu.memory_space<vmem>>, %arg3: memref<1x384xf32, #tpu.memory_space<vmem>>, %arg4: memref<128x128xbf16, #tpu.memory_space<vmem>>, %arg5: memref<1x128xf32, #tpu.memory_space<vmem>>, %arg6: memref<128x128xbf16, #tpu.memory_space<vmem>>, %arg7: memref<1x128xf32, #tpu.memory_space<vmem>>, %arg8: memref<128x1152xbf16, #tpu.memory_space<vmem>>, %arg9: memref<1x1152xf32, #tpu.memory_space<vmem>>, %arg10: memref<512x384xf32, #tpu.memory_space<vmem>>) attributes {dimension_semantics = [#tpu.dimension_semantics<parallel>], iteration_bounds = array<i64: 2>, scalar_prefetch = 0 : i64, scratch_operands = 0 : i64, tpu.core_type = #tpu.core_type<tc>, window_params = [{transform_indices = @transform_0, window_bounds = array<i64: 512, 300>}, {pipeline_mode = #tpu.pipeline_mode<synchronous>, transform_indices = @transform_1, window_bounds = array<i64: 300, 384>}, {pipeline_mode = #tpu.pipeline_mode<synchronous>, transform_indices = @transform_2, window_bounds = array<i64: 1, 384>}, {pipeline_mode = #tpu.pipeline_mode<synchronous>, transform_indices = @transform_3, window_bounds = array<i64: 128, 128>}, {pipeline_mode = #tpu.pipeline_mode<synchronous>, transform_indices = @transform_4, window_bounds = array<i64: 1, 128>}, {pipeline_mode = #tpu.pipeline_mode<synchronous>, transform_indices = @transform_5, window_bounds = array<i64: 128, 128>}, {pipeline_mode = #tpu.pipeline_mode<synchronous>, transform_indices = @transform_6, window_bounds = array<i64: 1, 128>}, {pipeline_mode = #tpu.pipeline_mode<synchronous>, transform_indices = @transform_7, window_bounds = array<i64: 128, 1152>}, {pipeline_mode = #tpu.pipeline_mode<synchronous>, transform_indices = @transform_8, window_bounds = array<i64: 1, 1152>}, {transform_indices = @transform_9, window_bounds = array<i64: 512, 384>}]} {
    %c0 = arith.constant 0 : index
    %c0_0 = arith.constant 0 : index
    %0 = vector.load %arg1[%c0, %c0_0] : memref<512x300xf32, #tpu.memory_space<vmem>>, vector<256x300xf32>
    %1 = arith.truncf %0 : vector<256x300xf32> to vector<256x300xbf16>
    %c0_1 = arith.constant 0 : index
    %c0_2 = arith.constant 0 : index
    %2 = vector.load %arg2[%c0_1, %c0_2] : memref<300x384xbf16, #tpu.memory_space<vmem>>, vector<300x384xbf16>
    %cst = arith.constant dense<0.000000e+00> : vector<256x384xf32>
    %3 = tpu.matmul %1, %2, %cst {dimension_numbers = #tpu.dot_dimension_numbers<[1], [0], [0], [1], [0, 0, 1, 1], [], []>} : vector<256x300xbf16>, vector<300x384xbf16>, vector<256x384xf32> -> vector<256x384xf32>
    %c0_3 = arith.constant 0 : index
    %c0_4 = arith.constant 0 : index
    %4 = vector.load %arg3[%c0_3, %c0_4] : memref<1x384xf32, #tpu.memory_space<vmem>>, vector<1x384xf32>
    %5 = vector.broadcast %4 : vector<1x384xf32> to vector<256x384xf32>
    %6 = arith.addf %3, %5 : vector<256x384xf32>
    %7 = vector.extract_strided_slice %6 {offsets = [0, 0], sizes = [256, 128], strides = [1, 1]} : vector<256x384xf32> to vector<256x128xf32>
    %8 = arith.negf %7 : vector<256x128xf32>
    %9 = math.exp %8 : vector<256x128xf32>
    %cst_5 = arith.constant 1.000000e+00 : f32
    %10 = vector.broadcast %cst_5 : f32 to vector<256x128xf32>
    %11 = arith.addf %10, %9 : vector<256x128xf32>
    %12 = arith.divf %10, %11 : vector<256x128xf32>
    %13 = vector.extract_strided_slice %6 {offsets = [0, 128], sizes = [256, 128], strides = [1, 1]} : vector<256x384xf32> to vector<256x128xf32>
    %14 = math.tanh %13 : vector<256x128xf32>
    %15 = vector.extract_strided_slice %6 {offsets = [0, 256], sizes = [256, 128], strides = [1, 1]} : vector<256x384xf32> to vector<256x128xf32>
    %16 = arith.negf %15 : vector<256x128xf32>
    %17 = math.exp %16 : vector<256x128xf32>
    %cst_6 = arith.constant 1.000000e+00 : f32
    %18 = vector.broadcast %cst_6 : f32 to vector<256x128xf32>
    %19 = arith.addf %18, %17 : vector<256x128xf32>
    %20 = arith.divf %18, %19 : vector<256x128xf32>
    %21 = arith.mulf %12, %14 : vector<256x128xf32>
    %22 = math.tanh %21 : vector<256x128xf32>
    %23 = arith.mulf %20, %22 : vector<256x128xf32>
    %24 = arith.truncf %23 : vector<256x128xf32> to vector<256x128xbf16>
    %c0_7 = arith.constant 0 : index
    %c0_8 = arith.constant 0 : index
    %25 = vector.load %arg4[%c0_7, %c0_8] : memref<128x128xbf16, #tpu.memory_space<vmem>>, vector<128x128xbf16>
    %cst_9 = arith.constant dense<0.000000e+00> : vector<256x128xf32>
    %26 = tpu.matmul %24, %25, %cst_9 {dimension_numbers = #tpu.dot_dimension_numbers<[1], [0], [0], [1], [0, 0, 1, 1], [], []>} : vector<256x128xbf16>, vector<128x128xbf16>, vector<256x128xf32> -> vector<256x128xf32>
    %c0_10 = arith.constant 0 : index
    %c0_11 = arith.constant 0 : index
    %27 = vector.load %arg5[%c0_10, %c0_11] : memref<1x128xf32, #tpu.memory_space<vmem>>, vector<1x128xf32>
    %28 = vector.broadcast %27 : vector<1x128xf32> to vector<256x128xf32>
    %29 = arith.addf %26, %28 : vector<256x128xf32>
    %cst_12 = arith.constant 0.000000e+00 : f32
    %30 = vector.broadcast %cst_12 : f32 to vector<256x128xf32>
    %31 = arith.maximumf %29, %30 : vector<256x128xf32>
    %32 = arith.truncf %31 : vector<256x128xf32> to vector<256x128xbf16>
    %c0_13 = arith.constant 0 : index
    %c0_14 = arith.constant 0 : index
    %33 = vector.load %arg6[%c0_13, %c0_14] : memref<128x128xbf16, #tpu.memory_space<vmem>>, vector<128x128xbf16>
    %cst_15 = arith.constant dense<0.000000e+00> : vector<256x128xf32>
    %34 = tpu.matmul %32, %33, %cst_15 {dimension_numbers = #tpu.dot_dimension_numbers<[1], [0], [0], [1], [0, 0, 1, 1], [], []>} : vector<256x128xbf16>, vector<128x128xbf16>, vector<256x128xf32> -> vector<256x128xf32>
    %c0_16 = arith.constant 0 : index
    %c0_17 = arith.constant 0 : index
    %35 = vector.load %arg7[%c0_16, %c0_17] : memref<1x128xf32, #tpu.memory_space<vmem>>, vector<1x128xf32>
    %36 = vector.broadcast %35 : vector<1x128xf32> to vector<256x128xf32>
    %37 = arith.addf %34, %36 : vector<256x128xf32>
    %cst_18 = arith.constant 0.000000e+00 : f32
    %38 = vector.broadcast %cst_18 : f32 to vector<256x128xf32>
    %39 = arith.maximumf %37, %38 : vector<256x128xf32>
    %40 = arith.truncf %39 : vector<256x128xf32> to vector<256x128xbf16>
    %c0_19 = arith.constant 0 : index
    %c0_20 = arith.constant 0 : index
    %41 = vector.load %arg8[%c0_19, %c0_20] : memref<128x1152xbf16, #tpu.memory_space<vmem>>, vector<128x1152xbf16>
    %cst_21 = arith.constant dense<0.000000e+00> : vector<256x1152xf32>
    %42 = tpu.matmul %40, %41, %cst_21 {dimension_numbers = #tpu.dot_dimension_numbers<[1], [0], [0], [1], [0, 0, 1, 1], [], []>} : vector<256x128xbf16>, vector<128x1152xbf16>, vector<256x1152xf32> -> vector<256x1152xf32>
    %c0_22 = arith.constant 0 : index
    %c0_23 = arith.constant 0 : index
    %43 = vector.load %arg9[%c0_22, %c0_23] : memref<1x1152xf32, #tpu.memory_space<vmem>>, vector<1x1152xf32>
    %44 = vector.broadcast %43 : vector<1x1152xf32> to vector<256x1152xf32>
    %45 = arith.addf %42, %44 : vector<256x1152xf32>
    %46 = vector.extract_strided_slice %45 {offsets = [0, 0], sizes = [256, 384], strides = [1, 1]} : vector<256x1152xf32> to vector<256x384xf32>
    %47 = arith.negf %46 : vector<256x384xf32>
    %48 = math.exp %47 : vector<256x384xf32>
    %cst_24 = arith.constant 1.000000e+00 : f32
    %49 = vector.broadcast %cst_24 : f32 to vector<256x384xf32>
    %50 = arith.addf %49, %48 : vector<256x384xf32>
    %51 = arith.divf %49, %50 : vector<256x384xf32>
    %52 = vector.extract_strided_slice %45 {offsets = [0, 384], sizes = [256, 384], strides = [1, 1]} : vector<256x1152xf32> to vector<256x384xf32>
    %53 = math.tanh %52 : vector<256x384xf32>
    %54 = vector.extract_strided_slice %45 {offsets = [0, 768], sizes = [256, 384], strides = [1, 1]} : vector<256x1152xf32> to vector<256x384xf32>
    %55 = arith.negf %54 : vector<256x384xf32>
    %56 = math.exp %55 : vector<256x384xf32>
    %cst_25 = arith.constant 1.000000e+00 : f32
    %57 = vector.broadcast %cst_25 : f32 to vector<256x384xf32>
    %58 = arith.addf %57, %56 : vector<256x384xf32>
    %59 = arith.divf %57, %58 : vector<256x384xf32>
    %60 = arith.mulf %51, %53 : vector<256x384xf32>
    %61 = math.tanh %60 : vector<256x384xf32>
    %62 = arith.mulf %59, %61 : vector<256x384xf32>
    %c0_26 = arith.constant 0 : index
    %c0_27 = arith.constant 0 : index
    %63 = vector.load %arg10[%c0_26, %c0_27] : memref<512x384xf32, #tpu.memory_space<vmem>>, vector<256x384xf32>
    tpu.vector_store %arg10[%c0_26, %c0_27], %62 {strides = array<i32>} : memref<512x384xf32, #tpu.memory_space<vmem>>, vector<256x384xf32>,
    %c256 = arith.constant 256 : index
    %c0_28 = arith.constant 0 : index
    %64 = vector.load %arg1[%c256, %c0_28] : memref<512x300xf32, #tpu.memory_space<vmem>>, vector<256x300xf32>
    %65 = arith.truncf %64 : vector<256x300xf32> to vector<256x300xbf16>
    %c0_29 = arith.constant 0 : index
    %c0_30 = arith.constant 0 : index
    %66 = vector.load %arg2[%c0_29, %c0_30] : memref<300x384xbf16, #tpu.memory_space<vmem>>, vector<300x384xbf16>
    %cst_31 = arith.constant dense<0.000000e+00> : vector<256x384xf32>
    %67 = tpu.matmul %65, %66, %cst_31 {dimension_numbers = #tpu.dot_dimension_numbers<[1], [0], [0], [1], [0, 0, 1, 1], [], []>} : vector<256x300xbf16>, vector<300x384xbf16>, vector<256x384xf32> -> vector<256x384xf32>
    %c0_32 = arith.constant 0 : index
    %c0_33 = arith.constant 0 : index
    %68 = vector.load %arg3[%c0_32, %c0_33] : memref<1x384xf32, #tpu.memory_space<vmem>>, vector<1x384xf32>
    %69 = vector.broadcast %68 : vector<1x384xf32> to vector<256x384xf32>
    %70 = arith.addf %67, %69 : vector<256x384xf32>
    %71 = vector.extract_strided_slice %70 {offsets = [0, 0], sizes = [256, 128], strides = [1, 1]} : vector<256x384xf32> to vector<256x128xf32>
    %72 = arith.negf %71 : vector<256x128xf32>
    %73 = math.exp %72 : vector<256x128xf32>
    %cst_34 = arith.constant 1.000000e+00 : f32
    %74 = vector.broadcast %cst_34 : f32 to vector<256x128xf32>
    %75 = arith.addf %74, %73 : vector<256x128xf32>
    %76 = arith.divf %74, %75 : vector<256x128xf32>
    %77 = vector.extract_strided_slice %70 {offsets = [0, 128], sizes = [256, 128], strides = [1, 1]} : vector<256x384xf32> to vector<256x128xf32>
    %78 = math.tanh %77 : vector<256x128xf32>
    %79 = vector.extract_strided_slice %70 {offsets = [0, 256], sizes = [256, 128], strides = [1, 1]} : vector<256x384xf32> to vector<256x128xf32>
    %80 = arith.negf %79 : vector<256x128xf32>
    %81 = math.exp %80 : vector<256x128xf32>
    %cst_35 = arith.constant 1.000000e+00 : f32
    %82 = vector.broadcast %cst_35 : f32 to vector<256x128xf32>
    %83 = arith.addf %82, %81 : vector<256x128xf32>
    %84 = arith.divf %82, %83 : vector<256x128xf32>
    %85 = arith.mulf %76, %78 : vector<256x128xf32>
    %86 = math.tanh %85 : vector<256x128xf32>
    %87 = arith.mulf %84, %86 : vector<256x128xf32>
    %88 = arith.truncf %87 : vector<256x128xf32> to vector<256x128xbf16>
    %c0_36 = arith.constant 0 : index
    %c0_37 = arith.constant 0 : index
    %89 = vector.load %arg4[%c0_36, %c0_37] : memref<128x128xbf16, #tpu.memory_space<vmem>>, vector<128x128xbf16>
    %cst_38 = arith.constant dense<0.000000e+00> : vector<256x128xf32>
    %90 = tpu.matmul %88, %89, %cst_38 {dimension_numbers = #tpu.dot_dimension_numbers<[1], [0], [0], [1], [0, 0, 1, 1], [], []>} : vector<256x128xbf16>, vector<128x128xbf16>, vector<256x128xf32> -> vector<256x128xf32>
    %c0_39 = arith.constant 0 : index
    %c0_40 = arith.constant 0 : index
    %91 = vector.load %arg5[%c0_39, %c0_40] : memref<1x128xf32, #tpu.memory_space<vmem>>, vector<1x128xf32>
    %92 = vector.broadcast %91 : vector<1x128xf32> to vector<256x128xf32>
    %93 = arith.addf %90, %92 : vector<256x128xf32>
    %cst_41 = arith.constant 0.000000e+00 : f32
    %94 = vector.broadcast %cst_41 : f32 to vector<256x128xf32>
    %95 = arith.maximumf %93, %94 : vector<256x128xf32>
    %96 = arith.truncf %95 : vector<256x128xf32> to vector<256x128xbf16>
    %c0_42 = arith.constant 0 : index
    %c0_43 = arith.constant 0 : index
    %97 = vector.load %arg6[%c0_42, %c0_43] : memref<128x128xbf16, #tpu.memory_space<vmem>>, vector<128x128xbf16>
    %cst_44 = arith.constant dense<0.000000e+00> : vector<256x128xf32>
    %98 = tpu.matmul %96, %97, %cst_44 {dimension_numbers = #tpu.dot_dimension_numbers<[1], [0], [0], [1], [0, 0, 1, 1], [], []>} : vector<256x128xbf16>, vector<128x128xbf16>, vector<256x128xf32> -> vector<256x128xf32>
    %c0_45 = arith.constant 0 : index
    %c0_46 = arith.constant 0 : index
    %99 = vector.load %arg7[%c0_45, %c0_46] : memref<1x128xf32, #tpu.memory_space<vmem>>, vector<1x128xf32>
    %100 = vector.broadcast %99 : vector<1x128xf32> to vector<256x128xf32>
    %101 = arith.addf %98, %100 : vector<256x128xf32>
    %cst_47 = arith.constant 0.000000e+00 : f32
    %102 = vector.broadcast %cst_47 : f32 to vector<256x128xf32>
    %103 = arith.maximumf %101, %102 : vector<256x128xf32>
    %104 = arith.truncf %103 : vector<256x128xf32> to vector<256x128xbf16>
    %c0_48 = arith.constant 0 : index
    %c0_49 = arith.constant 0 : index
    %105 = vector.load %arg8[%c0_48, %c0_49] : memref<128x1152xbf16, #tpu.memory_space<vmem>>, vector<128x1152xbf16>
    %cst_50 = arith.constant dense<0.000000e+00> : vector<256x1152xf32>
    %106 = tpu.matmul %104, %105, %cst_50 {dimension_numbers = #tpu.dot_dimension_numbers<[1], [0], [0], [1], [0, 0, 1, 1], [], []>} : vector<256x128xbf16>, vector<128x1152xbf16>, vector<256x1152xf32> -> vector<256x1152xf32>
    %c0_51 = arith.constant 0 : index
    %c0_52 = arith.constant 0 : index
    %107 = vector.load %arg9[%c0_51, %c0_52] : memref<1x1152xf32, #tpu.memory_space<vmem>>, vector<1x1152xf32>
    %108 = vector.broadcast %107 : vector<1x1152xf32> to vector<256x1152xf32>
    %109 = arith.addf %106, %108 : vector<256x1152xf32>
    %110 = vector.extract_strided_slice %109 {offsets = [0, 0], sizes = [256, 384], strides = [1, 1]} : vector<256x1152xf32> to vector<256x384xf32>
    %111 = arith.negf %110 : vector<256x384xf32>
    %112 = math.exp %111 : vector<256x384xf32>
    %cst_53 = arith.constant 1.000000e+00 : f32
    %113 = vector.broadcast %cst_53 : f32 to vector<256x384xf32>
    %114 = arith.addf %113, %112 : vector<256x384xf32>
    %115 = arith.divf %113, %114 : vector<256x384xf32>
    %116 = vector.extract_strided_slice %109 {offsets = [0, 384], sizes = [256, 384], strides = [1, 1]} : vector<256x1152xf32> to vector<256x384xf32>
    %117 = math.tanh %116 : vector<256x384xf32>
    %118 = vector.extract_strided_slice %109 {offsets = [0, 768], sizes = [256, 384], strides = [1, 1]} : vector<256x1152xf32> to vector<256x384xf32>
    %119 = arith.negf %118 : vector<256x384xf32>
    %120 = math.exp %119 : vector<256x384xf32>
    %cst_54 = arith.constant 1.000000e+00 : f32
    %121 = vector.broadcast %cst_54 : f32 to vector<256x384xf32>
    %122 = arith.addf %121, %120 : vector<256x384xf32>
    %123 = arith.divf %121, %122 : vector<256x384xf32>
    %124 = arith.mulf %115, %117 : vector<256x384xf32>
    %125 = math.tanh %124 : vector<256x384xf32>
    %126 = arith.mulf %123, %125 : vector<256x384xf32>
    %c256_55 = arith.constant 256 : index
    %c0_56 = arith.constant 0 : index
    %127 = vector.load %arg10[%c256_55, %c0_56] : memref<512x384xf32, #tpu.memory_space<vmem>>, vector<256x384xf32>
    tpu.vector_store %arg10[%c256_55, %c0_56], %126 {strides = array<i32>} : memref<512x384xf32, #tpu.memory_space<vmem>>, vector<256x384xf32>,
    return
  }
  func.func @transform_0(%arg0: i32) -> (i32, i32) {
    %c0_i32 = arith.constant 0 : i32
    %c0_i32_0 = arith.constant 0 : i32
    return %arg0, %c0_i32 : i32, i32
  }
  func.func @transform_1(%arg0: i32) -> (i32, i32) {
    %c0_i32 = arith.constant 0 : i32
    %c0_i32_0 = arith.constant 0 : i32
    %c0_i32_1 = arith.constant 0 : i32
    return %c0_i32, %c0_i32_0 : i32, i32
  }
  func.func @transform_2(%arg0: i32) -> (i32, i32) {
    %c0_i32 = arith.constant 0 : i32
    %c0_i32_0 = arith.constant 0 : i32
    %c0_i32_1 = arith.constant 0 : i32
    return %c0_i32, %c0_i32_0 : i32, i32
  }
  func.func @transform_3(%arg0: i32) -> (i32, i32) {
    %c0_i32 = arith.constant 0 : i32
    %c0_i32_0 = arith.constant 0 : i32
    %c0_i32_1 = arith.constant 0 : i32
    return %c0_i32, %c0_i32_0 : i32, i32
  }
  func.func @transform_4(%arg0: i32) -> (i32, i32) {
    %c0_i32 = arith.constant 0 : i32
    %c0_i32_0 = arith.constant 0 : i32
    %c0_i32_1 = arith.constant 0 : i32
    return %c0_i32, %c0_i32_0 : i32, i32
  }
  func.func @transform_5(%arg0: i32) -> (i32, i32) {
    %c0_i32 = arith.constant 0 : i32
    %c0_i32_0 = arith.constant 0 : i32
    %c0_i32_1 = arith.constant 0 : i32
    return %c0_i32, %c0_i32_0 : i32, i32
  }
  func.func @transform_6(%arg0: i32) -> (i32, i32) {
    %c0_i32 = arith.constant 0 : i32
    %c0_i32_0 = arith.constant 0 : i32
    %c0_i32_1 = arith.constant 0 : i32
    return %c0_i32, %c0_i32_0 : i32, i32
  }
  func.func @transform_7(%arg0: i32) -> (i32, i32) {
    %c0_i32 = arith.constant 0 : i32
    %c0_i32_0 = arith.constant 0 : i32
    %c0_i32_1 = arith.constant 0 : i32
    return %c0_i32, %c0_i32_0 : i32, i32
  }
  func.func @transform_8(%arg0: i32) -> (i32, i32) {
    %c0_i32 = arith.constant 0 : i32
    %c0_i32_0 = arith.constant 0 : i32
    %c0_i32_1 = arith.constant 0 : i32
    return %c0_i32, %c0_i32_0 : i32, i32
  }
  func.func @transform_9(%arg0: i32) -> (i32, i32) {
    %c0_i32 = arith.constant 0 : i32
    %c0_i32_0 = arith.constant 0 : i32
    return %arg0, %c0_i32 : i32, i32
  }
}

</mosaic_0001>

<llo_original>
// kernel: tpu_custom_call.1
$region0: #{tpu_custom_call.1}
  #allocation0 [shape = 'u32[]', space=smem, size = 0x4, offset = 0x4, fixed_abs, tag = 'smem constant byte address 0x4 - core index']
  #allocation1 [shape = 'u32[144,128]{1,0:T(1,128)}', space=vmem, size = 0x12000, scoped, tag = 'internal scratch']
  %s0 = inlined_call_operand.vmem [shape: f32[1024,300], index: 0, kind: input, shape index: {}]
  %s1 = inlined_call_operand.vmem [shape: bf16[300,384], index: 1, kind: input, shape index: {}]
  %s2 = inlined_call_operand.vmem [shape: f32[1,384], index: 2, kind: input, shape index: {}]
  %s3 = inlined_call_operand.vmem [shape: bf16[128,128], index: 3, kind: input, shape index: {}]
  %s4 = inlined_call_operand.vmem [shape: f32[1,128], index: 4, kind: input, shape index: {}]
  %s5 = inlined_call_operand.vmem [shape: bf16[128,128], index: 5, kind: input, shape index: {}]
  %s6 = inlined_call_operand.vmem [shape: f32[1,128], index: 6, kind: input, shape index: {}]
  %s7 = inlined_call_operand.vmem [shape: bf16[128,1152], index: 7, kind: input, shape index: {}]
  %s8 = inlined_call_operand.vmem [shape: f32[1,1152], index: 8, kind: input, shape index: {}]
  %s9 = inlined_call_operand.hbm [shape: f32[1024,384], index: 9, kind: output, shape index: {}]
  %s10 = sld [smem:[#allocation0]]
  $region69: #{tpu_custom_call.1} parent=0
    _
  %s12 = ssub.s32 1, %s10
  %s13 = scalar_select 0, %s12, %s10
  $region1: #{tpu_custom_call.1} parent=0
    #allocation2 [shape = 'u8[1572864]{0}', space=vmem, size = 0x180000, scoped, tag = 'output window, operand 0']
    #allocation3 [shape = 's32[2]{0}', space=sflag, size = 0x8, scoped, tag = 'scoped memory for tpu_custom_call.1']
    %14 = vsyncpa [#allocation3], 0
    %s15 = scalar_lea.sflag [#allocation3], 1
    %16 = vsyncpa %s15, 0
    loop: start=0, step=1, limit=4
    $region2: #{tpu_custom_call.1} parent=1 // loop_pre_header
      _
    $region3: #{tpu_custom_call.1} parent=1 // loop_header
      %s18 = sphi 0, %s22
      %p19 = scmp.ge.s32.totalorder %s18, 4
      %s28 = sphi 0, %s30
      %s31 = sphi 0, %s28
      %s32 = sphi 0, %s31
      %s48 = sphi 0, %s32
      %s52 = sphi 0, %s52
      %s54 = sphi 0, %s52
      %s55 = sphi 0, %s54
      %s69 = sphi 0, %s55
      %s73 = sphi 0, %s73
      %s75 = sphi 0, %s73
      %s76 = sphi 0, %s75
      %s90 = sphi 0, %s76
      %s94 = sphi 0, %s94
      %s96 = sphi 0, %s94
      %s97 = sphi 0, %s96
      %s111 = sphi 0, %s97
      %s115 = sphi 0, %s115
      %s117 = sphi 0, %s115
      %s118 = sphi 0, %s117
      %s132 = sphi 0, %s118
      %s136 = sphi 0, %s136
      %s138 = sphi 0, %s136
      %s139 = sphi 0, %s138
      %s153 = sphi 0, %s139
      %s157 = sphi 0, %s157
      %s159 = sphi 0, %s157
      %s160 = sphi 0, %s159
      %s174 = sphi 0, %s160
      %s178 = sphi 0, %s178
      %s180 = sphi 0, %s178
      %s181 = sphi 0, %s180
      %s195 = sphi 0, %s181
      %s199 = sphi 0, %s199
      %s201 = sphi 0, %s199
      %s202 = sphi 0, %s201
      %s216 = sphi 0, %s202
      %s222 = sphi 0, %s224
      %s225 = sphi 0, %s222
      %s226 = sphi 0, %s225
      %s242 = sphi 0, %s226
    $region4: #{tpu_custom_call.1} parent=1 // loop_header_branch
      %21 = sbr.rel (%p19) target = $region8
    $region5: #{tpu_custom_call.1} parent=1 // loop_body
      %s23 = ssub.s32 %s18, 1
      %s24 = ssub.s32 %s18, 2
      %s25 = sadd.s32 %s18, 1
      %s26 = ssub.s32 %s18, %s25
      %p27 = scmp.eq.s32.totalorder %s26, 0
      %s29 = sadd.s32 %s28, 1
      %s30 = scalar_select %p27, %s28, %s29
      %p33 = pneg %p27
      %p34 = scmp.eq.s32.totalorder %s18, 1
      %p35 = por %p33, %p34
      %p36 = scmp.ne.s32.totalorder %s28, %s31
      %p37 = scmp.eq.s32.totalorder %s18, 0
      %p38 = por %p36, %p37
      %p39 = scmp.ne.s32.totalorder %s28, %s31
      %p40 = scmp.eq.s32.totalorder %s23, 1
      %p41 = por %p39, %p40
      %p42 = scmp.ne.s32.totalorder %s31, %s32
      %p43 = scmp.eq.s32.totalorder %s23, 0
      %p44 = por %p42, %p43
      %p45 = scmp.ne.s32.totalorder %s31, %s32
      %p46 = scmp.eq.s32.totalorder %s24, 1
      %p47 = por %p45, %p46
      %p49 = scmp.ne.s32.totalorder %s32, %s48
      %p50 = scmp.eq.s32.totalorder %s24, 0
      %p51 = por %p49, %p50
      %s53 = sadd.s32 %s52, 1
      %p56 = scmp.eq.s32.totalorder %s18, 1
      %p57 = scmp.ne.s32.totalorder %s52, %s54
      %p58 = scmp.eq.s32.totalorder %s18, 0
      %p59 = por %p57, %p58
      %p60 = scmp.ne.s32.totalorder %s52, %s54
      %p61 = scmp.eq.s32.totalorder %s23, 1
      %p62 = por %p60, %p61
      %p63 = scmp.ne.s32.totalorder %s54, %s55
      %p64 = scmp.eq.s32.totalorder %s23, 0
      %p65 = por %p63, %p64
      %p66 = scmp.ne.s32.totalorder %s54, %s55
      %p67 = scmp.eq.s32.totalorder %s24, 1
      %p68 = por %p66, %p67
      %p70 = scmp.ne.s32.totalorder %s55, %s69
      %p71 = scmp.eq.s32.totalorder %s24, 0
      %p72 = por %p70, %p71
      %s74 = sadd.s32 %s73, 1
      %p77 = scmp.eq.s32.totalorder %s18, 1
      %p78 = scmp.ne.s32.totalorder %s73, %s75
      %p79 = scmp.eq.s32.totalorder %s18, 0
      %p80 = por %p78, %p79
      %p81 = scmp.ne.s32.totalorder %s73, %s75
      %p82 = scmp.eq.s32.totalorder %s23, 1
      %p83 = por %p81, %p82
      %p84 = scmp.ne.s32.totalorder %s75, %s76
      %p85 = scmp.eq.s32.totalorder %s23, 0
      %p86 = por %p84, %p85
      %p87 = scmp.ne.s32.totalorder %s75, %s76
      %p88 = scmp.eq.s32.totalorder %s24, 1
      %p89 = por %p87, %p88
      %p91 = scmp.ne.s32.totalorder %s76, %s90
      %p92 = scmp.eq.s32.totalorder %s24, 0
      %p93 = por %p91, %p92
      %s95 = sadd.s32 %s94, 1
      %p98 = scmp.eq.s32.totalorder %s18, 1
      %p99 = scmp.ne.s32.totalorder %s94, %s96
      %p100 = scmp.eq.s32.totalorder %s18, 0
      %p101 = por %p99, %p100
      %p102 = scmp.ne.s32.totalorder %s94, %s96
      %p103 = scmp.eq.s32.totalorder %s23, 1
      %p104 = por %p102, %p103
      %p105 = scmp.ne.s32.totalorder %s96, %s97
      %p106 = scmp.eq.s32.totalorder %s23, 0
      %p107 = por %p105, %p106
      %p108 = scmp.ne.s32.totalorder %s96, %s97
      %p109 = scmp.eq.s32.totalorder %s24, 1
      %p110 = por %p108, %p109
      %p112 = scmp.ne.s32.totalorder %s97, %s111
      %p113 = scmp.eq.s32.totalorder %s24, 0
      %p114 = por %p112, %p113
      %s116 = sadd.s32 %s115, 1
      %p119 = scmp.eq.s32.totalorder %s18, 1
      %p120 = scmp.ne.s32.totalorder %s115, %s117
      %p121 = scmp.eq.s32.totalorder %s18, 0
      %p122 = por %p120, %p121
      %p123 = scmp.ne.s32.totalorder %s115, %s117
      %p124 = scmp.eq.s32.totalorder %s23, 1
      %p125 = por %p123, %p124
      %p126 = scmp.ne.s32.totalorder %s117, %s118
      %p127 = scmp.eq.s32.totalorder %s23, 0
      %p128 = por %p126, %p127
      %p129 = scmp.ne.s32.totalorder %s117, %s118
      %p130 = scmp.eq.s32.totalorder %s24, 1
      %p131 = por %p129, %p130
      %p133 = scmp.ne.s32.totalorder %s118, %s132
      %p134 = scmp.eq.s32.totalorder %s24, 0
      %p135 = por %p133, %p134
      %s137 = sadd.s32 %s136, 1
      %p140 = scmp.eq.s32.totalorder %s18, 1
      %p141 = scmp.ne.s32.totalorder %s136, %s138
      %p142 = scmp.eq.s32.totalorder %s18, 0
      %p143 = por %p141, %p142
      %p144 = scmp.ne.s32.totalorder %s136, %s138
      %p145 = scmp.eq.s32.totalorder %s23, 1
      %p146 = por %p144, %p145
      %p147 = scmp.ne.s32.totalorder %s138, %s139
      %p148 = scmp.eq.s32.totalorder %s23, 0
      %p149 = por %p147, %p148
      %p150 = scmp.ne.s32.totalorder %s138, %s139
      %p151 = scmp.eq.s32.totalorder %s24, 1
      %p152 = por %p150, %p151
      %p154 = scmp.ne.s32.totalorder %s139, %s153
      %p155 = scmp.eq.s32.totalorder %s24, 0
      %p156 = por %p154, %p155
      %s158 = sadd.s32 %s157, 1
      %p161 = scmp.eq.s32.totalorder %s18, 1
      %p162 = scmp.ne.s32.totalorder %s157, %s159
      %p163 = scmp.eq.s32.totalorder %s18, 0
      %p164 = por %p162, %p163
      %p165 = scmp.ne.s32.totalorder %s157, %s159
      %p166 = scmp.eq.s32.totalorder %s23, 1
      %p167 = por %p165, %p166
      %p168 = scmp.ne.s32.totalorder %s159, %s160
      %p169 = scmp.eq.s32.totalorder %s23, 0
      %p170 = por %p168, %p169
      %p171 = scmp.ne.s32.totalorder %s159, %s160
      %p172 = scmp.eq.s32.totalorder %s24, 1
      %p173 = por %p171, %p172
      %p175 = scmp.ne.s32.totalorder %s160, %s174
      %p176 = scmp.eq.s32.totalorder %s24, 0
      %p177 = por %p175, %p176
      %s179 = sadd.s32 %s178, 1
      %p182 = scmp.eq.s32.totalorder %s18, 1
      %p183 = scmp.ne.s32.totalorder %s178, %s180
      %p184 = scmp.eq.s32.totalorder %s18, 0
      %p185 = por %p183, %p184
      %p186 = scmp.ne.s32.totalorder %s178, %s180
      %p187 = scmp.eq.s32.totalorder %s23, 1
      %p188 = por %p186, %p187
      %p189 = scmp.ne.s32.totalorder %s180, %s181
      %p190 = scmp.eq.s32.totalorder %s23, 0
      %p191 = por %p189, %p190
      %p192 = scmp.ne.s32.totalorder %s180, %s181
      %p193 = scmp.eq.s32.totalorder %s24, 1
      %p194 = por %p192, %p193
      %p196 = scmp.ne.s32.totalorder %s181, %s195
      %p197 = scmp.eq.s32.totalorder %s24, 0
      %p198 = por %p196, %p197
      %s200 = sadd.s32 %s199, 1
      %p203 = scmp.eq.s32.totalorder %s18, 1
      %p204 = scmp.ne.s32.totalorder %s199, %s201
      %p205 = scmp.eq.s32.totalorder %s18, 0
      %p206 = por %p204, %p205
      %p207 = scmp.ne.s32.totalorder %s199, %s201
      %p208 = scmp.eq.s32.totalorder %s23, 1
      %p209 = por %p207, %p208
      %p210 = scmp.ne.s32.totalorder %s201, %s202
      %p211 = scmp.eq.s32.totalorder %s23, 0
      %p212 = por %p210, %p211
      %p213 = scmp.ne.s32.totalorder %s201, %s202
      %p214 = scmp.eq.s32.totalorder %s24, 1
      %p215 = por %p213, %p214
      %p217 = scmp.ne.s32.totalorder %s202, %s216
      %p218 = scmp.eq.s32.totalorder %s24, 0
      %p219 = por %p217, %p218
      %s220 = ssub.s32 %s18, %s25
      %p221 = scmp.eq.s32.totalorder %s220, 0
      %s223 = sadd.s32 %s222, 1
      %s224 = scalar_select %p221, %s222, %s223
      %p227 = pneg %p221
      %p228 = scmp.eq.s32.totalorder %s18, 1
      %p229 = por %p227, %p228
      %p230 = scmp.ne.s32.totalorder %s222, %s225
      %p231 = scmp.eq.s32.totalorder %s18, 0
      %p232 = por %p230, %p231
      %p233 = scmp.ne.s32.totalorder %s222, %s225
      %p234 = scmp.eq.s32.totalorder %s23, 1
      %p235 = por %p233, %p234
      %p236 = scmp.ne.s32.totalorder %s225, %s226
      %p237 = scmp.eq.s32.totalorder %s23, 0
      %p238 = por %p236, %p237
      %p239 = scmp.ne.s32.totalorder %s225, %s226
      %p240 = scmp.eq.s32.totalorder %s24, 1
      %p241 = por %p239, %p240
      %p243 = scmp.ne.s32.totalorder %s226, %s242
      %p244 = scmp.eq.s32.totalorder %s24, 0
      %p245 = por %p243, %p244
      %p246 = scmp.le.s32.totalorder 1, %s18
      %p247 = scmp.lt.s32.totalorder %s18, 3
      %p248 = pnand %p246, %p247
      %p249 = pneg %p248
      // Predicated region
      $region9: #{tpu_custom_call.1} parent=5 // pred_check
        _
      $region10: #{tpu_custom_call.1} parent=5 // pred_check_branch
        %251 = sbr.rel (%p248) target = $region12
      $region11: #{tpu_custom_call.1} parent=5 // pred_region
        %s252 = ssub.s32 %s18, 1
        // Predicated region
        $region13: #{tpu_custom_call.1} parent=11 // pred_check
          %p253 = pneg %p65
        $region14: #{tpu_custom_call.1} parent=11 // pred_check_branch
          %255 = sbr.rel (%p253) target = $region16
        $region15: #{tpu_custom_call.1} parent=11 // pred_region
          _
        $region16: #{tpu_custom_call.1} parent=11 // pred_fallthru
          _
        // Predicated region
        $region17: #{tpu_custom_call.1} parent=11 // pred_check
          %p256 = pneg %p86
        $region18: #{tpu_custom_call.1} parent=11 // pred_check_branch
          %258 = sbr.rel (%p256) target = $region20
        $region19: #{tpu_custom_call.1} parent=11 // pred_region
          _
        $region20: #{tpu_custom_call.1} parent=11 // pred_fallthru
          _
        // Predicated region
        $region21: #{tpu_custom_call.1} parent=11 // pred_check
          %p259 = pneg %p107
        $region22: #{tpu_custom_call.1} parent=11 // pred_check_branch
          %261 = sbr.rel (%p259) target = $region24
        $region23: #{tpu_custom_call.1} parent=11 // pred_region
          _
        $region24: #{tpu_custom_call.1} parent=11 // pred_fallthru
          _
        // Predicated region
        $region25: #{tpu_custom_call.1} parent=11 // pred_check
          %p262 = pneg %p128
        $region26: #{tpu_custom_call.1} parent=11 // pred_check_branch
          %264 = sbr.rel (%p262) target = $region28
        $region27: #{tpu_custom_call.1} parent=11 // pred_region
          _
        $region28: #{tpu_custom_call.1} parent=11 // pred_fallthru
          _
        // Predicated region
        $region29: #{tpu_custom_call.1} parent=11 // pred_check
          %p265 = pneg %p149
        $region30: #{tpu_custom_call.1} parent=11 // pred_check_branch
          %267 = sbr.rel (%p265) target = $region32
        $region31: #{tpu_custom_call.1} parent=11 // pred_region
          _
        $region32: #{tpu_custom_call.1} parent=11 // pred_fallthru
          _
        // Predicated region
        $region33: #{tpu_custom_call.1} parent=11 // pred_check
          %p268 = pneg %p170
        $region34: #{tpu_custom_call.1} parent=11 // pred_check_branch
          %270 = sbr.rel (%p268) target = $region36
        $region35: #{tpu_custom_call.1} parent=11 // pred_region
          _
        $region36: #{tpu_custom_call.1} parent=11 // pred_fallthru
          _
        // Predicated region
        $region37: #{tpu_custom_call.1} parent=11 // pred_check
          %p271 = pneg %p191
        $region38: #{tpu_custom_call.1} parent=11 // pred_check_branch
          %273 = sbr.rel (%p271) target = $region40
        $region39: #{tpu_custom_call.1} parent=11 // pred_region
          _
        $region40: #{tpu_custom_call.1} parent=11 // pred_fallthru
          _
        // Predicated region
        $region41: #{tpu_custom_call.1} parent=11 // pred_check
          %p274 = pneg %p212
        $region42: #{tpu_custom_call.1} parent=11 // pred_check_branch
          %276 = sbr.rel (%p274) target = $region44
        $region43: #{tpu_custom_call.1} parent=11 // pred_region
          _
        $region44: #{tpu_custom_call.1} parent=11 // pred_fallthru
          _
      $region12: #{tpu_custom_call.1} parent=5 // pred_fallthru
        _
      %p277 = scmp.lt.s32.totalorder %s18, 2
      // Predicated region
      $region45: #{tpu_custom_call.1} parent=5 // pred_check
        %p278 = pneg %p277
      $region46: #{tpu_custom_call.1} parent=5 // pred_check_branch
        %280 = sbr.rel (%p278) target = $region48
      $region47: #{tpu_custom_call.1} parent=5 // pred_region
        // Predicated region
        $region49: #{tpu_custom_call.1} parent=47 // pred_check
          %p281 = pneg %p38
        $region50: #{tpu_custom_call.1} parent=47 // pred_check_branch
          %283 = sbr.rel (%p281) target = $region52
        $region51: #{tpu_custom_call.1} parent=47 // pred_region
          %s284 = smul.u32 64, %s18
          %p285 = scmp.lt.s32.totalorder %s284, 127
          %s286 = scalar_select %p285, %s284, 127
          %s287 = smul.addr %s286, 3
          %s288 = smul.addr %s287, 8
          %s289 = scalar_lea.vmem %s0, %s288
          %s290 = smul.u32 64, %s18
        $region52: #{tpu_custom_call.1} parent=47 // pred_fallthru
          _
      $region48: #{tpu_custom_call.1} parent=5 // pred_fallthru
        _
      %p291 = scmp.le.s32.totalorder 1, %s18
      %p292 = scmp.lt.s32.totalorder %s18, 3
      %p293 = pnand %p291, %p292
      %p294 = pneg %p293
      // Predicated region
      $region53: #{tpu_custom_call.1} parent=5 // pred_check
        _
      $region54: #{tpu_custom_call.1} parent=5 // pred_check_branch
        %296 = sbr.rel (%p293) target = $region56
      $region55: #{tpu_custom_call.1} parent=5 // pred_region
        %s297 = ssub.s32 %s18, 1
        %s298 = smul.u32 64, %s23
        %p299 = scmp.lt.s32.totalorder %s298, 127
        %s300 = scalar_select %p299, %s298, 127
        %s301 = smul.addr %s300, 3
        %s302 = smul.addr %s301, 8
        %s303 = scalar_lea.vmem %s0, %s302
        %p304 = pneg %p44
        %p305 = pneg %p41
        %p306 = pneg %p65
        %p307 = pneg %p62
        %p308 = pneg %p86
        %p309 = pneg %p83
        %p310 = pneg %p107
        %p311 = pneg %p104
        %p312 = pneg %p128
        %p313 = pneg %p125
        %p314 = pneg %p149
        %p315 = pneg %p146
        %p316 = pneg %p170
        %p317 = pneg %p167
        %p318 = pneg %p191
        %p319 = pneg %p188
        %p320 = pneg %p212
        %p321 = pneg %p209
        %p322 = pneg %p238
        %p323 = pneg %p235
        %s324 = sand.u32 %s225, 1
        %s325 = scalar_lea.sflag [#allocation3], %s324
        %s326 = sand.u32 %s225, 1
        %s327 = smul.addr %s326, 1536
        %s328 = scalar_lea.vmem [#allocation2], %s327
        %s329 = smul.u32 64, %s23
        %p330 = scmp.lt.s32.totalorder %s329, 127
        %s331 = scalar_select %p330, %s329, 127
        %s332 = smul.addr %s331, 3
        %s333 = smul.addr %s332, 8
        %s334 = scalar_lea.vmem %s0, %s333
        %s335 = smul.u32 64, %s23
        %s336 = smul.u32 64, %s23
        %v338 = vld [vmem:[%s334] sm:$0xff]
        %v339 = vld [vmem:[%s334 + $0x8] sm:$0xff]
        %v340 = vld [vmem:[%s334 + $0x10] sm:$0xff]
        %v341 = vld [vmem:[%s334 + $0x18] sm:$0xff]
        %v342 = vld [vmem:[%s334 + $0x20] sm:$0xff]
        %v343 = vld [vmem:[%s334 + $0x28] sm:$0xff]
        %v344 = vld [vmem:[%s334 + $0x30] sm:$0xff]
        %v345 = vld [vmem:[%s334 + $0x38] sm:$0xff]
        %v346 = vld [vmem:[%s334 + $0x40] sm:$0xff]
        %v347 = vld [vmem:[%s334 + $0x48] sm:$0xff]
        %v348 = vld [vmem:[%s334 + $0x50] sm:$0xff]
        %v349 = vld [vmem:[%s334 + $0x58] sm:$0xff]
        %v350 = vld [vmem:[%s334 + $0x60] sm:$0xff]
        %v351 = vld [vmem:[%s334 + $0x68] sm:$0xff]
        %v352 = vld [vmem:[%s334 + $0x70] sm:$0xff]
        %v353 = vld [vmem:[%s334 + $0x78] sm:$0xff]
        %v354 = vld [vmem:[%s334 + $0x80] sm:$0xff]
        %v355 = vld [vmem:[%s334 + $0x88] sm:$0xff]
        %v356 = vld [vmem:[%s334 + $0x90] sm:$0xff]
        %v357 = vld [vmem:[%s334 + $0x98] sm:$0xff]
        %v358 = vld [vmem:[%s334 + $0xa0] sm:$0xff]
        %v359 = vld [vmem:[%s334 + $0xa8] sm:$0xff]
        %v360 = vld [vmem:[%s334 + $0xb0] sm:$0xff]
        %v361 = vld [vmem:[%s334 + $0xb8] sm:$0xff]
        %v362 = vld [vmem:[%s334 + $0xc0] sm:$0xff]
        %v363 = vld [vmem:[%s334 + $0xc8] sm:$0xff]
        %v364 = vld [vmem:[%s334 + $0xd0] sm:$0xff]
        %v365 = vld [vmem:[%s334 + $0xd8] sm:$0xff]
        %v366 = vld [vmem:[%s334 + $0xe0] sm:$0xff]
        %v367 = vld [vmem:[%s334 + $0xe8] sm:$0xff]
        %v368 = vld [vmem:[%s334 + $0xf0] sm:$0xff]
        %v369 = vld [vmem:[%s334 + $0xf8] sm:$0xff]
        %v370 = vld [vmem:[%s334 + $0x100] sm:$0xff]
        %v371 = vld [vmem:[%s334 + $0x108] sm:$0xff]
        %v372 = vld [vmem:[%s334 + $0x110] sm:$0xff]
        %v373 = vld [vmem:[%s334 + $0x118] sm:$0xff]
        %v374 = vld [vmem:[%s334 + $0x120] sm:$0xff]
        %v375 = vld [vmem:[%s334 + $0x128] sm:$0xff]
        %v376 = vld [vmem:[%s334 + $0x130] sm:$0xff]
        %v377 = vld [vmem:[%s334 + $0x138] sm:$0xff]
        %v378 = vld [vmem:[%s334 + $0x140] sm:$0xff]
        %v379 = vld [vmem:[%s334 + $0x148] sm:$0xff]
        %v380 = vld [vmem:[%s334 + $0x150] sm:$0xff]
        %v381 = vld [vmem:[%s334 + $0x158] sm:$0xff]
        %v382 = vld [vmem:[%s334 + $0x160] sm:$0xff]
        %v383 = vld [vmem:[%s334 + $0x168] sm:$0xff]
        %v384 = vld [vmem:[%s334 + $0x170] sm:$0xff]
        %v385 = vld [vmem:[%s334 + $0x178] sm:$0xff]
        %v386 = vld [vmem:[%s334 + $0x180] sm:$0xff]
        %v387 = vld [vmem:[%s334 + $0x188] sm:$0xff]
        %v388 = vld [vmem:[%s334 + $0x190] sm:$0xff]
        %v389 = vld [vmem:[%s334 + $0x198] sm:$0xff]
        %v390 = vld [vmem:[%s334 + $0x1a0] sm:$0xff]
        %v391 = vld [vmem:[%s334 + $0x1a8] sm:$0xff]
        %v392 = vld [vmem:[%s334 + $0x1b0] sm:$0xff]
        %v393 = vld [vmem:[%s334 + $0x1b8] sm:$0xff]
        %v394 = vld [vmem:[%s334 + $0x1c0] sm:$0xff]
        %v395 = vld [vmem:[%s334 + $0x1c8] sm:$0xff]
        %v396 = vld [vmem:[%s334 + $0x1d0] sm:$0xff]
        %v397 = vld [vmem:[%s334 + $0x1d8] sm:$0xff]
        %v398 = vld [vmem:[%s334 + $0x1e0] sm:$0xff]
        %v399 = vld [vmem:[%s334 + $0x1e8] sm:$0xff]
        %v400 = vld [vmem:[%s334 + $0x1f0] sm:$0xff]
        %v401 = vld [vmem:[%s334 + $0x1f8] sm:$0xff]
        %v402 = vld [vmem:[%s334 + $0x200] sm:$0xff]
        %v403 = vld [vmem:[%s334 + $0x208] sm:$0xff]
        %v404 = vld [vmem:[%s334 + $0x210] sm:$0xff]
        %v405 = vld [vmem:[%s334 + $0x218] sm:$0xff]
        %v406 = vld [vmem:[%s334 + $0x220] sm:$0xff]
        %v407 = vld [vmem:[%s334 + $0x228] sm:$0xff]
        %v408 = vld [vmem:[%s334 + $0x230] sm:$0xff]
        %v409 = vld [vmem:[%s334 + $0x238] sm:$0xff]
        %v410 = vld [vmem:[%s334 + $0x240] sm:$0xff]
        %v411 = vld [vmem:[%s334 + $0x248] sm:$0xff]
        %v412 = vld [vmem:[%s334 + $0x250] sm:$0xff]
        %v413 = vld [vmem:[%s334 + $0x258] sm:$0xff]
        %v414 = vld [vmem:[%s334 + $0x260] sm:$0xff]
        %v415 = vld [vmem:[%s334 + $0x268] sm:$0xff]
        %v416 = vld [vmem:[%s334 + $0x270] sm:$0xff]
        %v417 = vld [vmem:[%s334 + $0x278] sm:$0xff]
        %v418 = vld [vmem:[%s334 + $0x280] sm:$0xff]
        %v419 = vld [vmem:[%s334 + $0x288] sm:$0xff]
        %v420 = vld [vmem:[%s334 + $0x290] sm:$0xff]
        %v421 = vld [vmem:[%s334 + $0x298] sm:$0xff]
        %v422 = vld [vmem:[%s334 + $0x2a0] sm:$0xff]
        %v423 = vld [vmem:[%s334 + $0x2a8] sm:$0xff]
        %v424 = vld [vmem:[%s334 + $0x2b0] sm:$0xff]
        %v425 = vld [vmem:[%s334 + $0x2b8] sm:$0xff]
        %v426 = vld [vmem:[%s334 + $0x2c0] sm:$0xff]
        %v427 = vld [vmem:[%s334 + $0x2c8] sm:$0xff]
        %v428 = vld [vmem:[%s334 + $0x2d0] sm:$0xff]
        %v429 = vld [vmem:[%s334 + $0x2d8] sm:$0xff]
        %v430 = vld [vmem:[%s334 + $0x2e0] sm:$0xff]
        %v431 = vld [vmem:[%s334 + $0x2e8] sm:$0xff]
        %v432 = vld [vmem:[%s334 + $0x2f0] sm:$0xff]
        %v433 = vld [vmem:[%s334 + $0x2f8] sm:$0xff]
        %v434 = vpack.c.bf16 %v341, %v338
        %v435 = vpack.c.bf16 %v342, %v339
        %v436 = vpack.c.bf16 %v343, %v340
        %v437 = vpack.c.bf16 %v347, %v344
        %v438 = vpack.c.bf16 %v348, %v345
        %v439 = vpack.c.bf16 %v349, %v346
        %v440 = vpack.c.bf16 %v353, %v350
        %v441 = vpack.c.bf16 %v354, %v351
        %v442 = vpack.c.bf16 %v355, %v352
        %v443 = vpack.c.bf16 %v359, %v356
        %v444 = vpack.c.bf16 %v360, %v357
        %v445 = vpack.c.bf16 %v361, %v358
        %v446 = vpack.c.bf16 %v365, %v362
        %v447 = vpack.c.bf16 %v366, %v363
        %v448 = vpack.c.bf16 %v367, %v364
        %v449 = vpack.c.bf16 %v371, %v368
        %v450 = vpack.c.bf16 %v372, %v369
        %v451 = vpack.c.bf16 %v373, %v370
        %v452 = vpack.c.bf16 %v377, %v374
        %v453 = vpack.c.bf16 %v378, %v375
        %v454 = vpack.c.bf16 %v379, %v376
        %v455 = vpack.c.bf16 %v383, %v380
        %v456 = vpack.c.bf16 %v384, %v381
        %v457 = vpack.c.bf16 %v385, %v382
        %v458 = vpack.c.bf16 %v389, %v386
        %v459 = vpack.c.bf16 %v390, %v387
        %v460 = vpack.c.bf16 %v391, %v388
        %v461 = vpack.c.bf16 %v395, %v392
        %v462 = vpack.c.bf16 %v396, %v393
        %v463 = vpack.c.bf16 %v397, %v394
        %v464 = vpack.c.bf16 %v401, %v398
        %v465 = vpack.c.bf16 %v402, %v399
        %v466 = vpack.c.bf16 %v403, %v400
        %v467 = vpack.c.bf16 %v407, %v404
        %v468 = vpack.c.bf16 %v408, %v405
        %v469 = vpack.c.bf16 %v409, %v406
        %v470 = vpack.c.bf16 %v413, %v410
        %v471 = vpack.c.bf16 %v414, %v411
        %v472 = vpack.c.bf16 %v415, %v412
        %v473 = vpack.c.bf16 %v419, %v416
        %v474 = vpack.c.bf16 %v420, %v417
        %v475 = vpack.c.bf16 %v421, %v418
        %v476 = vpack.c.bf16 %v425, %v422
        %v477 = vpack.c.bf16 %v426, %v423
        %v478 = vpack.c.bf16 %v427, %v424
        %v479 = vpack.c.bf16 %v431, %v428
        %v480 = vpack.c.bf16 %v432, %v429
        %v481 = vpack.c.bf16 %v433, %v430
        %v482 = vld [vmem:[%s1] sm:$0xff]
        %v483 = vld [vmem:[%s1 + $0x8] sm:$0xf]
        %v484 = vld [vmem:[%s1 + $0xc] sm:$0xff]
        %v485 = vld [vmem:[%s1 + $0x14] sm:$0xf]
        %v486 = vld [vmem:[%s1 + $0x18] sm:$0xff]
        %v487 = vld [vmem:[%s1 + $0x20] sm:$0xf]
        %v488 = vld [vmem:[%s1 + $0x24] sm:$0xff]
        %v489 = vld [vmem:[%s1 + $0x2c] sm:$0xf]
        %v490 = vld [vmem:[%s1 + $0x30] sm:$0xff]
        %v491 = vld [vmem:[%s1 + $0x38] sm:$0xf]
        %v492 = vld [vmem:[%s1 + $0x3c] sm:$0xff]
        %v493 = vld [vmem:[%s1 + $0x44] sm:$0xf]
        %v494 = vld [vmem:[%s1 + $0x48] sm:$0xff]
        %v495 = vld [vmem:[%s1 + $0x50] sm:$0xf]
        %v496 = vld [vmem:[%s1 + $0x54] sm:$0xff]
        %v497 = vld [vmem:[%s1 + $0x5c] sm:$0xf]
        %v498 = vld [vmem:[%s1 + $0x60] sm:$0xff]
        %v499 = vld [vmem:[%s1 + $0x68] sm:$0xf]
        %v500 = vld [vmem:[%s1 + $0x6c] sm:$0xff]
        %v501 = vld [vmem:[%s1 + $0x74] sm:$0xf]
        %v502 = vld [vmem:[%s1 + $0x78] sm:$0xff]
        %v503 = vld [vmem:[%s1 + $0x80] sm:$0xf]
        %v504 = vld [vmem:[%s1 + $0x84] sm:$0xff]
        %v505 = vld [vmem:[%s1 + $0x8c] sm:$0xf]
        %v506 = vld [vmem:[%s1 + $0x90] sm:$0xff]
        %v507 = vld [vmem:[%s1 + $0x98] sm:$0xf]
        %v508 = vld [vmem:[%s1 + $0x9c] sm:$0xff]
        %v509 = vld [vmem:[%s1 + $0xa4] sm:$0xf]
        %v510 = vld [vmem:[%s1 + $0xa8] sm:$0xff]
        %v511 = vld [vmem:[%s1 + $0xb0] sm:$0xf]
        %v512 = vld [vmem:[%s1 + $0xb4] sm:$0xff]
        %v513 = vld [vmem:[%s1 + $0xbc] sm:$0xf]
        %v514 = vld [vmem:[%s1 + $0xc0] sm:$0xff]
        %v515 = vld [vmem:[%s1 + $0xc8] sm:$0xf]
        %v516 = vld [vmem:[%s1 + $0xcc] sm:$0xff]
        %v517 = vld [vmem:[%s1 + $0xd4] sm:$0xf]
        %v518 = vld [vmem:[%s1 + $0xd8] sm:$0xff]
        %v519 = vld [vmem:[%s1 + $0xe0] sm:$0xf]
        %v520 = vld [vmem:[%s1 + $0xe4] sm:$0xff]
        %v521 = vld [vmem:[%s1 + $0xec] sm:$0xf]
        %v522 = vld [vmem:[%s1 + $0xf0] sm:$0xff]
        %v523 = vld [vmem:[%s1 + $0xf8] sm:$0xf]
        %v524 = vld [vmem:[%s1 + $0xfc] sm:$0xff]
        %v525 = vld [vmem:[%s1 + $0x104] sm:$0xf]
        %v526 = vld [vmem:[%s1 + $0x108] sm:$0xff]
        %v527 = vld [vmem:[%s1 + $0x110] sm:$0xf]
        %v528 = vld [vmem:[%s1 + $0x114] sm:$0xff]
        %v529 = vld [vmem:[%s1 + $0x11c] sm:$0xf]
        %v530 = vld [vmem:[%s1 + $0x120] sm:$0xff]
        %v531 = vld [vmem:[%s1 + $0x128] sm:$0xf]
        %v532 = vld [vmem:[%s1 + $0x12c] sm:$0xff]
        %v533 = vld [vmem:[%s1 + $0x134] sm:$0xf]
        %v534 = vld [vmem:[%s1 + $0x138] sm:$0xff]
        %v535 = vld [vmem:[%s1 + $0x140] sm:$0xf]
        %v536 = vld [vmem:[%s1 + $0x144] sm:$0xff]
        %v537 = vld [vmem:[%s1 + $0x14c] sm:$0xf]
        %v538 = vld [vmem:[%s1 + $0x150] sm:$0xff]
        %v539 = vld [vmem:[%s1 + $0x158] sm:$0xf]
        %v540 = vld [vmem:[%s1 + $0x15c] sm:$0xff]
        %v541 = vld [vmem:[%s1 + $0x164] sm:$0xf]
        %v542 = vld [vmem:[%s1 + $0x168] sm:$0xff]
        %v543 = vld [vmem:[%s1 + $0x170] sm:$0xf]
        %v544 = vld [vmem:[%s1 + $0x174] sm:$0xff]
        %v545 = vld [vmem:[%s1 + $0x17c] sm:$0xf]
        %v546 = vld [vmem:[%s1 + $0x180] sm:$0xff]
        %v547 = vld [vmem:[%s1 + $0x188] sm:$0xf]
        %v548 = vld [vmem:[%s1 + $0x18c] sm:$0xff]
        %v549 = vld [vmem:[%s1 + $0x194] sm:$0xf]
        %v550 = vld [vmem:[%s1 + $0x198] sm:$0xff]
        %v551 = vld [vmem:[%s1 + $0x1a0] sm:$0xf]
        %v552 = vld [vmem:[%s1 + $0x1a4] sm:$0xff]
        %v553 = vld [vmem:[%s1 + $0x1ac] sm:$0xf]
        %v554 = vld [vmem:[%s1 + $0x1b0] sm:$0xff]
        %v555 = vld [vmem:[%s1 + $0x1b8] sm:$0xf]
        %v556 = vld [vmem:[%s1 + $0x1bc] sm:$0x33]
        %v557 = vld [vmem:[%s1 + $0x1c4] sm:$0x3]
        %v558 = vld [vmem:[%s2] sm:$0x7]
        %v560 = vlaneseq
        %v561 = vshrl.u32 %v560, 7
        %v562 = vsub.s32 0, %v561
        %v563 = vrot.slane %v558, %v562
        %v564 = vlaneseq
        %v565 = vshrl.u32 %v564, 7
        %v566 = vsub.s32 1, %v565
        %v567 = vrot.slane %v558, %v566
        %v568 = vlaneseq
        %v569 = vshrl.u32 %v568, 7
        %v570 = vsub.s32 2, %v569
        %v571 = vrot.slane %v558, %v570
        %v651 = vunpack.c.l.b16 %v482
        %v652 = vunpack.c.h.b16 %v482
        %v653 = vunpack.c.l.b16 %v483
        %v654 = vunpack.c.l.b16 %v484
        %v655 = vunpack.c.h.b16 %v484
        %v656 = vunpack.c.l.b16 %v485
        %v657 = vunpack.c.l.b16 %v486
        %v658 = vunpack.c.h.b16 %v486
        %v659 = vunpack.c.l.b16 %v487
        %v660 = vunpack.c.l.b16 %v488
        %v661 = vunpack.c.h.b16 %v488
        %v662 = vunpack.c.l.b16 %v489
        %v663 = vunpack.c.l.b16 %v490
        %v664 = vunpack.c.h.b16 %v490
        %v665 = vunpack.c.l.b16 %v491
        %v666 = vunpack.c.l.b16 %v492
        %v667 = vunpack.c.h.b16 %v492
        %v668 = vunpack.c.l.b16 %v493
        %v669 = vunpack.c.l.b16 %v494
        %v670 = vunpack.c.h.b16 %v494
        %v671 = vunpack.c.l.b16 %v495
        %v672 = vunpack.c.l.b16 %v496
        %v673 = vunpack.c.h.b16 %v496
        %v674 = vunpack.c.l.b16 %v497
        %v675 = vunpack.c.l.b16 %v498
        %v676 = vunpack.c.h.b16 %v498
        %v677 = vunpack.c.l.b16 %v499
        %v678 = vunpack.c.l.b16 %v500
        %v679 = vunpack.c.h.b16 %v500
        %v680 = vunpack.c.l.b16 %v501
        %v681 = vunpack.c.l.b16 %v502
        %v682 = vunpack.c.h.b16 %v502
        %v683 = vunpack.c.l.b16 %v503
        %v684 = vunpack.c.l.b16 %v504
        %v685 = vunpack.c.h.b16 %v504
        %v686 = vunpack.c.l.b16 %v505
        %v687 = vunpack.c.l.b16 %v506
        %v688 = vunpack.c.h.b16 %v506
        %v689 = vunpack.c.l.b16 %v507
        %v690 = vunpack.c.l.b16 %v508
        %v691 = vunpack.c.h.b16 %v508
        %v692 = vunpack.c.l.b16 %v509
        %v693 = vunpack.c.l.b16 %v510
        %v694 = vunpack.c.h.b16 %v510
        %v695 = vunpack.c.l.b16 %v511
        %v696 = vunpack.c.l.b16 %v512
        %v697 = vunpack.c.h.b16 %v512
        %v698 = vunpack.c.l.b16 %v513
        %v699 = vunpack.c.l.b16 %v514
        %v700 = vunpack.c.h.b16 %v514
        %v701 = vunpack.c.l.b16 %v515
        %v702 = vunpack.c.l.b16 %v516
        %v703 = vunpack.c.h.b16 %v516
        %v704 = vunpack.c.l.b16 %v517
        %v705 = vunpack.c.l.b16 %v518
        %v706 = vunpack.c.h.b16 %v518
        %v707 = vunpack.c.l.b16 %v519
        %v708 = vunpack.c.l.b16 %v520
        %v709 = vunpack.c.h.b16 %v520
        %v710 = vunpack.c.l.b16 %v521
        %v711 = vunpack.c.l.b16 %v522
        %v712 = vunpack.c.h.b16 %v522
        %v713 = vunpack.c.l.b16 %v523
        %v714 = vunpack.c.l.b16 %v524
        %v715 = vunpack.c.h.b16 %v524
        %v716 = vunpack.c.l.b16 %v525
        %v717 = vunpack.c.l.b16 %v526
        %v718 = vunpack.c.h.b16 %v526
        %v719 = vunpack.c.l.b16 %v527
        %v720 = vunpack.c.l.b16 %v528
        %v721 = vunpack.c.h.b16 %v528
        %v722 = vunpack.c.l.b16 %v529
        %v723 = vunpack.c.l.b16 %v530
        %v724 = vunpack.c.h.b16 %v530
        %v725 = vunpack.c.l.b16 %v531
        %v726 = vunpack.c.l.b16 %v532
        %v727 = vunpack.c.h.b16 %v532
        %v728 = vunpack.c.l.b16 %v533
        %v729 = vunpack.c.l.b16 %v534
        %v730 = vunpack.c.h.b16 %v534
        %v731 = vunpack.c.l.b16 %v535
        %v732 = vunpack.c.l.b16 %v536
        %v733 = vunpack.c.h.b16 %v536
        %v734 = vunpack.c.l.b16 %v537
        %v735 = vunpack.c.l.b16 %v538
        %v736 = vunpack.c.h.b16 %v538
        %v737 = vunpack.c.l.b16 %v539
        %v738 = vunpack.c.l.b16 %v540
        %v739 = vunpack.c.h.b16 %v540
        %v740 = vunpack.c.l.b16 %v541
        %v741 = vunpack.c.l.b16 %v542
        %v742 = vunpack.c.h.b16 %v542
        %v743 = vunpack.c.l.b16 %v543
        %v744 = vunpack.c.l.b16 %v544
        %v745 = vunpack.c.h.b16 %v544
        %v746 = vunpack.c.l.b16 %v545
        %v747 = vunpack.c.l.b16 %v546
        %v748 = vunpack.c.h.b16 %v546
        %v749 = vunpack.c.l.b16 %v547
        %v750 = vunpack.c.l.b16 %v548
        %v751 = vunpack.c.h.b16 %v548
        %v752 = vunpack.c.l.b16 %v549
        %v753 = vunpack.c.l.b16 %v550
        %v754 = vunpack.c.h.b16 %v550
        %v755 = vunpack.c.l.b16 %v551
        %v756 = vunpack.c.l.b16 %v552
        %v757 = vunpack.c.h.b16 %v552
        %v758 = vunpack.c.l.b16 %v553
        %v759 = vunpack.c.l.b16 %v554
        %v760 = vunpack.c.h.b16 %v554
        %v761 = vunpack.c.l.b16 %v555
        %v762 = vunpack.c.l.b16 %v556
        %v763 = vunpack.c.h.b16 %v556
        %v764 = vunpack.c.l.b16 %v557
        %v765 = vpack.c.b16 %v654, %v651
        %v766 = vpack.c.b16 %v655, %v652
        %v767 = vpack.c.b16 %v656, %v653
        %v768 = vpack.c.b16 %v660, %v657
        %v769 = vpack.c.b16 %v661, %v658
        %v770 = vpack.c.b16 %v662, %v659
        %v771 = vpack.c.b16 %v666, %v663
        %v772 = vpack.c.b16 %v667, %v664
        %v773 = vpack.c.b16 %v668, %v665
        %v774 = vpack.c.b16 %v672, %v669
        %v775 = vpack.c.b16 %v673, %v670
        %v776 = vpack.c.b16 %v674, %v671
        %v777 = vpack.c.b16 %v678, %v675
        %v778 = vpack.c.b16 %v679, %v676
        %v779 = vpack.c.b16 %v680, %v677
        %v780 = vpack.c.b16 %v684, %v681
        %v781 = vpack.c.b16 %v685, %v682
        %v782 = vpack.c.b16 %v686, %v683
        %v783 = vpack.c.b16 %v690, %v687
        %v784 = vpack.c.b16 %v691, %v688
        %v785 = vpack.c.b16 %v692, %v689
        %v786 = vpack.c.b16 %v696, %v693
        %v787 = vpack.c.b16 %v697, %v694
        %v788 = vpack.c.b16 %v698, %v695
        %v789 = vpack.c.b16 %v702, %v699
        %v790 = vpack.c.b16 %v703, %v700
        %v791 = vpack.c.b16 %v704, %v701
        %v792 = vpack.c.b16 %v708, %v705
        %v793 = vpack.c.b16 %v709, %v706
        %v794 = vpack.c.b16 %v710, %v707
        %v795 = vpack.c.b16 %v714, %v711
        %v796 = vpack.c.b16 %v715, %v712
        %v797 = vpack.c.b16 %v716, %v713
        %v798 = vpack.c.b16 %v720, %v717
        %v799 = vpack.c.b16 %v721, %v718
        %v800 = vpack.c.b16 %v722, %v719
        %v801 = vpack.c.b16 %v726, %v723
        %v802 = vpack.c.b16 %v727, %v724
        %v803 = vpack.c.b16 %v728, %v725
        %v804 = vpack.c.b16 %v732, %v729
        %v805 = vpack.c.b16 %v733, %v730
        %v806 = vpack.c.b16 %v734, %v731
        %v807 = vpack.c.b16 %v738, %v735
        %v808 = vpack.c.b16 %v739, %v736
        %v809 = vpack.c.b16 %v740, %v737
        %v810 = vpack.c.b16 %v744, %v741
        %v811 = vpack.c.b16 %v745, %v742
        %v812 = vpack.c.b16 %v746, %v743
        %v813 = vpack.c.b16 %v750, %v747
        %v814 = vpack.c.b16 %v751, %v748
        %v815 = vpack.c.b16 %v752, %v749
        %v816 = vpack.c.b16 %v756, %v753
        %v817 = vpack.c.b16 %v757, %v754
        %v818 = vpack.c.b16 %v758, %v755
        %v819 = vpack.c.b16 %v762, %v759
        %v820 = vpack.c.b16 %v763, %v760
        %v821 = vpack.c.b16 %v764, %v761
        %vm876 = vcmask 359424
        %v878 = vsel %vm876, %v436, 0
        %v881 = vsel %vm876, %v439, 0
        %v884 = vsel %vm876, %v442, 0
        %v887 = vsel %vm876, %v445, 0
        %v890 = vsel %vm876, %v448, 0
        %v893 = vsel %vm876, %v451, 0
        %v896 = vsel %vm876, %v454, 0
        %v899 = vsel %vm876, %v457, 0
        %v902 = vsel %vm876, %v460, 0
        %v905 = vsel %vm876, %v463, 0
        %v908 = vsel %vm876, %v466, 0
        %v911 = vsel %vm876, %v469, 0
        %v914 = vsel %vm876, %v472, 0
        %v917 = vsel %vm876, %v475, 0
        %v920 = vsel %vm876, %v478, 0
        %v923 = vsel %vm876, %v481, 0
        %vm925 = vcmask 1045504
        %v927 = vsel %vm925, %v819, 0
        %v930 = vsel %vm925, %v820, 0
        %v933 = vsel %vm925, %v821, 0
        %935 = vmatprep.subr.bf16.mxu0 %v787
        %936 = vmatpush1.bf16.msra.mxu0 %v786
        %937 = vmatprep.subr.bf16.mxu0 %v784
        %938 = vmatpush1.bf16.msra.mxu0 %v783
        %939 = vmatprep.subr.bf16.mxu0 %v781
        %940 = vmatpush1.bf16.msra.mxu0 %v780
        %941 = vmatprep.subr.bf16.mxu0 %v778
        %942 = vmatpush1.bf16.msra.mxu0 %v777
        %943 = vmatprep.subr.bf16.mxu0 %v775
        %944 = vmatpush1.bf16.msra.mxu0 %v774
        %945 = vmatprep.subr.bf16.mxu0 %v772
        %946 = vmatpush1.bf16.msra.mxu0 %v771
        %947 = vmatprep.subr.bf16.mxu0 %v769
        %948 = vmatpush1.bf16.msra.mxu0 %v768
        %949 = vmatprep.subr.bf16.mxu0 %v766
        %950 = vmatpush1.bf16.msra.mxu0 %v765
        %951 = vmatprep.subr.bf16.mxu0 %v811
        %952 = vmatpush2.bf16.msra.mxu0 %v810
        %953 = vmatprep.subr.bf16.mxu0 %v808
        %954 = vmatpush2.bf16.msra.mxu0 %v807
        %955 = vmatprep.subr.bf16.mxu0 %v805
        %956 = vmatpush2.bf16.msra.mxu0 %v804
        %957 = vmatprep.subr.bf16.mxu0 %v802
        %958 = vmatpush2.bf16.msra.mxu0 %v801
        %959 = vmatprep.subr.bf16.mxu0 %v799
        %960 = vmatpush2.bf16.msra.mxu0 %v798
        %961 = vmatprep.subr.bf16.mxu0 %v796
        %962 = vmatpush2.bf16.msra.mxu0 %v795
        %963 = vmatprep.subr.bf16.mxu0 %v793
        %964 = vmatpush2.bf16.msra.mxu0 %v792
        %965 = vmatprep.subr.bf16.mxu0 %v790
        %966 = vmatpush2.bf16.msra.mxu0 %v789
        %967 = vmatprep.mubr.bf16.mxu0 %v435
        %968 = vmatmul.mubr.bf16.gmra.mxu0 %v434
        %v969 = vpop.f32.mrf.mxu0
        %v970 = vadd.f32 %v563, %v969
        %v971 = vpop.f32.mrf.mxu0
        %v972 = vadd.f32 %v567, %v971
        %v973 = vpop.f32.mrf.mxu0
        %v974 = vadd.f32 %v563, %v973
        %v975 = vpop.f32.mrf.mxu0
        %v976 = vadd.f32 %v567, %v975
        %977 = vmatprep.mubr.bf16.mxu0 %v438
        %978 = vmatmul.mubr.bf16.gmra.mxu0 %v437
        %v979 = vpop.f32.mrf.mxu0
        %v980 = vadd.f32 %v563, %v979
        %v981 = vpop.f32.mrf.mxu0
        %v982 = vadd.f32 %v567, %v981
        %v983 = vpop.f32.mrf.mxu0
        %v984 = vadd.f32 %v563, %v983
        %v985 = vpop.f32.mrf.mxu0
        %v986 = vadd.f32 %v567, %v985
        %987 = vmatprep.mubr.bf16.mxu0 %v441
        %988 = vmatmul.mubr.bf16.gmra.mxu0 %v440
        %v989 = vpop.f32.mrf.mxu0
        %v990 = vadd.f32 %v563, %v989
        %v991 = vpop.f32.mrf.mxu0
        %v992 = vadd.f32 %v567, %v991
        %v993 = vpop.f32.mrf.mxu0
        %v994 = vadd.f32 %v563, %v993
        %v995 = vpop.f32.mrf.mxu0
        %v996 = vadd.f32 %v567, %v995
        %997 = vmatprep.mubr.bf16.mxu0 %v444
        %998 = vmatmul.mubr.bf16.gmra.mxu0 %v443
        %v999 = vpop.f32.mrf.mxu0
        %v1000 = vadd.f32 %v563, %v999
        %v1001 = vpop.f32.mrf.mxu0
        %v1002 = vadd.f32 %v567, %v1001
        %v1003 = vpop.f32.mrf.mxu0
        %v1004 = vadd.f32 %v563, %v1003
        %v1005 = vpop.f32.mrf.mxu0
        %v1006 = vadd.f32 %v567, %v1005
        %1007 = vmatprep.mubr.bf16.mxu0 %v447
        %1008 = vmatmul.mubr.bf16.gmra.mxu0 %v446
        %v1009 = vpop.f32.mrf.mxu0
        %v1010 = vadd.f32 %v563, %v1009
        %v1011 = vpop.f32.mrf.mxu0
        %v1012 = vadd.f32 %v567, %v1011
        %v1013 = vpop.f32.mrf.mxu0
        %v1014 = vadd.f32 %v563, %v1013
        %v1015 = vpop.f32.mrf.mxu0
        %v1016 = vadd.f32 %v567, %v1015
        %1017 = vmatprep.mubr.bf16.mxu0 %v450
        %1018 = vmatmul.mubr.bf16.gmra.mxu0 %v449
        %v1019 = vpop.f32.mrf.mxu0
        %v1020 = vadd.f32 %v563, %v1019
        %v1021 = vpop.f32.mrf.mxu0
        %v1022 = vadd.f32 %v567, %v1021
        %v1023 = vpop.f32.mrf.mxu0
        %v1024 = vadd.f32 %v563, %v1023
        %v1025 = vpop.f32.mrf.mxu0
        %v1026 = vadd.f32 %v567, %v1025
        %1027 = vmatprep.mubr.bf16.mxu0 %v453
        %1028 = vmatmul.mubr.bf16.gmra.mxu0 %v452
        %v1029 = vpop.f32.mrf.mxu0
        %v1030 = vadd.f32 %v563, %v1029
        %v1031 = vpop.f32.mrf.mxu0
        %v1032 = vadd.f32 %v567, %v1031
        %v1033 = vpop.f32.mrf.mxu0
        %v1034 = vadd.f32 %v563, %v1033
        %v1035 = vpop.f32.mrf.mxu0
        %v1036 = vadd.f32 %v567, %v1035
        %1037 = vmatprep.mubr.bf16.mxu0 %v456
        %1038 = vmatmul.mubr.bf16.gmra.mxu0 %v455
        %v1039 = vpop.f32.mrf.mxu0
        %v1040 = vadd.f32 %v563, %v1039
        %v1041 = vpop.f32.mrf.mxu0
        %v1042 = vadd.f32 %v567, %v1041
        %v1043 = vpop.f32.mrf.mxu0
        %v1044 = vadd.f32 %v563, %v1043
        %v1045 = vpop.f32.mrf.mxu0
        %v1046 = vadd.f32 %v567, %v1045
        %1047 = vmatprep.mubr.bf16.mxu0 %v459
        %1048 = vmatmul.mubr.bf16.gmra.mxu0 %v458
        %v1049 = vpop.f32.mrf.mxu0
        %v1050 = vadd.f32 %v563, %v1049
        %v1051 = vpop.f32.mrf.mxu0
        %v1052 = vadd.f32 %v567, %v1051
        %v1053 = vpop.f32.mrf.mxu0
        %v1054 = vadd.f32 %v563, %v1053
        %v1055 = vpop.f32.mrf.mxu0
        %v1056 = vadd.f32 %v567, %v1055
        %1057 = vmatprep.mubr.bf16.mxu0 %v462
        %1058 = vmatmul.mubr.bf16.gmra.mxu0 %v461
        %v1059 = vpop.f32.mrf.mxu0
        %v1060 = vadd.f32 %v563, %v1059
        %v1061 = vpop.f32.mrf.mxu0
        %v1062 = vadd.f32 %v567, %v1061
        %v1063 = vpop.f32.mrf.mxu0
        %v1064 = vadd.f32 %v563, %v1063
        %v1065 = vpop.f32.mrf.mxu0
        %v1066 = vadd.f32 %v567, %v1065
        %1067 = vmatprep.mubr.bf16.mxu0 %v465
        %1068 = vmatmul.mubr.bf16.gmra.mxu0 %v464
        %v1069 = vpop.f32.mrf.mxu0
        %v1070 = vadd.f32 %v563, %v1069
        %v1071 = vpop.f32.mrf.mxu0
        %v1072 = vadd.f32 %v567, %v1071
        %v1073 = vpop.f32.mrf.mxu0
        %v1074 = vadd.f32 %v563, %v1073
        %v1075 = vpop.f32.mrf.mxu0
        %v1076 = vadd.f32 %v567, %v1075
        %1077 = vmatprep.mubr.bf16.mxu0 %v468
        %1078 = vmatmul.mubr.bf16.gmra.mxu0 %v467
        %v1079 = vpop.f32.mrf.mxu0
        %v1080 = vadd.f32 %v563, %v1079
        %v1081 = vpop.f32.mrf.mxu0
        %v1082 = vadd.f32 %v567, %v1081
        %v1083 = vpop.f32.mrf.mxu0
        %v1084 = vadd.f32 %v563, %v1083
        %v1085 = vpop.f32.mrf.mxu0
        %v1086 = vadd.f32 %v567, %v1085
        %1087 = vmatprep.mubr.bf16.mxu0 %v471
        %1088 = vmatmul.mubr.bf16.gmra.mxu0 %v470
        %v1089 = vpop.f32.mrf.mxu0
        %v1090 = vadd.f32 %v563, %v1089
        %v1091 = vpop.f32.mrf.mxu0
        %v1092 = vadd.f32 %v567, %v1091
        %v1093 = vpop.f32.mrf.mxu0
        %v1094 = vadd.f32 %v563, %v1093
        %v1095 = vpop.f32.mrf.mxu0
        %v1096 = vadd.f32 %v567, %v1095
        %1097 = vmatprep.mubr.bf16.mxu0 %v474
        %1098 = vmatmul.mubr.bf16.gmra.mxu0 %v473
        %v1099 = vpop.f32.mrf.mxu0
        %v1100 = vadd.f32 %v563, %v1099
        %v1101 = vpop.f32.mrf.mxu0
        %v1102 = vadd.f32 %v567, %v1101
        %v1103 = vpop.f32.mrf.mxu0
        %v1104 = vadd.f32 %v563, %v1103
        %v1105 = vpop.f32.mrf.mxu0
        %v1106 = vadd.f32 %v567, %v1105
        %1107 = vmatprep.mubr.bf16.mxu0 %v477
        %1108 = vmatmul.mubr.bf16.gmra.mxu0 %v476
        %v1109 = vpop.f32.mrf.mxu0
        %v1110 = vadd.f32 %v563, %v1109
        %v1111 = vpop.f32.mrf.mxu0
        %v1112 = vadd.f32 %v567, %v1111
        %v1113 = vpop.f32.mrf.mxu0
        %v1114 = vadd.f32 %v563, %v1113
        %v1115 = vpop.f32.mrf.mxu0
        %v1116 = vadd.f32 %v567, %v1115
        %1117 = vmatprep.mubr.bf16.mxu0 %v480
        %1118 = vmatmul.mubr.bf16.gmra.mxu0 %v479
        %v1119 = vpop.f32.mrf.mxu0
        %v1120 = vadd.f32 %v563, %v1119
        %v1121 = vpop.f32.mrf.mxu0
        %v1122 = vadd.f32 %v567, %v1121
        %v1123 = vpop.f32.mrf.mxu0
        %v1124 = vadd.f32 %v563, %v1123
        %v1125 = vpop.f32.mrf.mxu0
        %v1126 = vadd.f32 %v567, %v1125
        %1127 = vdwg.mxu0
        %1128 = vmatprep.subr.bf16.mxu0 0
        %1129 = vmatpush1.bf16.msra.mxu0 0
        %1130 = vmatprep.subr.bf16.mxu0 0
        %1131 = vmatpush1.bf16.msra.mxu0 0
        %1132 = vmatprep.subr.bf16.mxu0 0
        %1133 = vmatpush1.bf16.msra.mxu0 0
        %1134 = vmatprep.subr.bf16.mxu0 0
        %1135 = vmatpush1.bf16.msra.mxu0 0
        %1136 = vmatprep.subr.bf16.mxu0 0
        %1137 = vmatpush1.bf16.msra.mxu0 0
        %1138 = vmatprep.subr.bf16.mxu0 %v930
        %1139 = vmatpush1.bf16.msra.mxu0 %v927
        %1140 = vmatprep.subr.bf16.mxu0 %v817
        %1141 = vmatpush1.bf16.msra.mxu0 %v816
        %1142 = vmatprep.subr.bf16.mxu0 %v814
        %1143 = vmatpush1.bf16.msra.mxu0 %v813
        %1144 = vmatprep.subr.bf16.mxu0 0
        %1145 = vmatpush2.bf16.msra.mxu0 0
        %1146 = vmatprep.subr.bf16.mxu0 0
        %1147 = vmatpush2.bf16.msra.mxu0 0
        %1148 = vmatprep.subr.bf16.mxu0 0
        %1149 = vmatpush2.bf16.msra.mxu0 0
        %1150 = vmatprep.subr.bf16.mxu0 0
        %1151 = vmatpush2.bf16.msra.mxu0 0
        %1152 = vmatprep.subr.bf16.mxu0 0
        %1153 = vmatpush2.bf16.msra.mxu0 0
        %1154 = vmatprep.subr.bf16.mxu0 0
        %1155 = vmatpush2.bf16.msra.mxu0 0
        %1156 = vmatprep.subr.bf16.mxu0 0
        %1157 = vmatpush2.bf16.msra.mxu0 0
        %1158 = vmatprep.subr.bf16.mxu0 0
        %1159 = vmatpush2.bf16.msra.mxu0 0
        %1160 = vmatprep.mubr.bf16.mxu0 0
        %1161 = vmatmul.mubr.bf16.gmra.mxu0 %v878
        %v1162 = vpop.f32.mrf.mxu0
        %v1163 = vadd.f32 %v970, %v1162
        %v1164 = vpop.f32.mrf.mxu0
        %v1165 = vadd.f32 %v972, %v1164
        %v1166 = vpop.f32.mrf.mxu0
        %v1167 = vadd.f32 %v974, %v1166
        %v1168 = vpop.f32.mrf.mxu0
        %v1169 = vadd.f32 %v976, %v1168
        %1170 = vmatprep.mubr.bf16.mxu0 0
        %1171 = vmatmul.mubr.bf16.gmra.mxu0 %v881
        %v1172 = vpop.f32.mrf.mxu0
        %v1173 = vadd.f32 %v980, %v1172
        %v1174 = vpop.f32.mrf.mxu0
        %v1175 = vadd.f32 %v982, %v1174
        %v1176 = vpop.f32.mrf.mxu0
        %v1177 = vadd.f32 %v984, %v1176
        %v1178 = vpop.f32.mrf.mxu0
        %v1179 = vadd.f32 %v986, %v1178
        %1180 = vmatprep.mubr.bf16.mxu0 0
        %1181 = vmatmul.mubr.bf16.gmra.mxu0 %v884
        %v1182 = vpop.f32.mrf.mxu0
        %v1183 = vadd.f32 %v990, %v1182
        %v1184 = vpop.f32.mrf.mxu0
        %v1185 = vadd.f32 %v992, %v1184
        %v1186 = vpop.f32.mrf.mxu0
        %v1187 = vadd.f32 %v994, %v1186
        %v1188 = vpop.f32.mrf.mxu0
        %v1189 = vadd.f32 %v996, %v1188
        %1190 = vmatprep.mubr.bf16.mxu0 0
        %1191 = vmatmul.mubr.bf16.gmra.mxu0 %v887
        %v1192 = vpop.f32.mrf.mxu0
        %v1193 = vadd.f32 %v1000, %v1192
        %v1194 = vpop.f32.mrf.mxu0
        %v1195 = vadd.f32 %v1002, %v1194
        %v1196 = vpop.f32.mrf.mxu0
        %v1197 = vadd.f32 %v1004, %v1196
        %v1198 = vpop.f32.mrf.mxu0
        %v1199 = vadd.f32 %v1006, %v1198
        %1200 = vmatprep.mubr.bf16.mxu0 0
        %1201 = vmatmul.mubr.bf16.gmra.mxu0 %v890
        %v1202 = vpop.f32.mrf.mxu0
        %v1203 = vadd.f32 %v1010, %v1202
        %v1204 = vpop.f32.mrf.mxu0
        %v1205 = vadd.f32 %v1012, %v1204
        %v1206 = vpop.f32.mrf.mxu0
        %v1207 = vadd.f32 %v1014, %v1206
        %v1208 = vpop.f32.mrf.mxu0
        %v1209 = vadd.f32 %v1016, %v1208
        %1210 = vmatprep.mubr.bf16.mxu0 0
        %1211 = vmatmul.mubr.bf16.gmra.mxu0 %v893
        %v1212 = vpop.f32.mrf.mxu0
        %v1213 = vadd.f32 %v1020, %v1212
        %v1214 = vpop.f32.mrf.mxu0
        %v1215 = vadd.f32 %v1022, %v1214
        %v1216 = vpop.f32.mrf.mxu0
        %v1217 = vadd.f32 %v1024, %v1216
        %v1218 = vpop.f32.mrf.mxu0
        %v1219 = vadd.f32 %v1026, %v1218
        %1220 = vmatprep.mubr.bf16.mxu0 0
        %1221 = vmatmul.mubr.bf16.gmra.mxu0 %v896
        %v1222 = vpop.f32.mrf.mxu0
        %v1223 = vadd.f32 %v1030, %v1222
        %v1224 = vpop.f32.mrf.mxu0
        %v1225 = vadd.f32 %v1032, %v1224
        %v1226 = vpop.f32.mrf.mxu0
        %v1227 = vadd.f32 %v1034, %v1226
        %v1228 = vpop.f32.mrf.mxu0
        %v1229 = vadd.f32 %v1036, %v1228
        %1230 = vmatprep.mubr.bf16.mxu0 0
        %1231 = vmatmul.mubr.bf16.gmra.mxu0 %v899
        %v1232 = vpop.f32.mrf.mxu0
        %v1233 = vadd.f32 %v1040, %v1232
        %v1234 = vpop.f32.mrf.mxu0
        %v1235 = vadd.f32 %v1042, %v1234
        %v1236 = vpop.f32.mrf.mxu0
        %v1237 = vadd.f32 %v1044, %v1236
        %v1238 = vpop.f32.mrf.mxu0
        %v1239 = vadd.f32 %v1046, %v1238
        %1240 = vmatprep.mubr.bf16.mxu0 0
        %1241 = vmatmul.mubr.bf16.gmra.mxu0 %v902
        %v1242 = vpop.f32.mrf.mxu0
        %v1243 = vadd.f32 %v1050, %v1242
        %v1244 = vpop.f32.mrf.mxu0
        %v1245 = vadd.f32 %v1052, %v1244
        %v1246 = vpop.f32.mrf.mxu0
        %v1247 = vadd.f32 %v1054, %v1246
        %v1248 = vpop.f32.mrf.mxu0
        %v1249 = vadd.f32 %v1056, %v1248
        %1250 = vmatprep.mubr.bf16.mxu0 0
        %1251 = vmatmul.mubr.bf16.gmra.mxu0 %v905
        %v1252 = vpop.f32.mrf.mxu0
        %v1253 = vadd.f32 %v1060, %v1252
        %v1254 = vpop.f32.mrf.mxu0
        %v1255 = vadd.f32 %v1062, %v1254
        %v1256 = vpop.f32.mrf.mxu0
        %v1257 = vadd.f32 %v1064, %v1256
        %v1258 = vpop.f32.mrf.mxu0
        %v1259 = vadd.f32 %v1066, %v1258
        %1260 = vmatprep.mubr.bf16.mxu0 0
        %1261 = vmatmul.mubr.bf16.gmra.mxu0 %v908
        %v1262 = vpop.f32.mrf.mxu0
        %v1263 = vadd.f32 %v1070, %v1262
        %v1264 = vpop.f32.mrf.mxu0
        %v1265 = vadd.f32 %v1072, %v1264
        %v1266 = vpop.f32.mrf.mxu0
        %v1267 = vadd.f32 %v1074, %v1266
        %v1268 = vpop.f32.mrf.mxu0
        %v1269 = vadd.f32 %v1076, %v1268
        %1270 = vmatprep.mubr.bf16.mxu0 0
        %1271 = vmatmul.mubr.bf16.gmra.mxu0 %v911
        %v1272 = vpop.f32.mrf.mxu0
        %v1273 = vadd.f32 %v1080, %v1272
        %v1274 = vpop.f32.mrf.mxu0
        %v1275 = vadd.f32 %v1082, %v1274
        %v1276 = vpop.f32.mrf.mxu0
        %v1277 = vadd.f32 %v1084, %v1276
        %v1278 = vpop.f32.mrf.mxu0
        %v1279 = vadd.f32 %v1086, %v1278
        %1280 = vmatprep.mubr.bf16.mxu0 0
        %1281 = vmatmul.mubr.bf16.gmra.mxu0 %v914
        %v1282 = vpop.f32.mrf.mxu0
        %v1283 = vadd.f32 %v1090, %v1282
        %v1284 = vpop.f32.mrf.mxu0
        %v1285 = vadd.f32 %v1092, %v1284
        %v1286 = vpop.f32.mrf.mxu0
        %v1287 = vadd.f32 %v1094, %v1286
        %v1288 = vpop.f32.mrf.mxu0
        %v1289 = vadd.f32 %v1096, %v1288
        %1290 = vmatprep.mubr.bf16.mxu0 0
        %1291 = vmatmul.mubr.bf16.gmra.mxu0 %v917
        %v1292 = vpop.f32.mrf.mxu0
        %v1293 = vadd.f32 %v1100, %v1292
        %v1294 = vpop.f32.mrf.mxu0
        %v1295 = vadd.f32 %v1102, %v1294
        %v1296 = vpop.f32.mrf.mxu0
        %v1297 = vadd.f32 %v1104, %v1296
        %v1298 = vpop.f32.mrf.mxu0
        %v1299 = vadd.f32 %v1106, %v1298
        %1300 = vmatprep.mubr.bf16.mxu0 0
        %1301 = vmatmul.mubr.bf16.gmra.mxu0 %v920
        %v1302 = vpop.f32.mrf.mxu0
        %v1303 = vadd.f32 %v1110, %v1302
        %v1304 = vpop.f32.mrf.mxu0
        %v1305 = vadd.f32 %v1112, %v1304
        %v1306 = vpop.f32.mrf.mxu0
        %v1307 = vadd.f32 %v1114, %v1306
        %v1308 = vpop.f32.mrf.mxu0
        %v1309 = vadd.f32 %v1116, %v1308
        %1310 = vmatprep.mubr.bf16.mxu0 0
        %1311 = vmatmul.mubr.bf16.gmra.mxu0 %v923
        %v1312 = vpop.f32.mrf.mxu0
        %v1313 = vadd.f32 %v1120, %v1312
        %v1314 = vpop.f32.mrf.mxu0
        %v1315 = vadd.f32 %v1122, %v1314
        %v1316 = vpop.f32.mrf.mxu0
        %v1317 = vadd.f32 %v1124, %v1316
        %v1318 = vpop.f32.mrf.mxu0
        %v1319 = vadd.f32 %v1126, %v1318
        %1320 = vdwg.mxu0
        %1321 = vmatprep.subr.bf16.mxu0 0
        %1322 = vmatpush1.bf16.msra.mxu0 %v788
        %1323 = vmatprep.subr.bf16.mxu0 0
        %1324 = vmatpush1.bf16.msra.mxu0 %v785
        %1325 = vmatprep.subr.bf16.mxu0 0
        %1326 = vmatpush1.bf16.msra.mxu0 %v782
        %1327 = vmatprep.subr.bf16.mxu0 0
        %1328 = vmatpush1.bf16.msra.mxu0 %v779
        %1329 = vmatprep.subr.bf16.mxu0 0
        %1330 = vmatpush1.bf16.msra.mxu0 %v776
        %1331 = vmatprep.subr.bf16.mxu0 0
        %1332 = vmatpush1.bf16.msra.mxu0 %v773
        %1333 = vmatprep.subr.bf16.mxu0 0
        %1334 = vmatpush1.bf16.msra.mxu0 %v770
        %1335 = vmatprep.subr.bf16.mxu0 0
        %1336 = vmatpush1.bf16.msra.mxu0 %v767
        %1337 = vmatprep.subr.bf16.mxu0 0
        %1338 = vmatpush2.bf16.msra.mxu0 %v812
        %1339 = vmatprep.subr.bf16.mxu0 0
        %1340 = vmatpush2.bf16.msra.mxu0 %v809
        %1341 = vmatprep.subr.bf16.mxu0 0
        %1342 = vmatpush2.bf16.msra.mxu0 %v806
        %1343 = vmatprep.subr.bf16.mxu0 0
        %1344 = vmatpush2.bf16.msra.mxu0 %v803
        %1345 = vmatprep.subr.bf16.mxu0 0
        %1346 = vmatpush2.bf16.msra.mxu0 %v800
        %1347 = vmatprep.subr.bf16.mxu0 0
        %1348 = vmatpush2.bf16.msra.mxu0 %v797
        %1349 = vmatprep.subr.bf16.mxu0 0
        %1350 = vmatpush2.bf16.msra.mxu0 %v794
        %1351 = vmatprep.subr.bf16.mxu0 0
        %1352 = vmatpush2.bf16.msra.mxu0 %v791
        %1353 = vmatprep.mubr.bf16.mxu0 %v435
        %1354 = vmatmul.mubr.bf16.gmra.mxu0 %v434
        %v1355 = vpop.f32.mrf.mxu0
        %v1356 = vadd.f32 %v571, %v1355
        %v1357 = vpop.f32.mrf.mxu0
        %v1358 = vpop.f32.mrf.mxu0
        %v1359 = vadd.f32 %v571, %v1358
        %v1360 = vpop.f32.mrf.mxu0
        %1361 = vmatprep.mubr.bf16.mxu0 %v438
        %1362 = vmatmul.mubr.bf16.gmra.mxu0 %v437
        %v1363 = vpop.f32.mrf.mxu0
        %v1364 = vadd.f32 %v571, %v1363
        %v1365 = vpop.f32.mrf.mxu0
        %v1366 = vpop.f32.mrf.mxu0
        %v1367 = vadd.f32 %v571, %v1366
        %v1368 = vpop.f32.mrf.mxu0
        %1369 = vmatprep.mubr.bf16.mxu0 %v441
        %1370 = vmatmul.mubr.bf16.gmra.mxu0 %v440
        %v1371 = vpop.f32.mrf.mxu0
        %v1372 = vadd.f32 %v571, %v1371
        %v1373 = vpop.f32.mrf.mxu0
        %v1374 = vpop.f32.mrf.mxu0
        %v1375 = vadd.f32 %v571, %v1374
        %v1376 = vpop.f32.mrf.mxu0
        %1377 = vmatprep.mubr.bf16.mxu0 %v444
        %1378 = vmatmul.mubr.bf16.gmra.mxu0 %v443
        %v1379 = vpop.f32.mrf.mxu0
        %v1380 = vadd.f32 %v571, %v1379
        %v1381 = vpop.f32.mrf.mxu0
        %v1382 = vpop.f32.mrf.mxu0
        %v1383 = vadd.f32 %v571, %v1382
        %v1384 = vpop.f32.mrf.mxu0
        %1385 = vmatprep.mubr.bf16.mxu0 %v447
        %1386 = vmatmul.mubr.bf16.gmra.mxu0 %v446
        %v1387 = vpop.f32.mrf.mxu0
        %v1388 = vadd.f32 %v571, %v1387
        %v1389 = vpop.f32.mrf.mxu0
        %v1390 = vpop.f32.mrf.mxu0
        %v1391 = vadd.f32 %v571, %v1390
        %v1392 = vpop.f32.mrf.mxu0
        %1393 = vmatprep.mubr.bf16.mxu0 %v450
        %1394 = vmatmul.mubr.bf16.gmra.mxu0 %v449
        %v1395 = vpop.f32.mrf.mxu0
        %v1396 = vadd.f32 %v571, %v1395
        %v1397 = vpop.f32.mrf.mxu0
        %v1398 = vpop.f32.mrf.mxu0
        %v1399 = vadd.f32 %v571, %v1398
        %v1400 = vpop.f32.mrf.mxu0
        %1401 = vmatprep.mubr.bf16.mxu0 %v453
        %1402 = vmatmul.mubr.bf16.gmra.mxu0 %v452
        %v1403 = vpop.f32.mrf.mxu0
        %v1404 = vadd.f32 %v571, %v1403
        %v1405 = vpop.f32.mrf.mxu0
        %v1406 = vpop.f32.mrf.mxu0
        %v1407 = vadd.f32 %v571, %v1406
        %v1408 = vpop.f32.mrf.mxu0
        %1409 = vmatprep.mubr.bf16.mxu0 %v456
        %1410 = vmatmul.mubr.bf16.gmra.mxu0 %v455
        %v1411 = vpop.f32.mrf.mxu0
        %v1412 = vadd.f32 %v571, %v1411
        %v1413 = vpop.f32.mrf.mxu0
        %v1414 = vpop.f32.mrf.mxu0
        %v1415 = vadd.f32 %v571, %v1414
        %v1416 = vpop.f32.mrf.mxu0
        %1417 = vmatprep.mubr.bf16.mxu0 %v459
        %1418 = vmatmul.mubr.bf16.gmra.mxu0 %v458
        %v1419 = vpop.f32.mrf.mxu0
        %v1420 = vadd.f32 %v571, %v1419
        %v1421 = vpop.f32.mrf.mxu0
        %v1422 = vpop.f32.mrf.mxu0
        %v1423 = vadd.f32 %v571, %v1422
        %v1424 = vpop.f32.mrf.mxu0
        %1425 = vmatprep.mubr.bf16.mxu0 %v462
        %1426 = vmatmul.mubr.bf16.gmra.mxu0 %v461
        %v1427 = vpop.f32.mrf.mxu0
        %v1428 = vadd.f32 %v571, %v1427
        %v1429 = vpop.f32.mrf.mxu0
        %v1430 = vpop.f32.mrf.mxu0
        %v1431 = vadd.f32 %v571, %v1430
        %v1432 = vpop.f32.mrf.mxu0
        %1433 = vmatprep.mubr.bf16.mxu0 %v465
        %1434 = vmatmul.mubr.bf16.gmra.mxu0 %v464
        %v1435 = vpop.f32.mrf.mxu0
        %v1436 = vadd.f32 %v571, %v1435
        %v1437 = vpop.f32.mrf.mxu0
        %v1438 = vpop.f32.mrf.mxu0
        %v1439 = vadd.f32 %v571, %v1438
        %v1440 = vpop.f32.mrf.mxu0
        %1441 = vmatprep.mubr.bf16.mxu0 %v468
        %1442 = vmatmul.mubr.bf16.gmra.mxu0 %v467
        %v1443 = vpop.f32.mrf.mxu0
        %v1444 = vadd.f32 %v571, %v1443
        %v1445 = vpop.f32.mrf.mxu0
        %v1446 = vpop.f32.mrf.mxu0
        %v1447 = vadd.f32 %v571, %v1446
        %v1448 = vpop.f32.mrf.mxu0
        %1449 = vmatprep.mubr.bf16.mxu0 %v471
        %1450 = vmatmul.mubr.bf16.gmra.mxu0 %v470
        %v1451 = vpop.f32.mrf.mxu0
        %v1452 = vadd.f32 %v571, %v1451
        %v1453 = vpop.f32.mrf.mxu0
        %v1454 = vpop.f32.mrf.mxu0
        %v1455 = vadd.f32 %v571, %v1454
        %v1456 = vpop.f32.mrf.mxu0
        %1457 = vmatprep.mubr.bf16.mxu0 %v474
        %1458 = vmatmul.mubr.bf16.gmra.mxu0 %v473
        %v1459 = vpop.f32.mrf.mxu0
        %v1460 = vadd.f32 %v571, %v1459
        %v1461 = vpop.f32.mrf.mxu0
        %v1462 = vpop.f32.mrf.mxu0
        %v1463 = vadd.f32 %v571, %v1462
        %v1464 = vpop.f32.mrf.mxu0
        %1465 = vmatprep.mubr.bf16.mxu0 %v477
        %1466 = vmatmul.mubr.bf16.gmra.mxu0 %v476
        %v1467 = vpop.f32.mrf.mxu0
        %v1468 = vadd.f32 %v571, %v1467
        %v1469 = vpop.f32.mrf.mxu0
        %v1470 = vpop.f32.mrf.mxu0
        %v1471 = vadd.f32 %v571, %v1470
        %v1472 = vpop.f32.mrf.mxu0
        %1473 = vmatprep.mubr.bf16.mxu0 %v480
        %1474 = vmatmul.mubr.bf16.gmra.mxu0 %v479
        %v1475 = vpop.f32.mrf.mxu0
        %v1476 = vadd.f32 %v571, %v1475
        %v1477 = vpop.f32.mrf.mxu0
        %v1478 = vpop.f32.mrf.mxu0
        %v1479 = vadd.f32 %v571, %v1478
        %v1480 = vpop.f32.mrf.mxu0
        %1481 = vdwg.mxu0
        %1482 = vmatprep.subr.bf16.mxu0 0
        %1483 = vmatpush1.bf16.msra.mxu0 0
        %1484 = vmatprep.subr.bf16.mxu0 0
        %1485 = vmatpush1.bf16.msra.mxu0 0
        %1486 = vmatprep.subr.bf16.mxu0 0
        %1487 = vmatpush1.bf16.msra.mxu0 0
        %1488 = vmatprep.subr.bf16.mxu0 0
        %1489 = vmatpush1.bf16.msra.mxu0 0
        %1490 = vmatprep.subr.bf16.mxu0 0
        %1491 = vmatpush1.bf16.msra.mxu0 0
        %1492 = vmatprep.subr.bf16.mxu0 0
        %1493 = vmatpush1.bf16.msra.mxu0 %v933
        %1494 = vmatprep.subr.bf16.mxu0 0
        %1495 = vmatpush1.bf16.msra.mxu0 %v818
        %1496 = vmatprep.subr.bf16.mxu0 0
        %1497 = vmatpush1.bf16.msra.mxu0 %v815
        %1498 = vmatprep.subr.bf16.mxu0 0
        %1499 = vmatpush2.bf16.msra.mxu0 0
        %1500 = vmatprep.subr.bf16.mxu0 0
        %1501 = vmatpush2.bf16.msra.mxu0 0
        %1502 = vmatprep.subr.bf16.mxu0 0
        %1503 = vmatpush2.bf16.msra.mxu0 0
        %1504 = vmatprep.subr.bf16.mxu0 0
        %1505 = vmatpush2.bf16.msra.mxu0 0
        %1506 = vmatprep.subr.bf16.mxu0 0
        %1507 = vmatpush2.bf16.msra.mxu0 0
        %1508 = vmatprep.subr.bf16.mxu0 0
        %1509 = vmatpush2.bf16.msra.mxu0 0
        %1510 = vmatprep.subr.bf16.mxu0 0
        %1511 = vmatpush2.bf16.msra.mxu0 0
        %1512 = vmatprep.subr.bf16.mxu0 0
        %1513 = vmatpush2.bf16.msra.mxu0 0
        %1514 = vmatprep.mubr.bf16.mxu0 0
        %1515 = vmatmul.mubr.bf16.gmra.mxu0 %v878
        %v1516 = vpop.f32.mrf.mxu0
        %v1517 = vadd.f32 %v1356, %v1516
        %v1518 = vpop.f32.mrf.mxu0
        %v1519 = vpop.f32.mrf.mxu0
        %v1520 = vadd.f32 %v1359, %v1519
        %v1521 = vpop.f32.mrf.mxu0
        %1522 = vmatprep.mubr.bf16.mxu0 0
        %1523 = vmatmul.mubr.bf16.gmra.mxu0 %v881
        %v1524 = vpop.f32.mrf.mxu0
        %v1525 = vadd.f32 %v1364, %v1524
        %v1526 = vpop.f32.mrf.mxu0
        %v1527 = vpop.f32.mrf.mxu0
        %v1528 = vadd.f32 %v1367, %v1527
        %v1529 = vpop.f32.mrf.mxu0
        %1530 = vmatprep.mubr.bf16.mxu0 0
        %1531 = vmatmul.mubr.bf16.gmra.mxu0 %v884
        %v1532 = vpop.f32.mrf.mxu0
        %v1533 = vadd.f32 %v1372, %v1532
        %v1534 = vpop.f32.mrf.mxu0
        %v1535 = vpop.f32.mrf.mxu0
        %v1536 = vadd.f32 %v1375, %v1535
        %v1537 = vpop.f32.mrf.mxu0
        %1538 = vmatprep.mubr.bf16.mxu0 0
        %1539 = vmatmul.mubr.bf16.gmra.mxu0 %v887
        %v1540 = vpop.f32.mrf.mxu0
        %v1541 = vadd.f32 %v1380, %v1540
        %v1542 = vpop.f32.mrf.mxu0
        %v1543 = vpop.f32.mrf.mxu0
        %v1544 = vadd.f32 %v1383, %v1543
        %v1545 = vpop.f32.mrf.mxu0
        %1546 = vmatprep.mubr.bf16.mxu0 0
        %1547 = vmatmul.mubr.bf16.gmra.mxu0 %v890
        %v1548 = vpop.f32.mrf.mxu0
        %v1549 = vadd.f32 %v1388, %v1548
        %v1550 = vpop.f32.mrf.mxu0
        %v1551 = vpop.f32.mrf.mxu0
        %v1552 = vadd.f32 %v1391, %v1551
        %v1553 = vpop.f32.mrf.mxu0
        %1554 = vmatprep.mubr.bf16.mxu0 0
        %1555 = vmatmul.mubr.bf16.gmra.mxu0 %v893
        %v1556 = vpop.f32.mrf.mxu0
        %v1557 = vadd.f32 %v1396, %v1556
        %v1558 = vpop.f32.mrf.mxu0
        %v1559 = vpop.f32.mrf.mxu0
        %v1560 = vadd.f32 %v1399, %v1559
        %v1561 = vpop.f32.mrf.mxu0
        %1562 = vmatprep.mubr.bf16.mxu0 0
        %1563 = vmatmul.mubr.bf16.gmra.mxu0 %v896
        %v1564 = vpop.f32.mrf.mxu0
        %v1565 = vadd.f32 %v1404, %v1564
        %v1566 = vpop.f32.mrf.mxu0
        %v1567 = vpop.f32.mrf.mxu0
        %v1568 = vadd.f32 %v1407, %v1567
        %v1569 = vpop.f32.mrf.mxu0
        %1570 = vmatprep.mubr.bf16.mxu0 0
        %1571 = vmatmul.mubr.bf16.gmra.mxu0 %v899
        %v1572 = vpop.f32.mrf.mxu0
        %v1573 = vadd.f32 %v1412, %v1572
        %v1574 = vpop.f32.mrf.mxu0
        %v1575 = vpop.f32.mrf.mxu0
        %v1576 = vadd.f32 %v1415, %v1575
        %v1577 = vpop.f32.mrf.mxu0
        %1578 = vmatprep.mubr.bf16.mxu0 0
        %1579 = vmatmul.mubr.bf16.gmra.mxu0 %v902
        %v1580 = vpop.f32.mrf.mxu0
        %v1581 = vadd.f32 %v1420, %v1580
        %v1582 = vpop.f32.mrf.mxu0
        %v1583 = vpop.f32.mrf.mxu0
        %v1584 = vadd.f32 %v1423, %v1583
        %v1585 = vpop.f32.mrf.mxu0
        %1586 = vmatprep.mubr.bf16.mxu0 0
        %1587 = vmatmul.mubr.bf16.gmra.mxu0 %v905
        %v1588 = vpop.f32.mrf.mxu0
        %v1589 = vadd.f32 %v1428, %v1588
        %v1590 = vpop.f32.mrf.mxu0
        %v1591 = vpop.f32.mrf.mxu0
        %v1592 = vadd.f32 %v1431, %v1591
        %v1593 = vpop.f32.mrf.mxu0
        %1594 = vmatprep.mubr.bf16.mxu0 0
        %1595 = vmatmul.mubr.bf16.gmra.mxu0 %v908
        %v1596 = vpop.f32.mrf.mxu0
        %v1597 = vadd.f32 %v1436, %v1596
        %v1598 = vpop.f32.mrf.mxu0
        %v1599 = vpop.f32.mrf.mxu0
        %v1600 = vadd.f32 %v1439, %v1599
        %v1601 = vpop.f32.mrf.mxu0
        %1602 = vmatprep.mubr.bf16.mxu0 0
        %1603 = vmatmul.mubr.bf16.gmra.mxu0 %v911
        %v1604 = vpop.f32.mrf.mxu0
        %v1605 = vadd.f32 %v1444, %v1604
        %v1606 = vpop.f32.mrf.mxu0
        %v1607 = vpop.f32.mrf.mxu0
        %v1608 = vadd.f32 %v1447, %v1607
        %v1609 = vpop.f32.mrf.mxu0
        %1610 = vmatprep.mubr.bf16.mxu0 0
        %1611 = vmatmul.mubr.bf16.gmra.mxu0 %v914
        %v1612 = vpop.f32.mrf.mxu0
        %v1613 = vadd.f32 %v1452, %v1612
        %v1614 = vpop.f32.mrf.mxu0
        %v1615 = vpop.f32.mrf.mxu0
        %v1616 = vadd.f32 %v1455, %v1615
        %v1617 = vpop.f32.mrf.mxu0
        %1618 = vmatprep.mubr.bf16.mxu0 0
        %1619 = vmatmul.mubr.bf16.gmra.mxu0 %v917
        %v1620 = vpop.f32.mrf.mxu0
        %v1621 = vadd.f32 %v1460, %v1620
        %v1622 = vpop.f32.mrf.mxu0
        %v1623 = vpop.f32.mrf.mxu0
        %v1624 = vadd.f32 %v1463, %v1623
        %v1625 = vpop.f32.mrf.mxu0
        %1626 = vmatprep.mubr.bf16.mxu0 0
        %1627 = vmatmul.mubr.bf16.gmra.mxu0 %v920
        %v1628 = vpop.f32.mrf.mxu0
        %v1629 = vadd.f32 %v1468, %v1628
        %v1630 = vpop.f32.mrf.mxu0
        %v1631 = vpop.f32.mrf.mxu0
        %v1632 = vadd.f32 %v1471, %v1631
        %v1633 = vpop.f32.mrf.mxu0
        %1634 = vmatprep.mubr.bf16.mxu0 0
        %1635 = vmatmul.mubr.bf16.gmra.mxu0 %v923
        %v1636 = vpop.f32.mrf.mxu0
        %v1637 = vadd.f32 %v1476, %v1636
        %v1638 = vpop.f32.mrf.mxu0
        %v1639 = vpop.f32.mrf.mxu0
        %v1640 = vadd.f32 %v1479, %v1639
        %v1641 = vpop.f32.mrf.mxu0
        %1642 = vdwg.mxu0
        %v1643 = vxor.u32 %v1163, 2147483648
        %v1644 = vxor.u32 %v1167, 2147483648
        %v1645 = vxor.u32 %v1173, 2147483648
        %v1646 = vxor.u32 %v1177, 2147483648
        %v1647 = vxor.u32 %v1183, 2147483648
        %v1648 = vxor.u32 %v1187, 2147483648
        %v1649 = vxor.u32 %v1193, 2147483648
        %v1650 = vxor.u32 %v1197, 2147483648
        %v1651 = vxor.u32 %v1203, 2147483648
        %v1652 = vxor.u32 %v1207, 2147483648
        %v1653 = vxor.u32 %v1213, 2147483648
        %v1654 = vxor.u32 %v1217, 2147483648
        %v1655 = vxor.u32 %v1223, 2147483648
        %v1656 = vxor.u32 %v1227, 2147483648
        %v1657 = vxor.u32 %v1233, 2147483648
        %v1658 = vxor.u32 %v1237, 2147483648
        %v1659 = vxor.u32 %v1243, 2147483648
        %v1660 = vxor.u32 %v1247, 2147483648
        %v1661 = vxor.u32 %v1253, 2147483648
        %v1662 = vxor.u32 %v1257, 2147483648
        %v1663 = vxor.u32 %v1263, 2147483648
        %v1664 = vxor.u32 %v1267, 2147483648
        %v1665 = vxor.u32 %v1273, 2147483648
        %v1666 = vxor.u32 %v1277, 2147483648
        %v1667 = vxor.u32 %v1283, 2147483648
        %v1668 = vxor.u32 %v1287, 2147483648
        %v1669 = vxor.u32 %v1293, 2147483648
        %v1670 = vxor.u32 %v1297, 2147483648
        %v1671 = vxor.u32 %v1303, 2147483648
        %v1672 = vxor.u32 %v1307, 2147483648
        %v1673 = vxor.u32 %v1313, 2147483648
        %v1674 = vxor.u32 %v1317, 2147483648
        %v1675 = vmul.f32 %v1643, 1.442695
        %v1676 = vpow.pop %v1675
        %v1677 = vmul.f32 %v1644, 1.442695
        %v1678 = vpow.pop %v1677
        %v1679 = vmul.f32 %v1645, 1.442695
        %v1680 = vpow.pop %v1679
        %v1681 = vmul.f32 %v1646, 1.442695
        %v1682 = vpow.pop %v1681
        %v1683 = vmul.f32 %v1647, 1.442695
        %v1684 = vpow.pop %v1683
        %v1685 = vmul.f32 %v1648, 1.442695
        %v1686 = vpow.pop %v1685
        %v1687 = vmul.f32 %v1649, 1.442695
        %v1688 = vpow.pop %v1687
        %v1689 = vmul.f32 %v1650, 1.442695
        %v1690 = vpow.pop %v1689
        %v1691 = vmul.f32 %v1651, 1.442695
        %v1692 = vpow.pop %v1691
        %v1693 = vmul.f32 %v1652, 1.442695
        %v1694 = vpow.pop %v1693
        %v1695 = vmul.f32 %v1653, 1.442695
        %v1696 = vpow.pop %v1695
        %v1697 = vmul.f32 %v1654, 1.442695
        %v1698 = vpow.pop %v1697
        %v1699 = vmul.f32 %v1655, 1.442695
        %v1700 = vpow.pop %v1699
        %v1701 = vmul.f32 %v1656, 1.442695
        %v1702 = vpow.pop %v1701
        %v1703 = vmul.f32 %v1657, 1.442695
        %v1704 = vpow.pop %v1703
        %v1705 = vmul.f32 %v1658, 1.442695
        %v1706 = vpow.pop %v1705
        %v1707 = vmul.f32 %v1659, 1.442695
        %v1708 = vpow.pop %v1707
        %v1709 = vmul.f32 %v1660, 1.442695
        %v1710 = vpow.pop %v1709
        %v1711 = vmul.f32 %v1661, 1.442695
        %v1712 = vpow.pop %v1711
        %v1713 = vmul.f32 %v1662, 1.442695
        %v1714 = vpow.pop %v1713
        %v1715 = vmul.f32 %v1663, 1.442695
        %v1716 = vpow.pop %v1715
        %v1717 = vmul.f32 %v1664, 1.442695
        %v1718 = vpow.pop %v1717
        %v1719 = vmul.f32 %v1665, 1.442695
        %v1720 = vpow.pop %v1719
        %v1721 = vmul.f32 %v1666, 1.442695
        %v1722 = vpow.pop %v1721
        %v1723 = vmul.f32 %v1667, 1.442695
        %v1724 = vpow.pop %v1723
        %v1725 = vmul.f32 %v1668, 1.442695
        %v1726 = vpow.pop %v1725
        %v1727 = vmul.f32 %v1669, 1.442695
        %v1728 = vpow.pop %v1727
        %v1729 = vmul.f32 %v1670, 1.442695
        %v1730 = vpow.pop %v1729
        %v1731 = vmul.f32 %v1671, 1.442695
        %v1732 = vpow.pop %v1731
        %v1733 = vmul.f32 %v1672, 1.442695
        %v1734 = vpow.pop %v1733
        %v1735 = vmul.f32 %v1673, 1.442695
        %v1736 = vpow.pop %v1735
        %v1737 = vmul.f32 %v1674, 1.442695
        %v1738 = vpow.pop %v1737
        %v1739 = vadd.f32 %v1676, 1.0
        %v1740 = vadd.f32 %v1678, 1.0
        %v1741 = vadd.f32 %v1680, 1.0
        %v1742 = vadd.f32 %v1682, 1.0
        %v1743 = vadd.f32 %v1684, 1.0
        %v1744 = vadd.f32 %v1686, 1.0
        %v1745 = vadd.f32 %v1688, 1.0
        %v1746 = vadd.f32 %v1690, 1.0
        %v1747 = vadd.f32 %v1692, 1.0
        %v1748 = vadd.f32 %v1694, 1.0
        %v1749 = vadd.f32 %v1696, 1.0
        %v1750 = vadd.f32 %v1698, 1.0
        %v1751 = vadd.f32 %v1700, 1.0
        %v1752 = vadd.f32 %v1702, 1.0
        %v1753 = vadd.f32 %v1704, 1.0
        %v1754 = vadd.f32 %v1706, 1.0
        %v1755 = vadd.f32 %v1708, 1.0
        %v1756 = vadd.f32 %v1710, 1.0
        %v1757 = vadd.f32 %v1712, 1.0
        %v1758 = vadd.f32 %v1714, 1.0
        %v1759 = vadd.f32 %v1716, 1.0
        %v1760 = vadd.f32 %v1718, 1.0
        %v1761 = vadd.f32 %v1720, 1.0
        %v1762 = vadd.f32 %v1722, 1.0
        %v1763 = vadd.f32 %v1724, 1.0
        %v1764 = vadd.f32 %v1726, 1.0
        %v1765 = vadd.f32 %v1728, 1.0
        %v1766 = vadd.f32 %v1730, 1.0
        %v1767 = vadd.f32 %v1732, 1.0
        %v1768 = vadd.f32 %v1734, 1.0
        %v1769 = vadd.f32 %v1736, 1.0
        %v1770 = vadd.f32 %v1738, 1.0
        %v1771 = vrcp.pop %v1739
        %v1772 = vmul.f32 1.0, %v1771
        %v1773 = vrcp.pop %v1740
        %v1774 = vmul.f32 1.0, %v1773
        %v1775 = vrcp.pop %v1741
        %v1776 = vmul.f32 1.0, %v1775
        %v1777 = vrcp.pop %v1742
        %v1778 = vmul.f32 1.0, %v1777
        %v1779 = vrcp.pop %v1743
        %v1780 = vmul.f32 1.0, %v1779
        %v1781 = vrcp.pop %v1744
        %v1782 = vmul.f32 1.0, %v1781
        %v1783 = vrcp.pop %v1745
        %v1784 = vmul.f32 1.0, %v1783
        %v1785 = vrcp.pop %v1746
        %v1786 = vmul.f32 1.0, %v1785
        %v1787 = vrcp.pop %v1747
        %v1788 = vmul.f32 1.0, %v1787
        %v1789 = vrcp.pop %v1748
        %v1790 = vmul.f32 1.0, %v1789
        %v1791 = vrcp.pop %v1749
        %v1792 = vmul.f32 1.0, %v1791
        %v1793 = vrcp.pop %v1750
        %v1794 = vmul.f32 1.0, %v1793
        %v1795 = vrcp.pop %v1751
        %v1796 = vmul.f32 1.0, %v1795
        %v1797 = vrcp.pop %v1752
        %v1798 = vmul.f32 1.0, %v1797
        %v1799 = vrcp.pop %v1753
        %v1800 = vmul.f32 1.0, %v1799
        %v1801 = vrcp.pop %v1754
        %v1802 = vmul.f32 1.0, %v1801
        %v1803 = vrcp.pop %v1755
        %v1804 = vmul.f32 1.0, %v1803
        %v1805 = vrcp.pop %v1756
        %v1806 = vmul.f32 1.0, %v1805
        %v1807 = vrcp.pop %v1757
        %v1808 = vmul.f32 1.0, %v1807
        %v1809 = vrcp.pop %v1758
        %v1810 = vmul.f32 1.0, %v1809
        %v1811 = vrcp.pop %v1759
        %v1812 = vmul.f32 1.0, %v1811
        %v1813 = vrcp.pop %v1760
        %v1814 = vmul.f32 1.0, %v1813
        %v1815 = vrcp.pop %v1761
        %v1816 = vmul.f32 1.0, %v1815
        %v1817 = vrcp.pop %v1762
        %v1818 = vmul.f32 1.0, %v1817
        %v1819 = vrcp.pop %v1763
        %v1820 = vmul.f32 1.0, %v1819
        %v1821 = vrcp.pop %v1764
        %v1822 = vmul.f32 1.0, %v1821
        %v1823 = vrcp.pop %v1765
        %v1824 = vmul.f32 1.0, %v1823
        %v1825 = vrcp.pop %v1766
        %v1826 = vmul.f32 1.0, %v1825
        %v1827 = vrcp.pop %v1767
        %v1828 = vmul.f32 1.0, %v1827
        %v1829 = vrcp.pop %v1768
        %v1830 = vmul.f32 1.0, %v1829
        %v1831 = vrcp.pop %v1769
        %v1832 = vmul.f32 1.0, %v1831
        %v1833 = vrcp.pop %v1770
        %v1834 = vmul.f32 1.0, %v1833
        %v1835 = vtanh.pop %v1165
        %v1836 = vtanh.pop %v1169
        %v1837 = vtanh.pop %v1175
        %v1838 = vtanh.pop %v1179
        %v1839 = vtanh.pop %v1185
        %v1840 = vtanh.pop %v1189
        %v1841 = vtanh.pop %v1195
        %v1842 = vtanh.pop %v1199
        %v1843 = vtanh.pop %v1205
        %v1844 = vtanh.pop %v1209
        %v1845 = vtanh.pop %v1215
        %v1846 = vtanh.pop %v1219
        %v1847 = vtanh.pop %v1225
        %v1848 = vtanh.pop %v1229
        %v1849 = vtanh.pop %v1235
        %v1850 = vtanh.pop %v1239
        %v1851 = vtanh.pop %v1245
        %v1852 = vtanh.pop %v1249
        %v1853 = vtanh.pop %v1255
        %v1854 = vtanh.pop %v1259
        %v1855 = vtanh.pop %v1265
        %v1856 = vtanh.pop %v1269
        %v1857 = vtanh.pop %v1275
        %v1858 = vtanh.pop %v1279
        %v1859 = vtanh.pop %v1285
        %v1860 = vtanh.pop %v1289
        %v1861 = vtanh.pop %v1295
        %v1862 = vtanh.pop %v1299
        %v1863 = vtanh.pop %v1305
        %v1864 = vtanh.pop %v1309
        %v1865 = vtanh.pop %v1315
        %v1866 = vtanh.pop %v1319
        %v1867 = vxor.u32 %v1517, 2147483648
        %v1868 = vxor.u32 %v1520, 2147483648
        %v1869 = vxor.u32 %v1525, 2147483648
        %v1870 = vxor.u32 %v1528, 2147483648
        %v1871 = vxor.u32 %v1533, 2147483648
        %v1872 = vxor.u32 %v1536, 2147483648
        %v1873 = vxor.u32 %v1541, 2147483648
        %v1874 = vxor.u32 %v1544, 2147483648
        %v1875 = vxor.u32 %v1549, 2147483648
        %v1876 = vxor.u32 %v1552, 2147483648
        %v1877 = vxor.u32 %v1557, 2147483648
        %v1878 = vxor.u32 %v1560, 2147483648
        %v1879 = vxor.u32 %v1565, 2147483648
        %v1880 = vxor.u32 %v1568, 2147483648
        %v1881 = vxor.u32 %v1573, 2147483648
        %v1882 = vxor.u32 %v1576, 2147483648
        %v1883 = vxor.u32 %v1581, 2147483648
        %v1884 = vxor.u32 %v1584, 2147483648
        %v1885 = vxor.u32 %v1589, 2147483648
        %v1886 = vxor.u32 %v1592, 2147483648
        %v1887 = vxor.u32 %v1597, 2147483648
        %v1888 = vxor.u32 %v1600, 2147483648
        %v1889 = vxor.u32 %v1605, 2147483648
        %v1890 = vxor.u32 %v1608, 2147483648
        %v1891 = vxor.u32 %v1613, 2147483648
        %v1892 = vxor.u32 %v1616, 2147483648
        %v1893 = vxor.u32 %v1621, 2147483648
        %v1894 = vxor.u32 %v1624, 2147483648
        %v1895 = vxor.u32 %v1629, 2147483648
        %v1896 = vxor.u32 %v1632, 2147483648
        %v1897 = vxor.u32 %v1637, 2147483648
        %v1898 = vxor.u32 %v1640, 2147483648
        %v1899 = vmul.f32 %v1867, 1.442695
        %v1900 = vpow.pop %v1899
        %v1901 = vmul.f32 %v1868, 1.442695
        %v1902 = vpow.pop %v1901
        %v1903 = vmul.f32 %v1869, 1.442695
        %v1904 = vpow.pop %v1903
        %v1905 = vmul.f32 %v1870, 1.442695
        %v1906 = vpow.pop %v1905
        %v1907 = vmul.f32 %v1871, 1.442695
        %v1908 = vpow.pop %v1907
        %v1909 = vmul.f32 %v1872, 1.442695
        %v1910 = vpow.pop %v1909
        %v1911 = vmul.f32 %v1873, 1.442695
        %v1912 = vpow.pop %v1911
        %v1913 = vmul.f32 %v1874, 1.442695
        %v1914 = vpow.pop %v1913
        %v1915 = vmul.f32 %v1875, 1.442695
        %v1916 = vpow.pop %v1915
        %v1917 = vmul.f32 %v1876, 1.442695
        %v1918 = vpow.pop %v1917
        %v1919 = vmul.f32 %v1877, 1.442695
        %v1920 = vpow.pop %v1919
        %v1921 = vmul.f32 %v1878, 1.442695
        %v1922 = vpow.pop %v1921
        %v1923 = vmul.f32 %v1879, 1.442695
        %v1924 = vpow.pop %v1923
        %v1925 = vmul.f32 %v1880, 1.442695
        %v1926 = vpow.pop %v1925
        %v1927 = vmul.f32 %v1881, 1.442695
        %v1928 = vpow.pop %v1927
        %v1929 = vmul.f32 %v1882, 1.442695
        %v1930 = vpow.pop %v1929
        %v1931 = vmul.f32 %v1883, 1.442695
        %v1932 = vpow.pop %v1931
        %v1933 = vmul.f32 %v1884, 1.442695
        %v1934 = vpow.pop %v1933
        %v1935 = vmul.f32 %v1885, 1.442695
        %v1936 = vpow.pop %v1935
        %v1937 = vmul.f32 %v1886, 1.442695
        %v1938 = vpow.pop %v1937
        %v1939 = vmul.f32 %v1887, 1.442695
        %v1940 = vpow.pop %v1939
        %v1941 = vmul.f32 %v1888, 1.442695
        %v1942 = vpow.pop %v1941
        %v1943 = vmul.f32 %v1889, 1.442695
        %v1944 = vpow.pop %v1943
        %v1945 = vmul.f32 %v1890, 1.442695
        %v1946 = vpow.pop %v1945
        %v1947 = vmul.f32 %v1891, 1.442695
        %v1948 = vpow.pop %v1947
        %v1949 = vmul.f32 %v1892, 1.442695
        %v1950 = vpow.pop %v1949
        %v1951 = vmul.f32 %v1893, 1.442695
        %v1952 = vpow.pop %v1951
        %v1953 = vmul.f32 %v1894, 1.442695
        %v1954 = vpow.pop %v1953
        %v1955 = vmul.f32 %v1895, 1.442695
        %v1956 = vpow.pop %v1955
        %v1957 = vmul.f32 %v1896, 1.442695
        %v1958 = vpow.pop %v1957
        %v1959 = vmul.f32 %v1897, 1.442695
        %v1960 = vpow.pop %v1959
        %v1961 = vmul.f32 %v1898, 1.442695
        %v1962 = vpow.pop %v1961
        %v1963 = vadd.f32 %v1900, 1.0
        %v1964 = vadd.f32 %v1902, 1.0
        %v1965 = vadd.f32 %v1904, 1.0
        %v1966 = vadd.f32 %v1906, 1.0
        %v1967 = vadd.f32 %v1908, 1.0
        %v1968 = vadd.f32 %v1910, 1.0
        %v1969 = vadd.f32 %v1912, 1.0
        %v1970 = vadd.f32 %v1914, 1.0
        %v1971 = vadd.f32 %v1916, 1.0
        %v1972 = vadd.f32 %v1918, 1.0
        %v1973 = vadd.f32 %v1920, 1.0
        %v1974 = vadd.f32 %v1922, 1.0
        %v1975 = vadd.f32 %v1924, 1.0
        %v1976 = vadd.f32 %v1926, 1.0
        %v1977 = vadd.f32 %v1928, 1.0
        %v1978 = vadd.f32 %v1930, 1.0
        %v1979 = vadd.f32 %v1932, 1.0
        %v1980 = vadd.f32 %v1934, 1.0
        %v1981 = vadd.f32 %v1936, 1.0
        %v1982 = vadd.f32 %v1938, 1.0
        %v1983 = vadd.f32 %v1940, 1.0
        %v1984 = vadd.f32 %v1942, 1.0
        %v1985 = vadd.f32 %v1944, 1.0
        %v1986 = vadd.f32 %v1946, 1.0
        %v1987 = vadd.f32 %v1948, 1.0
        %v1988 = vadd.f32 %v1950, 1.0
        %v1989 = vadd.f32 %v1952, 1.0
        %v1990 = vadd.f32 %v1954, 1.0
        %v1991 = vadd.f32 %v1956, 1.0
        %v1992 = vadd.f32 %v1958, 1.0
        %v1993 = vadd.f32 %v1960, 1.0
        %v1994 = vadd.f32 %v1962, 1.0
        %v1995 = vrcp.pop %v1963
        %v1996 = vmul.f32 1.0, %v1995
        %v1997 = vrcp.pop %v1964
        %v1998 = vmul.f32 1.0, %v1997
        %v1999 = vrcp.pop %v1965
        %v2000 = vmul.f32 1.0, %v1999
        %v2001 = vrcp.pop %v1966
        %v2002 = vmul.f32 1.0, %v2001
        %v2003 = vrcp.pop %v1967
        %v2004 = vmul.f32 1.0, %v2003
        %v2005 = vrcp.pop %v1968
        %v2006 = vmul.f32 1.0, %v2005
        %v2007 = vrcp.pop %v1969
        %v2008 = vmul.f32 1.0, %v2007
        %v2009 = vrcp.pop %v1970
        %v2010 = vmul.f32 1.0, %v2009
        %v2011 = vrcp.pop %v1971
        %v2012 = vmul.f32 1.0, %v2011
        %v2013 = vrcp.pop %v1972
        %v2014 = vmul.f32 1.0, %v2013
        %v2015 = vrcp.pop %v1973
        %v2016 = vmul.f32 1.0, %v2015
        %v2017 = vrcp.pop %v1974
        %v2018 = vmul.f32 1.0, %v2017
        %v2019 = vrcp.pop %v1975
        %v2020 = vmul.f32 1.0, %v2019
        %v2021 = vrcp.pop %v1976
        %v2022 = vmul.f32 1.0, %v2021
        %v2023 = vrcp.pop %v1977
        %v2024 = vmul.f32 1.0, %v2023
        %v2025 = vrcp.pop %v1978
        %v2026 = vmul.f32 1.0, %v2025
        %v2027 = vrcp.pop %v1979
        %v2028 = vmul.f32 1.0, %v2027
        %v2029 = vrcp.pop %v1980
        %v2030 = vmul.f32 1.0, %v2029
        %v2031 = vrcp.pop %v1981
        %v2032 = vmul.f32 1.0, %v2031
        %v2033 = vrcp.pop %v1982
        %v2034 = vmul.f32 1.0, %v2033
        %v2035 = vrcp.pop %v1983
        %v2036 = vmul.f32 1.0, %v2035
        %v2037 = vrcp.pop %v1984
        %v2038 = vmul.f32 1.0, %v2037
        %v2039 = vrcp.pop %v1985
        %v2040 = vmul.f32 1.0, %v2039
        %v2041 = vrcp.pop %v1986
        %v2042 = vmul.f32 1.0, %v2041
        %v2043 = vrcp.pop %v1987
        %v2044 = vmul.f32 1.0, %v2043
        %v2045 = vrcp.pop %v1988
        %v2046 = vmul.f32 1.0, %v2045
        %v2047 = vrcp.pop %v1989
        %v2048 = vmul.f32 1.0, %v2047
        %v2049 = vrcp.pop %v1990
        %v2050 = vmul.f32 1.0, %v2049
        %v2051 = vrcp.pop %v1991
        %v2052 = vmul.f32 1.0, %v2051
        %v2053 = vrcp.pop %v1992
        %v2054 = vmul.f32 1.0, %v2053
        %v2055 = vrcp.pop %v1993
        %v2056 = vmul.f32 1.0, %v2055
        %v2057 = vrcp.pop %v1994
        %v2058 = vmul.f32 1.0, %v2057
        %v2059 = vmul.f32 %v1772, %v1835
        %v2060 = vmul.f32 %v1774, %v1836
        %v2061 = vmul.f32 %v1776, %v1837
        %v2062 = vmul.f32 %v1778, %v1838
        %v2063 = vmul.f32 %v1780, %v1839
        %v2064 = vmul.f32 %v1782, %v1840
        %v2065 = vmul.f32 %v1784, %v1841
        %v2066 = vmul.f32 %v1786, %v1842
        %v2067 = vmul.f32 %v1788, %v1843
        %v2068 = vmul.f32 %v1790, %v1844
        %v2069 = vmul.f32 %v1792, %v1845
        %v2070 = vmul.f32 %v1794, %v1846
        %v2071 = vmul.f32 %v1796, %v1847
        %v2072 = vmul.f32 %v1798, %v1848
        %v2073 = vmul.f32 %v1800, %v1849
        %v2074 = vmul.f32 %v1802, %v1850
        %v2075 = vmul.f32 %v1804, %v1851
        %v2076 = vmul.f32 %v1806, %v1852
        %v2077 = vmul.f32 %v1808, %v1853
        %v2078 = vmul.f32 %v1810, %v1854
        %v2079 = vmul.f32 %v1812, %v1855
        %v2080 = vmul.f32 %v1814, %v1856
        %v2081 = vmul.f32 %v1816, %v1857
        %v2082 = vmul.f32 %v1818, %v1858
        %v2083 = vmul.f32 %v1820, %v1859
        %v2084 = vmul.f32 %v1822, %v1860
        %v2085 = vmul.f32 %v1824, %v1861
        %v2086 = vmul.f32 %v1826, %v1862
        %v2087 = vmul.f32 %v1828, %v1863
        %v2088 = vmul.f32 %v1830, %v1864
        %v2089 = vmul.f32 %v1832, %v1865
        %v2090 = vmul.f32 %v1834, %v1866
        %v2091 = vtanh.pop %v2059
        %v2092 = vtanh.pop %v2060
        %v2093 = vtanh.pop %v2061
        %v2094 = vtanh.pop %v2062
        %v2095 = vtanh.pop %v2063
        %v2096 = vtanh.pop %v2064
        %v2097 = vtanh.pop %v2065
        %v2098 = vtanh.pop %v2066
        %v2099 = vtanh.pop %v2067
        %v2100 = vtanh.pop %v2068
        %v2101 = vtanh.pop %v2069
        %v2102 = vtanh.pop %v2070
        %v2103 = vtanh.pop %v2071
        %v2104 = vtanh.pop %v2072
        %v2105 = vtanh.pop %v2073
        %v2106 = vtanh.pop %v2074
        %v2107 = vtanh.pop %v2075
        %v2108 = vtanh.pop %v2076
        %v2109 = vtanh.pop %v2077
        %v2110 = vtanh.pop %v2078
        %v2111 = vtanh.pop %v2079
        %v2112 = vtanh.pop %v2080
        %v2113 = vtanh.pop %v2081
        %v2114 = vtanh.pop %v2082
        %v2115 = vtanh.pop %v2083
        %v2116 = vtanh.pop %v2084
        %v2117 = vtanh.pop %v2085
        %v2118 = vtanh.pop %v2086
        %v2119 = vtanh.pop %v2087
        %v2120 = vtanh.pop %v2088
        %v2121 = vtanh.pop %v2089
        %v2122 = vtanh.pop %v2090
        %v2123 = vmul.f32 %v1996, %v2091
        %v2124 = vmul.f32 %v1998, %v2092
        %v2125 = vmul.f32 %v2000, %v2093
        %v2126 = vmul.f32 %v2002, %v2094
        %v2127 = vmul.f32 %v2004, %v2095
        %v2128 = vmul.f32 %v2006, %v2096
        %v2129 = vmul.f32 %v2008, %v2097
        %v2130 = vmul.f32 %v2010, %v2098
        %v2131 = vmul.f32 %v2012, %v2099
        %v2132 = vmul.f32 %v2014, %v2100
        %v2133 = vmul.f32 %v2016, %v2101
        %v2134 = vmul.f32 %v2018, %v2102
        %v2135 = vmul.f32 %v2020, %v2103
        %v2136 = vmul.f32 %v2022, %v2104
        %v2137 = vmul.f32 %v2024, %v2105
        %v2138 = vmul.f32 %v2026, %v2106
        %v2139 = vmul.f32 %v2028, %v2107
        %v2140 = vmul.f32 %v2030, %v2108
        %v2141 = vmul.f32 %v2032, %v2109
        %v2142 = vmul.f32 %v2034, %v2110
        %v2143 = vmul.f32 %v2036, %v2111
        %v2144 = vmul.f32 %v2038, %v2112
        %v2145 = vmul.f32 %v2040, %v2113
        %v2146 = vmul.f32 %v2042, %v2114
        %v2147 = vmul.f32 %v2044, %v2115
        %v2148 = vmul.f32 %v2046, %v2116
        %v2149 = vmul.f32 %v2048, %v2117
        %v2150 = vmul.f32 %v2050, %v2118
        %v2151 = vmul.f32 %v2052, %v2119
        %v2152 = vmul.f32 %v2054, %v2120
        %v2153 = vmul.f32 %v2056, %v2121
        %v2154 = vmul.f32 %v2058, %v2122
        %v2155 = vpack.c.bf16 %v2124, %v2123
        %v2156 = vpack.c.bf16 %v2126, %v2125
        %v2157 = vpack.c.bf16 %v2128, %v2127
        %v2158 = vpack.c.bf16 %v2130, %v2129
        %v2159 = vpack.c.bf16 %v2132, %v2131
        %v2160 = vpack.c.bf16 %v2134, %v2133
        %v2161 = vpack.c.bf16 %v2136, %v2135
        %v2162 = vpack.c.bf16 %v2138, %v2137
        %v2163 = vpack.c.bf16 %v2140, %v2139
        %v2164 = vpack.c.bf16 %v2142, %v2141
        %v2165 = vpack.c.bf16 %v2144, %v2143
        %v2166 = vpack.c.bf16 %v2146, %v2145
        %v2167 = vpack.c.bf16 %v2148, %v2147
        %v2168 = vpack.c.bf16 %v2150, %v2149
        %v2169 = vpack.c.bf16 %v2152, %v2151
        %v2170 = vpack.c.bf16 %v2154, %v2153
        %v2171 = vld [vmem:[%s3] sm:$0xf]
        %v2172 = vld [vmem:[%s3 + $0x4] sm:$0xf]
        %v2173 = vld [vmem:[%s3 + $0x8] sm:$0xf]
        %v2174 = vld [vmem:[%s3 + $0xc] sm:$0xf]
        %v2175 = vld [vmem:[%s3 + $0x10] sm:$0xf]
        %v2176 = vld [vmem:[%s3 + $0x14] sm:$0xf]
        %v2177 = vld [vmem:[%s3 + $0x18] sm:$0xf]
        %v2178 = vld [vmem:[%s3 + $0x1c] sm:$0xf]
        %v2179 = vld [vmem:[%s3 + $0x20] sm:$0xf]
        %v2180 = vld [vmem:[%s3 + $0x24] sm:$0xf]
        %v2181 = vld [vmem:[%s3 + $0x28] sm:$0xf]
        %v2182 = vld [vmem:[%s3 + $0x2c] sm:$0xf]
        %v2183 = vld [vmem:[%s3 + $0x30] sm:$0xf]
        %v2184 = vld [vmem:[%s3 + $0x34] sm:$0xf]
        %v2185 = vld [vmem:[%s3 + $0x38] sm:$0xf]
        %v2186 = vld [vmem:[%s3 + $0x3c] sm:$0xf]
        %v2187 = vld [vmem:[%s4] sm:$0x1]
        %v2189 = vlaneseq
        %v2190 = vshrl.u32 %v2189, 7
        %v2191 = vsub.s32 0, %v2190
        %v2192 = vrot.slane %v2187, %v2191
        %v2210 = vunpack.c.l.b16 %v2171
        %v2211 = vunpack.c.l.b16 %v2172
        %v2212 = vunpack.c.l.b16 %v2173
        %v2213 = vunpack.c.l.b16 %v2174
        %v2214 = vunpack.c.l.b16 %v2175
        %v2215 = vunpack.c.l.b16 %v2176
        %v2216 = vunpack.c.l.b16 %v2177
        %v2217 = vunpack.c.l.b16 %v2178
        %v2218 = vunpack.c.l.b16 %v2179
        %v2219 = vunpack.c.l.b16 %v2180
        %v2220 = vunpack.c.l.b16 %v2181
        %v2221 = vunpack.c.l.b16 %v2182
        %v2222 = vunpack.c.l.b16 %v2183
        %v2223 = vunpack.c.l.b16 %v2184
        %v2224 = vunpack.c.l.b16 %v2185
        %v2225 = vunpack.c.l.b16 %v2186
        %v2226 = vpack.c.b16 %v2211, %v2210
        %v2227 = vpack.c.b16 %v2213, %v2212
        %v2228 = vpack.c.b16 %v2215, %v2214
        %v2229 = vpack.c.b16 %v2217, %v2216
        %v2230 = vpack.c.b16 %v2219, %v2218
        %v2231 = vpack.c.b16 %v2221, %v2220
        %v2232 = vpack.c.b16 %v2223, %v2222
        %v2233 = vpack.c.b16 %v2225, %v2224
        %2242 = vmatprep.subr.bf16.mxu0 0
        %2243 = vmatpush1.bf16.msra.mxu0 %v2233
        %2244 = vmatprep.subr.bf16.mxu0 0
        %2245 = vmatpush1.bf16.msra.mxu0 %v2232
        %2246 = vmatprep.subr.bf16.mxu0 0
        %2247 = vmatpush1.bf16.msra.mxu0 %v2231
        %2248 = vmatprep.subr.bf16.mxu0 0
        %2249 = vmatpush1.bf16.msra.mxu0 %v2230
        %2250 = vmatprep.subr.bf16.mxu0 0
        %2251 = vmatpush1.bf16.msra.mxu0 %v2229
        %2252 = vmatprep.subr.bf16.mxu0 0
        %2253 = vmatpush1.bf16.msra.mxu0 %v2228
        %2254 = vmatprep.subr.bf16.mxu0 0
        %2255 = vmatpush1.bf16.msra.mxu0 %v2227
        %2256 = vmatprep.subr.bf16.mxu0 0
        %2257 = vmatpush1.bf16.msra.mxu0 %v2226
        %2258 = vmatprep.subr.bf16.mxu0 0
        %2259 = vmatpush2.bf16.msra.mxu0 0
        %2260 = vmatprep.subr.bf16.mxu0 0
        %2261 = vmatpush2.bf16.msra.mxu0 0
        %2262 = vmatprep.subr.bf16.mxu0 0
        %2263 = vmatpush2.bf16.msra.mxu0 0
        %2264 = vmatprep.subr.bf16.mxu0 0
        %2265 = vmatpush2.bf16.msra.mxu0 0
        %2266 = vmatprep.subr.bf16.mxu0 0
        %2267 = vmatpush2.bf16.msra.mxu0 0
        %2268 = vmatprep.subr.bf16.mxu0 0
        %2269 = vmatpush2.bf16.msra.mxu0 0
        %2270 = vmatprep.subr.bf16.mxu0 0
        %2271 = vmatpush2.bf16.msra.mxu0 0
        %2272 = vmatprep.subr.bf16.mxu0 0
        %2273 = vmatpush2.bf16.msra.mxu0 0
        %2274 = vmatprep.mubr.bf16.mxu0 0
        %2275 = vmatmul.mubr.bf16.gmra.mxu0 %v2155
        %v2276 = vpop.f32.mrf.mxu0
        %v2277 = vadd.f32 %v2192, %v2276
        %v2278 = vpop.f32.mrf.mxu0
        %v2279 = vpop.f32.mrf.mxu0
        %v2280 = vadd.f32 %v2192, %v2279
        %v2281 = vpop.f32.mrf.mxu0
        %2282 = vmatprep.mubr.bf16.mxu0 0
        %2283 = vmatmul.mubr.bf16.gmra.mxu0 %v2156
        %v2284 = vpop.f32.mrf.mxu0
        %v2285 = vadd.f32 %v2192, %v2284
        %v2286 = vpop.f32.mrf.mxu0
        %v2287 = vpop.f32.mrf.mxu0
        %v2288 = vadd.f32 %v2192, %v2287
        %v2289 = vpop.f32.mrf.mxu0
        %2290 = vmatprep.mubr.bf16.mxu0 0
        %2291 = vmatmul.mubr.bf16.gmra.mxu0 %v2157
        %v2292 = vpop.f32.mrf.mxu0
        %v2293 = vadd.f32 %v2192, %v2292
        %v2294 = vpop.f32.mrf.mxu0
        %v2295 = vpop.f32.mrf.mxu0
        %v2296 = vadd.f32 %v2192, %v2295
        %v2297 = vpop.f32.mrf.mxu0
        %2298 = vmatprep.mubr.bf16.mxu0 0
        %2299 = vmatmul.mubr.bf16.gmra.mxu0 %v2158
        %v2300 = vpop.f32.mrf.mxu0
        %v2301 = vadd.f32 %v2192, %v2300
        %v2302 = vpop.f32.mrf.mxu0
        %v2303 = vpop.f32.mrf.mxu0
        %v2304 = vadd.f32 %v2192, %v2303
        %v2305 = vpop.f32.mrf.mxu0
        %2306 = vmatprep.mubr.bf16.mxu0 0
        %2307 = vmatmul.mubr.bf16.gmra.mxu0 %v2159
        %v2308 = vpop.f32.mrf.mxu0
        %v2309 = vadd.f32 %v2192, %v2308
        %v2310 = vpop.f32.mrf.mxu0
        %v2311 = vpop.f32.mrf.mxu0
        %v2312 = vadd.f32 %v2192, %v2311
        %v2313 = vpop.f32.mrf.mxu0
        %2314 = vmatprep.mubr.bf16.mxu0 0
        %2315 = vmatmul.mubr.bf16.gmra.mxu0 %v2160
        %v2316 = vpop.f32.mrf.mxu0
        %v2317 = vadd.f32 %v2192, %v2316
        %v2318 = vpop.f32.mrf.mxu0
        %v2319 = vpop.f32.mrf.mxu0
        %v2320 = vadd.f32 %v2192, %v2319
        %v2321 = vpop.f32.mrf.mxu0
        %2322 = vmatprep.mubr.bf16.mxu0 0
        %2323 = vmatmul.mubr.bf16.gmra.mxu0 %v2161
        %v2324 = vpop.f32.mrf.mxu0
        %v2325 = vadd.f32 %v2192, %v2324
        %v2326 = vpop.f32.mrf.mxu0
        %v2327 = vpop.f32.mrf.mxu0
        %v2328 = vadd.f32 %v2192, %v2327
        %v2329 = vpop.f32.mrf.mxu0
        %2330 = vmatprep.mubr.bf16.mxu0 0
        %2331 = vmatmul.mubr.bf16.gmra.mxu0 %v2162
        %v2332 = vpop.f32.mrf.mxu0
        %v2333 = vadd.f32 %v2192, %v2332
        %v2334 = vpop.f32.mrf.mxu0
        %v2335 = vpop.f32.mrf.mxu0
        %v2336 = vadd.f32 %v2192, %v2335
        %v2337 = vpop.f32.mrf.mxu0
        %2338 = vmatprep.mubr.bf16.mxu0 0
        %2339 = vmatmul.mubr.bf16.gmra.mxu0 %v2163
        %v2340 = vpop.f32.mrf.mxu0
        %v2341 = vadd.f32 %v2192, %v2340
        %v2342 = vpop.f32.mrf.mxu0
        %v2343 = vpop.f32.mrf.mxu0
        %v2344 = vadd.f32 %v2192, %v2343
        %v2345 = vpop.f32.mrf.mxu0
        %2346 = vmatprep.mubr.bf16.mxu0 0
        %2347 = vmatmul.mubr.bf16.gmra.mxu0 %v2164
        %v2348 = vpop.f32.mrf.mxu0
        %v2349 = vadd.f32 %v2192, %v2348
        %v2350 = vpop.f32.mrf.mxu0
        %v2351 = vpop.f32.mrf.mxu0
        %v2352 = vadd.f32 %v2192, %v2351
        %v2353 = vpop.f32.mrf.mxu0
        %2354 = vmatprep.mubr.bf16.mxu0 0
        %2355 = vmatmul.mubr.bf16.gmra.mxu0 %v2165
        %v2356 = vpop.f32.mrf.mxu0
        %v2357 = vadd.f32 %v2192, %v2356
        %v2358 = vpop.f32.mrf.mxu0
        %v2359 = vpop.f32.mrf.mxu0
        %v2360 = vadd.f32 %v2192, %v2359
        %v2361 = vpop.f32.mrf.mxu0
        %2362 = vmatprep.mubr.bf16.mxu0 0
        %2363 = vmatmul.mubr.bf16.gmra.mxu0 %v2166
        %v2364 = vpop.f32.mrf.mxu0
        %v2365 = vadd.f32 %v2192, %v2364
        %v2366 = vpop.f32.mrf.mxu0
        %v2367 = vpop.f32.mrf.mxu0
        %v2368 = vadd.f32 %v2192, %v2367
        %v2369 = vpop.f32.mrf.mxu0
        %2370 = vmatprep.mubr.bf16.mxu0 0
        %2371 = vmatmul.mubr.bf16.gmra.mxu0 %v2167
        %v2372 = vpop.f32.mrf.mxu0
        %v2373 = vadd.f32 %v2192, %v2372
        %v2374 = vpop.f32.mrf.mxu0
        %v2375 = vpop.f32.mrf.mxu0
        %v2376 = vadd.f32 %v2192, %v2375
        %v2377 = vpop.f32.mrf.mxu0
        %2378 = vmatprep.mubr.bf16.mxu0 0
        %2379 = vmatmul.mubr.bf16.gmra.mxu0 %v2168
        %v2380 = vpop.f32.mrf.mxu0
        %v2381 = vadd.f32 %v2192, %v2380
        %v2382 = vpop.f32.mrf.mxu0
        %v2383 = vpop.f32.mrf.mxu0
        %v2384 = vadd.f32 %v2192, %v2383
        %v2385 = vpop.f32.mrf.mxu0
        %2386 = vmatprep.mubr.bf16.mxu0 0
        %2387 = vmatmul.mubr.bf16.gmra.mxu0 %v2169
        %v2388 = vpop.f32.mrf.mxu0
        %v2389 = vadd.f32 %v2192, %v2388
        %v2390 = vpop.f32.mrf.mxu0
        %v2391 = vpop.f32.mrf.mxu0
        %v2392 = vadd.f32 %v2192, %v2391
        %v2393 = vpop.f32.mrf.mxu0
        %2394 = vmatprep.mubr.bf16.mxu0 0
        %2395 = vmatmul.mubr.bf16.gmra.mxu0 %v2170
        %v2396 = vpop.f32.mrf.mxu0
        %v2397 = vadd.f32 %v2192, %v2396
        %v2398 = vpop.f32.mrf.mxu0
        %v2399 = vpop.f32.mrf.mxu0
        %v2400 = vadd.f32 %v2192, %v2399
        %v2401 = vpop.f32.mrf.mxu0
        %2402 = vdwg.mxu0
        %v2403 = vmax.f32 %v2277, 0.0
        %v2404 = vmax.f32 %v2280, 0.0
        %v2405 = vmax.f32 %v2285, 0.0
        %v2406 = vmax.f32 %v2288, 0.0
        %v2407 = vmax.f32 %v2293, 0.0
        %v2408 = vmax.f32 %v2296, 0.0
        %v2409 = vmax.f32 %v2301, 0.0
        %v2410 = vmax.f32 %v2304, 0.0
        %v2411 = vmax.f32 %v2309, 0.0
        %v2412 = vmax.f32 %v2312, 0.0
        %v2413 = vmax.f32 %v2317, 0.0
        %v2414 = vmax.f32 %v2320, 0.0
        %v2415 = vmax.f32 %v2325, 0.0
        %v2416 = vmax.f32 %v2328, 0.0
        %v2417 = vmax.f32 %v2333, 0.0
        %v2418 = vmax.f32 %v2336, 0.0
        %v2419 = vmax.f32 %v2341, 0.0
        %v2420 = vmax.f32 %v2344, 0.0
        %v2421 = vmax.f32 %v2349, 0.0
        %v2422 = vmax.f32 %v2352, 0.0
        %v2423 = vmax.f32 %v2357, 0.0
        %v2424 = vmax.f32 %v2360, 0.0
        %v2425 = vmax.f32 %v2365, 0.0
        %v2426 = vmax.f32 %v2368, 0.0
        %v2427 = vmax.f32 %v2373, 0.0
        %v2428 = vmax.f32 %v2376, 0.0
        %v2429 = vmax.f32 %v2381, 0.0
        %v2430 = vmax.f32 %v2384, 0.0
        %v2431 = vmax.f32 %v2389, 0.0
        %v2432 = vmax.f32 %v2392, 0.0
        %v2433 = vmax.f32 %v2397, 0.0
        %v2434 = vmax.f32 %v2400, 0.0
        %v2435 = vpack.c.bf16 %v2404, %v2403
        %v2436 = vpack.c.bf16 %v2406, %v2405
        %v2437 = vpack.c.bf16 %v2408, %v2407
        %v2438 = vpack.c.bf16 %v2410, %v2409
        %v2439 = vpack.c.bf16 %v2412, %v2411
        %v2440 = vpack.c.bf16 %v2414, %v2413
        %v2441 = vpack.c.bf16 %v2416, %v2415
        %v2442 = vpack.c.bf16 %v2418, %v2417
        %v2443 = vpack.c.bf16 %v2420, %v2419
        %v2444 = vpack.c.bf16 %v2422, %v2421
        %v2445 = vpack.c.bf16 %v2424, %v2423
        %v2446 = vpack.c.bf16 %v2426, %v2425
        %v2447 = vpack.c.bf16 %v2428, %v2427
        %v2448 = vpack.c.bf16 %v2430, %v2429
        %v2449 = vpack.c.bf16 %v2432, %v2431
        %v2450 = vpack.c.bf16 %v2434, %v2433
        %v2451 = vld [vmem:[%s5] sm:$0xf]
        %v2452 = vld [vmem:[%s5 + $0x4] sm:$0xf]
        %v2453 = vld [vmem:[%s5 + $0x8] sm:$0xf]
        %v2454 = vld [vmem:[%s5 + $0xc] sm:$0xf]
        %v2455 = vld [vmem:[%s5 + $0x10] sm:$0xf]
        %v2456 = vld [vmem:[%s5 + $0x14] sm:$0xf]
        %v2457 = vld [vmem:[%s5 + $0x18] sm:$0xf]
        %v2458 = vld [vmem:[%s5 + $0x1c] sm:$0xf]
        %v2459 = vld [vmem:[%s5 + $0x20] sm:$0xf]
        %v2460 = vld [vmem:[%s5 + $0x24] sm:$0xf]
        %v2461 = vld [vmem:[%s5 + $0x28] sm:$0xf]
        %v2462 = vld [vmem:[%s5 + $0x2c] sm:$0xf]
        %v2463 = vld [vmem:[%s5 + $0x30] sm:$0xf]
        %v2464 = vld [vmem:[%s5 + $0x34] sm:$0xf]
        %v2465 = vld [vmem:[%s5 + $0x38] sm:$0xf]
        %v2466 = vld [vmem:[%s5 + $0x3c] sm:$0xf]
        %v2467 = vld [vmem:[%s6] sm:$0x1]
        %v2469 = vlaneseq
        %v2470 = vshrl.u32 %v2469, 7
        %v2471 = vsub.s32 0, %v2470
        %v2472 = vrot.slane %v2467, %v2471
        %v2490 = vunpack.c.l.b16 %v2451
        %v2491 = vunpack.c.l.b16 %v2452
        %v2492 = vunpack.c.l.b16 %v2453
        %v2493 = vunpack.c.l.b16 %v2454
        %v2494 = vunpack.c.l.b16 %v2455
        %v2495 = vunpack.c.l.b16 %v2456
        %v2496 = vunpack.c.l.b16 %v2457
        %v2497 = vunpack.c.l.b16 %v2458
        %v2498 = vunpack.c.l.b16 %v2459
        %v2499 = vunpack.c.l.b16 %v2460
        %v2500 = vunpack.c.l.b16 %v2461
        %v2501 = vunpack.c.l.b16 %v2462
        %v2502 = vunpack.c.l.b16 %v2463
        %v2503 = vunpack.c.l.b16 %v2464
        %v2504 = vunpack.c.l.b16 %v2465
        %v2505 = vunpack.c.l.b16 %v2466
        %v2506 = vpack.c.b16 %v2491, %v2490
        %v2507 = vpack.c.b16 %v2493, %v2492
        %v2508 = vpack.c.b16 %v2495, %v2494
        %v2509 = vpack.c.b16 %v2497, %v2496
        %v2510 = vpack.c.b16 %v2499, %v2498
        %v2511 = vpack.c.b16 %v2501, %v2500
        %v2512 = vpack.c.b16 %v2503, %v2502
        %v2513 = vpack.c.b16 %v2505, %v2504
        %2522 = vmatprep.subr.bf16.mxu0 0
        %2523 = vmatpush1.bf16.msra.mxu0 %v2513
        %2524 = vmatprep.subr.bf16.mxu0 0
        %2525 = vmatpush1.bf16.msra.mxu0 %v2512
        %2526 = vmatprep.subr.bf16.mxu0 0
        %2527 = vmatpush1.bf16.msra.mxu0 %v2511
        %2528 = vmatprep.subr.bf16.mxu0 0
        %2529 = vmatpush1.bf16.msra.mxu0 %v2510
        %2530 = vmatprep.subr.bf16.mxu0 0
        %2531 = vmatpush1.bf16.msra.mxu0 %v2509
        %2532 = vmatprep.subr.bf16.mxu0 0
        %2533 = vmatpush1.bf16.msra.mxu0 %v2508
        %2534 = vmatprep.subr.bf16.mxu0 0
        %2535 = vmatpush1.bf16.msra.mxu0 %v2507
        %2536 = vmatprep.subr.bf16.mxu0 0
        %2537 = vmatpush1.bf16.msra.mxu0 %v2506
        %2538 = vmatprep.subr.bf16.mxu0 0
        %2539 = vmatpush2.bf16.msra.mxu0 0
        %2540 = vmatprep.subr.bf16.mxu0 0
        %2541 = vmatpush2.bf16.msra.mxu0 0
        %2542 = vmatprep.subr.bf16.mxu0 0
        %2543 = vmatpush2.bf16.msra.mxu0 0
        %2544 = vmatprep.subr.bf16.mxu0 0
        %2545 = vmatpush2.bf16.msra.mxu0 0
        %2546 = vmatprep.subr.bf16.mxu0 0
        %2547 = vmatpush2.bf16.msra.mxu0 0
        %2548 = vmatprep.subr.bf16.mxu0 0
        %2549 = vmatpush2.bf16.msra.mxu0 0
        %2550 = vmatprep.subr.bf16.mxu0 0
        %2551 = vmatpush2.bf16.msra.mxu0 0
        %2552 = vmatprep.subr.bf16.mxu0 0
        %2553 = vmatpush2.bf16.msra.mxu0 0
        %2554 = vmatprep.mubr.bf16.mxu0 0
        %2555 = vmatmul.mubr.bf16.gmra.mxu0 %v2435
        %v2556 = vpop.f32.mrf.mxu0
        %v2557 = vadd.f32 %v2472, %v2556
        %v2558 = vpop.f32.mrf.mxu0
        %v2559 = vpop.f32.mrf.mxu0
        %v2560 = vadd.f32 %v2472, %v2559
        %v2561 = vpop.f32.mrf.mxu0
        %2562 = vmatprep.mubr.bf16.mxu0 0
        %2563 = vmatmul.mubr.bf16.gmra.mxu0 %v2436
        %v2564 = vpop.f32.mrf.mxu0
        %v2565 = vadd.f32 %v2472, %v2564
        %v2566 = vpop.f32.mrf.mxu0
        %v2567 = vpop.f32.mrf.mxu0
        %v2568 = vadd.f32 %v2472, %v2567
        %v2569 = vpop.f32.mrf.mxu0
        %2570 = vmatprep.mubr.bf16.mxu0 0
        %2571 = vmatmul.mubr.bf16.gmra.mxu0 %v2437
        %v2572 = vpop.f32.mrf.mxu0
        %v2573 = vadd.f32 %v2472, %v2572
        %v2574 = vpop.f32.mrf.mxu0
        %v2575 = vpop.f32.mrf.mxu0
        %v2576 = vadd.f32 %v2472, %v2575
        %v2577 = vpop.f32.mrf.mxu0
        %2578 = vmatprep.mubr.bf16.mxu0 0
        %2579 = vmatmul.mubr.bf16.gmra.mxu0 %v2438
        %v2580 = vpop.f32.mrf.mxu0
        %v2581 = vadd.f32 %v2472, %v2580
        %v2582 = vpop.f32.mrf.mxu0
        %v2583 = vpop.f32.mrf.mxu0
        %v2584 = vadd.f32 %v2472, %v2583
        %v2585 = vpop.f32.mrf.mxu0
        %2586 = vmatprep.mubr.bf16.mxu0 0
        %2587 = vmatmul.mubr.bf16.gmra.mxu0 %v2439
        %v2588 = vpop.f32.mrf.mxu0
        %v2589 = vadd.f32 %v2472, %v2588
        %v2590 = vpop.f32.mrf.mxu0
        %v2591 = vpop.f32.mrf.mxu0
        %v2592 = vadd.f32 %v2472, %v2591
        %v2593 = vpop.f32.mrf.mxu0
        %2594 = vmatprep.mubr.bf16.mxu0 0
        %2595 = vmatmul.mubr.bf16.gmra.mxu0 %v2440
        %v2596 = vpop.f32.mrf.mxu0
        %v2597 = vadd.f32 %v2472, %v2596
        %v2598 = vpop.f32.mrf.mxu0
        %v2599 = vpop.f32.mrf.mxu0
        %v2600 = vadd.f32 %v2472, %v2599
        %v2601 = vpop.f32.mrf.mxu0
        %2602 = vmatprep.mubr.bf16.mxu0 0
        %2603 = vmatmul.mubr.bf16.gmra.mxu0 %v2441
        %v2604 = vpop.f32.mrf.mxu0
        %v2605 = vadd.f32 %v2472, %v2604
        %v2606 = vpop.f32.mrf.mxu0
        %v2607 = vpop.f32.mrf.mxu0
        %v2608 = vadd.f32 %v2472, %v2607
        %v2609 = vpop.f32.mrf.mxu0
        %2610 = vmatprep.mubr.bf16.mxu0 0
        %2611 = vmatmul.mubr.bf16.gmra.mxu0 %v2442
        %v2612 = vpop.f32.mrf.mxu0
        %v2613 = vadd.f32 %v2472, %v2612
        %v2614 = vpop.f32.mrf.mxu0
        %v2615 = vpop.f32.mrf.mxu0
        %v2616 = vadd.f32 %v2472, %v2615
        %v2617 = vpop.f32.mrf.mxu0
        %2618 = vmatprep.mubr.bf16.mxu0 0
        %2619 = vmatmul.mubr.bf16.gmra.mxu0 %v2443
        %v2620 = vpop.f32.mrf.mxu0
        %v2621 = vadd.f32 %v2472, %v2620
        %v2622 = vpop.f32.mrf.mxu0
        %v2623 = vpop.f32.mrf.mxu0
        %v2624 = vadd.f32 %v2472, %v2623
        %v2625 = vpop.f32.mrf.mxu0
        %2626 = vmatprep.mubr.bf16.mxu0 0
        %2627 = vmatmul.mubr.bf16.gmra.mxu0 %v2444
        %v2628 = vpop.f32.mrf.mxu0
        %v2629 = vadd.f32 %v2472, %v2628
        %v2630 = vpop.f32.mrf.mxu0
        %v2631 = vpop.f32.mrf.mxu0
        %v2632 = vadd.f32 %v2472, %v2631
        %v2633 = vpop.f32.mrf.mxu0
        %2634 = vmatprep.mubr.bf16.mxu0 0
        %2635 = vmatmul.mubr.bf16.gmra.mxu0 %v2445
        %v2636 = vpop.f32.mrf.mxu0
        %v2637 = vadd.f32 %v2472, %v2636
        %v2638 = vpop.f32.mrf.mxu0
        %v2639 = vpop.f32.mrf.mxu0
        %v2640 = vadd.f32 %v2472, %v2639
        %v2641 = vpop.f32.mrf.mxu0
        %2642 = vmatprep.mubr.bf16.mxu0 0
        %2643 = vmatmul.mubr.bf16.gmra.mxu0 %v2446
        %v2644 = vpop.f32.mrf.mxu0
        %v2645 = vadd.f32 %v2472, %v2644
        %v2646 = vpop.f32.mrf.mxu0
        %v2647 = vpop.f32.mrf.mxu0
        %v2648 = vadd.f32 %v2472, %v2647
        %v2649 = vpop.f32.mrf.mxu0
        %2650 = vmatprep.mubr.bf16.mxu0 0
        %2651 = vmatmul.mubr.bf16.gmra.mxu0 %v2447
        %v2652 = vpop.f32.mrf.mxu0
        %v2653 = vadd.f32 %v2472, %v2652
        %v2654 = vpop.f32.mrf.mxu0
        %v2655 = vpop.f32.mrf.mxu0
        %v2656 = vadd.f32 %v2472, %v2655
        %v2657 = vpop.f32.mrf.mxu0
        %2658 = vmatprep.mubr.bf16.mxu0 0
        %2659 = vmatmul.mubr.bf16.gmra.mxu0 %v2448
        %v2660 = vpop.f32.mrf.mxu0
        %v2661 = vadd.f32 %v2472, %v2660
        %v2662 = vpop.f32.mrf.mxu0
        %v2663 = vpop.f32.mrf.mxu0
        %v2664 = vadd.f32 %v2472, %v2663
        %v2665 = vpop.f32.mrf.mxu0
        %2666 = vmatprep.mubr.bf16.mxu0 0
        %2667 = vmatmul.mubr.bf16.gmra.mxu0 %v2449
        %v2668 = vpop.f32.mrf.mxu0
        %v2669 = vadd.f32 %v2472, %v2668
        %v2670 = vpop.f32.mrf.mxu0
        %v2671 = vpop.f32.mrf.mxu0
        %v2672 = vadd.f32 %v2472, %v2671
        %v2673 = vpop.f32.mrf.mxu0
        %2674 = vmatprep.mubr.bf16.mxu0 0
        %2675 = vmatmul.mubr.bf16.gmra.mxu0 %v2450
        %v2676 = vpop.f32.mrf.mxu0
        %v2677 = vadd.f32 %v2472, %v2676
        %v2678 = vpop.f32.mrf.mxu0
        %v2679 = vpop.f32.mrf.mxu0
        %v2680 = vadd.f32 %v2472, %v2679
        %v2681 = vpop.f32.mrf.mxu0
        %2682 = vdwg.mxu0
        %v2683 = vmax.f32 %v2557, 0.0
        %v2684 = vmax.f32 %v2560, 0.0
        %v2685 = vmax.f32 %v2565, 0.0
        %v2686 = vmax.f32 %v2568, 0.0
        %v2687 = vmax.f32 %v2573, 0.0
        %v2688 = vmax.f32 %v2576, 0.0
        %v2689 = vmax.f32 %v2581, 0.0
        %v2690 = vmax.f32 %v2584, 0.0
        %v2691 = vmax.f32 %v2589, 0.0
        %v2692 = vmax.f32 %v2592, 0.0
        %v2693 = vmax.f32 %v2597, 0.0
        %v2694 = vmax.f32 %v2600, 0.0
        %v2695 = vmax.f32 %v2605, 0.0
        %v2696 = vmax.f32 %v2608, 0.0
        %v2697 = vmax.f32 %v2613, 0.0
        %v2698 = vmax.f32 %v2616, 0.0
        %v2699 = vmax.f32 %v2621, 0.0
        %v2700 = vmax.f32 %v2624, 0.0
        %v2701 = vmax.f32 %v2629, 0.0
        %v2702 = vmax.f32 %v2632, 0.0
        %v2703 = vmax.f32 %v2637, 0.0
        %v2704 = vmax.f32 %v2640, 0.0
        %v2705 = vmax.f32 %v2645, 0.0
        %v2706 = vmax.f32 %v2648, 0.0
        %v2707 = vmax.f32 %v2653, 0.0
        %v2708 = vmax.f32 %v2656, 0.0
        %v2709 = vmax.f32 %v2661, 0.0
        %v2710 = vmax.f32 %v2664, 0.0
        %v2711 = vmax.f32 %v2669, 0.0
        %v2712 = vmax.f32 %v2672, 0.0
        %v2713 = vmax.f32 %v2677, 0.0
        %v2714 = vmax.f32 %v2680, 0.0
        %v2715 = vpack.c.bf16 %v2684, %v2683
        %v2716 = vpack.c.bf16 %v2686, %v2685
        %v2717 = vpack.c.bf16 %v2688, %v2687
        %v2718 = vpack.c.bf16 %v2690, %v2689
        %v2719 = vpack.c.bf16 %v2692, %v2691
        %v2720 = vpack.c.bf16 %v2694, %v2693
        %v2721 = vpack.c.bf16 %v2696, %v2695
        %v2722 = vpack.c.bf16 %v2698, %v2697
        %v2723 = vpack.c.bf16 %v2700, %v2699
        %v2724 = vpack.c.bf16 %v2702, %v2701
        %v2725 = vpack.c.bf16 %v2704, %v2703
        %v2726 = vpack.c.bf16 %v2706, %v2705
        %v2727 = vpack.c.bf16 %v2708, %v2707
        %v2728 = vpack.c.bf16 %v2710, %v2709
        %v2729 = vpack.c.bf16 %v2712, %v2711
        %v2730 = vpack.c.bf16 %v2714, %v2713
        %v2731 = vld [vmem:[%s7] sm:$0xff]
        %v2732 = vld [vmem:[%s7 + $0x8] sm:$0xff]
        %v2733 = vld [vmem:[%s7 + $0x10] sm:$0xff]
        %v2734 = vld [vmem:[%s7 + $0x18] sm:$0xff]
        %v2735 = vld [vmem:[%s7 + $0x20] sm:$0xf]
        %v2736 = vld [vmem:[%s7 + $0x24] sm:$0xff]
        %v2737 = vld [vmem:[%s7 + $0x2c] sm:$0xff]
        %v2738 = vld [vmem:[%s7 + $0x34] sm:$0xff]
        %v2739 = vld [vmem:[%s7 + $0x3c] sm:$0xff]
        %v2740 = vld [vmem:[%s7 + $0x44] sm:$0xf]
        %v2741 = vld [vmem:[%s7 + $0x48] sm:$0xff]
        %v2742 = vld [vmem:[%s7 + $0x50] sm:$0xff]
        %v2743 = vld [vmem:[%s7 + $0x58] sm:$0xff]
        %v2744 = vld [vmem:[%s7 + $0x60] sm:$0xff]
        %v2745 = vld [vmem:[%s7 + $0x68] sm:$0xf]
        %v2746 = vld [vmem:[%s7 + $0x6c] sm:$0xff]
        %v2747 = vld [vmem:[%s7 + $0x74] sm:$0xff]
        %v2748 = vld [vmem:[%s7 + $0x7c] sm:$0xff]
        %v2749 = vld [vmem:[%s7 + $0x84] sm:$0xff]
        %v2750 = vld [vmem:[%s7 + $0x8c] sm:$0xf]
        %v2751 = vld [vmem:[%s7 + $0x90] sm:$0xff]
        %v2752 = vld [vmem:[%s7 + $0x98] sm:$0xff]
        %v2753 = vld [vmem:[%s7 + $0xa0] sm:$0xff]
        %v2754 = vld [vmem:[%s7 + $0xa8] sm:$0xff]
        %v2755 = vld [vmem:[%s7 + $0xb0] sm:$0xf]
        %v2756 = vld [vmem:[%s7 + $0xb4] sm:$0xff]
        %v2757 = vld [vmem:[%s7 + $0xbc] sm:$0xff]
        %v2758 = vld [vmem:[%s7 + $0xc4] sm:$0xff]
        %v2759 = vld [vmem:[%s7 + $0xcc] sm:$0xff]
        %v2760 = vld [vmem:[%s7 + $0xd4] sm:$0xf]
        %v2761 = vld [vmem:[%s7 + $0xd8] sm:$0xff]
        %v2762 = vld [vmem:[%s7 + $0xe0] sm:$0xff]
        %v2763 = vld [vmem:[%s7 + $0xe8] sm:$0xff]
        %v2764 = vld [vmem:[%s7 + $0xf0] sm:$0xff]
        %v2765 = vld [vmem:[%s7 + $0xf8] sm:$0xf]
        %v2766 = vld [vmem:[%s7 + $0xfc] sm:$0xff]
        %v2767 = vld [vmem:[%s7 + $0x104] sm:$0xff]
        %v2768 = vld [vmem:[%s7 + $0x10c] sm:$0xff]
        %v2769 = vld [vmem:[%s7 + $0x114] sm:$0xff]
        %v2770 = vld [vmem:[%s7 + $0x11c] sm:$0xf]
        %v2771 = vld [vmem:[%s7 + $0x120] sm:$0xff]
        %v2772 = vld [vmem:[%s7 + $0x128] sm:$0xff]
        %v2773 = vld [vmem:[%s7 + $0x130] sm:$0xff]
        %v2774 = vld [vmem:[%s7 + $0x138] sm:$0xff]
        %v2775 = vld [vmem:[%s7 + $0x140] sm:$0xf]
        %v2776 = vld [vmem:[%s7 + $0x144] sm:$0xff]
        %v2777 = vld [vmem:[%s7 + $0x14c] sm:$0xff]
        %v2778 = vld [vmem:[%s7 + $0x154] sm:$0xff]
        %v2779 = vld [vmem:[%s7 + $0x15c] sm:$0xff]
        %v2780 = vld [vmem:[%s7 + $0x164] sm:$0xf]
        %v2781 = vld [vmem:[%s7 + $0x168] sm:$0xff]
        %v2782 = vld [vmem:[%s7 + $0x170] sm:$0xff]
        %v2783 = vld [vmem:[%s7 + $0x178] sm:$0xff]
        %v2784 = vld [vmem:[%s7 + $0x180] sm:$0xff]
        %v2785 = vld [vmem:[%s7 + $0x188] sm:$0xf]
        %v2786 = vld [vmem:[%s7 + $0x18c] sm:$0xff]
        %v2787 = vld [vmem:[%s7 + $0x194] sm:$0xff]
        %v2788 = vld [vmem:[%s7 + $0x19c] sm:$0xff]
        %v2789 = vld [vmem:[%s7 + $0x1a4] sm:$0xff]
        %v2790 = vld [vmem:[%s7 + $0x1ac] sm:$0xf]
        %v2791 = vld [vmem:[%s7 + $0x1b0] sm:$0xff]
        %v2792 = vld [vmem:[%s7 + $0x1b8] sm:$0xff]
        %v2793 = vld [vmem:[%s7 + $0x1c0] sm:$0xff]
        %v2794 = vld [vmem:[%s7 + $0x1c8] sm:$0xff]
        %v2795 = vld [vmem:[%s7 + $0x1d0] sm:$0xf]
        %v2796 = vld [vmem:[%s7 + $0x1d4] sm:$0xff]
        %v2797 = vld [vmem:[%s7 + $0x1dc] sm:$0xff]
        %v2798 = vld [vmem:[%s7 + $0x1e4] sm:$0xff]
        %v2799 = vld [vmem:[%s7 + $0x1ec] sm:$0xff]
        %v2800 = vld [vmem:[%s7 + $0x1f4] sm:$0xf]
        %v2801 = vld [vmem:[%s7 + $0x1f8] sm:$0xff]
        %v2802 = vld [vmem:[%s7 + $0x200] sm:$0xff]
        %v2803 = vld [vmem:[%s7 + $0x208] sm:$0xff]
        %v2804 = vld [vmem:[%s7 + $0x210] sm:$0xff]
        %v2805 = vld [vmem:[%s7 + $0x218] sm:$0xf]
        %v2806 = vld [vmem:[%s7 + $0x21c] sm:$0xff]
        %v2807 = vld [vmem:[%s7 + $0x224] sm:$0xff]
        %v2808 = vld [vmem:[%s7 + $0x22c] sm:$0xff]
        %v2809 = vld [vmem:[%s7 + $0x234] sm:$0xff]
        %v2810 = vld [vmem:[%s7 + $0x23c] sm:$0xf]
        %v2811 = vld [vmem:[%s8] sm:$0xff]
        %v2812 = vld [vmem:[%s8 + $0x8] sm:$0x1]
        %v2815 = vlaneseq
        %v2816 = vshrl.u32 %v2815, 7
        %v2817 = vsub.s32 0, %v2816
        %v2818 = vrot.slane %v2811, %v2817
        %v2819 = vlaneseq
        %v2820 = vshrl.u32 %v2819, 7
        %v2821 = vsub.s32 1, %v2820
        %v2822 = vrot.slane %v2811, %v2821
        %v2823 = vlaneseq
        %v2824 = vshrl.u32 %v2823, 7
        %v2825 = vsub.s32 2, %v2824
        %v2826 = vrot.slane %v2811, %v2825
        %v2827 = vlaneseq
        %v2828 = vshrl.u32 %v2827, 7
        %v2829 = vsub.s32 3, %v2828
        %v2830 = vrot.slane %v2811, %v2829
        %v2831 = vlaneseq
        %v2832 = vshrl.u32 %v2831, 7
        %v2833 = vsub.s32 4, %v2832
        %v2834 = vrot.slane %v2811, %v2833
        %v2835 = vlaneseq
        %v2836 = vshrl.u32 %v2835, 7
        %v2837 = vsub.s32 5, %v2836
        %v2838 = vrot.slane %v2811, %v2837
        %v2839 = vlaneseq
        %v2840 = vshrl.u32 %v2839, 7
        %v2841 = vsub.s32 6, %v2840
        %v2842 = vrot.slane %v2811, %v2841
        %v2843 = vlaneseq
        %v2844 = vshrl.u32 %v2843, 7
        %v2845 = vsub.s32 7, %v2844
        %v2846 = vrot.slane %v2811, %v2845
        %v2847 = vlaneseq
        %v2848 = vshrl.u32 %v2847, 7
        %v2849 = vsub.s32 0, %v2848
        %v2850 = vrot.slane %v2812, %v2849
        %v2940 = vunpack.c.l.b16 %v2731
        %v2941 = vunpack.c.h.b16 %v2731
        %v2942 = vunpack.c.l.b16 %v2732
        %v2943 = vunpack.c.h.b16 %v2732
        %v2944 = vunpack.c.l.b16 %v2733
        %v2945 = vunpack.c.h.b16 %v2733
        %v2946 = vunpack.c.l.b16 %v2734
        %v2947 = vunpack.c.h.b16 %v2734
        %v2948 = vunpack.c.l.b16 %v2735
        %v2949 = vunpack.c.l.b16 %v2736
        %v2950 = vunpack.c.h.b16 %v2736
        %v2951 = vunpack.c.l.b16 %v2737
        %v2952 = vunpack.c.h.b16 %v2737
        %v2953 = vunpack.c.l.b16 %v2738
        %v2954 = vunpack.c.h.b16 %v2738
        %v2955 = vunpack.c.l.b16 %v2739
        %v2956 = vunpack.c.h.b16 %v2739
        %v2957 = vunpack.c.l.b16 %v2740
        %v2958 = vunpack.c.l.b16 %v2741
        %v2959 = vunpack.c.h.b16 %v2741
        %v2960 = vunpack.c.l.b16 %v2742
        %v2961 = vunpack.c.h.b16 %v2742
        %v2962 = vunpack.c.l.b16 %v2743
        %v2963 = vunpack.c.h.b16 %v2743
        %v2964 = vunpack.c.l.b16 %v2744
        %v2965 = vunpack.c.h.b16 %v2744
        %v2966 = vunpack.c.l.b16 %v2745
        %v2967 = vunpack.c.l.b16 %v2746
        %v2968 = vunpack.c.h.b16 %v2746
        %v2969 = vunpack.c.l.b16 %v2747
        %v2970 = vunpack.c.h.b16 %v2747
        %v2971 = vunpack.c.l.b16 %v2748
        %v2972 = vunpack.c.h.b16 %v2748
        %v2973 = vunpack.c.l.b16 %v2749
        %v2974 = vunpack.c.h.b16 %v2749
        %v2975 = vunpack.c.l.b16 %v2750
        %v2976 = vunpack.c.l.b16 %v2751
        %v2977 = vunpack.c.h.b16 %v2751
        %v2978 = vunpack.c.l.b16 %v2752
        %v2979 = vunpack.c.h.b16 %v2752
        %v2980 = vunpack.c.l.b16 %v2753
        %v2981 = vunpack.c.h.b16 %v2753
        %v2982 = vunpack.c.l.b16 %v2754
        %v2983 = vunpack.c.h.b16 %v2754
        %v2984 = vunpack.c.l.b16 %v2755
        %v2985 = vunpack.c.l.b16 %v2756
        %v2986 = vunpack.c.h.b16 %v2756
        %v2987 = vunpack.c.l.b16 %v2757
        %v2988 = vunpack.c.h.b16 %v2757
        %v2989 = vunpack.c.l.b16 %v2758
        %v2990 = vunpack.c.h.b16 %v2758
        %v2991 = vunpack.c.l.b16 %v2759
        %v2992 = vunpack.c.h.b16 %v2759
        %v2993 = vunpack.c.l.b16 %v2760
        %v2994 = vunpack.c.l.b16 %v2761
        %v2995 = vunpack.c.h.b16 %v2761
        %v2996 = vunpack.c.l.b16 %v2762
        %v2997 = vunpack.c.h.b16 %v2762
        %v2998 = vunpack.c.l.b16 %v2763
        %v2999 = vunpack.c.h.b16 %v2763
        %v3000 = vunpack.c.l.b16 %v2764
        %v3001 = vunpack.c.h.b16 %v2764
        %v3002 = vunpack.c.l.b16 %v2765
        %v3003 = vunpack.c.l.b16 %v2766
        %v3004 = vunpack.c.h.b16 %v2766
        %v3005 = vunpack.c.l.b16 %v2767
        %v3006 = vunpack.c.h.b16 %v2767
        %v3007 = vunpack.c.l.b16 %v2768
        %v3008 = vunpack.c.h.b16 %v2768
        %v3009 = vunpack.c.l.b16 %v2769
        %v3010 = vunpack.c.h.b16 %v2769
        %v3011 = vunpack.c.l.b16 %v2770
        %v3012 = vunpack.c.l.b16 %v2771
        %v3013 = vunpack.c.h.b16 %v2771
        %v3014 = vunpack.c.l.b16 %v2772
        %v3015 = vunpack.c.h.b16 %v2772
        %v3016 = vunpack.c.l.b16 %v2773
        %v3017 = vunpack.c.h.b16 %v2773
        %v3018 = vunpack.c.l.b16 %v2774
        %v3019 = vunpack.c.h.b16 %v2774
        %v3020 = vunpack.c.l.b16 %v2775
        %v3021 = vunpack.c.l.b16 %v2776
        %v3022 = vunpack.c.h.b16 %v2776
        %v3023 = vunpack.c.l.b16 %v2777
        %v3024 = vunpack.c.h.b16 %v2777
        %v3025 = vunpack.c.l.b16 %v2778
        %v3026 = vunpack.c.h.b16 %v2778
        %v3027 = vunpack.c.l.b16 %v2779
        %v3028 = vunpack.c.h.b16 %v2779
        %v3029 = vunpack.c.l.b16 %v2780
        %v3030 = vunpack.c.l.b16 %v2781
        %v3031 = vunpack.c.h.b16 %v2781
        %v3032 = vunpack.c.l.b16 %v2782
        %v3033 = vunpack.c.h.b16 %v2782
        %v3034 = vunpack.c.l.b16 %v2783
        %v3035 = vunpack.c.h.b16 %v2783
        %v3036 = vunpack.c.l.b16 %v2784
        %v3037 = vunpack.c.h.b16 %v2784
        %v3038 = vunpack.c.l.b16 %v2785
        %v3039 = vunpack.c.l.b16 %v2786
        %v3040 = vunpack.c.h.b16 %v2786
        %v3041 = vunpack.c.l.b16 %v2787
        %v3042 = vunpack.c.h.b16 %v2787
        %v3043 = vunpack.c.l.b16 %v2788
        %v3044 = vunpack.c.h.b16 %v2788
        %v3045 = vunpack.c.l.b16 %v2789
        %v3046 = vunpack.c.h.b16 %v2789
        %v3047 = vunpack.c.l.b16 %v2790
        %v3048 = vunpack.c.l.b16 %v2791
        %v3049 = vunpack.c.h.b16 %v2791
        %v3050 = vunpack.c.l.b16 %v2792
        %v3051 = vunpack.c.h.b16 %v2792
        %v3052 = vunpack.c.l.b16 %v2793
        %v3053 = vunpack.c.h.b16 %v2793
        %v3054 = vunpack.c.l.b16 %v2794
        %v3055 = vunpack.c.h.b16 %v2794
        %v3056 = vunpack.c.l.b16 %v2795
        %v3057 = vunpack.c.l.b16 %v2796
        %v3058 = vunpack.c.h.b16 %v2796
        %v3059 = vunpack.c.l.b16 %v2797
        %v3060 = vunpack.c.h.b16 %v2797
        %v3061 = vunpack.c.l.b16 %v2798
        %v3062 = vunpack.c.h.b16 %v2798
        %v3063 = vunpack.c.l.b16 %v2799
        %v3064 = vunpack.c.h.b16 %v2799
        %v3065 = vunpack.c.l.b16 %v2800
        %v3066 = vunpack.c.l.b16 %v2801
        %v3067 = vunpack.c.h.b16 %v2801
        %v3068 = vunpack.c.l.b16 %v2802
        %v3069 = vunpack.c.h.b16 %v2802
        %v3070 = vunpack.c.l.b16 %v2803
        %v3071 = vunpack.c.h.b16 %v2803
        %v3072 = vunpack.c.l.b16 %v2804
        %v3073 = vunpack.c.h.b16 %v2804
        %v3074 = vunpack.c.l.b16 %v2805
        %v3075 = vunpack.c.l.b16 %v2806
        %v3076 = vunpack.c.h.b16 %v2806
        %v3077 = vunpack.c.l.b16 %v2807
        %v3078 = vunpack.c.h.b16 %v2807
        %v3079 = vunpack.c.l.b16 %v2808
        %v3080 = vunpack.c.h.b16 %v2808
        %v3081 = vunpack.c.l.b16 %v2809
        %v3082 = vunpack.c.h.b16 %v2809
        %v3083 = vunpack.c.l.b16 %v2810
        %v3084 = vpack.c.b16 %v2949, %v2940
        %v3085 = vpack.c.b16 %v2950, %v2941
        %v3086 = vpack.c.b16 %v2951, %v2942
        %v3087 = vpack.c.b16 %v2952, %v2943
        %v3088 = vpack.c.b16 %v2953, %v2944
        %v3089 = vpack.c.b16 %v2954, %v2945
        %v3090 = vpack.c.b16 %v2955, %v2946
        %v3091 = vpack.c.b16 %v2956, %v2947
        %v3092 = vpack.c.b16 %v2957, %v2948
        %v3093 = vpack.c.b16 %v2967, %v2958
        %v3094 = vpack.c.b16 %v2968, %v2959
        %v3095 = vpack.c.b16 %v2969, %v2960
        %v3096 = vpack.c.b16 %v2970, %v2961
        %v3097 = vpack.c.b16 %v2971, %v2962
        %v3098 = vpack.c.b16 %v2972, %v2963
        %v3099 = vpack.c.b16 %v2973, %v2964
        %v3100 = vpack.c.b16 %v2974, %v2965
        %v3101 = vpack.c.b16 %v2975, %v2966
        %v3102 = vpack.c.b16 %v2985, %v2976
        %v3103 = vpack.c.b16 %v2986, %v2977
        %v3104 = vpack.c.b16 %v2987, %v2978
        %v3105 = vpack.c.b16 %v2988, %v2979
        %v3106 = vpack.c.b16 %v2989, %v2980
        %v3107 = vpack.c.b16 %v2990, %v2981
        %v3108 = vpack.c.b16 %v2991, %v2982
        %v3109 = vpack.c.b16 %v2992, %v2983
        %v3110 = vpack.c.b16 %v2993, %v2984
        %v3111 = vpack.c.b16 %v3003, %v2994
        %v3112 = vpack.c.b16 %v3004, %v2995
        %v3113 = vpack.c.b16 %v3005, %v2996
        %v3114 = vpack.c.b16 %v3006, %v2997
        %v3115 = vpack.c.b16 %v3007, %v2998
        %v3116 = vpack.c.b16 %v3008, %v2999
        %v3117 = vpack.c.b16 %v3009, %v3000
        %v3118 = vpack.c.b16 %v3010, %v3001
        %v3119 = vpack.c.b16 %v3011, %v3002
        %v3120 = vpack.c.b16 %v3021, %v3012
        %v3121 = vpack.c.b16 %v3022, %v3013
        %v3122 = vpack.c.b16 %v3023, %v3014
        %v3123 = vpack.c.b16 %v3024, %v3015
        %v3124 = vpack.c.b16 %v3025, %v3016
        %v3125 = vpack.c.b16 %v3026, %v3017
        %v3126 = vpack.c.b16 %v3027, %v3018
        %v3127 = vpack.c.b16 %v3028, %v3019
        %v3128 = vpack.c.b16 %v3029, %v3020
        %v3129 = vpack.c.b16 %v3039, %v3030
        %v3130 = vpack.c.b16 %v3040, %v3031
        %v3131 = vpack.c.b16 %v3041, %v3032
        %v3132 = vpack.c.b16 %v3042, %v3033
        %v3133 = vpack.c.b16 %v3043, %v3034
        %v3134 = vpack.c.b16 %v3044, %v3035
        %v3135 = vpack.c.b16 %v3045, %v3036
        %v3136 = vpack.c.b16 %v3046, %v3037
        %v3137 = vpack.c.b16 %v3047, %v3038
        %v3138 = vpack.c.b16 %v3057, %v3048
        %v3139 = vpack.c.b16 %v3058, %v3049
        %v3140 = vpack.c.b16 %v3059, %v3050
        %v3141 = vpack.c.b16 %v3060, %v3051
        %v3142 = vpack.c.b16 %v3061, %v3052
        %v3143 = vpack.c.b16 %v3062, %v3053
        %v3144 = vpack.c.b16 %v3063, %v3054
        %v3145 = vpack.c.b16 %v3064, %v3055
        %v3146 = vpack.c.b16 %v3065, %v3056
        %v3147 = vpack.c.b16 %v3075, %v3066
        %v3148 = vpack.c.b16 %v3076, %v3067
        %v3149 = vpack.c.b16 %v3077, %v3068
        %v3150 = vpack.c.b16 %v3078, %v3069
        %v3151 = vpack.c.b16 %v3079, %v3070
        %v3152 = vpack.c.b16 %v3080, %v3071
        %v3153 = vpack.c.b16 %v3081, %v3072
        %v3154 = vpack.c.b16 %v3082, %v3073
        %v3155 = vpack.c.b16 %v3083, %v3074
        %3228 = vmatprep.subr.bf16.mxu0 %v3148
        %3229 = vmatpush1.bf16.msra.mxu0 %v3147
        %3230 = vmatprep.subr.bf16.mxu0 %v3139
        %3231 = vmatpush1.bf16.msra.mxu0 %v3138
        %3232 = vmatprep.subr.bf16.mxu0 %v3130
        %3233 = vmatpush1.bf16.msra.mxu0 %v3129
        %3234 = vmatprep.subr.bf16.mxu0 %v3121
        %3235 = vmatpush1.bf16.msra.mxu0 %v3120
        %3236 = vmatprep.subr.bf16.mxu0 %v3112
        %3237 = vmatpush1.bf16.msra.mxu0 %v3111
        %3238 = vmatprep.subr.bf16.mxu0 %v3103
        %3239 = vmatpush1.bf16.msra.mxu0 %v3102
        %3240 = vmatprep.subr.bf16.mxu0 %v3094
        %3241 = vmatpush1.bf16.msra.mxu0 %v3093
        %3242 = vmatprep.subr.bf16.mxu0 %v3085
        %3243 = vmatpush1.bf16.msra.mxu0 %v3084
        %3244 = vmatprep.subr.bf16.mxu0 0
        %3245 = vmatpush2.bf16.msra.mxu0 0
        %3246 = vmatprep.subr.bf16.mxu0 0
        %3247 = vmatpush2.bf16.msra.mxu0 0
        %3248 = vmatprep.subr.bf16.mxu0 0
        %3249 = vmatpush2.bf16.msra.mxu0 0
        %3250 = vmatprep.subr.bf16.mxu0 0
        %3251 = vmatpush2.bf16.msra.mxu0 0
        %3252 = vmatprep.subr.bf16.mxu0 0
        %3253 = vmatpush2.bf16.msra.mxu0 0
        %3254 = vmatprep.subr.bf16.mxu0 0
        %3255 = vmatpush2.bf16.msra.mxu0 0
        %3256 = vmatprep.subr.bf16.mxu0 0
        %3257 = vmatpush2.bf16.msra.mxu0 0
        %3258 = vmatprep.subr.bf16.mxu0 0
        %3259 = vmatpush2.bf16.msra.mxu0 0
        %3260 = vmatprep.mubr.bf16.mxu0 0
        %3261 = vmatmul.mubr.bf16.gmra.mxu0 %v2715
        %v3262 = vpop.f32.mrf.mxu0
        %v3263 = vadd.f32 %v2818, %v3262
        %v3264 = vpop.f32.mrf.mxu0
        %v3265 = vadd.f32 %v2822, %v3264
        %v3266 = vpop.f32.mrf.mxu0
        %v3267 = vadd.f32 %v2818, %v3266
        %v3268 = vpop.f32.mrf.mxu0
        %v3269 = vadd.f32 %v2822, %v3268
        %3270 = vmatprep.mubr.bf16.mxu0 0
        %3271 = vmatmul.mubr.bf16.gmra.mxu0 %v2716
        %v3272 = vpop.f32.mrf.mxu0
        %v3273 = vadd.f32 %v2818, %v3272
        %v3274 = vpop.f32.mrf.mxu0
        %v3275 = vadd.f32 %v2822, %v3274
        %v3276 = vpop.f32.mrf.mxu0
        %v3277 = vadd.f32 %v2818, %v3276
        %v3278 = vpop.f32.mrf.mxu0
        %v3279 = vadd.f32 %v2822, %v3278
        %3280 = vmatprep.mubr.bf16.mxu0 0
        %3281 = vmatmul.mubr.bf16.gmra.mxu0 %v2717
        %v3282 = vpop.f32.mrf.mxu0
        %v3283 = vadd.f32 %v2818, %v3282
        %v3284 = vpop.f32.mrf.mxu0
        %v3285 = vadd.f32 %v2822, %v3284
        %v3286 = vpop.f32.mrf.mxu0
        %v3287 = vadd.f32 %v2818, %v3286
        %v3288 = vpop.f32.mrf.mxu0
        %v3289 = vadd.f32 %v2822, %v3288
        %3290 = vmatprep.mubr.bf16.mxu0 0
        %3291 = vmatmul.mubr.bf16.gmra.mxu0 %v2718
        %v3292 = vpop.f32.mrf.mxu0
        %v3293 = vadd.f32 %v2818, %v3292
        %v3294 = vpop.f32.mrf.mxu0
        %v3295 = vadd.f32 %v2822, %v3294
        %v3296 = vpop.f32.mrf.mxu0
        %v3297 = vadd.f32 %v2818, %v3296
        %v3298 = vpop.f32.mrf.mxu0
        %v3299 = vadd.f32 %v2822, %v3298
        %3300 = vmatprep.mubr.bf16.mxu0 0
        %3301 = vmatmul.mubr.bf16.gmra.mxu0 %v2719
        %v3302 = vpop.f32.mrf.mxu0
        %v3303 = vadd.f32 %v2818, %v3302
        %v3304 = vpop.f32.mrf.mxu0
        %v3305 = vadd.f32 %v2822, %v3304
        %v3306 = vpop.f32.mrf.mxu0
        %v3307 = vadd.f32 %v2818, %v3306
        %v3308 = vpop.f32.mrf.mxu0
        %v3309 = vadd.f32 %v2822, %v3308
        %3310 = vmatprep.mubr.bf16.mxu0 0
        %3311 = vmatmul.mubr.bf16.gmra.mxu0 %v2720
        %v3312 = vpop.f32.mrf.mxu0
        %v3313 = vadd.f32 %v2818, %v3312
        %v3314 = vpop.f32.mrf.mxu0
        %v3315 = vadd.f32 %v2822, %v3314
        %v3316 = vpop.f32.mrf.mxu0
        %v3317 = vadd.f32 %v2818, %v3316
        %v3318 = vpop.f32.mrf.mxu0
        %v3319 = vadd.f32 %v2822, %v3318
        %3320 = vmatprep.mubr.bf16.mxu0 0
        %3321 = vmatmul.mubr.bf16.gmra.mxu0 %v2721
        %v3322 = vpop.f32.mrf.mxu0
        %v3323 = vadd.f32 %v2818, %v3322
        %v3324 = vpop.f32.mrf.mxu0
        %v3325 = vadd.f32 %v2822, %v3324
        %v3326 = vpop.f32.mrf.mxu0
        %v3327 = vadd.f32 %v2818, %v3326
        %v3328 = vpop.f32.mrf.mxu0
        %v3329 = vadd.f32 %v2822, %v3328
        %3330 = vmatprep.mubr.bf16.mxu0 0
        %3331 = vmatmul.mubr.bf16.gmra.mxu0 %v2722
        %v3332 = vpop.f32.mrf.mxu0
        %v3333 = vadd.f32 %v2818, %v3332
        %v3334 = vpop.f32.mrf.mxu0
        %v3335 = vadd.f32 %v2822, %v3334
        %v3336 = vpop.f32.mrf.mxu0
        %v3337 = vadd.f32 %v2818, %v3336
        %v3338 = vpop.f32.mrf.mxu0
        %v3339 = vadd.f32 %v2822, %v3338
        %3340 = vmatprep.mubr.bf16.mxu0 0
        %3341 = vmatmul.mubr.bf16.gmra.mxu0 %v2723
        %v3342 = vpop.f32.mrf.mxu0
        %v3343 = vadd.f32 %v2818, %v3342
        %v3344 = vpop.f32.mrf.mxu0
        %v3345 = vadd.f32 %v2822, %v3344
        %v3346 = vpop.f32.mrf.mxu0
        %v3347 = vadd.f32 %v2818, %v3346
        %v3348 = vpop.f32.mrf.mxu0
        %v3349 = vadd.f32 %v2822, %v3348
        %3350 = vmatprep.mubr.bf16.mxu0 0
        %3351 = vmatmul.mubr.bf16.gmra.mxu0 %v2724
        %v3352 = vpop.f32.mrf.mxu0
        %v3353 = vadd.f32 %v2818, %v3352
        %v3354 = vpop.f32.mrf.mxu0
        %v3355 = vadd.f32 %v2822, %v3354
        %v3356 = vpop.f32.mrf.mxu0
        %v3357 = vadd.f32 %v2818, %v3356
        %v3358 = vpop.f32.mrf.mxu0
        %v3359 = vadd.f32 %v2822, %v3358
        %3360 = vmatprep.mubr.bf16.mxu0 0
        %3361 = vmatmul.mubr.bf16.gmra.mxu0 %v2725
        %v3362 = vpop.f32.mrf.mxu0
        %v3363 = vadd.f32 %v2818, %v3362
        %v3364 = vpop.f32.mrf.mxu0
        %v3365 = vadd.f32 %v2822, %v3364
        %v3366 = vpop.f32.mrf.mxu0
        %v3367 = vadd.f32 %v2818, %v3366
        %v3368 = vpop.f32.mrf.mxu0
        %v3369 = vadd.f32 %v2822, %v3368
        %3370 = vmatprep.mubr.bf16.mxu0 0
        %3371 = vmatmul.mubr.bf16.gmra.mxu0 %v2726
        %v3372 = vpop.f32.mrf.mxu0
        %v3373 = vadd.f32 %v2818, %v3372
        %v3374 = vpop.f32.mrf.mxu0
        %v3375 = vadd.f32 %v2822, %v3374
        %v3376 = vpop.f32.mrf.mxu0
        %v3377 = vadd.f32 %v2818, %v3376
        %v3378 = vpop.f32.mrf.mxu0
        %v3379 = vadd.f32 %v2822, %v3378
        %3380 = vmatprep.mubr.bf16.mxu0 0
        %3381 = vmatmul.mubr.bf16.gmra.mxu0 %v2727
        %v3382 = vpop.f32.mrf.mxu0
        %v3383 = vadd.f32 %v2818, %v3382
        %v3384 = vpop.f32.mrf.mxu0
        %v3385 = vadd.f32 %v2822, %v3384
        %v3386 = vpop.f32.mrf.mxu0
        %v3387 = vadd.f32 %v2818, %v3386
        %v3388 = vpop.f32.mrf.mxu0
        %v3389 = vadd.f32 %v2822, %v3388
        %3390 = vmatprep.mubr.bf16.mxu0 0
        %3391 = vmatmul.mubr.bf16.gmra.mxu0 %v2728
        %v3392 = vpop.f32.mrf.mxu0
        %v3393 = vadd.f32 %v2818, %v3392
        %v3394 = vpop.f32.mrf.mxu0
        %v3395 = vadd.f32 %v2822, %v3394
        %v3396 = vpop.f32.mrf.mxu0
        %v3397 = vadd.f32 %v2818, %v3396
        %v3398 = vpop.f32.mrf.mxu0
        %v3399 = vadd.f32 %v2822, %v3398
        %3400 = vmatprep.mubr.bf16.mxu0 0
        %3401 = vmatmul.mubr.bf16.gmra.mxu0 %v2729
        %v3402 = vpop.f32.mrf.mxu0
        %v3403 = vadd.f32 %v2818, %v3402
        %v3404 = vpop.f32.mrf.mxu0
        %v3405 = vadd.f32 %v2822, %v3404
        %v3406 = vpop.f32.mrf.mxu0
        %v3407 = vadd.f32 %v2818, %v3406
        %v3408 = vpop.f32.mrf.mxu0
        %v3409 = vadd.f32 %v2822, %v3408
        %3410 = vmatprep.mubr.bf16.mxu0 0
        %3411 = vmatmul.mubr.bf16.gmra.mxu0 %v2730
        %v3412 = vpop.f32.mrf.mxu0
        %v3413 = vadd.f32 %v2818, %v3412
        %v3414 = vpop.f32.mrf.mxu0
        %v3415 = vadd.f32 %v2822, %v3414
        %v3416 = vpop.f32.mrf.mxu0
        %v3417 = vadd.f32 %v2818, %v3416
        %v3418 = vpop.f32.mrf.mxu0
        %v3419 = vadd.f32 %v2822, %v3418
        %3420 = vdwg.mxu0
        %3421 = vmatprep.subr.bf16.mxu0 %v3150
        %3422 = vmatpush1.bf16.msra.mxu0 %v3149
        %3423 = vmatprep.subr.bf16.mxu0 %v3141
        %3424 = vmatpush1.bf16.msra.mxu0 %v3140
        %3425 = vmatprep.subr.bf16.mxu0 %v3132
        %3426 = vmatpush1.bf16.msra.mxu0 %v3131
        %3427 = vmatprep.subr.bf16.mxu0 %v3123
        %3428 = vmatpush1.bf16.msra.mxu0 %v3122
        %3429 = vmatprep.subr.bf16.mxu0 %v3114
        %3430 = vmatpush1.bf16.msra.mxu0 %v3113
        %3431 = vmatprep.subr.bf16.mxu0 %v3105
        %3432 = vmatpush1.bf16.msra.mxu0 %v3104
        %3433 = vmatprep.subr.bf16.mxu0 %v3096
        %3434 = vmatpush1.bf16.msra.mxu0 %v3095
        %3435 = vmatprep.subr.bf16.mxu0 %v3087
        %3436 = vmatpush1.bf16.msra.mxu0 %v3086
        %3437 = vmatprep.subr.bf16.mxu0 0
        %3438 = vmatpush2.bf16.msra.mxu0 0
        %3439 = vmatprep.subr.bf16.mxu0 0
        %3440 = vmatpush2.bf16.msra.mxu0 0
        %3441 = vmatprep.subr.bf16.mxu0 0
        %3442 = vmatpush2.bf16.msra.mxu0 0
        %3443 = vmatprep.subr.bf16.mxu0 0
        %3444 = vmatpush2.bf16.msra.mxu0 0
        %3445 = vmatprep.subr.bf16.mxu0 0
        %3446 = vmatpush2.bf16.msra.mxu0 0
        %3447 = vmatprep.subr.bf16.mxu0 0
        %3448 = vmatpush2.bf16.msra.mxu0 0
        %3449 = vmatprep.subr.bf16.mxu0 0
        %3450 = vmatpush2.bf16.msra.mxu0 0
        %3451 = vmatprep.subr.bf16.mxu0 0
        %3452 = vmatpush2.bf16.msra.mxu0 0
        %3453 = vmatprep.mubr.bf16.mxu0 0
        %3454 = vmatmul.mubr.bf16.gmra.mxu0 %v2715
        %v3455 = vpop.f32.mrf.mxu0
        %v3456 = vadd.f32 %v2826, %v3455
        %v3457 = vpop.f32.mrf.mxu0
        %v3458 = vadd.f32 %v2830, %v3457
        %v3459 = vpop.f32.mrf.mxu0
        %v3460 = vadd.f32 %v2826, %v3459
        %v3461 = vpop.f32.mrf.mxu0
        %v3462 = vadd.f32 %v2830, %v3461
        %3463 = vmatprep.mubr.bf16.mxu0 0
        %3464 = vmatmul.mubr.bf16.gmra.mxu0 %v2716
        %v3465 = vpop.f32.mrf.mxu0
        %v3466 = vadd.f32 %v2826, %v3465
        %v3467 = vpop.f32.mrf.mxu0
        %v3468 = vadd.f32 %v2830, %v3467
        %v3469 = vpop.f32.mrf.mxu0
        %v3470 = vadd.f32 %v2826, %v3469
        %v3471 = vpop.f32.mrf.mxu0
        %v3472 = vadd.f32 %v2830, %v3471
        %3473 = vmatprep.mubr.bf16.mxu0 0
        %3474 = vmatmul.mubr.bf16.gmra.mxu0 %v2717
        %v3475 = vpop.f32.mrf.mxu0
        %v3476 = vadd.f32 %v2826, %v3475
        %v3477 = vpop.f32.mrf.mxu0
        %v3478 = vadd.f32 %v2830, %v3477
        %v3479 = vpop.f32.mrf.mxu0
        %v3480 = vadd.f32 %v2826, %v3479
        %v3481 = vpop.f32.mrf.mxu0
        %v3482 = vadd.f32 %v2830, %v3481
        %3483 = vmatprep.mubr.bf16.mxu0 0
        %3484 = vmatmul.mubr.bf16.gmra.mxu0 %v2718
        %v3485 = vpop.f32.mrf.mxu0
        %v3486 = vadd.f32 %v2826, %v3485
        %v3487 = vpop.f32.mrf.mxu0
        %v3488 = vadd.f32 %v2830, %v3487
        %v3489 = vpop.f32.mrf.mxu0
        %v3490 = vadd.f32 %v2826, %v3489
        %v3491 = vpop.f32.mrf.mxu0
        %v3492 = vadd.f32 %v2830, %v3491
        %3493 = vmatprep.mubr.bf16.mxu0 0
        %3494 = vmatmul.mubr.bf16.gmra.mxu0 %v2719
        %v3495 = vpop.f32.mrf.mxu0
        %v3496 = vadd.f32 %v2826, %v3495
        %v3497 = vpop.f32.mrf.mxu0
        %v3498 = vadd.f32 %v2830, %v3497
        %v3499 = vpop.f32.mrf.mxu0
        %v3500 = vadd.f32 %v2826, %v3499
        %v3501 = vpop.f32.mrf.mxu0
        %v3502 = vadd.f32 %v2830, %v3501
        %3503 = vmatprep.mubr.bf16.mxu0 0
        %3504 = vmatmul.mubr.bf16.gmra.mxu0 %v2720
        %v3505 = vpop.f32.mrf.mxu0
        %v3506 = vadd.f32 %v2826, %v3505
        %v3507 = vpop.f32.mrf.mxu0
        %v3508 = vadd.f32 %v2830, %v3507
        %v3509 = vpop.f32.mrf.mxu0
        %v3510 = vadd.f32 %v2826, %v3509
        %v3511 = vpop.f32.mrf.mxu0
        %v3512 = vadd.f32 %v2830, %v3511
        %3513 = vmatprep.mubr.bf16.mxu0 0
        %3514 = vmatmul.mubr.bf16.gmra.mxu0 %v2721
        %v3515 = vpop.f32.mrf.mxu0
        %v3516 = vadd.f32 %v2826, %v3515
        %v3517 = vpop.f32.mrf.mxu0
        %v3518 = vadd.f32 %v2830, %v3517
        %v3519 = vpop.f32.mrf.mxu0
        %v3520 = vadd.f32 %v2826, %v3519
        %v3521 = vpop.f32.mrf.mxu0
        %v3522 = vadd.f32 %v2830, %v3521
        %3523 = vmatprep.mubr.bf16.mxu0 0
        %3524 = vmatmul.mubr.bf16.gmra.mxu0 %v2722
        %v3525 = vpop.f32.mrf.mxu0
        %v3526 = vadd.f32 %v2826, %v3525
        %v3527 = vpop.f32.mrf.mxu0
        %v3528 = vadd.f32 %v2830, %v3527
        %v3529 = vpop.f32.mrf.mxu0
        %v3530 = vadd.f32 %v2826, %v3529
        %v3531 = vpop.f32.mrf.mxu0
        %v3532 = vadd.f32 %v2830, %v3531
        %3533 = vmatprep.mubr.bf16.mxu0 0
        %3534 = vmatmul.mubr.bf16.gmra.mxu0 %v2723
        %v3535 = vpop.f32.mrf.mxu0
        %v3536 = vadd.f32 %v2826, %v3535
        %v3537 = vpop.f32.mrf.mxu0
        %v3538 = vadd.f32 %v2830, %v3537
        %v3539 = vpop.f32.mrf.mxu0
        %v3540 = vadd.f32 %v2826, %v3539
        %v3541 = vpop.f32.mrf.mxu0
        %v3542 = vadd.f32 %v2830, %v3541
        %3543 = vmatprep.mubr.bf16.mxu0 0
        %3544 = vmatmul.mubr.bf16.gmra.mxu0 %v2724
        %v3545 = vpop.f32.mrf.mxu0
        %v3546 = vadd.f32 %v2826, %v3545
        %v3547 = vpop.f32.mrf.mxu0
        %v3548 = vadd.f32 %v2830, %v3547
        %v3549 = vpop.f32.mrf.mxu0
        %v3550 = vadd.f32 %v2826, %v3549
        %v3551 = vpop.f32.mrf.mxu0
        %v3552 = vadd.f32 %v2830, %v3551
        %3553 = vmatprep.mubr.bf16.mxu0 0
        %3554 = vmatmul.mubr.bf16.gmra.mxu0 %v2725
        %v3555 = vpop.f32.mrf.mxu0
        %v3556 = vadd.f32 %v2826, %v3555
        %v3557 = vpop.f32.mrf.mxu0
        %v3558 = vadd.f32 %v2830, %v3557
        %v3559 = vpop.f32.mrf.mxu0
        %v3560 = vadd.f32 %v2826, %v3559
        %v3561 = vpop.f32.mrf.mxu0
        %v3562 = vadd.f32 %v2830, %v3561
        %3563 = vmatprep.mubr.bf16.mxu0 0
        %3564 = vmatmul.mubr.bf16.gmra.mxu0 %v2726
        %v3565 = vpop.f32.mrf.mxu0
        %v3566 = vadd.f32 %v2826, %v3565
        %v3567 = vpop.f32.mrf.mxu0
        %v3568 = vadd.f32 %v2830, %v3567
        %v3569 = vpop.f32.mrf.mxu0
        %v3570 = vadd.f32 %v2826, %v3569
        %v3571 = vpop.f32.mrf.mxu0
        %v3572 = vadd.f32 %v2830, %v3571
        %3573 = vmatprep.mubr.bf16.mxu0 0
        %3574 = vmatmul.mubr.bf16.gmra.mxu0 %v2727
        %v3575 = vpop.f32.mrf.mxu0
        %v3576 = vadd.f32 %v2826, %v3575
        %v3577 = vpop.f32.mrf.mxu0
        %v3578 = vadd.f32 %v2830, %v3577
        %v3579 = vpop.f32.mrf.mxu0
        %v3580 = vadd.f32 %v2826, %v3579
        %v3581 = vpop.f32.mrf.mxu0
        %v3582 = vadd.f32 %v2830, %v3581
        %3583 = vmatprep.mubr.bf16.mxu0 0
        %3584 = vmatmul.mubr.bf16.gmra.mxu0 %v2728
        %v3585 = vpop.f32.mrf.mxu0
        %v3586 = vadd.f32 %v2826, %v3585
        %v3587 = vpop.f32.mrf.mxu0
        %v3588 = vadd.f32 %v2830, %v3587
        %v3589 = vpop.f32.mrf.mxu0
        %v3590 = vadd.f32 %v2826, %v3589
        %v3591 = vpop.f32.mrf.mxu0
        %v3592 = vadd.f32 %v2830, %v3591
        %3593 = vmatprep.mubr.bf16.mxu0 0
        %3594 = vmatmul.mubr.bf16.gmra.mxu0 %v2729
        %v3595 = vpop.f32.mrf.mxu0
        %v3596 = vadd.f32 %v2826, %v3595
        %v3597 = vpop.f32.mrf.mxu0
        %v3598 = vadd.f32 %v2830, %v3597
        %v3599 = vpop.f32.mrf.mxu0
        %v3600 = vadd.f32 %v2826, %v3599
        %v3601 = vpop.f32.mrf.mxu0
        %v3602 = vadd.f32 %v2830, %v3601
        %3603 = vmatprep.mubr.bf16.mxu0 0
        %3604 = vmatmul.mubr.bf16.gmra.mxu0 %v2730
        %v3605 = vpop.f32.mrf.mxu0
        %v3606 = vadd.f32 %v2826, %v3605
        %v3607 = vpop.f32.mrf.mxu0
        %v3608 = vadd.f32 %v2830, %v3607
        %v3609 = vpop.f32.mrf.mxu0
        %v3610 = vadd.f32 %v2826, %v3609
        %v3611 = vpop.f32.mrf.mxu0
        %v3612 = vadd.f32 %v2830, %v3611
        %3613 = vdwg.mxu0
        %3614 = vmatprep.subr.bf16.mxu0 %v3152
        %3615 = vmatpush1.bf16.msra.mxu0 %v3151
        %3616 = vmatprep.subr.bf16.mxu0 %v3143
        %3617 = vmatpush1.bf16.msra.mxu0 %v3142
        %3618 = vmatprep.subr.bf16.mxu0 %v3134
        %3619 = vmatpush1.bf16.msra.mxu0 %v3133
        %3620 = vmatprep.subr.bf16.mxu0 %v3125
        %3621 = vmatpush1.bf16.msra.mxu0 %v3124
        %3622 = vmatprep.subr.bf16.mxu0 %v3116
        %3623 = vmatpush1.bf16.msra.mxu0 %v3115
        %3624 = vmatprep.subr.bf16.mxu0 %v3107
        %3625 = vmatpush1.bf16.msra.mxu0 %v3106
        %3626 = vmatprep.subr.bf16.mxu0 %v3098
        %3627 = vmatpush1.bf16.msra.mxu0 %v3097
        %3628 = vmatprep.subr.bf16.mxu0 %v3089
        %3629 = vmatpush1.bf16.msra.mxu0 %v3088
        %3630 = vmatprep.subr.bf16.mxu0 0
        %3631 = vmatpush2.bf16.msra.mxu0 0
        %3632 = vmatprep.subr.bf16.mxu0 0
        %3633 = vmatpush2.bf16.msra.mxu0 0
        %3634 = vmatprep.subr.bf16.mxu0 0
        %3635 = vmatpush2.bf16.msra.mxu0 0
        %3636 = vmatprep.subr.bf16.mxu0 0
        %3637 = vmatpush2.bf16.msra.mxu0 0
        %3638 = vmatprep.subr.bf16.mxu0 0
        %3639 = vmatpush2.bf16.msra.mxu0 0
        %3640 = vmatprep.subr.bf16.mxu0 0
        %3641 = vmatpush2.bf16.msra.mxu0 0
        %3642 = vmatprep.subr.bf16.mxu0 0
        %3643 = vmatpush2.bf16.msra.mxu0 0
        %3644 = vmatprep.subr.bf16.mxu0 0
        %3645 = vmatpush2.bf16.msra.mxu0 0
        %3646 = vmatprep.mubr.bf16.mxu0 0
        %3647 = vmatmul.mubr.bf16.gmra.mxu0 %v2715
        %v3648 = vpop.f32.mrf.mxu0
        %v3649 = vadd.f32 %v2834, %v3648
        %v3650 = vpop.f32.mrf.mxu0
        %v3651 = vadd.f32 %v2838, %v3650
        %v3652 = vpop.f32.mrf.mxu0
        %v3653 = vadd.f32 %v2834, %v3652
        %v3654 = vpop.f32.mrf.mxu0
        %v3655 = vadd.f32 %v2838, %v3654
        %3656 = vmatprep.mubr.bf16.mxu0 0
        %3657 = vmatmul.mubr.bf16.gmra.mxu0 %v2716
        %v3658 = vpop.f32.mrf.mxu0
        %v3659 = vadd.f32 %v2834, %v3658
        %v3660 = vpop.f32.mrf.mxu0
        %v3661 = vadd.f32 %v2838, %v3660
        %v3662 = vpop.f32.mrf.mxu0
        %v3663 = vadd.f32 %v2834, %v3662
        %v3664 = vpop.f32.mrf.mxu0
        %v3665 = vadd.f32 %v2838, %v3664
        %3666 = vmatprep.mubr.bf16.mxu0 0
        %3667 = vmatmul.mubr.bf16.gmra.mxu0 %v2717
        %v3668 = vpop.f32.mrf.mxu0
        %v3669 = vadd.f32 %v2834, %v3668
        %v3670 = vpop.f32.mrf.mxu0
        %v3671 = vadd.f32 %v2838, %v3670
        %v3672 = vpop.f32.mrf.mxu0
        %v3673 = vadd.f32 %v2834, %v3672
        %v3674 = vpop.f32.mrf.mxu0
        %v3675 = vadd.f32 %v2838, %v3674
        %3676 = vmatprep.mubr.bf16.mxu0 0
        %3677 = vmatmul.mubr.bf16.gmra.mxu0 %v2718
        %v3678 = vpop.f32.mrf.mxu0
        %v3679 = vadd.f32 %v2834, %v3678
        %v3680 = vpop.f32.mrf.mxu0
        %v3681 = vadd.f32 %v2838, %v3680
        %v3682 = vpop.f32.mrf.mxu0
        %v3683 = vadd.f32 %v2834, %v3682
        %v3684 = vpop.f32.mrf.mxu0
        %v3685 = vadd.f32 %v2838, %v3684
        %3686 = vmatprep.mubr.bf16.mxu0 0
        %3687 = vmatmul.mubr.bf16.gmra.mxu0 %v2719
        %v3688 = vpop.f32.mrf.mxu0
        %v3689 = vadd.f32 %v2834, %v3688
        %v3690 = vpop.f32.mrf.mxu0
        %v3691 = vadd.f32 %v2838, %v3690
        %v3692 = vpop.f32.mrf.mxu0
        %v3693 = vadd.f32 %v2834, %v3692
        %v3694 = vpop.f32.mrf.mxu0
        %v3695 = vadd.f32 %v2838, %v3694
        %3696 = vmatprep.mubr.bf16.mxu0 0
        %3697 = vmatmul.mubr.bf16.gmra.mxu0 %v2720
        %v3698 = vpop.f32.mrf.mxu0
        %v3699 = vadd.f32 %v2834, %v3698
        %v3700 = vpop.f32.mrf.mxu0
        %v3701 = vadd.f32 %v2838, %v3700
        %v3702 = vpop.f32.mrf.mxu0
        %v3703 = vadd.f32 %v2834, %v3702
        %v3704 = vpop.f32.mrf.mxu0
        %v3705 = vadd.f32 %v2838, %v3704
        %3706 = vmatprep.mubr.bf16.mxu0 0
        %3707 = vmatmul.mubr.bf16.gmra.mxu0 %v2721
        %v3708 = vpop.f32.mrf.mxu0
        %v3709 = vadd.f32 %v2834, %v3708
        %v3710 = vpop.f32.mrf.mxu0
        %v3711 = vadd.f32 %v2838, %v3710
        %v3712 = vpop.f32.mrf.mxu0
        %v3713 = vadd.f32 %v2834, %v3712
        %v3714 = vpop.f32.mrf.mxu0
        %v3715 = vadd.f32 %v2838, %v3714
        %3716 = vmatprep.mubr.bf16.mxu0 0
        %3717 = vmatmul.mubr.bf16.gmra.mxu0 %v2722
        %v3718 = vpop.f32.mrf.mxu0
        %v3719 = vadd.f32 %v2834, %v3718
        %v3720 = vpop.f32.mrf.mxu0
        %v3721 = vadd.f32 %v2838, %v3720
        %v3722 = vpop.f32.mrf.mxu0
        %v3723 = vadd.f32 %v2834, %v3722
        %v3724 = vpop.f32.mrf.mxu0
        %v3725 = vadd.f32 %v2838, %v3724
        %3726 = vmatprep.mubr.bf16.mxu0 0
        %3727 = vmatmul.mubr.bf16.gmra.mxu0 %v2723
        %v3728 = vpop.f32.mrf.mxu0
        %v3729 = vadd.f32 %v2834, %v3728
        %v3730 = vpop.f32.mrf.mxu0
        %v3731 = vadd.f32 %v2838, %v3730
        %v3732 = vpop.f32.mrf.mxu0
        %v3733 = vadd.f32 %v2834, %v3732
        %v3734 = vpop.f32.mrf.mxu0
        %v3735 = vadd.f32 %v2838, %v3734
        %3736 = vmatprep.mubr.bf16.mxu0 0
        %3737 = vmatmul.mubr.bf16.gmra.mxu0 %v2724
        %v3738 = vpop.f32.mrf.mxu0
        %v3739 = vadd.f32 %v2834, %v3738
        %v3740 = vpop.f32.mrf.mxu0
        %v3741 = vadd.f32 %v2838, %v3740
        %v3742 = vpop.f32.mrf.mxu0
        %v3743 = vadd.f32 %v2834, %v3742
        %v3744 = vpop.f32.mrf.mxu0
        %v3745 = vadd.f32 %v2838, %v3744
        %3746 = vmatprep.mubr.bf16.mxu0 0
        %3747 = vmatmul.mubr.bf16.gmra.mxu0 %v2725
        %v3748 = vpop.f32.mrf.mxu0
        %v3749 = vadd.f32 %v2834, %v3748
        %v3750 = vpop.f32.mrf.mxu0
        %v3751 = vadd.f32 %v2838, %v3750
        %v3752 = vpop.f32.mrf.mxu0
        %v3753 = vadd.f32 %v2834, %v3752
        %v3754 = vpop.f32.mrf.mxu0
        %v3755 = vadd.f32 %v2838, %v3754
        %3756 = vmatprep.mubr.bf16.mxu0 0
        %3757 = vmatmul.mubr.bf16.gmra.mxu0 %v2726
        %v3758 = vpop.f32.mrf.mxu0
        %v3759 = vadd.f32 %v2834, %v3758
        %v3760 = vpop.f32.mrf.mxu0
        %v3761 = vadd.f32 %v2838, %v3760
        %v3762 = vpop.f32.mrf.mxu0
        %v3763 = vadd.f32 %v2834, %v3762
        %v3764 = vpop.f32.mrf.mxu0
        %v3765 = vadd.f32 %v2838, %v3764
        %3766 = vmatprep.mubr.bf16.mxu0 0
        %3767 = vmatmul.mubr.bf16.gmra.mxu0 %v2727
        %v3768 = vpop.f32.mrf.mxu0
        %v3769 = vadd.f32 %v2834, %v3768
        %v3770 = vpop.f32.mrf.mxu0
        %v3771 = vadd.f32 %v2838, %v3770
        %v3772 = vpop.f32.mrf.mxu0
        %v3773 = vadd.f32 %v2834, %v3772
        %v3774 = vpop.f32.mrf.mxu0
        %v3775 = vadd.f32 %v2838, %v3774
        %3776 = vmatprep.mubr.bf16.mxu0 0
        %3777 = vmatmul.mubr.bf16.gmra.mxu0 %v2728
        %v3778 = vpop.f32.mrf.mxu0
        %v3779 = vadd.f32 %v2834, %v3778
        %v3780 = vpop.f32.mrf.mxu0
        %v3781 = vadd.f32 %v2838, %v3780
        %v3782 = vpop.f32.mrf.mxu0
        %v3783 = vadd.f32 %v2834, %v3782
        %v3784 = vpop.f32.mrf.mxu0
        %v3785 = vadd.f32 %v2838, %v3784
        %3786 = vmatprep.mubr.bf16.mxu0 0
        %3787 = vmatmul.mubr.bf16.gmra.mxu0 %v2729
        %v3788 = vpop.f32.mrf.mxu0
        %v3789 = vadd.f32 %v2834, %v3788
        %v3790 = vpop.f32.mrf.mxu0
        %v3791 = vadd.f32 %v2838, %v3790
        %v3792 = vpop.f32.mrf.mxu0
        %v3793 = vadd.f32 %v2834, %v3792
        %v3794 = vpop.f32.mrf.mxu0
        %v3795 = vadd.f32 %v2838, %v3794
        %3796 = vmatprep.mubr.bf16.mxu0 0
        %3797 = vmatmul.mubr.bf16.gmra.mxu0 %v2730
        %v3798 = vpop.f32.mrf.mxu0
        %v3799 = vadd.f32 %v2834, %v3798
        %v3800 = vpop.f32.mrf.mxu0
        %v3801 = vadd.f32 %v2838, %v3800
        %v3802 = vpop.f32.mrf.mxu0
        %v3803 = vadd.f32 %v2834, %v3802
        %v3804 = vpop.f32.mrf.mxu0
        %v3805 = vadd.f32 %v2838, %v3804
        %3806 = vdwg.mxu0
        %3807 = vmatprep.subr.bf16.mxu0 %v3154
        %3808 = vmatpush1.bf16.msra.mxu0 %v3153
        %3809 = vmatprep.subr.bf16.mxu0 %v3145
        %3810 = vmatpush1.bf16.msra.mxu0 %v3144
        %3811 = vmatprep.subr.bf16.mxu0 %v3136
        %3812 = vmatpush1.bf16.msra.mxu0 %v3135
        %3813 = vmatprep.subr.bf16.mxu0 %v3127
        %3814 = vmatpush1.bf16.msra.mxu0 %v3126
        %3815 = vmatprep.subr.bf16.mxu0 %v3118
        %3816 = vmatpush1.bf16.msra.mxu0 %v3117
        %3817 = vmatprep.subr.bf16.mxu0 %v3109
        %3818 = vmatpush1.bf16.msra.mxu0 %v3108
        %3819 = vmatprep.subr.bf16.mxu0 %v3100
        %3820 = vmatpush1.bf16.msra.mxu0 %v3099
        %3821 = vmatprep.subr.bf16.mxu0 %v3091
        %3822 = vmatpush1.bf16.msra.mxu0 %v3090
        %3823 = vmatprep.subr.bf16.mxu0 0
        %3824 = vmatpush2.bf16.msra.mxu0 0
        %3825 = vmatprep.subr.bf16.mxu0 0
        %3826 = vmatpush2.bf16.msra.mxu0 0
        %3827 = vmatprep.subr.bf16.mxu0 0
        %3828 = vmatpush2.bf16.msra.mxu0 0
        %3829 = vmatprep.subr.bf16.mxu0 0
        %3830 = vmatpush2.bf16.msra.mxu0 0
        %3831 = vmatprep.subr.bf16.mxu0 0
        %3832 = vmatpush2.bf16.msra.mxu0 0
        %3833 = vmatprep.subr.bf16.mxu0 0
        %3834 = vmatpush2.bf16.msra.mxu0 0
        %3835 = vmatprep.subr.bf16.mxu0 0
        %3836 = vmatpush2.bf16.msra.mxu0 0
        %3837 = vmatprep.subr.bf16.mxu0 0
        %3838 = vmatpush2.bf16.msra.mxu0 0
        %3839 = vmatprep.mubr.bf16.mxu0 0
        %3840 = vmatmul.mubr.bf16.gmra.mxu0 %v2715
        %v3841 = vpop.f32.mrf.mxu0
        %v3842 = vadd.f32 %v2842, %v3841
        %v3843 = vpop.f32.mrf.mxu0
        %v3844 = vadd.f32 %v2846, %v3843
        %v3845 = vpop.f32.mrf.mxu0
        %v3846 = vadd.f32 %v2842, %v3845
        %v3847 = vpop.f32.mrf.mxu0
        %v3848 = vadd.f32 %v2846, %v3847
        %3849 = vmatprep.mubr.bf16.mxu0 0
        %3850 = vmatmul.mubr.bf16.gmra.mxu0 %v2716
        %v3851 = vpop.f32.mrf.mxu0
        %v3852 = vadd.f32 %v2842, %v3851
        %v3853 = vpop.f32.mrf.mxu0
        %v3854 = vadd.f32 %v2846, %v3853
        %v3855 = vpop.f32.mrf.mxu0
        %v3856 = vadd.f32 %v2842, %v3855
        %v3857 = vpop.f32.mrf.mxu0
        %v3858 = vadd.f32 %v2846, %v3857
        %3859 = vmatprep.mubr.bf16.mxu0 0
        %3860 = vmatmul.mubr.bf16.gmra.mxu0 %v2717
        %v3861 = vpop.f32.mrf.mxu0
        %v3862 = vadd.f32 %v2842, %v3861
        %v3863 = vpop.f32.mrf.mxu0
        %v3864 = vadd.f32 %v2846, %v3863
        %v3865 = vpop.f32.mrf.mxu0
        %v3866 = vadd.f32 %v2842, %v3865
        %v3867 = vpop.f32.mrf.mxu0
        %v3868 = vadd.f32 %v2846, %v3867
        %3869 = vmatprep.mubr.bf16.mxu0 0
        %3870 = vmatmul.mubr.bf16.gmra.mxu0 %v2718
        %v3871 = vpop.f32.mrf.mxu0
        %v3872 = vadd.f32 %v2842, %v3871
        %v3873 = vpop.f32.mrf.mxu0
        %v3874 = vadd.f32 %v2846, %v3873
        %v3875 = vpop.f32.mrf.mxu0
        %v3876 = vadd.f32 %v2842, %v3875
        %v3877 = vpop.f32.mrf.mxu0
        %v3878 = vadd.f32 %v2846, %v3877
        %3879 = vmatprep.mubr.bf16.mxu0 0
        %3880 = vmatmul.mubr.bf16.gmra.mxu0 %v2719
        %v3881 = vpop.f32.mrf.mxu0
        %v3882 = vadd.f32 %v2842, %v3881
        %v3883 = vpop.f32.mrf.mxu0
        %v3884 = vadd.f32 %v2846, %v3883
        %v3885 = vpop.f32.mrf.mxu0
        %v3886 = vadd.f32 %v2842, %v3885
        %v3887 = vpop.f32.mrf.mxu0
        %v3888 = vadd.f32 %v2846, %v3887
        %3889 = vmatprep.mubr.bf16.mxu0 0
        %3890 = vmatmul.mubr.bf16.gmra.mxu0 %v2720
        %v3891 = vpop.f32.mrf.mxu0
        %v3892 = vadd.f32 %v2842, %v3891
        %v3893 = vpop.f32.mrf.mxu0
        %v3894 = vadd.f32 %v2846, %v3893
        %v3895 = vpop.f32.mrf.mxu0
        %v3896 = vadd.f32 %v2842, %v3895
        %v3897 = vpop.f32.mrf.mxu0
        %v3898 = vadd.f32 %v2846, %v3897
        %3899 = vmatprep.mubr.bf16.mxu0 0
        %3900 = vmatmul.mubr.bf16.gmra.mxu0 %v2721
        %v3901 = vpop.f32.mrf.mxu0
        %v3902 = vadd.f32 %v2842, %v3901
        %v3903 = vpop.f32.mrf.mxu0
        %v3904 = vadd.f32 %v2846, %v3903
        %v3905 = vpop.f32.mrf.mxu0
        %v3906 = vadd.f32 %v2842, %v3905
        %v3907 = vpop.f32.mrf.mxu0
        %v3908 = vadd.f32 %v2846, %v3907
        %3909 = vmatprep.mubr.bf16.mxu0 0
        %3910 = vmatmul.mubr.bf16.gmra.mxu0 %v2722
        %v3911 = vpop.f32.mrf.mxu0
        %v3912 = vadd.f32 %v2842, %v3911
        %v3913 = vpop.f32.mrf.mxu0
        %v3914 = vadd.f32 %v2846, %v3913
        %v3915 = vpop.f32.mrf.mxu0
        %v3916 = vadd.f32 %v2842, %v3915
        %v3917 = vpop.f32.mrf.mxu0
        %v3918 = vadd.f32 %v2846, %v3917
        %3919 = vmatprep.mubr.bf16.mxu0 0
        %3920 = vmatmul.mubr.bf16.gmra.mxu0 %v2723
        %v3921 = vpop.f32.mrf.mxu0
        %v3922 = vadd.f32 %v2842, %v3921
        %v3923 = vpop.f32.mrf.mxu0
        %v3924 = vadd.f32 %v2846, %v3923
        %v3925 = vpop.f32.mrf.mxu0
        %v3926 = vadd.f32 %v2842, %v3925
        %v3927 = vpop.f32.mrf.mxu0
        %v3928 = vadd.f32 %v2846, %v3927
        %3929 = vmatprep.mubr.bf16.mxu0 0
        %3930 = vmatmul.mubr.bf16.gmra.mxu0 %v2724
        %v3931 = vpop.f32.mrf.mxu0
        %v3932 = vadd.f32 %v2842, %v3931
        %v3933 = vpop.f32.mrf.mxu0
        %v3934 = vadd.f32 %v2846, %v3933
        %v3935 = vpop.f32.mrf.mxu0
        %v3936 = vadd.f32 %v2842, %v3935
        %v3937 = vpop.f32.mrf.mxu0
        %v3938 = vadd.f32 %v2846, %v3937
        %3939 = vmatprep.mubr.bf16.mxu0 0
        %3940 = vmatmul.mubr.bf16.gmra.mxu0 %v2725
        %v3941 = vpop.f32.mrf.mxu0
        %v3942 = vadd.f32 %v2842, %v3941
        %v3943 = vpop.f32.mrf.mxu0
        %v3944 = vadd.f32 %v2846, %v3943
        %v3945 = vpop.f32.mrf.mxu0
        %v3946 = vadd.f32 %v2842, %v3945
        %v3947 = vpop.f32.mrf.mxu0
        %v3948 = vadd.f32 %v2846, %v3947
        %3949 = vmatprep.mubr.bf16.mxu0 0
        %3950 = vmatmul.mubr.bf16.gmra.mxu0 %v2726
        %v3951 = vpop.f32.mrf.mxu0
        %v3952 = vadd.f32 %v2842, %v3951
        %v3953 = vpop.f32.mrf.mxu0
        %v3954 = vadd.f32 %v2846, %v3953
        %v3955 = vpop.f32.mrf.mxu0
        %v3956 = vadd.f32 %v2842, %v3955
        %v3957 = vpop.f32.mrf.mxu0
        %v3958 = vadd.f32 %v2846, %v3957
        %3959 = vmatprep.mubr.bf16.mxu0 0
        %3960 = vmatmul.mubr.bf16.gmra.mxu0 %v2727
        %v3961 = vpop.f32.mrf.mxu0
        %v3962 = vadd.f32 %v2842, %v3961
        %v3963 = vpop.f32.mrf.mxu0
        %v3964 = vadd.f32 %v2846, %v3963
        %v3965 = vpop.f32.mrf.mxu0
        %v3966 = vadd.f32 %v2842, %v3965
        %v3967 = vpop.f32.mrf.mxu0
        %v3968 = vadd.f32 %v2846, %v3967
        %3969 = vmatprep.mubr.bf16.mxu0 0
        %3970 = vmatmul.mubr.bf16.gmra.mxu0 %v2728
        %v3971 = vpop.f32.mrf.mxu0
        %v3972 = vadd.f32 %v2842, %v3971
        %v3973 = vpop.f32.mrf.mxu0
        %v3974 = vadd.f32 %v2846, %v3973
        %v3975 = vpop.f32.mrf.mxu0
        %v3976 = vadd.f32 %v2842, %v3975
        %v3977 = vpop.f32.mrf.mxu0
        %v3978 = vadd.f32 %v2846, %v3977
        %3979 = vmatprep.mubr.bf16.mxu0 0
        %3980 = vmatmul.mubr.bf16.gmra.mxu0 %v2729
        %v3981 = vpop.f32.mrf.mxu0
        %v3982 = vadd.f32 %v2842, %v3981
        %v3983 = vpop.f32.mrf.mxu0
        %v3984 = vadd.f32 %v2846, %v3983
        %v3985 = vpop.f32.mrf.mxu0
        %v3986 = vadd.f32 %v2842, %v3985
        %v3987 = vpop.f32.mrf.mxu0
        %v3988 = vadd.f32 %v2846, %v3987
        %3989 = vmatprep.mubr.bf16.mxu0 0
        %3990 = vmatmul.mubr.bf16.gmra.mxu0 %v2730
        %v3991 = vpop.f32.mrf.mxu0
        %v3992 = vadd.f32 %v2842, %v3991
        %v3993 = vpop.f32.mrf.mxu0
        %v3994 = vadd.f32 %v2846, %v3993
        %v3995 = vpop.f32.mrf.mxu0
        %v3996 = vadd.f32 %v2842, %v3995
        %v3997 = vpop.f32.mrf.mxu0
        %v3998 = vadd.f32 %v2846, %v3997
        %3999 = vdwg.mxu0
        %4000 = vmatprep.subr.bf16.mxu0 0
        %4001 = vmatpush1.bf16.msra.mxu0 %v3155
        %4002 = vmatprep.subr.bf16.mxu0 0
        %4003 = vmatpush1.bf16.msra.mxu0 %v3146
        %4004 = vmatprep.subr.bf16.mxu0 0
        %4005 = vmatpush1.bf16.msra.mxu0 %v3137
        %4006 = vmatprep.subr.bf16.mxu0 0
        %4007 = vmatpush1.bf16.msra.mxu0 %v3128
        %4008 = vmatprep.subr.bf16.mxu0 0
        %4009 = vmatpush1.bf16.msra.mxu0 %v3119
        %4010 = vmatprep.subr.bf16.mxu0 0
        %4011 = vmatpush1.bf16.msra.mxu0 %v3110
        %4012 = vmatprep.subr.bf16.mxu0 0
        %4013 = vmatpush1.bf16.msra.mxu0 %v3101
        %4014 = vmatprep.subr.bf16.mxu0 0
        %4015 = vmatpush1.bf16.msra.mxu0 %v3092
        %4016 = vmatprep.subr.bf16.mxu0 0
        %4017 = vmatpush2.bf16.msra.mxu0 0
        %4018 = vmatprep.subr.bf16.mxu0 0
        %4019 = vmatpush2.bf16.msra.mxu0 0
        %4020 = vmatprep.subr.bf16.mxu0 0
        %4021 = vmatpush2.bf16.msra.mxu0 0
        %4022 = vmatprep.subr.bf16.mxu0 0
        %4023 = vmatpush2.bf16.msra.mxu0 0
        %4024 = vmatprep.subr.bf16.mxu0 0
        %4025 = vmatpush2.bf16.msra.mxu0 0
        %4026 = vmatprep.subr.bf16.mxu0 0
        %4027 = vmatpush2.bf16.msra.mxu0 0
        %4028 = vmatprep.subr.bf16.mxu0 0
        %4029 = vmatpush2.bf16.msra.mxu0 0
        %4030 = vmatprep.subr.bf16.mxu0 0
        %4031 = vmatpush2.bf16.msra.mxu0 0
        %4032 = vmatprep.mubr.bf16.mxu0 0
        %4033 = vmatmul.mubr.bf16.gmra.mxu0 %v2715
        %v4034 = vpop.f32.mrf.mxu0
        %v4035 = vadd.f32 %v2850, %v4034
        %v4036 = vpop.f32.mrf.mxu0
        %v4037 = vpop.f32.mrf.mxu0
        %v4038 = vadd.f32 %v2850, %v4037
        %v4039 = vpop.f32.mrf.mxu0
        %4040 = vmatprep.mubr.bf16.mxu0 0
        %4041 = vmatmul.mubr.bf16.gmra.mxu0 %v2716
        %v4042 = vpop.f32.mrf.mxu0
        %v4043 = vadd.f32 %v2850, %v4042
        %v4044 = vpop.f32.mrf.mxu0
        %v4045 = vpop.f32.mrf.mxu0
        %v4046 = vadd.f32 %v2850, %v4045
        %v4047 = vpop.f32.mrf.mxu0
        %4048 = vmatprep.mubr.bf16.mxu0 0
        %4049 = vmatmul.mubr.bf16.gmra.mxu0 %v2717
        %v4050 = vpop.f32.mrf.mxu0
        %v4051 = vadd.f32 %v2850, %v4050
        %v4052 = vpop.f32.mrf.mxu0
        %v4053 = vpop.f32.mrf.mxu0
        %v4054 = vadd.f32 %v2850, %v4053
        %v4055 = vpop.f32.mrf.mxu0
        %4056 = vmatprep.mubr.bf16.mxu0 0
        %4057 = vmatmul.mubr.bf16.gmra.mxu0 %v2718
        %v4058 = vpop.f32.mrf.mxu0
        %v4059 = vadd.f32 %v2850, %v4058
        %v4060 = vpop.f32.mrf.mxu0
        %v4061 = vpop.f32.mrf.mxu0
        %v4062 = vadd.f32 %v2850, %v4061
        %v4063 = vpop.f32.mrf.mxu0
        %4064 = vmatprep.mubr.bf16.mxu0 0
        %4065 = vmatmul.mubr.bf16.gmra.mxu0 %v2719
        %v4066 = vpop.f32.mrf.mxu0
        %v4067 = vadd.f32 %v2850, %v4066
        %v4068 = vpop.f32.mrf.mxu0
        %v4069 = vpop.f32.mrf.mxu0
        %v4070 = vadd.f32 %v2850, %v4069
        %v4071 = vpop.f32.mrf.mxu0
        %4072 = vmatprep.mubr.bf16.mxu0 0
        %4073 = vmatmul.mubr.bf16.gmra.mxu0 %v2720
        %v4074 = vpop.f32.mrf.mxu0
        %v4075 = vadd.f32 %v2850, %v4074
        %v4076 = vpop.f32.mrf.mxu0
        %v4077 = vpop.f32.mrf.mxu0
        %v4078 = vadd.f32 %v2850, %v4077
        %v4079 = vpop.f32.mrf.mxu0
        %4080 = vmatprep.mubr.bf16.mxu0 0
        %4081 = vmatmul.mubr.bf16.gmra.mxu0 %v2721
        %v4082 = vpop.f32.mrf.mxu0
        %v4083 = vadd.f32 %v2850, %v4082
        %v4084 = vpop.f32.mrf.mxu0
        %v4085 = vpop.f32.mrf.mxu0
        %v4086 = vadd.f32 %v2850, %v4085
        %v4087 = vpop.f32.mrf.mxu0
        %4088 = vmatprep.mubr.bf16.mxu0 0
        %4089 = vmatmul.mubr.bf16.gmra.mxu0 %v2722
        %v4090 = vpop.f32.mrf.mxu0
        %v4091 = vadd.f32 %v2850, %v4090
        %v4092 = vpop.f32.mrf.mxu0
        %v4093 = vpop.f32.mrf.mxu0
        %v4094 = vadd.f32 %v2850, %v4093
        %v4095 = vpop.f32.mrf.mxu0
        %4096 = vmatprep.mubr.bf16.mxu0 0
        %4097 = vmatmul.mubr.bf16.gmra.mxu0 %v2723
        %v4098 = vpop.f32.mrf.mxu0
        %v4099 = vadd.f32 %v2850, %v4098
        %v4100 = vpop.f32.mrf.mxu0
        %v4101 = vpop.f32.mrf.mxu0
        %v4102 = vadd.f32 %v2850, %v4101
        %v4103 = vpop.f32.mrf.mxu0
        %4104 = vmatprep.mubr.bf16.mxu0 0
        %4105 = vmatmul.mubr.bf16.gmra.mxu0 %v2724
        %v4106 = vpop.f32.mrf.mxu0
        %v4107 = vadd.f32 %v2850, %v4106
        %v4108 = vpop.f32.mrf.mxu0
        %v4109 = vpop.f32.mrf.mxu0
        %v4110 = vadd.f32 %v2850, %v4109
        %v4111 = vpop.f32.mrf.mxu0
        %4112 = vmatprep.mubr.bf16.mxu0 0
        %4113 = vmatmul.mubr.bf16.gmra.mxu0 %v2725
        %v4114 = vpop.f32.mrf.mxu0
        %v4115 = vadd.f32 %v2850, %v4114
        %v4116 = vpop.f32.mrf.mxu0
        %v4117 = vpop.f32.mrf.mxu0
        %v4118 = vadd.f32 %v2850, %v4117
        %v4119 = vpop.f32.mrf.mxu0
        %4120 = vmatprep.mubr.bf16.mxu0 0
        %4121 = vmatmul.mubr.bf16.gmra.mxu0 %v2726
        %v4122 = vpop.f32.mrf.mxu0
        %v4123 = vadd.f32 %v2850, %v4122
        %v4124 = vpop.f32.mrf.mxu0
        %v4125 = vpop.f32.mrf.mxu0
        %v4126 = vadd.f32 %v2850, %v4125
        %v4127 = vpop.f32.mrf.mxu0
        %4128 = vmatprep.mubr.bf16.mxu0 0
        %4129 = vmatmul.mubr.bf16.gmra.mxu0 %v2727
        %v4130 = vpop.f32.mrf.mxu0
        %v4131 = vadd.f32 %v2850, %v4130
        %v4132 = vpop.f32.mrf.mxu0
        %v4133 = vpop.f32.mrf.mxu0
        %v4134 = vadd.f32 %v2850, %v4133
        %v4135 = vpop.f32.mrf.mxu0
        %4136 = vmatprep.mubr.bf16.mxu0 0
        %4137 = vmatmul.mubr.bf16.gmra.mxu0 %v2728
        %v4138 = vpop.f32.mrf.mxu0
        %v4139 = vadd.f32 %v2850, %v4138
        %v4140 = vpop.f32.mrf.mxu0
        %v4141 = vpop.f32.mrf.mxu0
        %v4142 = vadd.f32 %v2850, %v4141
        %v4143 = vpop.f32.mrf.mxu0
        %4144 = vmatprep.mubr.bf16.mxu0 0
        %4145 = vmatmul.mubr.bf16.gmra.mxu0 %v2729
        %v4146 = vpop.f32.mrf.mxu0
        %v4147 = vadd.f32 %v2850, %v4146
        %v4148 = vpop.f32.mrf.mxu0
        %v4149 = vpop.f32.mrf.mxu0
        %v4150 = vadd.f32 %v2850, %v4149
        %v4151 = vpop.f32.mrf.mxu0
        %4152 = vmatprep.mubr.bf16.mxu0 0
        %4153 = vmatmul.mubr.bf16.gmra.mxu0 %v2730
        %v4154 = vpop.f32.mrf.mxu0
        %v4155 = vadd.f32 %v2850, %v4154
        %v4156 = vpop.f32.mrf.mxu0
        %v4157 = vpop.f32.mrf.mxu0
        %v4158 = vadd.f32 %v2850, %v4157
        %v4159 = vpop.f32.mrf.mxu0
        %4160 = vdwg.mxu0
        %v4161 = vxor.u32 %v3263, 2147483648
        %v4162 = vxor.u32 %v3265, 2147483648
        %v4163 = vxor.u32 %v3456, 2147483648
        %v4164 = vxor.u32 %v3267, 2147483648
        %v4165 = vxor.u32 %v3269, 2147483648
        %v4166 = vxor.u32 %v3460, 2147483648
        %v4167 = vxor.u32 %v3273, 2147483648
        %v4168 = vxor.u32 %v3275, 2147483648
        %v4169 = vxor.u32 %v3466, 2147483648
        %v4170 = vxor.u32 %v3277, 2147483648
        %v4171 = vxor.u32 %v3279, 2147483648
        %v4172 = vxor.u32 %v3470, 2147483648
        %v4173 = vxor.u32 %v3283, 2147483648
        %v4174 = vxor.u32 %v3285, 2147483648
        %v4175 = vxor.u32 %v3476, 2147483648
        %v4176 = vxor.u32 %v3287, 2147483648
        %v4177 = vxor.u32 %v3289, 2147483648
        %v4178 = vxor.u32 %v3480, 2147483648
        %v4179 = vxor.u32 %v3293, 2147483648
        %v4180 = vxor.u32 %v3295, 2147483648
        %v4181 = vxor.u32 %v3486, 2147483648
        %v4182 = vxor.u32 %v3297, 2147483648
        %v4183 = vxor.u32 %v3299, 2147483648
        %v4184 = vxor.u32 %v3490, 2147483648
        %v4185 = vxor.u32 %v3303, 2147483648
        %v4186 = vxor.u32 %v3305, 2147483648
        %v4187 = vxor.u32 %v3496, 2147483648
        %v4188 = vxor.u32 %v3307, 2147483648
        %v4189 = vxor.u32 %v3309, 2147483648
        %v4190 = vxor.u32 %v3500, 2147483648
        %v4191 = vxor.u32 %v3313, 2147483648
        %v4192 = vxor.u32 %v3315, 2147483648
        %v4193 = vxor.u32 %v3506, 2147483648
        %v4194 = vxor.u32 %v3317, 2147483648
        %v4195 = vxor.u32 %v3319, 2147483648
        %v4196 = vxor.u32 %v3510, 2147483648
        %v4197 = vxor.u32 %v3323, 2147483648
        %v4198 = vxor.u32 %v3325, 2147483648
        %v4199 = vxor.u32 %v3516, 2147483648
        %v4200 = vxor.u32 %v3327, 2147483648
        %v4201 = vxor.u32 %v3329, 2147483648
        %v4202 = vxor.u32 %v3520, 2147483648
        %v4203 = vxor.u32 %v3333, 2147483648
        %v4204 = vxor.u32 %v3335, 2147483648
        %v4205 = vxor.u32 %v3526, 2147483648
        %v4206 = vxor.u32 %v3337, 2147483648
        %v4207 = vxor.u32 %v3339, 2147483648
        %v4208 = vxor.u32 %v3530, 2147483648
        %v4209 = vxor.u32 %v3343, 2147483648
        %v4210 = vxor.u32 %v3345, 2147483648
        %v4211 = vxor.u32 %v3536, 2147483648
        %v4212 = vxor.u32 %v3347, 2147483648
        %v4213 = vxor.u32 %v3349, 2147483648
        %v4214 = vxor.u32 %v3540, 2147483648
        %v4215 = vxor.u32 %v3353, 2147483648
        %v4216 = vxor.u32 %v3355, 2147483648
        %v4217 = vxor.u32 %v3546, 2147483648
        %v4218 = vxor.u32 %v3357, 2147483648
        %v4219 = vxor.u32 %v3359, 2147483648
        %v4220 = vxor.u32 %v3550, 2147483648
        %v4221 = vxor.u32 %v3363, 2147483648
        %v4222 = vxor.u32 %v3365, 2147483648
        %v4223 = vxor.u32 %v3556, 2147483648
        %v4224 = vxor.u32 %v3367, 2147483648
        %v4225 = vxor.u32 %v3369, 2147483648
        %v4226 = vxor.u32 %v3560, 2147483648
        %v4227 = vxor.u32 %v3373, 2147483648
        %v4228 = vxor.u32 %v3375, 2147483648
        %v4229 = vxor.u32 %v3566, 2147483648
        %v4230 = vxor.u32 %v3377, 2147483648
        %v4231 = vxor.u32 %v3379, 2147483648
        %v4232 = vxor.u32 %v3570, 2147483648
        %v4233 = vxor.u32 %v3383, 2147483648
        %v4234 = vxor.u32 %v3385, 2147483648
        %v4235 = vxor.u32 %v3576, 2147483648
        %v4236 = vxor.u32 %v3387, 2147483648
        %v4237 = vxor.u32 %v3389, 2147483648
        %v4238 = vxor.u32 %v3580, 2147483648
        %v4239 = vxor.u32 %v3393, 2147483648
        %v4240 = vxor.u32 %v3395, 2147483648
        %v4241 = vxor.u32 %v3586, 2147483648
        %v4242 = vxor.u32 %v3397, 2147483648
        %v4243 = vxor.u32 %v3399, 2147483648
        %v4244 = vxor.u32 %v3590, 2147483648
        %v4245 = vxor.u32 %v3403, 2147483648
        %v4246 = vxor.u32 %v3405, 2147483648
        %v4247 = vxor.u32 %v3596, 2147483648
        %v4248 = vxor.u32 %v3407, 2147483648
        %v4249 = vxor.u32 %v3409, 2147483648
        %v4250 = vxor.u32 %v3600, 2147483648
        %v4251 = vxor.u32 %v3413, 2147483648
        %v4252 = vxor.u32 %v3415, 2147483648
        %v4253 = vxor.u32 %v3606, 2147483648
        %v4254 = vxor.u32 %v3417, 2147483648
        %v4255 = vxor.u32 %v3419, 2147483648
        %v4256 = vxor.u32 %v3610, 2147483648
        %v4257 = vmul.f32 %v4161, 1.442695
        %v4258 = vpow.pop %v4257
        %v4259 = vmul.f32 %v4162, 1.442695
        %v4260 = vpow.pop %v4259
        %v4261 = vmul.f32 %v4163, 1.442695
        %v4262 = vpow.pop %v4261
        %v4263 = vmul.f32 %v4164, 1.442695
        %v4264 = vpow.pop %v4263
        %v4265 = vmul.f32 %v4165, 1.442695
        %v4266 = vpow.pop %v4265
        %v4267 = vmul.f32 %v4166, 1.442695
        %v4268 = vpow.pop %v4267
        %v4269 = vmul.f32 %v4167, 1.442695
        %v4270 = vpow.pop %v4269
        %v4271 = vmul.f32 %v4168, 1.442695
        %v4272 = vpow.pop %v4271
        %v4273 = vmul.f32 %v4169, 1.442695
        %v4274 = vpow.pop %v4273
        %v4275 = vmul.f32 %v4170, 1.442695
        %v4276 = vpow.pop %v4275
        %v4277 = vmul.f32 %v4171, 1.442695
        %v4278 = vpow.pop %v4277
        %v4279 = vmul.f32 %v4172, 1.442695
        %v4280 = vpow.pop %v4279
        %v4281 = vmul.f32 %v4173, 1.442695
        %v4282 = vpow.pop %v4281
        %v4283 = vmul.f32 %v4174, 1.442695
        %v4284 = vpow.pop %v4283
        %v4285 = vmul.f32 %v4175, 1.442695
        %v4286 = vpow.pop %v4285
        %v4287 = vmul.f32 %v4176, 1.442695
        %v4288 = vpow.pop %v4287
        %v4289 = vmul.f32 %v4177, 1.442695
        %v4290 = vpow.pop %v4289
        %v4291 = vmul.f32 %v4178, 1.442695
        %v4292 = vpow.pop %v4291
        %v4293 = vmul.f32 %v4179, 1.442695
        %v4294 = vpow.pop %v4293
        %v4295 = vmul.f32 %v4180, 1.442695
        %v4296 = vpow.pop %v4295
        %v4297 = vmul.f32 %v4181, 1.442695
        %v4298 = vpow.pop %v4297
        %v4299 = vmul.f32 %v4182, 1.442695
        %v4300 = vpow.pop %v4299
        %v4301 = vmul.f32 %v4183, 1.442695
        %v4302 = vpow.pop %v4301
        %v4303 = vmul.f32 %v4184, 1.442695
        %v4304 = vpow.pop %v4303
        %v4305 = vmul.f32 %v4185, 1.442695
        %v4306 = vpow.pop %v4305
        %v4307 = vmul.f32 %v4186, 1.442695
        %v4308 = vpow.pop %v4307
        %v4309 = vmul.f32 %v4187, 1.442695
        %v4310 = vpow.pop %v4309
        %v4311 = vmul.f32 %v4188, 1.442695
        %v4312 = vpow.pop %v4311
        %v4313 = vmul.f32 %v4189, 1.442695
        %v4314 = vpow.pop %v4313
        %v4315 = vmul.f32 %v4190, 1.442695
        %v4316 = vpow.pop %v4315
        %v4317 = vmul.f32 %v4191, 1.442695
        %v4318 = vpow.pop %v4317
        %v4319 = vmul.f32 %v4192, 1.442695
        %v4320 = vpow.pop %v4319
        %v4321 = vmul.f32 %v4193, 1.442695
        %v4322 = vpow.pop %v4321
        %v4323 = vmul.f32 %v4194, 1.442695
        %v4324 = vpow.pop %v4323
        %v4325 = vmul.f32 %v4195, 1.442695
        %v4326 = vpow.pop %v4325
        %v4327 = vmul.f32 %v4196, 1.442695
        %v4328 = vpow.pop %v4327
        %v4329 = vmul.f32 %v4197, 1.442695
        %v4330 = vpow.pop %v4329
        %v4331 = vmul.f32 %v4198, 1.442695
        %v4332 = vpow.pop %v4331
        %v4333 = vmul.f32 %v4199, 1.442695
        %v4334 = vpow.pop %v4333
        %v4335 = vmul.f32 %v4200, 1.442695
        %v4336 = vpow.pop %v4335
        %v4337 = vmul.f32 %v4201, 1.442695
        %v4338 = vpow.pop %v4337
        %v4339 = vmul.f32 %v4202, 1.442695
        %v4340 = vpow.pop %v4339
        %v4341 = vmul.f32 %v4203, 1.442695
        %v4342 = vpow.pop %v4341
        %v4343 = vmul.f32 %v4204, 1.442695
        %v4344 = vpow.pop %v4343
        %v4345 = vmul.f32 %v4205, 1.442695
        %v4346 = vpow.pop %v4345
        %v4347 = vmul.f32 %v4206, 1.442695
        %v4348 = vpow.pop %v4347
        %v4349 = vmul.f32 %v4207, 1.442695
        %v4350 = vpow.pop %v4349
        %v4351 = vmul.f32 %v4208, 1.442695
        %v4352 = vpow.pop %v4351
        %v4353 = vmul.f32 %v4209, 1.442695
        %v4354 = vpow.pop %v4353
        %v4355 = vmul.f32 %v4210, 1.442695
        %v4356 = vpow.pop %v4355
        %v4357 = vmul.f32 %v4211, 1.442695
        %v4358 = vpow.pop %v4357
        %v4359 = vmul.f32 %v4212, 1.442695
        %v4360 = vpow.pop %v4359
        %v4361 = vmul.f32 %v4213, 1.442695
        %v4362 = vpow.pop %v4361
        %v4363 = vmul.f32 %v4214, 1.442695
        %v4364 = vpow.pop %v4363
        %v4365 = vmul.f32 %v4215, 1.442695
        %v4366 = vpow.pop %v4365
        %v4367 = vmul.f32 %v4216, 1.442695
        %v4368 = vpow.pop %v4367
        %v4369 = vmul.f32 %v4217, 1.442695
        %v4370 = vpow.pop %v4369
        %v4371 = vmul.f32 %v4218, 1.442695
        %v4372 = vpow.pop %v4371
        %v4373 = vmul.f32 %v4219, 1.442695
        %v4374 = vpow.pop %v4373
        %v4375 = vmul.f32 %v4220, 1.442695
        %v4376 = vpow.pop %v4375
        %v4377 = vmul.f32 %v4221, 1.442695
        %v4378 = vpow.pop %v4377
        %v4379 = vmul.f32 %v4222, 1.442695
        %v4380 = vpow.pop %v4379
        %v4381 = vmul.f32 %v4223, 1.442695
        %v4382 = vpow.pop %v4381
        %v4383 = vmul.f32 %v4224, 1.442695
        %v4384 = vpow.pop %v4383
        %v4385 = vmul.f32 %v4225, 1.442695
        %v4386 = vpow.pop %v4385
        %v4387 = vmul.f32 %v4226, 1.442695
        %v4388 = vpow.pop %v4387
        %v4389 = vmul.f32 %v4227, 1.442695
        %v4390 = vpow.pop %v4389
        %v4391 = vmul.f32 %v4228, 1.442695
        %v4392 = vpow.pop %v4391
        %v4393 = vmul.f32 %v4229, 1.442695
        %v4394 = vpow.pop %v4393
        %v4395 = vmul.f32 %v4230, 1.442695
        %v4396 = vpow.pop %v4395
        %v4397 = vmul.f32 %v4231, 1.442695
        %v4398 = vpow.pop %v4397
        %v4399 = vmul.f32 %v4232, 1.442695
        %v4400 = vpow.pop %v4399
        %v4401 = vmul.f32 %v4233, 1.442695
        %v4402 = vpow.pop %v4401
        %v4403 = vmul.f32 %v4234, 1.442695
        %v4404 = vpow.pop %v4403
        %v4405 = vmul.f32 %v4235, 1.442695
        %v4406 = vpow.pop %v4405
        %v4407 = vmul.f32 %v4236, 1.442695
        %v4408 = vpow.pop %v4407
        %v4409 = vmul.f32 %v4237, 1.442695
        %v4410 = vpow.pop %v4409
        %v4411 = vmul.f32 %v4238, 1.442695
        %v4412 = vpow.pop %v4411
        %v4413 = vmul.f32 %v4239, 1.442695
        %v4414 = vpow.pop %v4413
        %v4415 = vmul.f32 %v4240, 1.442695
        %v4416 = vpow.pop %v4415
        %v4417 = vmul.f32 %v4241, 1.442695
        %v4418 = vpow.pop %v4417
        %v4419 = vmul.f32 %v4242, 1.442695
        %v4420 = vpow.pop %v4419
        %v4421 = vmul.f32 %v4243, 1.442695
        %v4422 = vpow.pop %v4421
        %v4423 = vmul.f32 %v4244, 1.442695
        %v4424 = vpow.pop %v4423
        %v4425 = vmul.f32 %v4245, 1.442695
        %v4426 = vpow.pop %v4425
        %v4427 = vmul.f32 %v4246, 1.442695
        %v4428 = vpow.pop %v4427
        %v4429 = vmul.f32 %v4247, 1.442695
        %v4430 = vpow.pop %v4429
        %v4431 = vmul.f32 %v4248, 1.442695
        %v4432 = vpow.pop %v4431
        %v4433 = vmul.f32 %v4249, 1.442695
        %v4434 = vpow.pop %v4433
        %v4435 = vmul.f32 %v4250, 1.442695
        %v4436 = vpow.pop %v4435
        %v4437 = vmul.f32 %v4251, 1.442695
        %v4438 = vpow.pop %v4437
        %v4439 = vmul.f32 %v4252, 1.442695
        %v4440 = vpow.pop %v4439
        %v4441 = vmul.f32 %v4253, 1.442695
        %v4442 = vpow.pop %v4441
        %v4443 = vmul.f32 %v4254, 1.442695
        %v4444 = vpow.pop %v4443
        %v4445 = vmul.f32 %v4255, 1.442695
        %v4446 = vpow.pop %v4445
        %v4447 = vmul.f32 %v4256, 1.442695
        %v4448 = vpow.pop %v4447
        %v4449 = vadd.f32 %v4258, 1.0
        %v4450 = vadd.f32 %v4260, 1.0
        %v4451 = vadd.f32 %v4262, 1.0
        %v4452 = vadd.f32 %v4264, 1.0
        %v4453 = vadd.f32 %v4266, 1.0
        %v4454 = vadd.f32 %v4268, 1.0
        %v4455 = vadd.f32 %v4270, 1.0
        %v4456 = vadd.f32 %v4272, 1.0
        %v4457 = vadd.f32 %v4274, 1.0
        %v4458 = vadd.f32 %v4276, 1.0
        %v4459 = vadd.f32 %v4278, 1.0
        %v4460 = vadd.f32 %v4280, 1.0
        %v4461 = vadd.f32 %v4282, 1.0
        %v4462 = vadd.f32 %v4284, 1.0
        %v4463 = vadd.f32 %v4286, 1.0
        %v4464 = vadd.f32 %v4288, 1.0
        %v4465 = vadd.f32 %v4290, 1.0
        %v4466 = vadd.f32 %v4292, 1.0
        %v4467 = vadd.f32 %v4294, 1.0
        %v4468 = vadd.f32 %v4296, 1.0
        %v4469 = vadd.f32 %v4298, 1.0
        %v4470 = vadd.f32 %v4300, 1.0
        %v4471 = vadd.f32 %v4302, 1.0
        %v4472 = vadd.f32 %v4304, 1.0
        %v4473 = vadd.f32 %v4306, 1.0
        %v4474 = vadd.f32 %v4308, 1.0
        %v4475 = vadd.f32 %v4310, 1.0
        %v4476 = vadd.f32 %v4312, 1.0
        %v4477 = vadd.f32 %v4314, 1.0
        %v4478 = vadd.f32 %v4316, 1.0
        %v4479 = vadd.f32 %v4318, 1.0
        %v4480 = vadd.f32 %v4320, 1.0
        %v4481 = vadd.f32 %v4322, 1.0
        %v4482 = vadd.f32 %v4324, 1.0
        %v4483 = vadd.f32 %v4326, 1.0
        %v4484 = vadd.f32 %v4328, 1.0
        %v4485 = vadd.f32 %v4330, 1.0
        %v4486 = vadd.f32 %v4332, 1.0
        %v4487 = vadd.f32 %v4334, 1.0
        %v4488 = vadd.f32 %v4336, 1.0
        %v4489 = vadd.f32 %v4338, 1.0
        %v4490 = vadd.f32 %v4340, 1.0
        %v4491 = vadd.f32 %v4342, 1.0
        %v4492 = vadd.f32 %v4344, 1.0
        %v4493 = vadd.f32 %v4346, 1.0
        %v4494 = vadd.f32 %v4348, 1.0
        %v4495 = vadd.f32 %v4350, 1.0
        %v4496 = vadd.f32 %v4352, 1.0
        %v4497 = vadd.f32 %v4354, 1.0
        %v4498 = vadd.f32 %v4356, 1.0
        %v4499 = vadd.f32 %v4358, 1.0
        %v4500 = vadd.f32 %v4360, 1.0
        %v4501 = vadd.f32 %v4362, 1.0
        %v4502 = vadd.f32 %v4364, 1.0
        %v4503 = vadd.f32 %v4366, 1.0
        %v4504 = vadd.f32 %v4368, 1.0
        %v4505 = vadd.f32 %v4370, 1.0
        %v4506 = vadd.f32 %v4372, 1.0
        %v4507 = vadd.f32 %v4374, 1.0
        %v4508 = vadd.f32 %v4376, 1.0
        %v4509 = vadd.f32 %v4378, 1.0
        %v4510 = vadd.f32 %v4380, 1.0
        %v4511 = vadd.f32 %v4382, 1.0
        %v4512 = vadd.f32 %v4384, 1.0
        %v4513 = vadd.f32 %v4386, 1.0
        %v4514 = vadd.f32 %v4388, 1.0
        %v4515 = vadd.f32 %v4390, 1.0
        %v4516 = vadd.f32 %v4392, 1.0
        %v4517 = vadd.f32 %v4394, 1.0
        %v4518 = vadd.f32 %v4396, 1.0
        %v4519 = vadd.f32 %v4398, 1.0
        %v4520 = vadd.f32 %v4400, 1.0
        %v4521 = vadd.f32 %v4402, 1.0
        %v4522 = vadd.f32 %v4404, 1.0
        %v4523 = vadd.f32 %v4406, 1.0
        %v4524 = vadd.f32 %v4408, 1.0
        %v4525 = vadd.f32 %v4410, 1.0
        %v4526 = vadd.f32 %v4412, 1.0
        %v4527 = vadd.f32 %v4414, 1.0
        %v4528 = vadd.f32 %v4416, 1.0
        %v4529 = vadd.f32 %v4418, 1.0
        %v4530 = vadd.f32 %v4420, 1.0
        %v4531 = vadd.f32 %v4422, 1.0
        %v4532 = vadd.f32 %v4424, 1.0
        %v4533 = vadd.f32 %v4426, 1.0
        %v4534 = vadd.f32 %v4428, 1.0
        %v4535 = vadd.f32 %v4430, 1.0
        %v4536 = vadd.f32 %v4432, 1.0
        %v4537 = vadd.f32 %v4434, 1.0
        %v4538 = vadd.f32 %v4436, 1.0
        %v4539 = vadd.f32 %v4438, 1.0
        %v4540 = vadd.f32 %v4440, 1.0
        %v4541 = vadd.f32 %v4442, 1.0
        %v4542 = vadd.f32 %v4444, 1.0
        %v4543 = vadd.f32 %v4446, 1.0
        %v4544 = vadd.f32 %v4448, 1.0
        %v4545 = vrcp.pop %v4449
        %v4546 = vmul.f32 1.0, %v4545
        %v4547 = vrcp.pop %v4450
        %v4548 = vmul.f32 1.0, %v4547
        %v4549 = vrcp.pop %v4451
        %v4550 = vmul.f32 1.0, %v4549
        %v4551 = vrcp.pop %v4452
        %v4552 = vmul.f32 1.0, %v4551
        %v4553 = vrcp.pop %v4453
        %v4554 = vmul.f32 1.0, %v4553
        %v4555 = vrcp.pop %v4454
        %v4556 = vmul.f32 1.0, %v4555
        %v4557 = vrcp.pop %v4455
        %v4558 = vmul.f32 1.0, %v4557
        %v4559 = vrcp.pop %v4456
        %v4560 = vmul.f32 1.0, %v4559
        %v4561 = vrcp.pop %v4457
        %v4562 = vmul.f32 1.0, %v4561
        %v4563 = vrcp.pop %v4458
        %v4564 = vmul.f32 1.0, %v4563
        %v4565 = vrcp.pop %v4459
        %v4566 = vmul.f32 1.0, %v4565
        %v4567 = vrcp.pop %v4460
        %v4568 = vmul.f32 1.0, %v4567
        %v4569 = vrcp.pop %v4461
        %v4570 = vmul.f32 1.0, %v4569
        %v4571 = vrcp.pop %v4462
        %v4572 = vmul.f32 1.0, %v4571
        %v4573 = vrcp.pop %v4463
        %v4574 = vmul.f32 1.0, %v4573
        %v4575 = vrcp.pop %v4464
        %v4576 = vmul.f32 1.0, %v4575
        %v4577 = vrcp.pop %v4465
        %v4578 = vmul.f32 1.0, %v4577
        %v4579 = vrcp.pop %v4466
        %v4580 = vmul.f32 1.0, %v4579
        %v4581 = vrcp.pop %v4467
        %v4582 = vmul.f32 1.0, %v4581
        %v4583 = vrcp.pop %v4468
        %v4584 = vmul.f32 1.0, %v4583
        %v4585 = vrcp.pop %v4469
        %v4586 = vmul.f32 1.0, %v4585
        %v4587 = vrcp.pop %v4470
        %v4588 = vmul.f32 1.0, %v4587
        %v4589 = vrcp.pop %v4471
        %v4590 = vmul.f32 1.0, %v4589
        %v4591 = vrcp.pop %v4472
        %v4592 = vmul.f32 1.0, %v4591
        %v4593 = vrcp.pop %v4473
        %v4594 = vmul.f32 1.0, %v4593
        %v4595 = vrcp.pop %v4474
        %v4596 = vmul.f32 1.0, %v4595
        %v4597 = vrcp.pop %v4475
        %v4598 = vmul.f32 1.0, %v4597
        %v4599 = vrcp.pop %v4476
        %v4600 = vmul.f32 1.0, %v4599
        %v4601 = vrcp.pop %v4477
        %v4602 = vmul.f32 1.0, %v4601
        %v4603 = vrcp.pop %v4478
        %v4604 = vmul.f32 1.0, %v4603
        %v4605 = vrcp.pop %v4479
        %v4606 = vmul.f32 1.0, %v4605
        %v4607 = vrcp.pop %v4480
        %v4608 = vmul.f32 1.0, %v4607
        %v4609 = vrcp.pop %v4481
        %v4610 = vmul.f32 1.0, %v4609
        %v4611 = vrcp.pop %v4482
        %v4612 = vmul.f32 1.0, %v4611
        %v4613 = vrcp.pop %v4483
        %v4614 = vmul.f32 1.0, %v4613
        %v4615 = vrcp.pop %v4484
        %v4616 = vmul.f32 1.0, %v4615
        %v4617 = vrcp.pop %v4485
        %v4618 = vmul.f32 1.0, %v4617
        %v4619 = vrcp.pop %v4486
        %v4620 = vmul.f32 1.0, %v4619
        %v4621 = vrcp.pop %v4487
        %v4622 = vmul.f32 1.0, %v4621
        %v4623 = vrcp.pop %v4488
        %v4624 = vmul.f32 1.0, %v4623
        %v4625 = vrcp.pop %v4489
        %v4626 = vmul.f32 1.0, %v4625
        %v4627 = vrcp.pop %v4490
        %v4628 = vmul.f32 1.0, %v4627
        %v4629 = vrcp.pop %v4491
        %v4630 = vmul.f32 1.0, %v4629
        %v4631 = vrcp.pop %v4492
        %v4632 = vmul.f32 1.0, %v4631
        %v4633 = vrcp.pop %v4493
        %v4634 = vmul.f32 1.0, %v4633
        %v4635 = vrcp.pop %v4494
        %v4636 = vmul.f32 1.0, %v4635
        %v4637 = vrcp.pop %v4495
        %v4638 = vmul.f32 1.0, %v4637
        %v4639 = vrcp.pop %v4496
        %v4640 = vmul.f32 1.0, %v4639
        %v4641 = vrcp.pop %v4497
        %v4642 = vmul.f32 1.0, %v4641
        %v4643 = vrcp.pop %v4498
        %v4644 = vmul.f32 1.0, %v4643
        %v4645 = vrcp.pop %v4499
        %v4646 = vmul.f32 1.0, %v4645
        %v4647 = vrcp.pop %v4500
        %v4648 = vmul.f32 1.0, %v4647
        %v4649 = vrcp.pop %v4501
        %v4650 = vmul.f32 1.0, %v4649
        %v4651 = vrcp.pop %v4502
        %v4652 = vmul.f32 1.0, %v4651
        %v4653 = vrcp.pop %v4503
        %v4654 = vmul.f32 1.0, %v4653
        %v4655 = vrcp.pop %v4504
        %v4656 = vmul.f32 1.0, %v4655
        %v4657 = vrcp.pop %v4505
        %v4658 = vmul.f32 1.0, %v4657
        %v4659 = vrcp.pop %v4506
        %v4660 = vmul.f32 1.0, %v4659
        %v4661 = vrcp.pop %v4507
        %v4662 = vmul.f32 1.0, %v4661
        %v4663 = vrcp.pop %v4508
        %v4664 = vmul.f32 1.0, %v4663
        %v4665 = vrcp.pop %v4509
        %v4666 = vmul.f32 1.0, %v4665
        %v4667 = vrcp.pop %v4510
        %v4668 = vmul.f32 1.0, %v4667
        %v4669 = vrcp.pop %v4511
        %v4670 = vmul.f32 1.0, %v4669
        %v4671 = vrcp.pop %v4512
        %v4672 = vmul.f32 1.0, %v4671
        %v4673 = vrcp.pop %v4513
        %v4674 = vmul.f32 1.0, %v4673
        %v4675 = vrcp.pop %v4514
        %v4676 = vmul.f32 1.0, %v4675
        %v4677 = vrcp.pop %v4515
        %v4678 = vmul.f32 1.0, %v4677
        %v4679 = vrcp.pop %v4516
        %v4680 = vmul.f32 1.0, %v4679
        %v4681 = vrcp.pop %v4517
        %v4682 = vmul.f32 1.0, %v4681
        %v4683 = vrcp.pop %v4518
        %v4684 = vmul.f32 1.0, %v4683
        %v4685 = vrcp.pop %v4519
        %v4686 = vmul.f32 1.0, %v4685
        %v4687 = vrcp.pop %v4520
        %v4688 = vmul.f32 1.0, %v4687
        %v4689 = vrcp.pop %v4521
        %v4690 = vmul.f32 1.0, %v4689
        %v4691 = vrcp.pop %v4522
        %v4692 = vmul.f32 1.0, %v4691
        %v4693 = vrcp.pop %v4523
        %v4694 = vmul.f32 1.0, %v4693
        %v4695 = vrcp.pop %v4524
        %v4696 = vmul.f32 1.0, %v4695
        %v4697 = vrcp.pop %v4525
        %v4698 = vmul.f32 1.0, %v4697
        %v4699 = vrcp.pop %v4526
        %v4700 = vmul.f32 1.0, %v4699
        %v4701 = vrcp.pop %v4527
        %v4702 = vmul.f32 1.0, %v4701
        %v4703 = vrcp.pop %v4528
        %v4704 = vmul.f32 1.0, %v4703
        %v4705 = vrcp.pop %v4529
        %v4706 = vmul.f32 1.0, %v4705
        %v4707 = vrcp.pop %v4530
        %v4708 = vmul.f32 1.0, %v4707
        %v4709 = vrcp.pop %v4531
        %v4710 = vmul.f32 1.0, %v4709
        %v4711 = vrcp.pop %v4532
        %v4712 = vmul.f32 1.0, %v4711
        %v4713 = vrcp.pop %v4533
        %v4714 = vmul.f32 1.0, %v4713
        %v4715 = vrcp.pop %v4534
        %v4716 = vmul.f32 1.0, %v4715
        %v4717 = vrcp.pop %v4535
        %v4718 = vmul.f32 1.0, %v4717
        %v4719 = vrcp.pop %v4536
        %v4720 = vmul.f32 1.0, %v4719
        %v4721 = vrcp.pop %v4537
        %v4722 = vmul.f32 1.0, %v4721
        %v4723 = vrcp.pop %v4538
        %v4724 = vmul.f32 1.0, %v4723
        %v4725 = vrcp.pop %v4539
        %v4726 = vmul.f32 1.0, %v4725
        %v4727 = vrcp.pop %v4540
        %v4728 = vmul.f32 1.0, %v4727
        %v4729 = vrcp.pop %v4541
        %v4730 = vmul.f32 1.0, %v4729
        %v4731 = vrcp.pop %v4542
        %v4732 = vmul.f32 1.0, %v4731
        %v4733 = vrcp.pop %v4543
        %v4734 = vmul.f32 1.0, %v4733
        %v4735 = vrcp.pop %v4544
        %v4736 = vmul.f32 1.0, %v4735
        %v4737 = vtanh.pop %v3458
        %v4738 = vtanh.pop %v3649
        %v4739 = vtanh.pop %v3651
        %v4740 = vtanh.pop %v3462
        %v4741 = vtanh.pop %v3653
        %v4742 = vtanh.pop %v3655
        %v4743 = vtanh.pop %v3468
        %v4744 = vtanh.pop %v3659
        %v4745 = vtanh.pop %v3661
        %v4746 = vtanh.pop %v3472
        %v4747 = vtanh.pop %v3663
        %v4748 = vtanh.pop %v3665
        %v4749 = vtanh.pop %v3478
        %v4750 = vtanh.pop %v3669
        %v4751 = vtanh.pop %v3671
        %v4752 = vtanh.pop %v3482
        %v4753 = vtanh.pop %v3673
        %v4754 = vtanh.pop %v3675
        %v4755 = vtanh.pop %v3488
        %v4756 = vtanh.pop %v3679
        %v4757 = vtanh.pop %v3681
        %v4758 = vtanh.pop %v3492
        %v4759 = vtanh.pop %v3683
        %v4760 = vtanh.pop %v3685
        %v4761 = vtanh.pop %v3498
        %v4762 = vtanh.pop %v3689
        %v4763 = vtanh.pop %v3691
        %v4764 = vtanh.pop %v3502
        %v4765 = vtanh.pop %v3693
        %v4766 = vtanh.pop %v3695
        %v4767 = vtanh.pop %v3508
        %v4768 = vtanh.pop %v3699
        %v4769 = vtanh.pop %v3701
        %v4770 = vtanh.pop %v3512
        %v4771 = vtanh.pop %v3703
        %v4772 = vtanh.pop %v3705
        %v4773 = vtanh.pop %v3518
        %v4774 = vtanh.pop %v3709
        %v4775 = vtanh.pop %v3711
        %v4776 = vtanh.pop %v3522
        %v4777 = vtanh.pop %v3713
        %v4778 = vtanh.pop %v3715
        %v4779 = vtanh.pop %v3528
        %v4780 = vtanh.pop %v3719
        %v4781 = vtanh.pop %v3721
        %v4782 = vtanh.pop %v3532
        %v4783 = vtanh.pop %v3723
        %v4784 = vtanh.pop %v3725
        %v4785 = vtanh.pop %v3538
        %v4786 = vtanh.pop %v3729
        %v4787 = vtanh.pop %v3731
        %v4788 = vtanh.pop %v3542
        %v4789 = vtanh.pop %v3733
        %v4790 = vtanh.pop %v3735
        %v4791 = vtanh.pop %v3548
        %v4792 = vtanh.pop %v3739
        %v4793 = vtanh.pop %v3741
        %v4794 = vtanh.pop %v3552
        %v4795 = vtanh.pop %v3743
        %v4796 = vtanh.pop %v3745
        %v4797 = vtanh.pop %v3558
        %v4798 = vtanh.pop %v3749
        %v4799 = vtanh.pop %v3751
        %v4800 = vtanh.pop %v3562
        %v4801 = vtanh.pop %v3753
        %v4802 = vtanh.pop %v3755
        %v4803 = vtanh.pop %v3568
        %v4804 = vtanh.pop %v3759
        %v4805 = vtanh.pop %v3761
        %v4806 = vtanh.pop %v3572
        %v4807 = vtanh.pop %v3763
        %v4808 = vtanh.pop %v3765
        %v4809 = vtanh.pop %v3578
        %v4810 = vtanh.pop %v3769
        %v4811 = vtanh.pop %v3771
        %v4812 = vtanh.pop %v3582
        %v4813 = vtanh.pop %v3773
        %v4814 = vtanh.pop %v3775
        %v4815 = vtanh.pop %v3588
        %v4816 = vtanh.pop %v3779
        %v4817 = vtanh.pop %v3781
        %v4818 = vtanh.pop %v3592
        %v4819 = vtanh.pop %v3783
        %v4820 = vtanh.pop %v3785
        %v4821 = vtanh.pop %v3598
        %v4822 = vtanh.pop %v3789
        %v4823 = vtanh.pop %v3791
        %v4824 = vtanh.pop %v3602
        %v4825 = vtanh.pop %v3793
        %v4826 = vtanh.pop %v3795
        %v4827 = vtanh.pop %v3608
        %v4828 = vtanh.pop %v3799
        %v4829 = vtanh.pop %v3801
        %v4830 = vtanh.pop %v3612
        %v4831 = vtanh.pop %v3803
        %v4832 = vtanh.pop %v3805
        %v4833 = vxor.u32 %v3842, 2147483648
        %v4834 = vxor.u32 %v3844, 2147483648
        %v4835 = vxor.u32 %v4035, 2147483648
        %v4836 = vxor.u32 %v3846, 2147483648
        %v4837 = vxor.u32 %v3848, 2147483648
        %v4838 = vxor.u32 %v4038, 2147483648
        %v4839 = vxor.u32 %v3852, 2147483648
        %v4840 = vxor.u32 %v3854, 2147483648
        %v4841 = vxor.u32 %v4043, 2147483648
        %v4842 = vxor.u32 %v3856, 2147483648
        %v4843 = vxor.u32 %v3858, 2147483648
        %v4844 = vxor.u32 %v4046, 2147483648
        %v4845 = vxor.u32 %v3862, 2147483648
        %v4846 = vxor.u32 %v3864, 2147483648
        %v4847 = vxor.u32 %v4051, 2147483648
        %v4848 = vxor.u32 %v3866, 2147483648
        %v4849 = vxor.u32 %v3868, 2147483648
        %v4850 = vxor.u32 %v4054, 2147483648
        %v4851 = vxor.u32 %v3872, 2147483648
        %v4852 = vxor.u32 %v3874, 2147483648
        %v4853 = vxor.u32 %v4059, 2147483648
        %v4854 = vxor.u32 %v3876, 2147483648
        %v4855 = vxor.u32 %v3878, 2147483648
        %v4856 = vxor.u32 %v4062, 2147483648
        %v4857 = vxor.u32 %v3882, 2147483648
        %v4858 = vxor.u32 %v3884, 2147483648
        %v4859 = vxor.u32 %v4067, 2147483648
        %v4860 = vxor.u32 %v3886, 2147483648
        %v4861 = vxor.u32 %v3888, 2147483648
        %v4862 = vxor.u32 %v4070, 2147483648
        %v4863 = vxor.u32 %v3892, 2147483648
        %v4864 = vxor.u32 %v3894, 2147483648
        %v4865 = vxor.u32 %v4075, 2147483648
        %v4866 = vxor.u32 %v3896, 2147483648
        %v4867 = vxor.u32 %v3898, 2147483648
        %v4868 = vxor.u32 %v4078, 2147483648
        %v4869 = vxor.u32 %v3902, 2147483648
        %v4870 = vxor.u32 %v3904, 2147483648
        %v4871 = vxor.u32 %v4083, 2147483648
        %v4872 = vxor.u32 %v3906, 2147483648
        %v4873 = vxor.u32 %v3908, 2147483648
        %v4874 = vxor.u32 %v4086, 2147483648
        %v4875 = vxor.u32 %v3912, 2147483648
        %v4876 = vxor.u32 %v3914, 2147483648
        %v4877 = vxor.u32 %v4091, 2147483648
        %v4878 = vxor.u32 %v3916, 2147483648
        %v4879 = vxor.u32 %v3918, 2147483648
        %v4880 = vxor.u32 %v4094, 2147483648
        %v4881 = vxor.u32 %v3922, 2147483648
        %v4882 = vxor.u32 %v3924, 2147483648
        %v4883 = vxor.u32 %v4099, 2147483648
        %v4884 = vxor.u32 %v3926, 2147483648
        %v4885 = vxor.u32 %v3928, 2147483648
        %v4886 = vxor.u32 %v4102, 2147483648
        %v4887 = vxor.u32 %v3932, 2147483648
        %v4888 = vxor.u32 %v3934, 2147483648
        %v4889 = vxor.u32 %v4107, 2147483648
        %v4890 = vxor.u32 %v3936, 2147483648
        %v4891 = vxor.u32 %v3938, 2147483648
        %v4892 = vxor.u32 %v4110, 2147483648
        %v4893 = vxor.u32 %v3942, 2147483648
        %v4894 = vxor.u32 %v3944, 2147483648
        %v4895 = vxor.u32 %v4115, 2147483648
        %v4896 = vxor.u32 %v3946, 2147483648
        %v4897 = vxor.u32 %v3948, 2147483648
        %v4898 = vxor.u32 %v4118, 2147483648
        %v4899 = vxor.u32 %v3952, 2147483648
        %v4900 = vxor.u32 %v3954, 2147483648
        %v4901 = vxor.u32 %v4123, 2147483648
        %v4902 = vxor.u32 %v3956, 2147483648
        %v4903 = vxor.u32 %v3958, 2147483648
        %v4904 = vxor.u32 %v4126, 2147483648
        %v4905 = vxor.u32 %v3962, 2147483648
        %v4906 = vxor.u32 %v3964, 2147483648
        %v4907 = vxor.u32 %v4131, 2147483648
        %v4908 = vxor.u32 %v3966, 2147483648
        %v4909 = vxor.u32 %v3968, 2147483648
        %v4910 = vxor.u32 %v4134, 2147483648
        %v4911 = vxor.u32 %v3972, 2147483648
        %v4912 = vxor.u32 %v3974, 2147483648
        %v4913 = vxor.u32 %v4139, 2147483648
        %v4914 = vxor.u32 %v3976, 2147483648
        %v4915 = vxor.u32 %v3978, 2147483648
        %v4916 = vxor.u32 %v4142, 2147483648
        %v4917 = vxor.u32 %v3982, 2147483648
        %v4918 = vxor.u32 %v3984, 2147483648
        %v4919 = vxor.u32 %v4147, 2147483648
        %v4920 = vxor.u32 %v3986, 2147483648
        %v4921 = vxor.u32 %v3988, 2147483648
        %v4922 = vxor.u32 %v4150, 2147483648
        %v4923 = vxor.u32 %v3992, 2147483648
        %v4924 = vxor.u32 %v3994, 2147483648
        %v4925 = vxor.u32 %v4155, 2147483648
        %v4926 = vxor.u32 %v3996, 2147483648
        %v4927 = vxor.u32 %v3998, 2147483648
        %v4928 = vxor.u32 %v4158, 2147483648
        %v4929 = vmul.f32 %v4833, 1.442695
        %v4930 = vpow.pop %v4929
        %v4931 = vmul.f32 %v4834, 1.442695
        %v4932 = vpow.pop %v4931
        %v4933 = vmul.f32 %v4835, 1.442695
        %v4934 = vpow.pop %v4933
        %v4935 = vmul.f32 %v4836, 1.442695
        %v4936 = vpow.pop %v4935
        %v4937 = vmul.f32 %v4837, 1.442695
        %v4938 = vpow.pop %v4937
        %v4939 = vmul.f32 %v4838, 1.442695
        %v4940 = vpow.pop %v4939
        %v4941 = vmul.f32 %v4839, 1.442695
        %v4942 = vpow.pop %v4941
        %v4943 = vmul.f32 %v4840, 1.442695
        %v4944 = vpow.pop %v4943
        %v4945 = vmul.f32 %v4841, 1.442695
        %v4946 = vpow.pop %v4945
        %v4947 = vmul.f32 %v4842, 1.442695
        %v4948 = vpow.pop %v4947
        %v4949 = vmul.f32 %v4843, 1.442695
        %v4950 = vpow.pop %v4949
        %v4951 = vmul.f32 %v4844, 1.442695
        %v4952 = vpow.pop %v4951
        %v4953 = vmul.f32 %v4845, 1.442695
        %v4954 = vpow.pop %v4953
        %v4955 = vmul.f32 %v4846, 1.442695
        %v4956 = vpow.pop %v4955
        %v4957 = vmul.f32 %v4847, 1.442695
        %v4958 = vpow.pop %v4957
        %v4959 = vmul.f32 %v4848, 1.442695
        %v4960 = vpow.pop %v4959
        %v4961 = vmul.f32 %v4849, 1.442695
        %v4962 = vpow.pop %v4961
        %v4963 = vmul.f32 %v4850, 1.442695
        %v4964 = vpow.pop %v4963
        %v4965 = vmul.f32 %v4851, 1.442695
        %v4966 = vpow.pop %v4965
        %v4967 = vmul.f32 %v4852, 1.442695
        %v4968 = vpow.pop %v4967
        %v4969 = vmul.f32 %v4853, 1.442695
        %v4970 = vpow.pop %v4969
        %v4971 = vmul.f32 %v4854, 1.442695
        %v4972 = vpow.pop %v4971
        %v4973 = vmul.f32 %v4855, 1.442695
        %v4974 = vpow.pop %v4973
        %v4975 = vmul.f32 %v4856, 1.442695
        %v4976 = vpow.pop %v4975
        %v4977 = vmul.f32 %v4857, 1.442695
        %v4978 = vpow.pop %v4977
        %v4979 = vmul.f32 %v4858, 1.442695
        %v4980 = vpow.pop %v4979
        %v4981 = vmul.f32 %v4859, 1.442695
        %v4982 = vpow.pop %v4981
        %v4983 = vmul.f32 %v4860, 1.442695
        %v4984 = vpow.pop %v4983
        %v4985 = vmul.f32 %v4861, 1.442695
        %v4986 = vpow.pop %v4985
        %v4987 = vmul.f32 %v4862, 1.442695
        %v4988 = vpow.pop %v4987
        %v4989 = vmul.f32 %v4863, 1.442695
        %v4990 = vpow.pop %v4989
        %v4991 = vmul.f32 %v4864, 1.442695
        %v4992 = vpow.pop %v4991
        %v4993 = vmul.f32 %v4865, 1.442695
        %v4994 = vpow.pop %v4993
        %v4995 = vmul.f32 %v4866, 1.442695
        %v4996 = vpow.pop %v4995
        %v4997 = vmul.f32 %v4867, 1.442695
        %v4998 = vpow.pop %v4997
        %v4999 = vmul.f32 %v4868, 1.442695
        %v5000 = vpow.pop %v4999
        %v5001 = vmul.f32 %v4869, 1.442695
        %v5002 = vpow.pop %v5001
        %v5003 = vmul.f32 %v4870, 1.442695
        %v5004 = vpow.pop %v5003
        %v5005 = vmul.f32 %v4871, 1.442695
        %v5006 = vpow.pop %v5005
        %v5007 = vmul.f32 %v4872, 1.442695
        %v5008 = vpow.pop %v5007
        %v5009 = vmul.f32 %v4873, 1.442695
        %v5010 = vpow.pop %v5009
        %v5011 = vmul.f32 %v4874, 1.442695
        %v5012 = vpow.pop %v5011
        %v5013 = vmul.f32 %v4875, 1.442695
        %v5014 = vpow.pop %v5013
        %v5015 = vmul.f32 %v4876, 1.442695
        %v5016 = vpow.pop %v5015
        %v5017 = vmul.f32 %v4877, 1.442695
        %v5018 = vpow.pop %v5017
        %v5019 = vmul.f32 %v4878, 1.442695
        %v5020 = vpow.pop %v5019
        %v5021 = vmul.f32 %v4879, 1.442695
        %v5022 = vpow.pop %v5021
        %v5023 = vmul.f32 %v4880, 1.442695
        %v5024 = vpow.pop %v5023
        %v5025 = vmul.f32 %v4881, 1.442695
        %v5026 = vpow.pop %v5025
        %v5027 = vmul.f32 %v4882, 1.442695
        %v5028 = vpow.pop %v5027
        %v5029 = vmul.f32 %v4883, 1.442695
        %v5030 = vpow.pop %v5029
        %v5031 = vmul.f32 %v4884, 1.442695
        %v5032 = vpow.pop %v5031
        %v5033 = vmul.f32 %v4885, 1.442695
        %v5034 = vpow.pop %v5033
        %v5035 = vmul.f32 %v4886, 1.442695
        %v5036 = vpow.pop %v5035
        %v5037 = vmul.f32 %v4887, 1.442695
        %v5038 = vpow.pop %v5037
        %v5039 = vmul.f32 %v4888, 1.442695
        %v5040 = vpow.pop %v5039
        %v5041 = vmul.f32 %v4889, 1.442695
        %v5042 = vpow.pop %v5041
        %v5043 = vmul.f32 %v4890, 1.442695
        %v5044 = vpow.pop %v5043
        %v5045 = vmul.f32 %v4891, 1.442695
        %v5046 = vpow.pop %v5045
        %v5047 = vmul.f32 %v4892, 1.442695
        %v5048 = vpow.pop %v5047
        %v5049 = vmul.f32 %v4893, 1.442695
        %v5050 = vpow.pop %v5049
        %v5051 = vmul.f32 %v4894, 1.442695
        %v5052 = vpow.pop %v5051
        %v5053 = vmul.f32 %v4895, 1.442695
        %v5054 = vpow.pop %v5053
        %v5055 = vmul.f32 %v4896, 1.442695
        %v5056 = vpow.pop %v5055
        %v5057 = vmul.f32 %v4897, 1.442695
        %v5058 = vpow.pop %v5057
        %v5059 = vmul.f32 %v4898, 1.442695
        %v5060 = vpow.pop %v5059
        %v5061 = vmul.f32 %v4899, 1.442695
        %v5062 = vpow.pop %v5061
        %v5063 = vmul.f32 %v4900, 1.442695
        %v5064 = vpow.pop %v5063
        %v5065 = vmul.f32 %v4901, 1.442695
        %v5066 = vpow.pop %v5065
        %v5067 = vmul.f32 %v4902, 1.442695
        %v5068 = vpow.pop %v5067
        %v5069 = vmul.f32 %v4903, 1.442695
        %v5070 = vpow.pop %v5069
        %v5071 = vmul.f32 %v4904, 1.442695
        %v5072 = vpow.pop %v5071
        %v5073 = vmul.f32 %v4905, 1.442695
        %v5074 = vpow.pop %v5073
        %v5075 = vmul.f32 %v4906, 1.442695
        %v5076 = vpow.pop %v5075
        %v5077 = vmul.f32 %v4907, 1.442695
        %v5078 = vpow.pop %v5077
        %v5079 = vmul.f32 %v4908, 1.442695
        %v5080 = vpow.pop %v5079
        %v5081 = vmul.f32 %v4909, 1.442695
        %v5082 = vpow.pop %v5081
        %v5083 = vmul.f32 %v4910, 1.442695
        %v5084 = vpow.pop %v5083
        %v5085 = vmul.f32 %v4911, 1.442695
        %v5086 = vpow.pop %v5085
        %v5087 = vmul.f32 %v4912, 1.442695
        %v5088 = vpow.pop %v5087
        %v5089 = vmul.f32 %v4913, 1.442695
        %v5090 = vpow.pop %v5089
        %v5091 = vmul.f32 %v4914, 1.442695
        %v5092 = vpow.pop %v5091
        %v5093 = vmul.f32 %v4915, 1.442695
        %v5094 = vpow.pop %v5093
        %v5095 = vmul.f32 %v4916, 1.442695
        %v5096 = vpow.pop %v5095
        %v5097 = vmul.f32 %v4917, 1.442695
        %v5098 = vpow.pop %v5097
        %v5099 = vmul.f32 %v4918, 1.442695
        %v5100 = vpow.pop %v5099
        %v5101 = vmul.f32 %v4919, 1.442695
        %v5102 = vpow.pop %v5101
        %v5103 = vmul.f32 %v4920, 1.442695
        %v5104 = vpow.pop %v5103
        %v5105 = vmul.f32 %v4921, 1.442695
        %v5106 = vpow.pop %v5105
        %v5107 = vmul.f32 %v4922, 1.442695
        %v5108 = vpow.pop %v5107
        %v5109 = vmul.f32 %v4923, 1.442695
        %v5110 = vpow.pop %v5109
        %v5111 = vmul.f32 %v4924, 1.442695
        %v5112 = vpow.pop %v5111
        %v5113 = vmul.f32 %v4925, 1.442695
        %v5114 = vpow.pop %v5113
        %v5115 = vmul.f32 %v4926, 1.442695
        %v5116 = vpow.pop %v5115
        %v5117 = vmul.f32 %v4927, 1.442695
        %v5118 = vpow.pop %v5117
        %v5119 = vmul.f32 %v4928, 1.442695
        %v5120 = vpow.pop %v5119
        %v5121 = vadd.f32 %v4930, 1.0
        %v5122 = vadd.f32 %v4932, 1.0
        %v5123 = vadd.f32 %v4934, 1.0
        %v5124 = vadd.f32 %v4936, 1.0
        %v5125 = vadd.f32 %v4938, 1.0
        %v5126 = vadd.f32 %v4940, 1.0
        %v5127 = vadd.f32 %v4942, 1.0
        %v5128 = vadd.f32 %v4944, 1.0
        %v5129 = vadd.f32 %v4946, 1.0
        %v5130 = vadd.f32 %v4948, 1.0
        %v5131 = vadd.f32 %v4950, 1.0
        %v5132 = vadd.f32 %v4952, 1.0
        %v5133 = vadd.f32 %v4954, 1.0
        %v5134 = vadd.f32 %v4956, 1.0
        %v5135 = vadd.f32 %v4958, 1.0
        %v5136 = vadd.f32 %v4960, 1.0
        %v5137 = vadd.f32 %v4962, 1.0
        %v5138 = vadd.f32 %v4964, 1.0
        %v5139 = vadd.f32 %v4966, 1.0
        %v5140 = vadd.f32 %v4968, 1.0
        %v5141 = vadd.f32 %v4970, 1.0
        %v5142 = vadd.f32 %v4972, 1.0
        %v5143 = vadd.f32 %v4974, 1.0
        %v5144 = vadd.f32 %v4976, 1.0
        %v5145 = vadd.f32 %v4978, 1.0
        %v5146 = vadd.f32 %v4980, 1.0
        %v5147 = vadd.f32 %v4982, 1.0
        %v5148 = vadd.f32 %v4984, 1.0
        %v5149 = vadd.f32 %v4986, 1.0
        %v5150 = vadd.f32 %v4988, 1.0
        %v5151 = vadd.f32 %v4990, 1.0
        %v5152 = vadd.f32 %v4992, 1.0
        %v5153 = vadd.f32 %v4994, 1.0
        %v5154 = vadd.f32 %v4996, 1.0
        %v5155 = vadd.f32 %v4998, 1.0
        %v5156 = vadd.f32 %v5000, 1.0
        %v5157 = vadd.f32 %v5002, 1.0
        %v5158 = vadd.f32 %v5004, 1.0
        %v5159 = vadd.f32 %v5006, 1.0
        %v5160 = vadd.f32 %v5008, 1.0
        %v5161 = vadd.f32 %v5010, 1.0
        %v5162 = vadd.f32 %v5012, 1.0
        %v5163 = vadd.f32 %v5014, 1.0
        %v5164 = vadd.f32 %v5016, 1.0
        %v5165 = vadd.f32 %v5018, 1.0
        %v5166 = vadd.f32 %v5020, 1.0
        %v5167 = vadd.f32 %v5022, 1.0
        %v5168 = vadd.f32 %v5024, 1.0
        %v5169 = vadd.f32 %v5026, 1.0
        %v5170 = vadd.f32 %v5028, 1.0
        %v5171 = vadd.f32 %v5030, 1.0
        %v5172 = vadd.f32 %v5032, 1.0
        %v5173 = vadd.f32 %v5034, 1.0
        %v5174 = vadd.f32 %v5036, 1.0
        %v5175 = vadd.f32 %v5038, 1.0
        %v5176 = vadd.f32 %v5040, 1.0
        %v5177 = vadd.f32 %v5042, 1.0
        %v5178 = vadd.f32 %v5044, 1.0
        %v5179 = vadd.f32 %v5046, 1.0
        %v5180 = vadd.f32 %v5048, 1.0
        %v5181 = vadd.f32 %v5050, 1.0
        %v5182 = vadd.f32 %v5052, 1.0
        %v5183 = vadd.f32 %v5054, 1.0
        %v5184 = vadd.f32 %v5056, 1.0
        %v5185 = vadd.f32 %v5058, 1.0
        %v5186 = vadd.f32 %v5060, 1.0
        %v5187 = vadd.f32 %v5062, 1.0
        %v5188 = vadd.f32 %v5064, 1.0
        %v5189 = vadd.f32 %v5066, 1.0
        %v5190 = vadd.f32 %v5068, 1.0
        %v5191 = vadd.f32 %v5070, 1.0
        %v5192 = vadd.f32 %v5072, 1.0
        %v5193 = vadd.f32 %v5074, 1.0
        %v5194 = vadd.f32 %v5076, 1.0
        %v5195 = vadd.f32 %v5078, 1.0
        %v5196 = vadd.f32 %v5080, 1.0
        %v5197 = vadd.f32 %v5082, 1.0
        %v5198 = vadd.f32 %v5084, 1.0
        %v5199 = vadd.f32 %v5086, 1.0
        %v5200 = vadd.f32 %v5088, 1.0
        %v5201 = vadd.f32 %v5090, 1.0
        %v5202 = vadd.f32 %v5092, 1.0
        %v5203 = vadd.f32 %v5094, 1.0
        %v5204 = vadd.f32 %v5096, 1.0
        %v5205 = vadd.f32 %v5098, 1.0
        %v5206 = vadd.f32 %v5100, 1.0
        %v5207 = vadd.f32 %v5102, 1.0
        %v5208 = vadd.f32 %v5104, 1.0
        %v5209 = vadd.f32 %v5106, 1.0
        %v5210 = vadd.f32 %v5108, 1.0
        %v5211 = vadd.f32 %v5110, 1.0
        %v5212 = vadd.f32 %v5112, 1.0
        %v5213 = vadd.f32 %v5114, 1.0
        %v5214 = vadd.f32 %v5116, 1.0
        %v5215 = vadd.f32 %v5118, 1.0
        %v5216 = vadd.f32 %v5120, 1.0
        %v5217 = vrcp.pop %v5121
        %v5218 = vmul.f32 1.0, %v5217
        %v5219 = vrcp.pop %v5122
        %v5220 = vmul.f32 1.0, %v5219
        %v5221 = vrcp.pop %v5123
        %v5222 = vmul.f32 1.0, %v5221
        %v5223 = vrcp.pop %v5124
        %v5224 = vmul.f32 1.0, %v5223
        %v5225 = vrcp.pop %v5125
        %v5226 = vmul.f32 1.0, %v5225
        %v5227 = vrcp.pop %v5126
        %v5228 = vmul.f32 1.0, %v5227
        %v5229 = vrcp.pop %v5127
        %v5230 = vmul.f32 1.0, %v5229
        %v5231 = vrcp.pop %v5128
        %v5232 = vmul.f32 1.0, %v5231
        %v5233 = vrcp.pop %v5129
        %v5234 = vmul.f32 1.0, %v5233
        %v5235 = vrcp.pop %v5130
        %v5236 = vmul.f32 1.0, %v5235
        %v5237 = vrcp.pop %v5131
        %v5238 = vmul.f32 1.0, %v5237
        %v5239 = vrcp.pop %v5132
        %v5240 = vmul.f32 1.0, %v5239
        %v5241 = vrcp.pop %v5133
        %v5242 = vmul.f32 1.0, %v5241
        %v5243 = vrcp.pop %v5134
        %v5244 = vmul.f32 1.0, %v5243
        %v5245 = vrcp.pop %v5135
        %v5246 = vmul.f32 1.0, %v5245
        %v5247 = vrcp.pop %v5136
        %v5248 = vmul.f32 1.0, %v5247
        %v5249 = vrcp.pop %v5137
        %v5250 = vmul.f32 1.0, %v5249
        %v5251 = vrcp.pop %v5138
        %v5252 = vmul.f32 1.0, %v5251
        %v5253 = vrcp.pop %v5139
        %v5254 = vmul.f32 1.0, %v5253
        %v5255 = vrcp.pop %v5140
        %v5256 = vmul.f32 1.0, %v5255
        %v5257 = vrcp.pop %v5141
        %v5258 = vmul.f32 1.0, %v5257
        %v5259 = vrcp.pop %v5142
        %v5260 = vmul.f32 1.0, %v5259
        %v5261 = vrcp.pop %v5143
        %v5262 = vmul.f32 1.0, %v5261
        %v5263 = vrcp.pop %v5144
        %v5264 = vmul.f32 1.0, %v5263
        %v5265 = vrcp.pop %v5145
        %v5266 = vmul.f32 1.0, %v5265
        %v5267 = vrcp.pop %v5146
        %v5268 = vmul.f32 1.0, %v5267
        %v5269 = vrcp.pop %v5147
        %v5270 = vmul.f32 1.0, %v5269
        %v5271 = vrcp.pop %v5148
        %v5272 = vmul.f32 1.0, %v5271
        %v5273 = vrcp.pop %v5149
        %v5274 = vmul.f32 1.0, %v5273
        %v5275 = vrcp.pop %v5150
        %v5276 = vmul.f32 1.0, %v5275
        %v5277 = vrcp.pop %v5151
        %v5278 = vmul.f32 1.0, %v5277
        %v5279 = vrcp.pop %v5152
        %v5280 = vmul.f32 1.0, %v5279
        %v5281 = vrcp.pop %v5153
        %v5282 = vmul.f32 1.0, %v5281
        %v5283 = vrcp.pop %v5154
        %v5284 = vmul.f32 1.0, %v5283
        %v5285 = vrcp.pop %v5155
        %v5286 = vmul.f32 1.0, %v5285
        %v5287 = vrcp.pop %v5156
        %v5288 = vmul.f32 1.0, %v5287
        %v5289 = vrcp.pop %v5157
        %v5290 = vmul.f32 1.0, %v5289
        %v5291 = vrcp.pop %v5158
        %v5292 = vmul.f32 1.0, %v5291
        %v5293 = vrcp.pop %v5159
        %v5294 = vmul.f32 1.0, %v5293
        %v5295 = vrcp.pop %v5160
        %v5296 = vmul.f32 1.0, %v5295
        %v5297 = vrcp.pop %v5161
        %v5298 = vmul.f32 1.0, %v5297
        %v5299 = vrcp.pop %v5162
        %v5300 = vmul.f32 1.0, %v5299
        %v5301 = vrcp.pop %v5163
        %v5302 = vmul.f32 1.0, %v5301
        %v5303 = vrcp.pop %v5164
        %v5304 = vmul.f32 1.0, %v5303
        %v5305 = vrcp.pop %v5165
        %v5306 = vmul.f32 1.0, %v5305
        %v5307 = vrcp.pop %v5166
        %v5308 = vmul.f32 1.0, %v5307
        %v5309 = vrcp.pop %v5167
        %v5310 = vmul.f32 1.0, %v5309
        %v5311 = vrcp.pop %v5168
        %v5312 = vmul.f32 1.0, %v5311
        %v5313 = vrcp.pop %v5169
        %v5314 = vmul.f32 1.0, %v5313
        %v5315 = vrcp.pop %v5170
        %v5316 = vmul.f32 1.0, %v5315
        %v5317 = vrcp.pop %v5171
        %v5318 = vmul.f32 1.0, %v5317
        %v5319 = vrcp.pop %v5172
        %v5320 = vmul.f32 1.0, %v5319
        %v5321 = vrcp.pop %v5173
        %v5322 = vmul.f32 1.0, %v5321
        %v5323 = vrcp.pop %v5174
        %v5324 = vmul.f32 1.0, %v5323
        %v5325 = vrcp.pop %v5175
        %v5326 = vmul.f32 1.0, %v5325
        %v5327 = vrcp.pop %v5176
        %v5328 = vmul.f32 1.0, %v5327
        %v5329 = vrcp.pop %v5177
        %v5330 = vmul.f32 1.0, %v5329
        %v5331 = vrcp.pop %v5178
        %v5332 = vmul.f32 1.0, %v5331
        %v5333 = vrcp.pop %v5179
        %v5334 = vmul.f32 1.0, %v5333
        %v5335 = vrcp.pop %v5180
        %v5336 = vmul.f32 1.0, %v5335
        %v5337 = vrcp.pop %v5181
        %v5338 = vmul.f32 1.0, %v5337
        %v5339 = vrcp.pop %v5182
        %v5340 = vmul.f32 1.0, %v5339
        %v5341 = vrcp.pop %v5183
        %v5342 = vmul.f32 1.0, %v5341
        %v5343 = vrcp.pop %v5184
        %v5344 = vmul.f32 1.0, %v5343
        %v5345 = vrcp.pop %v5185
        %v5346 = vmul.f32 1.0, %v5345
        %v5347 = vrcp.pop %v5186
        %v5348 = vmul.f32 1.0, %v5347
        %v5349 = vrcp.pop %v5187
        %v5350 = vmul.f32 1.0, %v5349
        %v5351 = vrcp.pop %v5188
        %v5352 = vmul.f32 1.0, %v5351
        %v5353 = vrcp.pop %v5189
        %v5354 = vmul.f32 1.0, %v5353
        %v5355 = vrcp.pop %v5190
        %v5356 = vmul.f32 1.0, %v5355
        %v5357 = vrcp.pop %v5191
        %v5358 = vmul.f32 1.0, %v5357
        %v5359 = vrcp.pop %v5192
        %v5360 = vmul.f32 1.0, %v5359
        %v5361 = vrcp.pop %v5193
        %v5362 = vmul.f32 1.0, %v5361
        %v5363 = vrcp.pop %v5194
        %v5364 = vmul.f32 1.0, %v5363
        %v5365 = vrcp.pop %v5195
        %v5366 = vmul.f32 1.0, %v5365
        %v5367 = vrcp.pop %v5196
        %v5368 = vmul.f32 1.0, %v5367
        %v5369 = vrcp.pop %v5197
        %v5370 = vmul.f32 1.0, %v5369
        %v5371 = vrcp.pop %v5198
        %v5372 = vmul.f32 1.0, %v5371
        %v5373 = vrcp.pop %v5199
        %v5374 = vmul.f32 1.0, %v5373
        %v5375 = vrcp.pop %v5200
        %v5376 = vmul.f32 1.0, %v5375
        %v5377 = vrcp.pop %v5201
        %v5378 = vmul.f32 1.0, %v5377
        %v5379 = vrcp.pop %v5202
        %v5380 = vmul.f32 1.0, %v5379
        %v5381 = vrcp.pop %v5203
        %v5382 = vmul.f32 1.0, %v5381
        %v5383 = vrcp.pop %v5204
        %v5384 = vmul.f32 1.0, %v5383
        %v5385 = vrcp.pop %v5205
        %v5386 = vmul.f32 1.0, %v5385
        %v5387 = vrcp.pop %v5206
        %v5388 = vmul.f32 1.0, %v5387
        %v5389 = vrcp.pop %v5207
        %v5390 = vmul.f32 1.0, %v5389
        %v5391 = vrcp.pop %v5208
        %v5392 = vmul.f32 1.0, %v5391
        %v5393 = vrcp.pop %v5209
        %v5394 = vmul.f32 1.0, %v5393
        %v5395 = vrcp.pop %v5210
        %v5396 = vmul.f32 1.0, %v5395
        %v5397 = vrcp.pop %v5211
        %v5398 = vmul.f32 1.0, %v5397
        %v5399 = vrcp.pop %v5212
        %v5400 = vmul.f32 1.0, %v5399
        %v5401 = vrcp.pop %v5213
        %v5402 = vmul.f32 1.0, %v5401
        %v5403 = vrcp.pop %v5214
        %v5404 = vmul.f32 1.0, %v5403
        %v5405 = vrcp.pop %v5215
        %v5406 = vmul.f32 1.0, %v5405
        %v5407 = vrcp.pop %v5216
        %v5408 = vmul.f32 1.0, %v5407
        %v5409 = vmul.f32 %v4546, %v4737
        %v5410 = vmul.f32 %v4548, %v4738
        %v5411 = vmul.f32 %v4550, %v4739
        %v5412 = vmul.f32 %v4552, %v4740
        %v5413 = vmul.f32 %v4554, %v4741
        %v5414 = vmul.f32 %v4556, %v4742
        %v5415 = vmul.f32 %v4558, %v4743
        %v5416 = vmul.f32 %v4560, %v4744
        %v5417 = vmul.f32 %v4562, %v4745
        %v5418 = vmul.f32 %v4564, %v4746
        %v5419 = vmul.f32 %v4566, %v4747
        %v5420 = vmul.f32 %v4568, %v4748
        %v5421 = vmul.f32 %v4570, %v4749
        %v5422 = vmul.f32 %v4572, %v4750
        %v5423 = vmul.f32 %v4574, %v4751
        %v5424 = vmul.f32 %v4576, %v4752
        %v5425 = vmul.f32 %v4578, %v4753
        %v5426 = vmul.f32 %v4580, %v4754
        %v5427 = vmul.f32 %v4582, %v4755
        %v5428 = vmul.f32 %v4584, %v4756
        %v5429 = vmul.f32 %v4586, %v4757
        %v5430 = vmul.f32 %v4588, %v4758
        %v5431 = vmul.f32 %v4590, %v4759
        %v5432 = vmul.f32 %v4592, %v4760
        %v5433 = vmul.f32 %v4594, %v4761
        %v5434 = vmul.f32 %v4596, %v4762
        %v5435 = vmul.f32 %v4598, %v4763
        %v5436 = vmul.f32 %v4600, %v4764
        %v5437 = vmul.f32 %v4602, %v4765
        %v5438 = vmul.f32 %v4604, %v4766
        %v5439 = vmul.f32 %v4606, %v4767
        %v5440 = vmul.f32 %v4608, %v4768
        %v5441 = vmul.f32 %v4610, %v4769
        %v5442 = vmul.f32 %v4612, %v4770
        %v5443 = vmul.f32 %v4614, %v4771
        %v5444 = vmul.f32 %v4616, %v4772
        %v5445 = vmul.f32 %v4618, %v4773
        %v5446 = vmul.f32 %v4620, %v4774
        %v5447 = vmul.f32 %v4622, %v4775
        %v5448 = vmul.f32 %v4624, %v4776
        %v5449 = vmul.f32 %v4626, %v4777
        %v5450 = vmul.f32 %v4628, %v4778
        %v5451 = vmul.f32 %v4630, %v4779
        %v5452 = vmul.f32 %v4632, %v4780
        %v5453 = vmul.f32 %v4634, %v4781
        %v5454 = vmul.f32 %v4636, %v4782
        %v5455 = vmul.f32 %v4638, %v4783
        %v5456 = vmul.f32 %v4640, %v4784
        %v5457 = vmul.f32 %v4642, %v4785
        %v5458 = vmul.f32 %v4644, %v4786
        %v5459 = vmul.f32 %v4646, %v4787
        %v5460 = vmul.f32 %v4648, %v4788
        %v5461 = vmul.f32 %v4650, %v4789
        %v5462 = vmul.f32 %v4652, %v4790
        %v5463 = vmul.f32 %v4654, %v4791
        %v5464 = vmul.f32 %v4656, %v4792
        %v5465 = vmul.f32 %v4658, %v4793
        %v5466 = vmul.f32 %v4660, %v4794
        %v5467 = vmul.f32 %v4662, %v4795
        %v5468 = vmul.f32 %v4664, %v4796
        %v5469 = vmul.f32 %v4666, %v4797
        %v5470 = vmul.f32 %v4668, %v4798
        %v5471 = vmul.f32 %v4670, %v4799
        %v5472 = vmul.f32 %v4672, %v4800
        %v5473 = vmul.f32 %v4674, %v4801
        %v5474 = vmul.f32 %v4676, %v4802
        %v5475 = vmul.f32 %v4678, %v4803
        %v5476 = vmul.f32 %v4680, %v4804
        %v5477 = vmul.f32 %v4682, %v4805
        %v5478 = vmul.f32 %v4684, %v4806
        %v5479 = vmul.f32 %v4686, %v4807
        %v5480 = vmul.f32 %v4688, %v4808
        %v5481 = vmul.f32 %v4690, %v4809
        %v5482 = vmul.f32 %v4692, %v4810
        %v5483 = vmul.f32 %v4694, %v4811
        %v5484 = vmul.f32 %v4696, %v4812
        %v5485 = vmul.f32 %v4698, %v4813
        %v5486 = vmul.f32 %v4700, %v4814
        %v5487 = vmul.f32 %v4702, %v4815
        %v5488 = vmul.f32 %v4704, %v4816
        %v5489 = vmul.f32 %v4706, %v4817
        %v5490 = vmul.f32 %v4708, %v4818
        %v5491 = vmul.f32 %v4710, %v4819
        %v5492 = vmul.f32 %v4712, %v4820
        %v5493 = vmul.f32 %v4714, %v4821
        %v5494 = vmul.f32 %v4716, %v4822
        %v5495 = vmul.f32 %v4718, %v4823
        %v5496 = vmul.f32 %v4720, %v4824
        %v5497 = vmul.f32 %v4722, %v4825
        %v5498 = vmul.f32 %v4724, %v4826
        %v5499 = vmul.f32 %v4726, %v4827
        %v5500 = vmul.f32 %v4728, %v4828
        %v5501 = vmul.f32 %v4730, %v4829
        %v5502 = vmul.f32 %v4732, %v4830
        %v5503 = vmul.f32 %v4734, %v4831
        %v5504 = vmul.f32 %v4736, %v4832
        %v5505 = vtanh.pop %v5409
        %v5506 = vtanh.pop %v5410
        %v5507 = vtanh.pop %v5411
        %v5508 = vtanh.pop %v5412
        %v5509 = vtanh.pop %v5413
        %v5510 = vtanh.pop %v5414
        %v5511 = vtanh.pop %v5415
        %v5512 = vtanh.pop %v5416
        %v5513 = vtanh.pop %v5417
        %v5514 = vtanh.pop %v5418
        %v5515 = vtanh.pop %v5419
        %v5516 = vtanh.pop %v5420
        %v5517 = vtanh.pop %v5421
        %v5518 = vtanh.pop %v5422
        %v5519 = vtanh.pop %v5423
        %v5520 = vtanh.pop %v5424
        %v5521 = vtanh.pop %v5425
        %v5522 = vtanh.pop %v5426
        %v5523 = vtanh.pop %v5427
        %v5524 = vtanh.pop %v5428
        %v5525 = vtanh.pop %v5429
        %v5526 = vtanh.pop %v5430
        %v5527 = vtanh.pop %v5431
        %v5528 = vtanh.pop %v5432
        %v5529 = vtanh.pop %v5433
        %v5530 = vtanh.pop %v5434
        %v5531 = vtanh.pop %v5435
        %v5532 = vtanh.pop %v5436
        %v5533 = vtanh.pop %v5437
        %v5534 = vtanh.pop %v5438
        %v5535 = vtanh.pop %v5439
        %v5536 = vtanh.pop %v5440
        %v5537 = vtanh.pop %v5441
        %v5538 = vtanh.pop %v5442
        %v5539 = vtanh.pop %v5443
        %v5540 = vtanh.pop %v5444
        %v5541 = vtanh.pop %v5445
        %v5542 = vtanh.pop %v5446
        %v5543 = vtanh.pop %v5447
        %v5544 = vtanh.pop %v5448
        %v5545 = vtanh.pop %v5449
        %v5546 = vtanh.pop %v5450
        %v5547 = vtanh.pop %v5451
        %v5548 = vtanh.pop %v5452
        %v5549 = vtanh.pop %v5453
        %v5550 = vtanh.pop %v5454
        %v5551 = vtanh.pop %v5455
        %v5552 = vtanh.pop %v5456
        %v5553 = vtanh.pop %v5457
        %v5554 = vtanh.pop %v5458
        %v5555 = vtanh.pop %v5459
        %v5556 = vtanh.pop %v5460
        %v5557 = vtanh.pop %v5461
        %v5558 = vtanh.pop %v5462
        %v5559 = vtanh.pop %v5463
        %v5560 = vtanh.pop %v5464
        %v5561 = vtanh.pop %v5465
        %v5562 = vtanh.pop %v5466
        %v5563 = vtanh.pop %v5467
        %v5564 = vtanh.pop %v5468
        %v5565 = vtanh.pop %v5469
        %v5566 = vtanh.pop %v5470
        %v5567 = vtanh.pop %v5471
        %v5568 = vtanh.pop %v5472
        %v5569 = vtanh.pop %v5473
        %v5570 = vtanh.pop %v5474
        %v5571 = vtanh.pop %v5475
        %v5572 = vtanh.pop %v5476
        %v5573 = vtanh.pop %v5477
        %v5574 = vtanh.pop %v5478
        %v5575 = vtanh.pop %v5479
        %v5576 = vtanh.pop %v5480
        %v5577 = vtanh.pop %v5481
        %v5578 = vtanh.pop %v5482
        %v5579 = vtanh.pop %v5483
        %v5580 = vtanh.pop %v5484
        %v5581 = vtanh.pop %v5485
        %v5582 = vtanh.pop %v5486
        %v5583 = vtanh.pop %v5487
        %v5584 = vtanh.pop %v5488
        %v5585 = vtanh.pop %v5489
        %v5586 = vtanh.pop %v5490
        %v5587 = vtanh.pop %v5491
        %v5588 = vtanh.pop %v5492
        %v5589 = vtanh.pop %v5493
        %v5590 = vtanh.pop %v5494
        %v5591 = vtanh.pop %v5495
        %v5592 = vtanh.pop %v5496
        %v5593 = vtanh.pop %v5497
        %v5594 = vtanh.pop %v5498
        %v5595 = vtanh.pop %v5499
        %v5596 = vtanh.pop %v5500
        %v5597 = vtanh.pop %v5501
        %v5598 = vtanh.pop %v5502
        %v5599 = vtanh.pop %v5503
        %v5600 = vtanh.pop %v5504
        %v5601 = vmul.f32 %v5218, %v5505
        %v5602 = vmul.f32 %v5220, %v5506
        %v5603 = vmul.f32 %v5222, %v5507
        %v5604 = vmul.f32 %v5224, %v5508
        %v5605 = vmul.f32 %v5226, %v5509
        %v5606 = vmul.f32 %v5228, %v5510
        %v5607 = vmul.f32 %v5230, %v5511
        %v5608 = vmul.f32 %v5232, %v5512
        %v5609 = vmul.f32 %v5234, %v5513
        %v5610 = vmul.f32 %v5236, %v5514
        %v5611 = vmul.f32 %v5238, %v5515
        %v5612 = vmul.f32 %v5240, %v5516
        %v5613 = vmul.f32 %v5242, %v5517
        %v5614 = vmul.f32 %v5244, %v5518
        %v5615 = vmul.f32 %v5246, %v5519
        %v5616 = vmul.f32 %v5248, %v5520
        %v5617 = vmul.f32 %v5250, %v5521
        %v5618 = vmul.f32 %v5252, %v5522
        %v5619 = vmul.f32 %v5254, %v5523
        %v5620 = vmul.f32 %v5256, %v5524
        %v5621 = vmul.f32 %v5258, %v5525
        %v5622 = vmul.f32 %v5260, %v5526
        %v5623 = vmul.f32 %v5262, %v5527
        %v5624 = vmul.f32 %v5264, %v5528
        %v5625 = vmul.f32 %v5266, %v5529
        %v5626 = vmul.f32 %v5268, %v5530
        %v5627 = vmul.f32 %v5270, %v5531
        %v5628 = vmul.f32 %v5272, %v5532
        %v5629 = vmul.f32 %v5274, %v5533
        %v5630 = vmul.f32 %v5276, %v5534
        %v5631 = vmul.f32 %v5278, %v5535
        %v5632 = vmul.f32 %v5280, %v5536
        %v5633 = vmul.f32 %v5282, %v5537
        %v5634 = vmul.f32 %v5284, %v5538
        %v5635 = vmul.f32 %v5286, %v5539
        %v5636 = vmul.f32 %v5288, %v5540
        %v5637 = vmul.f32 %v5290, %v5541
        %v5638 = vmul.f32 %v5292, %v5542
        %v5639 = vmul.f32 %v5294, %v5543
        %v5640 = vmul.f32 %v5296, %v5544
        %v5641 = vmul.f32 %v5298, %v5545
        %v5642 = vmul.f32 %v5300, %v5546
        %v5643 = vmul.f32 %v5302, %v5547
        %v5644 = vmul.f32 %v5304, %v5548
        %v5645 = vmul.f32 %v5306, %v5549
        %v5646 = vmul.f32 %v5308, %v5550
        %v5647 = vmul.f32 %v5310, %v5551
        %v5648 = vmul.f32 %v5312, %v5552
        %v5649 = vmul.f32 %v5314, %v5553
        %v5650 = vmul.f32 %v5316, %v5554
        %v5651 = vmul.f32 %v5318, %v5555
        %v5652 = vmul.f32 %v5320, %v5556
        %v5653 = vmul.f32 %v5322, %v5557
        %v5654 = vmul.f32 %v5324, %v5558
        %v5655 = vmul.f32 %v5326, %v5559
        %v5656 = vmul.f32 %v5328, %v5560
        %v5657 = vmul.f32 %v5330, %v5561
        %v5658 = vmul.f32 %v5332, %v5562
        %v5659 = vmul.f32 %v5334, %v5563
        %v5660 = vmul.f32 %v5336, %v5564
        %v5661 = vmul.f32 %v5338, %v5565
        %v5662 = vmul.f32 %v5340, %v5566
        %v5663 = vmul.f32 %v5342, %v5567
        %v5664 = vmul.f32 %v5344, %v5568
        %v5665 = vmul.f32 %v5346, %v5569
        %v5666 = vmul.f32 %v5348, %v5570
        %v5667 = vmul.f32 %v5350, %v5571
        %v5668 = vmul.f32 %v5352, %v5572
        %v5669 = vmul.f32 %v5354, %v5573
        %v5670 = vmul.f32 %v5356, %v5574
        %v5671 = vmul.f32 %v5358, %v5575
        %v5672 = vmul.f32 %v5360, %v5576
        %v5673 = vmul.f32 %v5362, %v5577
        %v5674 = vmul.f32 %v5364, %v5578
        %v5675 = vmul.f32 %v5366, %v5579
        %v5676 = vmul.f32 %v5368, %v5580
        %v5677 = vmul.f32 %v5370, %v5581
        %v5678 = vmul.f32 %v5372, %v5582
        %v5679 = vmul.f32 %v5374, %v5583
        %v5680 = vmul.f32 %v5376, %v5584
        %v5681 = vmul.f32 %v5378, %v5585
        %v5682 = vmul.f32 %v5380, %v5586
        %v5683 = vmul.f32 %v5382, %v5587
        %v5684 = vmul.f32 %v5384, %v5588
        %v5685 = vmul.f32 %v5386, %v5589
        %v5686 = vmul.f32 %v5388, %v5590
        %v5687 = vmul.f32 %v5390, %v5591
        %v5688 = vmul.f32 %v5392, %v5592
        %v5689 = vmul.f32 %v5394, %v5593
        %v5690 = vmul.f32 %v5396, %v5594
        %v5691 = vmul.f32 %v5398, %v5595
        %v5692 = vmul.f32 %v5400, %v5596
        %v5693 = vmul.f32 %v5402, %v5597
        %v5694 = vmul.f32 %v5404, %v5598
        %v5695 = vmul.f32 %v5406, %v5599
        %v5696 = vmul.f32 %v5408, %v5600
        %5697 = vst [vmem:[%s328] sm:$0xff] %v5601
        %5698 = vst [vmem:[%s328 + $0x8] sm:$0xff] %v5602
        %5699 = vst [vmem:[%s328 + $0x10] sm:$0xff] %v5603
        %5700 = vst [vmem:[%s328 + $0x18] sm:$0xff] %v5604
        %5701 = vst [vmem:[%s328 + $0x20] sm:$0xff] %v5605
        %5702 = vst [vmem:[%s328 + $0x28] sm:$0xff] %v5606
        %5703 = vst [vmem:[%s328 + $0x30] sm:$0xff] %v5607
        %5704 = vst [vmem:[%s328 + $0x38] sm:$0xff] %v5608
        %5705 = vst [vmem:[%s328 + $0x40] sm:$0xff] %v5609
        %5706 = vst [vmem:[%s328 + $0x48] sm:$0xff] %v5610
        %5707 = vst [vmem:[%s328 + $0x50] sm:$0xff] %v5611
        %5708 = vst [vmem:[%s328 + $0x58] sm:$0xff] %v5612
        %5709 = vst [vmem:[%s328 + $0x60] sm:$0xff] %v5613
        %5710 = vst [vmem:[%s328 + $0x68] sm:$0xff] %v5614
        %5711 = vst [vmem:[%s328 + $0x70] sm:$0xff] %v5615
        %5712 = vst [vmem:[%s328 + $0x78] sm:$0xff] %v5616
        %5713 = vst [vmem:[%s328 + $0x80] sm:$0xff] %v5617
        %5714 = vst [vmem:[%s328 + $0x88] sm:$0xff] %v5618
        %5715 = vst [vmem:[%s328 + $0x90] sm:$0xff] %v5619
        %5716 = vst [vmem:[%s328 + $0x98] sm:$0xff] %v5620
        %5717 = vst [vmem:[%s328 + $0xa0] sm:$0xff] %v5621
        %5718 = vst [vmem:[%s328 + $0xa8] sm:$0xff] %v5622
        %5719 = vst [vmem:[%s328 + $0xb0] sm:$0xff] %v5623
        %5720 = vst [vmem:[%s328 + $0xb8] sm:$0xff] %v5624
        %5721 = vst [vmem:[%s328 + $0xc0] sm:$0xff] %v5625
        %5722 = vst [vmem:[%s328 + $0xc8] sm:$0xff] %v5626
        %5723 = vst [vmem:[%s328 + $0xd0] sm:$0xff] %v5627
        %5724 = vst [vmem:[%s328 + $0xd8] sm:$0xff] %v5628
        %5725 = vst [vmem:[%s328 + $0xe0] sm:$0xff] %v5629
        %5726 = vst [vmem:[%s328 + $0xe8] sm:$0xff] %v5630
        %5727 = vst [vmem:[%s328 + $0xf0] sm:$0xff] %v5631
        %5728 = vst [vmem:[%s328 + $0xf8] sm:$0xff] %v5632
        %5729 = vst [vmem:[%s328 + $0x100] sm:$0xff] %v5633
        %5730 = vst [vmem:[%s328 + $0x108] sm:$0xff] %v5634
        %5731 = vst [vmem:[%s328 + $0x110] sm:$0xff] %v5635
        %5732 = vst [vmem:[%s328 + $0x118] sm:$0xff] %v5636
        %5733 = vst [vmem:[%s328 + $0x120] sm:$0xff] %v5637
        %5734 = vst [vmem:[%s328 + $0x128] sm:$0xff] %v5638
        %5735 = vst [vmem:[%s328 + $0x130] sm:$0xff] %v5639
        %5736 = vst [vmem:[%s328 + $0x138] sm:$0xff] %v5640
        %5737 = vst [vmem:[%s328 + $0x140] sm:$0xff] %v5641
        %5738 = vst [vmem:[%s328 + $0x148] sm:$0xff] %v5642
        %5739 = vst [vmem:[%s328 + $0x150] sm:$0xff] %v5643
        %5740 = vst [vmem:[%s328 + $0x158] sm:$0xff] %v5644
        %5741 = vst [vmem:[%s328 + $0x160] sm:$0xff] %v5645
        %5742 = vst [vmem:[%s328 + $0x168] sm:$0xff] %v5646
        %5743 = vst [vmem:[%s328 + $0x170] sm:$0xff] %v5647
        %5744 = vst [vmem:[%s328 + $0x178] sm:$0xff] %v5648
        %5745 = vst [vmem:[%s328 + $0x180] sm:$0xff] %v5649
        %5746 = vst [vmem:[%s328 + $0x188] sm:$0xff] %v5650
        %5747 = vst [vmem:[%s328 + $0x190] sm:$0xff] %v5651
        %5748 = vst [vmem:[%s328 + $0x198] sm:$0xff] %v5652
        %5749 = vst [vmem:[%s328 + $0x1a0] sm:$0xff] %v5653
        %5750 = vst [vmem:[%s328 + $0x1a8] sm:$0xff] %v5654
        %5751 = vst [vmem:[%s328 + $0x1b0] sm:$0xff] %v5655
        %5752 = vst [vmem:[%s328 + $0x1b8] sm:$0xff] %v5656
        %5753 = vst [vmem:[%s328 + $0x1c0] sm:$0xff] %v5657
        %5754 = vst [vmem:[%s328 + $0x1c8] sm:$0xff] %v5658
        %5755 = vst [vmem:[%s328 + $0x1d0] sm:$0xff] %v5659
        %5756 = vst [vmem:[%s328 + $0x1d8] sm:$0xff] %v5660
        %5757 = vst [vmem:[%s328 + $0x1e0] sm:$0xff] %v5661
        %5758 = vst [vmem:[%s328 + $0x1e8] sm:$0xff] %v5662
        %5759 = vst [vmem:[%s328 + $0x1f0] sm:$0xff] %v5663
        %5760 = vst [vmem:[%s328 + $0x1f8] sm:$0xff] %v5664
        %5761 = vst [vmem:[%s328 + $0x200] sm:$0xff] %v5665
        %5762 = vst [vmem:[%s328 + $0x208] sm:$0xff] %v5666
        %5763 = vst [vmem:[%s328 + $0x210] sm:$0xff] %v5667
        %5764 = vst [vmem:[%s328 + $0x218] sm:$0xff] %v5668
        %5765 = vst [vmem:[%s328 + $0x220] sm:$0xff] %v5669
        %5766 = vst [vmem:[%s328 + $0x228] sm:$0xff] %v5670
        %5767 = vst [vmem:[%s328 + $0x230] sm:$0xff] %v5671
        %5768 = vst [vmem:[%s328 + $0x238] sm:$0xff] %v5672
        %5769 = vst [vmem:[%s328 + $0x240] sm:$0xff] %v5673
        %5770 = vst [vmem:[%s328 + $0x248] sm:$0xff] %v5674
        %5771 = vst [vmem:[%s328 + $0x250] sm:$0xff] %v5675
        %5772 = vst [vmem:[%s328 + $0x258] sm:$0xff] %v5676
        %5773 = vst [vmem:[%s328 + $0x260] sm:$0xff] %v5677
        %5774 = vst [vmem:[%s328 + $0x268] sm:$0xff] %v5678
        %5775 = vst [vmem:[%s328 + $0x270] sm:$0xff] %v5679
        %5776 = vst [vmem:[%s328 + $0x278] sm:$0xff] %v5680
        %5777 = vst [vmem:[%s328 + $0x280] sm:$0xff] %v5681
        %5778 = vst [vmem:[%s328 + $0x288] sm:$0xff] %v5682
        %5779 = vst [vmem:[%s328 + $0x290] sm:$0xff] %v5683
        %5780 = vst [vmem:[%s328 + $0x298] sm:$0xff] %v5684
        %5781 = vst [vmem:[%s328 + $0x2a0] sm:$0xff] %v5685
        %5782 = vst [vmem:[%s328 + $0x2a8] sm:$0xff] %v5686
        %5783 = vst [vmem:[%s328 + $0x2b0] sm:$0xff] %v5687
        %5784 = vst [vmem:[%s328 + $0x2b8] sm:$0xff] %v5688
        %5785 = vst [vmem:[%s328 + $0x2c0] sm:$0xff] %v5689
        %5786 = vst [vmem:[%s328 + $0x2c8] sm:$0xff] %v5690
        %5787 = vst [vmem:[%s328 + $0x2d0] sm:$0xff] %v5691
        %5788 = vst [vmem:[%s328 + $0x2d8] sm:$0xff] %v5692
        %5789 = vst [vmem:[%s328 + $0x2e0] sm:$0xff] %v5693
        %5790 = vst [vmem:[%s328 + $0x2e8] sm:$0xff] %v5694
        %5791 = vst [vmem:[%s328 + $0x2f0] sm:$0xff] %v5695
        %5792 = vst [vmem:[%s328 + $0x2f8] sm:$0xff] %v5696
        %v5793 = vld [vmem:[%s334 + $0x300] sm:$0xff]
        %v5794 = vld [vmem:[%s334 + $0x308] sm:$0xff]
        %v5795 = vld [vmem:[%s334 + $0x310] sm:$0xff]
        %v5796 = vld [vmem:[%s334 + $0x318] sm:$0xff]
        %v5797 = vld [vmem:[%s334 + $0x320] sm:$0xff]
        %v5798 = vld [vmem:[%s334 + $0x328] sm:$0xff]
        %v5799 = vld [vmem:[%s334 + $0x330] sm:$0xff]
        %v5800 = vld [vmem:[%s334 + $0x338] sm:$0xff]
        %v5801 = vld [vmem:[%s334 + $0x340] sm:$0xff]
        %v5802 = vld [vmem:[%s334 + $0x348] sm:$0xff]
        %v5803 = vld [vmem:[%s334 + $0x350] sm:$0xff]
        %v5804 = vld [vmem:[%s334 + $0x358] sm:$0xff]
        %v5805 = vld [vmem:[%s334 + $0x360] sm:$0xff]
        %v5806 = vld [vmem:[%s334 + $0x368] sm:$0xff]
        %v5807 = vld [vmem:[%s334 + $0x370] sm:$0xff]
        %v5808 = vld [vmem:[%s334 + $0x378] sm:$0xff]
        %v5809 = vld [vmem:[%s334 + $0x380] sm:$0xff]
        %v5810 = vld [vmem:[%s334 + $0x388] sm:$0xff]
        %v5811 = vld [vmem:[%s334 + $0x390] sm:$0xff]
        %v5812 = vld [vmem:[%s334 + $0x398] sm:$0xff]
        %v5813 = vld [vmem:[%s334 + $0x3a0] sm:$0xff]
        %v5814 = vld [vmem:[%s334 + $0x3a8] sm:$0xff]
        %v5815 = vld [vmem:[%s334 + $0x3b0] sm:$0xff]
        %v5816 = vld [vmem:[%s334 + $0x3b8] sm:$0xff]
        %v5817 = vld [vmem:[%s334 + $0x3c0] sm:$0xff]
        %v5818 = vld [vmem:[%s334 + $0x3c8] sm:$0xff]
        %v5819 = vld [vmem:[%s334 + $0x3d0] sm:$0xff]
        %v5820 = vld [vmem:[%s334 + $0x3d8] sm:$0xff]
        %v5821 = vld [vmem:[%s334 + $0x3e0] sm:$0xff]
        %v5822 = vld [vmem:[%s334 + $0x3e8] sm:$0xff]
        %v5823 = vld [vmem:[%s334 + $0x3f0] sm:$0xff]
        %v5824 = vld [vmem:[%s334 + $0x3f8] sm:$0xff]
        %v5825 = vld [vmem:[%s334 + $0x400] sm:$0xff]
        %v5826 = vld [vmem:[%s334 + $0x408] sm:$0xff]
        %v5827 = vld [vmem:[%s334 + $0x410] sm:$0xff]
        %v5828 = vld [vmem:[%s334 + $0x418] sm:$0xff]
        %v5829 = vld [vmem:[%s334 + $0x420] sm:$0xff]
        %v5830 = vld [vmem:[%s334 + $0x428] sm:$0xff]
        %v5831 = vld [vmem:[%s334 + $0x430] sm:$0xff]
        %v5832 = vld [vmem:[%s334 + $0x438] sm:$0xff]
        %v5833 = vld [vmem:[%s334 + $0x440] sm:$0xff]
        %v5834 = vld [vmem:[%s334 + $0x448] sm:$0xff]
        %v5835 = vld [vmem:[%s334 + $0x450] sm:$0xff]
        %v5836 = vld [vmem:[%s334 + $0x458] sm:$0xff]
        %v5837 = vld [vmem:[%s334 + $0x460] sm:$0xff]
        %v5838 = vld [vmem:[%s334 + $0x468] sm:$0xff]
        %v5839 = vld [vmem:[%s334 + $0x470] sm:$0xff]
        %v5840 = vld [vmem:[%s334 + $0x478] sm:$0xff]
        %v5841 = vld [vmem:[%s334 + $0x480] sm:$0xff]
        %v5842 = vld [vmem:[%s334 + $0x488] sm:$0xff]
        %v5843 = vld [vmem:[%s334 + $0x490] sm:$0xff]
        %v5844 = vld [vmem:[%s334 + $0x498] sm:$0xff]
        %v5845 = vld [vmem:[%s334 + $0x4a0] sm:$0xff]
        %v5846 = vld [vmem:[%s334 + $0x4a8] sm:$0xff]
        %v5847 = vld [vmem:[%s334 + $0x4b0] sm:$0xff]
        %v5848 = vld [vmem:[%s334 + $0x4b8] sm:$0xff]
        %v5849 = vld [vmem:[%s334 + $0x4c0] sm:$0xff]
        %v5850 = vld [vmem:[%s334 + $0x4c8] sm:$0xff]
        %v5851 = vld [vmem:[%s334 + $0x4d0] sm:$0xff]
        %v5852 = vld [vmem:[%s334 + $0x4d8] sm:$0xff]
        %v5853 = vld [vmem:[%s334 + $0x4e0] sm:$0xff]
        %v5854 = vld [vmem:[%s334 + $0x4e8] sm:$0xff]
        %v5855 = vld [vmem:[%s334 + $0x4f0] sm:$0xff]
        %v5856 = vld [vmem:[%s334 + $0x4f8] sm:$0xff]
        %v5857 = vld [vmem:[%s334 + $0x500] sm:$0xff]
        %v5858 = vld [vmem:[%s334 + $0x508] sm:$0xff]
        %v5859 = vld [vmem:[%s334 + $0x510] sm:$0xff]
        %v5860 = vld [vmem:[%s334 + $0x518] sm:$0xff]
        %v5861 = vld [vmem:[%s334 + $0x520] sm:$0xff]
        %v5862 = vld [vmem:[%s334 + $0x528] sm:$0xff]
        %v5863 = vld [vmem:[%s334 + $0x530] sm:$0xff]
        %v5864 = vld [vmem:[%s334 + $0x538] sm:$0xff]
        %v5865 = vld [vmem:[%s334 + $0x540] sm:$0xff]
        %v5866 = vld [vmem:[%s334 + $0x548] sm:$0xff]
        %v5867 = vld [vmem:[%s334 + $0x550] sm:$0xff]
        %v5868 = vld [vmem:[%s334 + $0x558] sm:$0xff]
        %v5869 = vld [vmem:[%s334 + $0x560] sm:$0xff]
        %v5870 = vld [vmem:[%s334 + $0x568] sm:$0xff]
        %v5871 = vld [vmem:[%s334 + $0x570] sm:$0xff]
        %v5872 = vld [vmem:[%s334 + $0x578] sm:$0xff]
        %v5873 = vld [vmem:[%s334 + $0x580] sm:$0xff]
        %v5874 = vld [vmem:[%s334 + $0x588] sm:$0xff]
        %v5875 = vld [vmem:[%s334 + $0x590] sm:$0xff]
        %v5876 = vld [vmem:[%s334 + $0x598] sm:$0xff]
        %v5877 = vld [vmem:[%s334 + $0x5a0] sm:$0xff]
        %v5878 = vld [vmem:[%s334 + $0x5a8] sm:$0xff]
        %v5879 = vld [vmem:[%s334 + $0x5b0] sm:$0xff]
        %v5880 = vld [vmem:[%s334 + $0x5b8] sm:$0xff]
        %v5881 = vld [vmem:[%s334 + $0x5c0] sm:$0xff]
        %v5882 = vld [vmem:[%s334 + $0x5c8] sm:$0xff]
        %v5883 = vld [vmem:[%s334 + $0x5d0] sm:$0xff]
        %v5884 = vld [vmem:[%s334 + $0x5d8] sm:$0xff]
        %v5885 = vld [vmem:[%s334 + $0x5e0] sm:$0xff]
        %v5886 = vld [vmem:[%s334 + $0x5e8] sm:$0xff]
        %v5887 = vld [vmem:[%s334 + $0x5f0] sm:$0xff]
        %v5888 = vld [vmem:[%s334 + $0x5f8] sm:$0xff]
        %v5889 = vpack.c.bf16 %v5796, %v5793
        %v5890 = vpack.c.bf16 %v5797, %v5794
        %v5891 = vpack.c.bf16 %v5798, %v5795
        %v5892 = vpack.c.bf16 %v5802, %v5799
        %v5893 = vpack.c.bf16 %v5803, %v5800
        %v5894 = vpack.c.bf16 %v5804, %v5801
        %v5895 = vpack.c.bf16 %v5808, %v5805
        %v5896 = vpack.c.bf16 %v5809, %v5806
        %v5897 = vpack.c.bf16 %v5810, %v5807
        %v5898 = vpack.c.bf16 %v5814, %v5811
        %v5899 = vpack.c.bf16 %v5815, %v5812
        %v5900 = vpack.c.bf16 %v5816, %v5813
        %v5901 = vpack.c.bf16 %v5820, %v5817
        %v5902 = vpack.c.bf16 %v5821, %v5818
        %v5903 = vpack.c.bf16 %v5822, %v5819
        %v5904 = vpack.c.bf16 %v5826, %v5823
        %v5905 = vpack.c.bf16 %v5827, %v5824
        %v5906 = vpack.c.bf16 %v5828, %v5825
        %v5907 = vpack.c.bf16 %v5832, %v5829
        %v5908 = vpack.c.bf16 %v5833, %v5830
        %v5909 = vpack.c.bf16 %v5834, %v5831
        %v5910 = vpack.c.bf16 %v5838, %v5835
        %v5911 = vpack.c.bf16 %v5839, %v5836
        %v5912 = vpack.c.bf16 %v5840, %v5837
        %v5913 = vpack.c.bf16 %v5844, %v5841
        %v5914 = vpack.c.bf16 %v5845, %v5842
        %v5915 = vpack.c.bf16 %v5846, %v5843
        %v5916 = vpack.c.bf16 %v5850, %v5847
        %v5917 = vpack.c.bf16 %v5851, %v5848
        %v5918 = vpack.c.bf16 %v5852, %v5849
        %v5919 = vpack.c.bf16 %v5856, %v5853
        %v5920 = vpack.c.bf16 %v5857, %v5854
        %v5921 = vpack.c.bf16 %v5858, %v5855
        %v5922 = vpack.c.bf16 %v5862, %v5859
        %v5923 = vpack.c.bf16 %v5863, %v5860
        %v5924 = vpack.c.bf16 %v5864, %v5861
        %v5925 = vpack.c.bf16 %v5868, %v5865
        %v5926 = vpack.c.bf16 %v5869, %v5866
        %v5927 = vpack.c.bf16 %v5870, %v5867
        %v5928 = vpack.c.bf16 %v5874, %v5871
        %v5929 = vpack.c.bf16 %v5875, %v5872
        %v5930 = vpack.c.bf16 %v5876, %v5873
        %v5931 = vpack.c.bf16 %v5880, %v5877
        %v5932 = vpack.c.bf16 %v5881, %v5878
        %v5933 = vpack.c.bf16 %v5882, %v5879
        %v5934 = vpack.c.bf16 %v5886, %v5883
        %v5935 = vpack.c.bf16 %v5887, %v5884
        %v5936 = vpack.c.bf16 %v5888, %v5885
        %v5937 = vld [vmem:[%s1] sm:$0xff]
        %v5938 = vld [vmem:[%s1 + $0x8] sm:$0xf]
        %v5939 = vld [vmem:[%s1 + $0xc] sm:$0xff]
        %v5940 = vld [vmem:[%s1 + $0x14] sm:$0xf]
        %v5941 = vld [vmem:[%s1 + $0x18] sm:$0xff]
        %v5942 = vld [vmem:[%s1 + $0x20] sm:$0xf]
        %v5943 = vld [vmem:[%s1 + $0x24] sm:$0xff]
        %v5944 = vld [vmem:[%s1 + $0x2c] sm:$0xf]
        %v5945 = vld [vmem:[%s1 + $0x30] sm:$0xff]
        %v5946 = vld [vmem:[%s1 + $0x38] sm:$0xf]
        %v5947 = vld [vmem:[%s1 + $0x3c] sm:$0xff]
        %v5948 = vld [vmem:[%s1 + $0x44] sm:$0xf]
        %v5949 = vld [vmem:[%s1 + $0x48] sm:$0xff]
        %v5950 = vld [vmem:[%s1 + $0x50] sm:$0xf]
        %v5951 = vld [vmem:[%s1 + $0x54] sm:$0xff]
        %v5952 = vld [vmem:[%s1 + $0x5c] sm:$0xf]
        %v5953 = vld [vmem:[%s1 + $0x60] sm:$0xff]
        %v5954 = vld [vmem:[%s1 + $0x68] sm:$0xf]
        %v5955 = vld [vmem:[%s1 + $0x6c] sm:$0xff]
        %v5956 = vld [vmem:[%s1 + $0x74] sm:$0xf]
        %v5957 = vld [vmem:[%s1 + $0x78] sm:$0xff]
        %v5958 = vld [vmem:[%s1 + $0x80] sm:$0xf]
        %v5959 = vld [vmem:[%s1 + $0x84] sm:$0xff]
        %v5960 = vld [vmem:[%s1 + $0x8c] sm:$0xf]
        %v5961 = vld [vmem:[%s1 + $0x90] sm:$0xff]
        %v5962 = vld [vmem:[%s1 + $0x98] sm:$0xf]
        %v5963 = vld [vmem:[%s1 + $0x9c] sm:$0xff]
        %v5964 = vld [vmem:[%s1 + $0xa4] sm:$0xf]
        %v5965 = vld [vmem:[%s1 + $0xa8] sm:$0xff]
        %v5966 = vld [vmem:[%s1 + $0xb0] sm:$0xf]
        %v5967 = vld [vmem:[%s1 + $0xb4] sm:$0xff]
        %v5968 = vld [vmem:[%s1 + $0xbc] sm:$0xf]
        %v5969 = vld [vmem:[%s1 + $0xc0] sm:$0xff]
        %v5970 = vld [vmem:[%s1 + $0xc8] sm:$0xf]
        %v5971 = vld [vmem:[%s1 + $0xcc] sm:$0xff]
        %v5972 = vld [vmem:[%s1 + $0xd4] sm:$0xf]
        %v5973 = vld [vmem:[%s1 + $0xd8] sm:$0xff]
        %v5974 = vld [vmem:[%s1 + $0xe0] sm:$0xf]
        %v5975 = vld [vmem:[%s1 + $0xe4] sm:$0xff]
        %v5976 = vld [vmem:[%s1 + $0xec] sm:$0xf]
        %v5977 = vld [vmem:[%s1 + $0xf0] sm:$0xff]
        %v5978 = vld [vmem:[%s1 + $0xf8] sm:$0xf]
        %v5979 = vld [vmem:[%s1 + $0xfc] sm:$0xff]
        %v5980 = vld [vmem:[%s1 + $0x104] sm:$0xf]
        %v5981 = vld [vmem:[%s1 + $0x108] sm:$0xff]
        %v5982 = vld [vmem:[%s1 + $0x110] sm:$0xf]
        %v5983 = vld [vmem:[%s1 + $0x114] sm:$0xff]
        %v5984 = vld [vmem:[%s1 + $0x11c] sm:$0xf]
        %v5985 = vld [vmem:[%s1 + $0x120] sm:$0xff]
        %v5986 = vld [vmem:[%s1 + $0x128] sm:$0xf]
        %v5987 = vld [vmem:[%s1 + $0x12c] sm:$0xff]
        %v5988 = vld [vmem:[%s1 + $0x134] sm:$0xf]
        %v5989 = vld [vmem:[%s1 + $0x138] sm:$0xff]
        %v5990 = vld [vmem:[%s1 + $0x140] sm:$0xf]
        %v5991 = vld [vmem:[%s1 + $0x144] sm:$0xff]
        %v5992 = vld [vmem:[%s1 + $0x14c] sm:$0xf]
        %v5993 = vld [vmem:[%s1 + $0x150] sm:$0xff]
        %v5994 = vld [vmem:[%s1 + $0x158] sm:$0xf]
        %v5995 = vld [vmem:[%s1 + $0x15c] sm:$0xff]
        %v5996 = vld [vmem:[%s1 + $0x164] sm:$0xf]
        %v5997 = vld [vmem:[%s1 + $0x168] sm:$0xff]
        %v5998 = vld [vmem:[%s1 + $0x170] sm:$0xf]
        %v5999 = vld [vmem:[%s1 + $0x174] sm:$0xff]
        %v6000 = vld [vmem:[%s1 + $0x17c] sm:$0xf]
        %v6001 = vld [vmem:[%s1 + $0x180] sm:$0xff]
        %v6002 = vld [vmem:[%s1 + $0x188] sm:$0xf]
        %v6003 = vld [vmem:[%s1 + $0x18c] sm:$0xff]
        %v6004 = vld [vmem:[%s1 + $0x194] sm:$0xf]
        %v6005 = vld [vmem:[%s1 + $0x198] sm:$0xff]
        %v6006 = vld [vmem:[%s1 + $0x1a0] sm:$0xf]
        %v6007 = vld [vmem:[%s1 + $0x1a4] sm:$0xff]
        %v6008 = vld [vmem:[%s1 + $0x1ac] sm:$0xf]
        %v6009 = vld [vmem:[%s1 + $0x1b0] sm:$0xff]
        %v6010 = vld [vmem:[%s1 + $0x1b8] sm:$0xf]
        %v6011 = vld [vmem:[%s1 + $0x1bc] sm:$0x33]
        %v6012 = vld [vmem:[%s1 + $0x1c4] sm:$0x3]
        %v6013 = vld [vmem:[%s2] sm:$0x7]
        %v6015 = vlaneseq
        %v6016 = vshrl.u32 %v6015, 7
        %v6017 = vsub.s32 0, %v6016
        %v6018 = vrot.slane %v6013, %v6017
        %v6019 = vlaneseq
        %v6020 = vshrl.u32 %v6019, 7
        %v6021 = vsub.s32 1, %v6020
        %v6022 = vrot.slane %v6013, %v6021
        %v6023 = vlaneseq
        %v6024 = vshrl.u32 %v6023, 7
        %v6025 = vsub.s32 2, %v6024
        %v6026 = vrot.slane %v6013, %v6025
        %v6106 = vunpack.c.l.b16 %v5937
        %v6107 = vunpack.c.h.b16 %v5937
        %v6108 = vunpack.c.l.b16 %v5938
        %v6109 = vunpack.c.l.b16 %v5939
        %v6110 = vunpack.c.h.b16 %v5939
        %v6111 = vunpack.c.l.b16 %v5940
        %v6112 = vunpack.c.l.b16 %v5941
        %v6113 = vunpack.c.h.b16 %v5941
        %v6114 = vunpack.c.l.b16 %v5942
        %v6115 = vunpack.c.l.b16 %v5943
        %v6116 = vunpack.c.h.b16 %v5943
        %v6117 = vunpack.c.l.b16 %v5944
        %v6118 = vunpack.c.l.b16 %v5945
        %v6119 = vunpack.c.h.b16 %v5945
        %v6120 = vunpack.c.l.b16 %v5946
        %v6121 = vunpack.c.l.b16 %v5947
        %v6122 = vunpack.c.h.b16 %v5947
        %v6123 = vunpack.c.l.b16 %v5948
        %v6124 = vunpack.c.l.b16 %v5949
        %v6125 = vunpack.c.h.b16 %v5949
        %v6126 = vunpack.c.l.b16 %v5950
        %v6127 = vunpack.c.l.b16 %v5951
        %v6128 = vunpack.c.h.b16 %v5951
        %v6129 = vunpack.c.l.b16 %v5952
        %v6130 = vunpack.c.l.b16 %v5953
        %v6131 = vunpack.c.h.b16 %v5953
        %v6132 = vunpack.c.l.b16 %v5954
        %v6133 = vunpack.c.l.b16 %v5955
        %v6134 = vunpack.c.h.b16 %v5955
        %v6135 = vunpack.c.l.b16 %v5956
        %v6136 = vunpack.c.l.b16 %v5957
        %v6137 = vunpack.c.h.b16 %v5957
        %v6138 = vunpack.c.l.b16 %v5958
        %v6139 = vunpack.c.l.b16 %v5959
        %v6140 = vunpack.c.h.b16 %v5959
        %v6141 = vunpack.c.l.b16 %v5960
        %v6142 = vunpack.c.l.b16 %v5961
        %v6143 = vunpack.c.h.b16 %v5961
        %v6144 = vunpack.c.l.b16 %v5962
        %v6145 = vunpack.c.l.b16 %v5963
        %v6146 = vunpack.c.h.b16 %v5963
        %v6147 = vunpack.c.l.b16 %v5964
        %v6148 = vunpack.c.l.b16 %v5965
        %v6149 = vunpack.c.h.b16 %v5965
        %v6150 = vunpack.c.l.b16 %v5966
        %v6151 = vunpack.c.l.b16 %v5967
        %v6152 = vunpack.c.h.b16 %v5967
        %v6153 = vunpack.c.l.b16 %v5968
        %v6154 = vunpack.c.l.b16 %v5969
        %v6155 = vunpack.c.h.b16 %v5969
        %v6156 = vunpack.c.l.b16 %v5970
        %v6157 = vunpack.c.l.b16 %v5971
        %v6158 = vunpack.c.h.b16 %v5971
        %v6159 = vunpack.c.l.b16 %v5972
        %v6160 = vunpack.c.l.b16 %v5973
        %v6161 = vunpack.c.h.b16 %v5973
        %v6162 = vunpack.c.l.b16 %v5974
        %v6163 = vunpack.c.l.b16 %v5975
        %v6164 = vunpack.c.h.b16 %v5975
        %v6165 = vunpack.c.l.b16 %v5976
        %v6166 = vunpack.c.l.b16 %v5977
        %v6167 = vunpack.c.h.b16 %v5977
        %v6168 = vunpack.c.l.b16 %v5978
        %v6169 = vunpack.c.l.b16 %v5979
        %v6170 = vunpack.c.h.b16 %v5979
        %v6171 = vunpack.c.l.b16 %v5980
        %v6172 = vunpack.c.l.b16 %v5981
        %v6173 = vunpack.c.h.b16 %v5981
        %v6174 = vunpack.c.l.b16 %v5982
        %v6175 = vunpack.c.l.b16 %v5983
        %v6176 = vunpack.c.h.b16 %v5983
        %v6177 = vunpack.c.l.b16 %v5984
        %v6178 = vunpack.c.l.b16 %v5985
        %v6179 = vunpack.c.h.b16 %v5985
        %v6180 = vunpack.c.l.b16 %v5986
        %v6181 = vunpack.c.l.b16 %v5987
        %v6182 = vunpack.c.h.b16 %v5987
        %v6183 = vunpack.c.l.b16 %v5988
        %v6184 = vunpack.c.l.b16 %v5989
        %v6185 = vunpack.c.h.b16 %v5989
        %v6186 = vunpack.c.l.b16 %v5990
        %v6187 = vunpack.c.l.b16 %v5991
        %v6188 = vunpack.c.h.b16 %v5991
        %v6189 = vunpack.c.l.b16 %v5992
        %v6190 = vunpack.c.l.b16 %v5993
        %v6191 = vunpack.c.h.b16 %v5993
        %v6192 = vunpack.c.l.b16 %v5994
        %v6193 = vunpack.c.l.b16 %v5995
        %v6194 = vunpack.c.h.b16 %v5995
        %v6195 = vunpack.c.l.b16 %v5996
        %v6196 = vunpack.c.l.b16 %v5997
        %v6197 = vunpack.c.h.b16 %v5997
        %v6198 = vunpack.c.l.b16 %v5998
        %v6199 = vunpack.c.l.b16 %v5999
        %v6200 = vunpack.c.h.b16 %v5999
        %v6201 = vunpack.c.l.b16 %v6000
        %v6202 = vunpack.c.l.b16 %v6001
        %v6203 = vunpack.c.h.b16 %v6001
        %v6204 = vunpack.c.l.b16 %v6002
        %v6205 = vunpack.c.l.b16 %v6003
        %v6206 = vunpack.c.h.b16 %v6003
        %v6207 = vunpack.c.l.b16 %v6004
        %v6208 = vunpack.c.l.b16 %v6005
        %v6209 = vunpack.c.h.b16 %v6005
        %v6210 = vunpack.c.l.b16 %v6006
        %v6211 = vunpack.c.l.b16 %v6007
        %v6212 = vunpack.c.h.b16 %v6007
        %v6213 = vunpack.c.l.b16 %v6008
        %v6214 = vunpack.c.l.b16 %v6009
        %v6215 = vunpack.c.h.b16 %v6009
        %v6216 = vunpack.c.l.b16 %v6010
        %v6217 = vunpack.c.l.b16 %v6011
        %v6218 = vunpack.c.h.b16 %v6011
        %v6219 = vunpack.c.l.b16 %v6012
        %v6220 = vpack.c.b16 %v6109, %v6106
        %v6221 = vpack.c.b16 %v6110, %v6107
        %v6222 = vpack.c.b16 %v6111, %v6108
        %v6223 = vpack.c.b16 %v6115, %v6112
        %v6224 = vpack.c.b16 %v6116, %v6113
        %v6225 = vpack.c.b16 %v6117, %v6114
        %v6226 = vpack.c.b16 %v6121, %v6118
        %v6227 = vpack.c.b16 %v6122, %v6119
        %v6228 = vpack.c.b16 %v6123, %v6120
        %v6229 = vpack.c.b16 %v6127, %v6124
        %v6230 = vpack.c.b16 %v6128, %v6125
        %v6231 = vpack.c.b16 %v6129, %v6126
        %v6232 = vpack.c.b16 %v6133, %v6130
        %v6233 = vpack.c.b16 %v6134, %v6131
        %v6234 = vpack.c.b16 %v6135, %v6132
        %v6235 = vpack.c.b16 %v6139, %v6136
        %v6236 = vpack.c.b16 %v6140, %v6137
        %v6237 = vpack.c.b16 %v6141, %v6138
        %v6238 = vpack.c.b16 %v6145, %v6142
        %v6239 = vpack.c.b16 %v6146, %v6143
        %v6240 = vpack.c.b16 %v6147, %v6144
        %v6241 = vpack.c.b16 %v6151, %v6148
        %v6242 = vpack.c.b16 %v6152, %v6149
        %v6243 = vpack.c.b16 %v6153, %v6150
        %v6244 = vpack.c.b16 %v6157, %v6154
        %v6245 = vpack.c.b16 %v6158, %v6155
        %v6246 = vpack.c.b16 %v6159, %v6156
        %v6247 = vpack.c.b16 %v6163, %v6160
        %v6248 = vpack.c.b16 %v6164, %v6161
        %v6249 = vpack.c.b16 %v6165, %v6162
        %v6250 = vpack.c.b16 %v6169, %v6166
        %v6251 = vpack.c.b16 %v6170, %v6167
        %v6252 = vpack.c.b16 %v6171, %v6168
        %v6253 = vpack.c.b16 %v6175, %v6172
        %v6254 = vpack.c.b16 %v6176, %v6173
        %v6255 = vpack.c.b16 %v6177, %v6174
        %v6256 = vpack.c.b16 %v6181, %v6178
        %v6257 = vpack.c.b16 %v6182, %v6179
        %v6258 = vpack.c.b16 %v6183, %v6180
        %v6259 = vpack.c.b16 %v6187, %v6184
        %v6260 = vpack.c.b16 %v6188, %v6185
        %v6261 = vpack.c.b16 %v6189, %v6186
        %v6262 = vpack.c.b16 %v6193, %v6190
        %v6263 = vpack.c.b16 %v6194, %v6191
        %v6264 = vpack.c.b16 %v6195, %v6192
        %v6265 = vpack.c.b16 %v6199, %v6196
        %v6266 = vpack.c.b16 %v6200, %v6197
        %v6267 = vpack.c.b16 %v6201, %v6198
        %v6268 = vpack.c.b16 %v6205, %v6202
        %v6269 = vpack.c.b16 %v6206, %v6203
        %v6270 = vpack.c.b16 %v6207, %v6204
        %v6271 = vpack.c.b16 %v6211, %v6208
        %v6272 = vpack.c.b16 %v6212, %v6209
        %v6273 = vpack.c.b16 %v6213, %v6210
        %v6274 = vpack.c.b16 %v6217, %v6214
        %v6275 = vpack.c.b16 %v6218, %v6215
        %v6276 = vpack.c.b16 %v6219, %v6216
        %v6332 = vsel %vm876, %v5891, 0
        %v6335 = vsel %vm876, %v5894, 0
        %v6338 = vsel %vm876, %v5897, 0
        %v6341 = vsel %vm876, %v5900, 0
        %v6344 = vsel %vm876, %v5903, 0
        %v6347 = vsel %vm876, %v5906, 0
        %v6350 = vsel %vm876, %v5909, 0
        %v6353 = vsel %vm876, %v5912, 0
        %v6356 = vsel %vm876, %v5915, 0
        %v6359 = vsel %vm876, %v5918, 0
        %v6362 = vsel %vm876, %v5921, 0
        %v6365 = vsel %vm876, %v5924, 0
        %v6368 = vsel %vm876, %v5927, 0
        %v6371 = vsel %vm876, %v5930, 0
        %v6374 = vsel %vm876, %v5933, 0
        %v6377 = vsel %vm876, %v5936, 0
        %v6380 = vsel %vm925, %v6274, 0
        %v6383 = vsel %vm925, %v6275, 0
        %v6386 = vsel %vm925, %v6276, 0
        %6388 = vmatprep.subr.bf16.mxu0 %v6242
        %6389 = vmatpush1.bf16.msra.mxu0 %v6241
        %6390 = vmatprep.subr.bf16.mxu0 %v6239
        %6391 = vmatpush1.bf16.msra.mxu0 %v6238
        %6392 = vmatprep.subr.bf16.mxu0 %v6236
        %6393 = vmatpush1.bf16.msra.mxu0 %v6235
        %6394 = vmatprep.subr.bf16.mxu0 %v6233
        %6395 = vmatpush1.bf16.msra.mxu0 %v6232
        %6396 = vmatprep.subr.bf16.mxu0 %v6230
        %6397 = vmatpush1.bf16.msra.mxu0 %v6229
        %6398 = vmatprep.subr.bf16.mxu0 %v6227
        %6399 = vmatpush1.bf16.msra.mxu0 %v6226
        %6400 = vmatprep.subr.bf16.mxu0 %v6224
        %6401 = vmatpush1.bf16.msra.mxu0 %v6223
        %6402 = vmatprep.subr.bf16.mxu0 %v6221
        %6403 = vmatpush1.bf16.msra.mxu0 %v6220
        %6404 = vmatprep.subr.bf16.mxu0 %v6266
        %6405 = vmatpush2.bf16.msra.mxu0 %v6265
        %6406 = vmatprep.subr.bf16.mxu0 %v6263
        %6407 = vmatpush2.bf16.msra.mxu0 %v6262
        %6408 = vmatprep.subr.bf16.mxu0 %v6260
        %6409 = vmatpush2.bf16.msra.mxu0 %v6259
        %6410 = vmatprep.subr.bf16.mxu0 %v6257
        %6411 = vmatpush2.bf16.msra.mxu0 %v6256
        %6412 = vmatprep.subr.bf16.mxu0 %v6254
        %6413 = vmatpush2.bf16.msra.mxu0 %v6253
        %6414 = vmatprep.subr.bf16.mxu0 %v6251
        %6415 = vmatpush2.bf16.msra.mxu0 %v6250
        %6416 = vmatprep.subr.bf16.mxu0 %v6248
        %6417 = vmatpush2.bf16.msra.mxu0 %v6247
        %6418 = vmatprep.subr.bf16.mxu0 %v6245
        %6419 = vmatpush2.bf16.msra.mxu0 %v6244
        %6420 = vmatprep.mubr.bf16.mxu0 %v5890
        %6421 = vmatmul.mubr.bf16.gmra.mxu0 %v5889
        %v6422 = vpop.f32.mrf.mxu0
        %v6423 = vadd.f32 %v6018, %v6422
        %v6424 = vpop.f32.mrf.mxu0
        %v6425 = vadd.f32 %v6022, %v6424
        %v6426 = vpop.f32.mrf.mxu0
        %v6427 = vadd.f32 %v6018, %v6426
        %v6428 = vpop.f32.mrf.mxu0
        %v6429 = vadd.f32 %v6022, %v6428
        %6430 = vmatprep.mubr.bf16.mxu0 %v5893
        %6431 = vmatmul.mubr.bf16.gmra.mxu0 %v5892
        %v6432 = vpop.f32.mrf.mxu0
        %v6433 = vadd.f32 %v6018, %v6432
        %v6434 = vpop.f32.mrf.mxu0
        %v6435 = vadd.f32 %v6022, %v6434
        %v6436 = vpop.f32.mrf.mxu0
        %v6437 = vadd.f32 %v6018, %v6436
        %v6438 = vpop.f32.mrf.mxu0
        %v6439 = vadd.f32 %v6022, %v6438
        %6440 = vmatprep.mubr.bf16.mxu0 %v5896
        %6441 = vmatmul.mubr.bf16.gmra.mxu0 %v5895
        %v6442 = vpop.f32.mrf.mxu0
        %v6443 = vadd.f32 %v6018, %v6442
        %v6444 = vpop.f32.mrf.mxu0
        %v6445 = vadd.f32 %v6022, %v6444
        %v6446 = vpop.f32.mrf.mxu0
        %v6447 = vadd.f32 %v6018, %v6446
        %v6448 = vpop.f32.mrf.mxu0
        %v6449 = vadd.f32 %v6022, %v6448
        %6450 = vmatprep.mubr.bf16.mxu0 %v5899
        %6451 = vmatmul.mubr.bf16.gmra.mxu0 %v5898
        %v6452 = vpop.f32.mrf.mxu0
        %v6453 = vadd.f32 %v6018, %v6452
        %v6454 = vpop.f32.mrf.mxu0
        %v6455 = vadd.f32 %v6022, %v6454
        %v6456 = vpop.f32.mrf.mxu0
        %v6457 = vadd.f32 %v6018, %v6456
        %v6458 = vpop.f32.mrf.mxu0
        %v6459 = vadd.f32 %v6022, %v6458
        %6460 = vmatprep.mubr.bf16.mxu0 %v5902
        %6461 = vmatmul.mubr.bf16.gmra.mxu0 %v5901
        %v6462 = vpop.f32.mrf.mxu0
        %v6463 = vadd.f32 %v6018, %v6462
        %v6464 = vpop.f32.mrf.mxu0
        %v6465 = vadd.f32 %v6022, %v6464
        %v6466 = vpop.f32.mrf.mxu0
        %v6467 = vadd.f32 %v6018, %v6466
        %v6468 = vpop.f32.mrf.mxu0
        %v6469 = vadd.f32 %v6022, %v6468
        %6470 = vmatprep.mubr.bf16.mxu0 %v5905
        %6471 = vmatmul.mubr.bf16.gmra.mxu0 %v5904
        %v6472 = vpop.f32.mrf.mxu0
        %v6473 = vadd.f32 %v6018, %v6472
        %v6474 = vpop.f32.mrf.mxu0
        %v6475 = vadd.f32 %v6022, %v6474
        %v6476 = vpop.f32.mrf.mxu0
        %v6477 = vadd.f32 %v6018, %v6476
        %v6478 = vpop.f32.mrf.mxu0
        %v6479 = vadd.f32 %v6022, %v6478
        %6480 = vmatprep.mubr.bf16.mxu0 %v5908
        %6481 = vmatmul.mubr.bf16.gmra.mxu0 %v5907
        %v6482 = vpop.f32.mrf.mxu0
        %v6483 = vadd.f32 %v6018, %v6482
        %v6484 = vpop.f32.mrf.mxu0
        %v6485 = vadd.f32 %v6022, %v6484
        %v6486 = vpop.f32.mrf.mxu0
        %v6487 = vadd.f32 %v6018, %v6486
        %v6488 = vpop.f32.mrf.mxu0
        %v6489 = vadd.f32 %v6022, %v6488
        %6490 = vmatprep.mubr.bf16.mxu0 %v5911
        %6491 = vmatmul.mubr.bf16.gmra.mxu0 %v5910
        %v6492 = vpop.f32.mrf.mxu0
        %v6493 = vadd.f32 %v6018, %v6492
        %v6494 = vpop.f32.mrf.mxu0
        %v6495 = vadd.f32 %v6022, %v6494
        %v6496 = vpop.f32.mrf.mxu0
        %v6497 = vadd.f32 %v6018, %v6496
        %v6498 = vpop.f32.mrf.mxu0
        %v6499 = vadd.f32 %v6022, %v6498
        %6500 = vmatprep.mubr.bf16.mxu0 %v5914
        %6501 = vmatmul.mubr.bf16.gmra.mxu0 %v5913
        %v6502 = vpop.f32.mrf.mxu0
        %v6503 = vadd.f32 %v6018, %v6502
        %v6504 = vpop.f32.mrf.mxu0
        %v6505 = vadd.f32 %v6022, %v6504
        %v6506 = vpop.f32.mrf.mxu0
        %v6507 = vadd.f32 %v6018, %v6506
        %v6508 = vpop.f32.mrf.mxu0
        %v6509 = vadd.f32 %v6022, %v6508
        %6510 = vmatprep.mubr.bf16.mxu0 %v5917
        %6511 = vmatmul.mubr.bf16.gmra.mxu0 %v5916
        %v6512 = vpop.f32.mrf.mxu0
        %v6513 = vadd.f32 %v6018, %v6512
        %v6514 = vpop.f32.mrf.mxu0
        %v6515 = vadd.f32 %v6022, %v6514
        %v6516 = vpop.f32.mrf.mxu0
        %v6517 = vadd.f32 %v6018, %v6516
        %v6518 = vpop.f32.mrf.mxu0
        %v6519 = vadd.f32 %v6022, %v6518
        %6520 = vmatprep.mubr.bf16.mxu0 %v5920
        %6521 = vmatmul.mubr.bf16.gmra.mxu0 %v5919
        %v6522 = vpop.f32.mrf.mxu0
        %v6523 = vadd.f32 %v6018, %v6522
        %v6524 = vpop.f32.mrf.mxu0
        %v6525 = vadd.f32 %v6022, %v6524
        %v6526 = vpop.f32.mrf.mxu0
        %v6527 = vadd.f32 %v6018, %v6526
        %v6528 = vpop.f32.mrf.mxu0
        %v6529 = vadd.f32 %v6022, %v6528
        %6530 = vmatprep.mubr.bf16.mxu0 %v5923
        %6531 = vmatmul.mubr.bf16.gmra.mxu0 %v5922
        %v6532 = vpop.f32.mrf.mxu0
        %v6533 = vadd.f32 %v6018, %v6532
        %v6534 = vpop.f32.mrf.mxu0
        %v6535 = vadd.f32 %v6022, %v6534
        %v6536 = vpop.f32.mrf.mxu0
        %v6537 = vadd.f32 %v6018, %v6536
        %v6538 = vpop.f32.mrf.mxu0
        %v6539 = vadd.f32 %v6022, %v6538
        %6540 = vmatprep.mubr.bf16.mxu0 %v5926
        %6541 = vmatmul.mubr.bf16.gmra.mxu0 %v5925
        %v6542 = vpop.f32.mrf.mxu0
        %v6543 = vadd.f32 %v6018, %v6542
        %v6544 = vpop.f32.mrf.mxu0
        %v6545 = vadd.f32 %v6022, %v6544
        %v6546 = vpop.f32.mrf.mxu0
        %v6547 = vadd.f32 %v6018, %v6546
        %v6548 = vpop.f32.mrf.mxu0
        %v6549 = vadd.f32 %v6022, %v6548
        %6550 = vmatprep.mubr.bf16.mxu0 %v5929
        %6551 = vmatmul.mubr.bf16.gmra.mxu0 %v5928
        %v6552 = vpop.f32.mrf.mxu0
        %v6553 = vadd.f32 %v6018, %v6552
        %v6554 = vpop.f32.mrf.mxu0
        %v6555 = vadd.f32 %v6022, %v6554
        %v6556 = vpop.f32.mrf.mxu0
        %v6557 = vadd.f32 %v6018, %v6556
        %v6558 = vpop.f32.mrf.mxu0
        %v6559 = vadd.f32 %v6022, %v6558
        %6560 = vmatprep.mubr.bf16.mxu0 %v5932
        %6561 = vmatmul.mubr.bf16.gmra.mxu0 %v5931
        %v6562 = vpop.f32.mrf.mxu0
        %v6563 = vadd.f32 %v6018, %v6562
        %v6564 = vpop.f32.mrf.mxu0
        %v6565 = vadd.f32 %v6022, %v6564
        %v6566 = vpop.f32.mrf.mxu0
        %v6567 = vadd.f32 %v6018, %v6566
        %v6568 = vpop.f32.mrf.mxu0
        %v6569 = vadd.f32 %v6022, %v6568
        %6570 = vmatprep.mubr.bf16.mxu0 %v5935
        %6571 = vmatmul.mubr.bf16.gmra.mxu0 %v5934
        %v6572 = vpop.f32.mrf.mxu0
        %v6573 = vadd.f32 %v6018, %v6572
        %v6574 = vpop.f32.mrf.mxu0
        %v6575 = vadd.f32 %v6022, %v6574
        %v6576 = vpop.f32.mrf.mxu0
        %v6577 = vadd.f32 %v6018, %v6576
        %v6578 = vpop.f32.mrf.mxu0
        %v6579 = vadd.f32 %v6022, %v6578
        %6580 = vdwg.mxu0
        %6581 = vmatprep.subr.bf16.mxu0 0
        %6582 = vmatpush1.bf16.msra.mxu0 0
        %6583 = vmatprep.subr.bf16.mxu0 0
        %6584 = vmatpush1.bf16.msra.mxu0 0
        %6585 = vmatprep.subr.bf16.mxu0 0
        %6586 = vmatpush1.bf16.msra.mxu0 0
        %6587 = vmatprep.subr.bf16.mxu0 0
        %6588 = vmatpush1.bf16.msra.mxu0 0
        %6589 = vmatprep.subr.bf16.mxu0 0
        %6590 = vmatpush1.bf16.msra.mxu0 0
        %6591 = vmatprep.subr.bf16.mxu0 %v6383
        %6592 = vmatpush1.bf16.msra.mxu0 %v6380
        %6593 = vmatprep.subr.bf16.mxu0 %v6272
        %6594 = vmatpush1.bf16.msra.mxu0 %v6271
        %6595 = vmatprep.subr.bf16.mxu0 %v6269
        %6596 = vmatpush1.bf16.msra.mxu0 %v6268
        %6597 = vmatprep.subr.bf16.mxu0 0
        %6598 = vmatpush2.bf16.msra.mxu0 0
        %6599 = vmatprep.subr.bf16.mxu0 0
        %6600 = vmatpush2.bf16.msra.mxu0 0
        %6601 = vmatprep.subr.bf16.mxu0 0
        %6602 = vmatpush2.bf16.msra.mxu0 0
        %6603 = vmatprep.subr.bf16.mxu0 0
        %6604 = vmatpush2.bf16.msra.mxu0 0
        %6605 = vmatprep.subr.bf16.mxu0 0
        %6606 = vmatpush2.bf16.msra.mxu0 0
        %6607 = vmatprep.subr.bf16.mxu0 0
        %6608 = vmatpush2.bf16.msra.mxu0 0
        %6609 = vmatprep.subr.bf16.mxu0 0
        %6610 = vmatpush2.bf16.msra.mxu0 0
        %6611 = vmatprep.subr.bf16.mxu0 0
        %6612 = vmatpush2.bf16.msra.mxu0 0
        %6613 = vmatprep.mubr.bf16.mxu0 0
        %6614 = vmatmul.mubr.bf16.gmra.mxu0 %v6332
        %v6615 = vpop.f32.mrf.mxu0
        %v6616 = vadd.f32 %v6423, %v6615
        %v6617 = vpop.f32.mrf.mxu0
        %v6618 = vadd.f32 %v6425, %v6617
        %v6619 = vpop.f32.mrf.mxu0
        %v6620 = vadd.f32 %v6427, %v6619
        %v6621 = vpop.f32.mrf.mxu0
        %v6622 = vadd.f32 %v6429, %v6621
        %6623 = vmatprep.mubr.bf16.mxu0 0
        %6624 = vmatmul.mubr.bf16.gmra.mxu0 %v6335
        %v6625 = vpop.f32.mrf.mxu0
        %v6626 = vadd.f32 %v6433, %v6625
        %v6627 = vpop.f32.mrf.mxu0
        %v6628 = vadd.f32 %v6435, %v6627
        %v6629 = vpop.f32.mrf.mxu0
        %v6630 = vadd.f32 %v6437, %v6629
        %v6631 = vpop.f32.mrf.mxu0
        %v6632 = vadd.f32 %v6439, %v6631
        %6633 = vmatprep.mubr.bf16.mxu0 0
        %6634 = vmatmul.mubr.bf16.gmra.mxu0 %v6338
        %v6635 = vpop.f32.mrf.mxu0
        %v6636 = vadd.f32 %v6443, %v6635
        %v6637 = vpop.f32.mrf.mxu0
        %v6638 = vadd.f32 %v6445, %v6637
        %v6639 = vpop.f32.mrf.mxu0
        %v6640 = vadd.f32 %v6447, %v6639
        %v6641 = vpop.f32.mrf.mxu0
        %v6642 = vadd.f32 %v6449, %v6641
        %6643 = vmatprep.mubr.bf16.mxu0 0
        %6644 = vmatmul.mubr.bf16.gmra.mxu0 %v6341
        %v6645 = vpop.f32.mrf.mxu0
        %v6646 = vadd.f32 %v6453, %v6645
        %v6647 = vpop.f32.mrf.mxu0
        %v6648 = vadd.f32 %v6455, %v6647
        %v6649 = vpop.f32.mrf.mxu0
        %v6650 = vadd.f32 %v6457, %v6649
        %v6651 = vpop.f32.mrf.mxu0
        %v6652 = vadd.f32 %v6459, %v6651
        %6653 = vmatprep.mubr.bf16.mxu0 0
        %6654 = vmatmul.mubr.bf16.gmra.mxu0 %v6344
        %v6655 = vpop.f32.mrf.mxu0
        %v6656 = vadd.f32 %v6463, %v6655
        %v6657 = vpop.f32.mrf.mxu0
        %v6658 = vadd.f32 %v6465, %v6657
        %v6659 = vpop.f32.mrf.mxu0
        %v6660 = vadd.f32 %v6467, %v6659
        %v6661 = vpop.f32.mrf.mxu0
        %v6662 = vadd.f32 %v6469, %v6661
        %6663 = vmatprep.mubr.bf16.mxu0 0
        %6664 = vmatmul.mubr.bf16.gmra.mxu0 %v6347
        %v6665 = vpop.f32.mrf.mxu0
        %v6666 = vadd.f32 %v6473, %v6665
        %v6667 = vpop.f32.mrf.mxu0
        %v6668 = vadd.f32 %v6475, %v6667
        %v6669 = vpop.f32.mrf.mxu0
        %v6670 = vadd.f32 %v6477, %v6669
        %v6671 = vpop.f32.mrf.mxu0
        %v6672 = vadd.f32 %v6479, %v6671
        %6673 = vmatprep.mubr.bf16.mxu0 0
        %6674 = vmatmul.mubr.bf16.gmra.mxu0 %v6350
        %v6675 = vpop.f32.mrf.mxu0
        %v6676 = vadd.f32 %v6483, %v6675
        %v6677 = vpop.f32.mrf.mxu0
        %v6678 = vadd.f32 %v6485, %v6677
        %v6679 = vpop.f32.mrf.mxu0
        %v6680 = vadd.f32 %v6487, %v6679
        %v6681 = vpop.f32.mrf.mxu0
        %v6682 = vadd.f32 %v6489, %v6681
        %6683 = vmatprep.mubr.bf16.mxu0 0
        %6684 = vmatmul.mubr.bf16.gmra.mxu0 %v6353
        %v6685 = vpop.f32.mrf.mxu0
        %v6686 = vadd.f32 %v6493, %v6685
        %v6687 = vpop.f32.mrf.mxu0
        %v6688 = vadd.f32 %v6495, %v6687
        %v6689 = vpop.f32.mrf.mxu0
        %v6690 = vadd.f32 %v6497, %v6689
        %v6691 = vpop.f32.mrf.mxu0
        %v6692 = vadd.f32 %v6499, %v6691
        %6693 = vmatprep.mubr.bf16.mxu0 0
        %6694 = vmatmul.mubr.bf16.gmra.mxu0 %v6356
        %v6695 = vpop.f32.mrf.mxu0
        %v6696 = vadd.f32 %v6503, %v6695
        %v6697 = vpop.f32.mrf.mxu0
        %v6698 = vadd.f32 %v6505, %v6697
        %v6699 = vpop.f32.mrf.mxu0
        %v6700 = vadd.f32 %v6507, %v6699
        %v6701 = vpop.f32.mrf.mxu0
        %v6702 = vadd.f32 %v6509, %v6701
        %6703 = vmatprep.mubr.bf16.mxu0 0
        %6704 = vmatmul.mubr.bf16.gmra.mxu0 %v6359
        %v6705 = vpop.f32.mrf.mxu0
        %v6706 = vadd.f32 %v6513, %v6705
        %v6707 = vpop.f32.mrf.mxu0
        %v6708 = vadd.f32 %v6515, %v6707
        %v6709 = vpop.f32.mrf.mxu0
        %v6710 = vadd.f32 %v6517, %v6709
        %v6711 = vpop.f32.mrf.mxu0
        %v6712 = vadd.f32 %v6519, %v6711
        %6713 = vmatprep.mubr.bf16.mxu0 0
        %6714 = vmatmul.mubr.bf16.gmra.mxu0 %v6362
        %v6715 = vpop.f32.mrf.mxu0
        %v6716 = vadd.f32 %v6523, %v6715
        %v6717 = vpop.f32.mrf.mxu0
        %v6718 = vadd.f32 %v6525, %v6717
        %v6719 = vpop.f32.mrf.mxu0
        %v6720 = vadd.f32 %v6527, %v6719
        %v6721 = vpop.f32.mrf.mxu0
        %v6722 = vadd.f32 %v6529, %v6721
        %6723 = vmatprep.mubr.bf16.mxu0 0
        %6724 = vmatmul.mubr.bf16.gmra.mxu0 %v6365
        %v6725 = vpop.f32.mrf.mxu0
        %v6726 = vadd.f32 %v6533, %v6725
        %v6727 = vpop.f32.mrf.mxu0
        %v6728 = vadd.f32 %v6535, %v6727
        %v6729 = vpop.f32.mrf.mxu0
        %v6730 = vadd.f32 %v6537, %v6729
        %v6731 = vpop.f32.mrf.mxu0
        %v6732 = vadd.f32 %v6539, %v6731
        %6733 = vmatprep.mubr.bf16.mxu0 0
        %6734 = vmatmul.mubr.bf16.gmra.mxu0 %v6368
        %v6735 = vpop.f32.mrf.mxu0
        %v6736 = vadd.f32 %v6543, %v6735
        %v6737 = vpop.f32.mrf.mxu0
        %v6738 = vadd.f32 %v6545, %v6737
        %v6739 = vpop.f32.mrf.mxu0
        %v6740 = vadd.f32 %v6547, %v6739
        %v6741 = vpop.f32.mrf.mxu0
        %v6742 = vadd.f32 %v6549, %v6741
        %6743 = vmatprep.mubr.bf16.mxu0 0
        %6744 = vmatmul.mubr.bf16.gmra.mxu0 %v6371
        %v6745 = vpop.f32.mrf.mxu0
        %v6746 = vadd.f32 %v6553, %v6745
        %v6747 = vpop.f32.mrf.mxu0
        %v6748 = vadd.f32 %v6555, %v6747
        %v6749 = vpop.f32.mrf.mxu0
        %v6750 = vadd.f32 %v6557, %v6749
        %v6751 = vpop.f32.mrf.mxu0
        %v6752 = vadd.f32 %v6559, %v6751
        %6753 = vmatprep.mubr.bf16.mxu0 0
        %6754 = vmatmul.mubr.bf16.gmra.mxu0 %v6374
        %v6755 = vpop.f32.mrf.mxu0
        %v6756 = vadd.f32 %v6563, %v6755
        %v6757 = vpop.f32.mrf.mxu0
        %v6758 = vadd.f32 %v6565, %v6757
        %v6759 = vpop.f32.mrf.mxu0
        %v6760 = vadd.f32 %v6567, %v6759
        %v6761 = vpop.f32.mrf.mxu0
        %v6762 = vadd.f32 %v6569, %v6761
        %6763 = vmatprep.mubr.bf16.mxu0 0
        %6764 = vmatmul.mubr.bf16.gmra.mxu0 %v6377
        %v6765 = vpop.f32.mrf.mxu0
        %v6766 = vadd.f32 %v6573, %v6765
        %v6767 = vpop.f32.mrf.mxu0
        %v6768 = vadd.f32 %v6575, %v6767
        %v6769 = vpop.f32.mrf.mxu0
        %v6770 = vadd.f32 %v6577, %v6769
        %v6771 = vpop.f32.mrf.mxu0
        %v6772 = vadd.f32 %v6579, %v6771
        %6773 = vdwg.mxu0
        %6774 = vmatprep.subr.bf16.mxu0 0
        %6775 = vmatpush1.bf16.msra.mxu0 %v6243
        %6776 = vmatprep.subr.bf16.mxu0 0
        %6777 = vmatpush1.bf16.msra.mxu0 %v6240
        %6778 = vmatprep.subr.bf16.mxu0 0
        %6779 = vmatpush1.bf16.msra.mxu0 %v6237
        %6780 = vmatprep.subr.bf16.mxu0 0
        %6781 = vmatpush1.bf16.msra.mxu0 %v6234
        %6782 = vmatprep.subr.bf16.mxu0 0
        %6783 = vmatpush1.bf16.msra.mxu0 %v6231
        %6784 = vmatprep.subr.bf16.mxu0 0
        %6785 = vmatpush1.bf16.msra.mxu0 %v6228
        %6786 = vmatprep.subr.bf16.mxu0 0
        %6787 = vmatpush1.bf16.msra.mxu0 %v6225
        %6788 = vmatprep.subr.bf16.mxu0 0
        %6789 = vmatpush1.bf16.msra.mxu0 %v6222
        %6790 = vmatprep.subr.bf16.mxu0 0
        %6791 = vmatpush2.bf16.msra.mxu0 %v6267
        %6792 = vmatprep.subr.bf16.mxu0 0
        %6793 = vmatpush2.bf16.msra.mxu0 %v6264
        %6794 = vmatprep.subr.bf16.mxu0 0
        %6795 = vmatpush2.bf16.msra.mxu0 %v6261
        %6796 = vmatprep.subr.bf16.mxu0 0
        %6797 = vmatpush2.bf16.msra.mxu0 %v6258
        %6798 = vmatprep.subr.bf16.mxu0 0
        %6799 = vmatpush2.bf16.msra.mxu0 %v6255
        %6800 = vmatprep.subr.bf16.mxu0 0
        %6801 = vmatpush2.bf16.msra.mxu0 %v6252
        %6802 = vmatprep.subr.bf16.mxu0 0
        %6803 = vmatpush2.bf16.msra.mxu0 %v6249
        %6804 = vmatprep.subr.bf16.mxu0 0
        %6805 = vmatpush2.bf16.msra.mxu0 %v6246
        %6806 = vmatprep.mubr.bf16.mxu0 %v5890
        %6807 = vmatmul.mubr.bf16.gmra.mxu0 %v5889
        %v6808 = vpop.f32.mrf.mxu0
        %v6809 = vadd.f32 %v6026, %v6808
        %v6810 = vpop.f32.mrf.mxu0
        %v6811 = vpop.f32.mrf.mxu0
        %v6812 = vadd.f32 %v6026, %v6811
        %v6813 = vpop.f32.mrf.mxu0
        %6814 = vmatprep.mubr.bf16.mxu0 %v5893
        %6815 = vmatmul.mubr.bf16.gmra.mxu0 %v5892
        %v6816 = vpop.f32.mrf.mxu0
        %v6817 = vadd.f32 %v6026, %v6816
        %v6818 = vpop.f32.mrf.mxu0
        %v6819 = vpop.f32.mrf.mxu0
        %v6820 = vadd.f32 %v6026, %v6819
        %v6821 = vpop.f32.mrf.mxu0
        %6822 = vmatprep.mubr.bf16.mxu0 %v5896
        %6823 = vmatmul.mubr.bf16.gmra.mxu0 %v5895
        %v6824 = vpop.f32.mrf.mxu0
        %v6825 = vadd.f32 %v6026, %v6824
        %v6826 = vpop.f32.mrf.mxu0
        %v6827 = vpop.f32.mrf.mxu0
        %v6828 = vadd.f32 %v6026, %v6827
        %v6829 = vpop.f32.mrf.mxu0
        %6830 = vmatprep.mubr.bf16.mxu0 %v5899
        %6831 = vmatmul.mubr.bf16.gmra.mxu0 %v5898
        %v6832 = vpop.f32.mrf.mxu0
        %v6833 = vadd.f32 %v6026, %v6832
        %v6834 = vpop.f32.mrf.mxu0
        %v6835 = vpop.f32.mrf.mxu0
        %v6836 = vadd.f32 %v6026, %v6835
        %v6837 = vpop.f32.mrf.mxu0
        %6838 = vmatprep.mubr.bf16.mxu0 %v5902
        %6839 = vmatmul.mubr.bf16.gmra.mxu0 %v5901
        %v6840 = vpop.f32.mrf.mxu0
        %v6841 = vadd.f32 %v6026, %v6840
        %v6842 = vpop.f32.mrf.mxu0
        %v6843 = vpop.f32.mrf.mxu0
        %v6844 = vadd.f32 %v6026, %v6843
        %v6845 = vpop.f32.mrf.mxu0
        %6846 = vmatprep.mubr.bf16.mxu0 %v5905
        %6847 = vmatmul.mubr.bf16.gmra.mxu0 %v5904
        %v6848 = vpop.f32.mrf.mxu0
        %v6849 = vadd.f32 %v6026, %v6848
        %v6850 = vpop.f32.mrf.mxu0
        %v6851 = vpop.f32.mrf.mxu0
        %v6852 = vadd.f32 %v6026, %v6851
        %v6853 = vpop.f32.mrf.mxu0
        %6854 = vmatprep.mubr.bf16.mxu0 %v5908
        %6855 = vmatmul.mubr.bf16.gmra.mxu0 %v5907
        %v6856 = vpop.f32.mrf.mxu0
        %v6857 = vadd.f32 %v6026, %v6856
        %v6858 = vpop.f32.mrf.mxu0
        %v6859 = vpop.f32.mrf.mxu0
        %v6860 = vadd.f32 %v6026, %v6859
        %v6861 = vpop.f32.mrf.mxu0
        %6862 = vmatprep.mubr.bf16.mxu0 %v5911
        %6863 = vmatmul.mubr.bf16.gmra.mxu0 %v5910
        %v6864 = vpop.f32.mrf.mxu0
        %v6865 = vadd.f32 %v6026, %v6864
        %v6866 = vpop.f32.mrf.mxu0
        %v6867 = vpop.f32.mrf.mxu0
        %v6868 = vadd.f32 %v6026, %v6867
        %v6869 = vpop.f32.mrf.mxu0
        %6870 = vmatprep.mubr.bf16.mxu0 %v5914
        %6871 = vmatmul.mubr.bf16.gmra.mxu0 %v5913
        %v6872 = vpop.f32.mrf.mxu0
        %v6873 = vadd.f32 %v6026, %v6872
        %v6874 = vpop.f32.mrf.mxu0
        %v6875 = vpop.f32.mrf.mxu0
        %v6876 = vadd.f32 %v6026, %v6875
        %v6877 = vpop.f32.mrf.mxu0
        %6878 = vmatprep.mubr.bf16.mxu0 %v5917
        %6879 = vmatmul.mubr.bf16.gmra.mxu0 %v5916
        %v6880 = vpop.f32.mrf.mxu0
        %v6881 = vadd.f32 %v6026, %v6880
        %v6882 = vpop.f32.mrf.mxu0
        %v6883 = vpop.f32.mrf.mxu0
        %v6884 = vadd.f32 %v6026, %v6883
        %v6885 = vpop.f32.mrf.mxu0
        %6886 = vmatprep.mubr.bf16.mxu0 %v5920
        %6887 = vmatmul.mubr.bf16.gmra.mxu0 %v5919
        %v6888 = vpop.f32.mrf.mxu0
        %v6889 = vadd.f32 %v6026, %v6888
        %v6890 = vpop.f32.mrf.mxu0
        %v6891 = vpop.f32.mrf.mxu0
        %v6892 = vadd.f32 %v6026, %v6891
        %v6893 = vpop.f32.mrf.mxu0
        %6894 = vmatprep.mubr.bf16.mxu0 %v5923
        %6895 = vmatmul.mubr.bf16.gmra.mxu0 %v5922
        %v6896 = vpop.f32.mrf.mxu0
        %v6897 = vadd.f32 %v6026, %v6896
        %v6898 = vpop.f32.mrf.mxu0
        %v6899 = vpop.f32.mrf.mxu0
        %v6900 = vadd.f32 %v6026, %v6899
        %v6901 = vpop.f32.mrf.mxu0
        %6902 = vmatprep.mubr.bf16.mxu0 %v5926
        %6903 = vmatmul.mubr.bf16.gmra.mxu0 %v5925
        %v6904 = vpop.f32.mrf.mxu0
        %v6905 = vadd.f32 %v6026, %v6904
        %v6906 = vpop.f32.mrf.mxu0
        %v6907 = vpop.f32.mrf.mxu0
        %v6908 = vadd.f32 %v6026, %v6907
        %v6909 = vpop.f32.mrf.mxu0
        %6910 = vmatprep.mubr.bf16.mxu0 %v5929
        %6911 = vmatmul.mubr.bf16.gmra.mxu0 %v5928
        %v6912 = vpop.f32.mrf.mxu0
        %v6913 = vadd.f32 %v6026, %v6912
        %v6914 = vpop.f32.mrf.mxu0
        %v6915 = vpop.f32.mrf.mxu0
        %v6916 = vadd.f32 %v6026, %v6915
        %v6917 = vpop.f32.mrf.mxu0
        %6918 = vmatprep.mubr.bf16.mxu0 %v5932
        %6919 = vmatmul.mubr.bf16.gmra.mxu0 %v5931
        %v6920 = vpop.f32.mrf.mxu0
        %v6921 = vadd.f32 %v6026, %v6920
        %v6922 = vpop.f32.mrf.mxu0
        %v6923 = vpop.f32.mrf.mxu0
        %v6924 = vadd.f32 %v6026, %v6923
        %v6925 = vpop.f32.mrf.mxu0
        %6926 = vmatprep.mubr.bf16.mxu0 %v5935
        %6927 = vmatmul.mubr.bf16.gmra.mxu0 %v5934
        %v6928 = vpop.f32.mrf.mxu0
        %v6929 = vadd.f32 %v6026, %v6928
        %v6930 = vpop.f32.mrf.mxu0
        %v6931 = vpop.f32.mrf.mxu0
        %v6932 = vadd.f32 %v6026, %v6931
        %v6933 = vpop.f32.mrf.mxu0
        %6934 = vdwg.mxu0
        %6935 = vmatprep.subr.bf16.mxu0 0
        %6936 = vmatpush1.bf16.msra.mxu0 0
        %6937 = vmatprep.subr.bf16.mxu0 0
        %6938 = vmatpush1.bf16.msra.mxu0 0
        %6939 = vmatprep.subr.bf16.mxu0 0
        %6940 = vmatpush1.bf16.msra.mxu0 0
        %6941 = vmatprep.subr.bf16.mxu0 0
        %6942 = vmatpush1.bf16.msra.mxu0 0
        %6943 = vmatprep.subr.bf16.mxu0 0
        %6944 = vmatpush1.bf16.msra.mxu0 0
        %6945 = vmatprep.subr.bf16.mxu0 0
        %6946 = vmatpush1.bf16.msra.mxu0 %v6386
        %6947 = vmatprep.subr.bf16.mxu0 0
        %6948 = vmatpush1.bf16.msra.mxu0 %v6273
        %6949 = vmatprep.subr.bf16.mxu0 0
        %6950 = vmatpush1.bf16.msra.mxu0 %v6270
        %6951 = vmatprep.subr.bf16.mxu0 0
        %6952 = vmatpush2.bf16.msra.mxu0 0
        %6953 = vmatprep.subr.bf16.mxu0 0
        %6954 = vmatpush2.bf16.msra.mxu0 0
        %6955 = vmatprep.subr.bf16.mxu0 0
        %6956 = vmatpush2.bf16.msra.mxu0 0
        %6957 = vmatprep.subr.bf16.mxu0 0
        %6958 = vmatpush2.bf16.msra.mxu0 0
        %6959 = vmatprep.subr.bf16.mxu0 0
        %6960 = vmatpush2.bf16.msra.mxu0 0
        %6961 = vmatprep.subr.bf16.mxu0 0
        %6962 = vmatpush2.bf16.msra.mxu0 0
        %6963 = vmatprep.subr.bf16.mxu0 0
        %6964 = vmatpush2.bf16.msra.mxu0 0
        %6965 = vmatprep.subr.bf16.mxu0 0
        %6966 = vmatpush2.bf16.msra.mxu0 0
        %6967 = vmatprep.mubr.bf16.mxu0 0
        %6968 = vmatmul.mubr.bf16.gmra.mxu0 %v6332
        %v6969 = vpop.f32.mrf.mxu0
        %v6970 = vadd.f32 %v6809, %v6969
        %v6971 = vpop.f32.mrf.mxu0
        %v6972 = vpop.f32.mrf.mxu0
        %v6973 = vadd.f32 %v6812, %v6972
        %v6974 = vpop.f32.mrf.mxu0
        %6975 = vmatprep.mubr.bf16.mxu0 0
        %6976 = vmatmul.mubr.bf16.gmra.mxu0 %v6335
        %v6977 = vpop.f32.mrf.mxu0
        %v6978 = vadd.f32 %v6817, %v6977
        %v6979 = vpop.f32.mrf.mxu0
        %v6980 = vpop.f32.mrf.mxu0
        %v6981 = vadd.f32 %v6820, %v6980
        %v6982 = vpop.f32.mrf.mxu0
        %6983 = vmatprep.mubr.bf16.mxu0 0
        %6984 = vmatmul.mubr.bf16.gmra.mxu0 %v6338
        %v6985 = vpop.f32.mrf.mxu0
        %v6986 = vadd.f32 %v6825, %v6985
        %v6987 = vpop.f32.mrf.mxu0
        %v6988 = vpop.f32.mrf.mxu0
        %v6989 = vadd.f32 %v6828, %v6988
        %v6990 = vpop.f32.mrf.mxu0
        %6991 = vmatprep.mubr.bf16.mxu0 0
        %6992 = vmatmul.mubr.bf16.gmra.mxu0 %v6341
        %v6993 = vpop.f32.mrf.mxu0
        %v6994 = vadd.f32 %v6833, %v6993
        %v6995 = vpop.f32.mrf.mxu0
        %v6996 = vpop.f32.mrf.mxu0
        %v6997 = vadd.f32 %v6836, %v6996
        %v6998 = vpop.f32.mrf.mxu0
        %6999 = vmatprep.mubr.bf16.mxu0 0
        %7000 = vmatmul.mubr.bf16.gmra.mxu0 %v6344
        %v7001 = vpop.f32.mrf.mxu0
        %v7002 = vadd.f32 %v6841, %v7001
        %v7003 = vpop.f32.mrf.mxu0
        %v7004 = vpop.f32.mrf.mxu0
        %v7005 = vadd.f32 %v6844, %v7004
        %v7006 = vpop.f32.mrf.mxu0
        %7007 = vmatprep.mubr.bf16.mxu0 0
        %7008 = vmatmul.mubr.bf16.gmra.mxu0 %v6347
        %v7009 = vpop.f32.mrf.mxu0
        %v7010 = vadd.f32 %v6849, %v7009
        %v7011 = vpop.f32.mrf.mxu0
        %v7012 = vpop.f32.mrf.mxu0
        %v7013 = vadd.f32 %v6852, %v7012
        %v7014 = vpop.f32.mrf.mxu0
        %7015 = vmatprep.mubr.bf16.mxu0 0
        %7016 = vmatmul.mubr.bf16.gmra.mxu0 %v6350
        %v7017 = vpop.f32.mrf.mxu0
        %v7018 = vadd.f32 %v6857, %v7017
        %v7019 = vpop.f32.mrf.mxu0
        %v7020 = vpop.f32.mrf.mxu0
        %v7021 = vadd.f32 %v6860, %v7020
        %v7022 = vpop.f32.mrf.mxu0
        %7023 = vmatprep.mubr.bf16.mxu0 0
        %7024 = vmatmul.mubr.bf16.gmra.mxu0 %v6353
        %v7025 = vpop.f32.mrf.mxu0
        %v7026 = vadd.f32 %v6865, %v7025
        %v7027 = vpop.f32.mrf.mxu0
        %v7028 = vpop.f32.mrf.mxu0
        %v7029 = vadd.f32 %v6868, %v7028
        %v7030 = vpop.f32.mrf.mxu0
        %7031 = vmatprep.mubr.bf16.mxu0 0
        %7032 = vmatmul.mubr.bf16.gmra.mxu0 %v6356
        %v7033 = vpop.f32.mrf.mxu0
        %v7034 = vadd.f32 %v6873, %v7033
        %v7035 = vpop.f32.mrf.mxu0
        %v7036 = vpop.f32.mrf.mxu0
        %v7037 = vadd.f32 %v6876, %v7036
        %v7038 = vpop.f32.mrf.mxu0
        %7039 = vmatprep.mubr.bf16.mxu0 0
        %7040 = vmatmul.mubr.bf16.gmra.mxu0 %v6359
        %v7041 = vpop.f32.mrf.mxu0
        %v7042 = vadd.f32 %v6881, %v7041
        %v7043 = vpop.f32.mrf.mxu0
        %v7044 = vpop.f32.mrf.mxu0
        %v7045 = vadd.f32 %v6884, %v7044
        %v7046 = vpop.f32.mrf.mxu0
        %7047 = vmatprep.mubr.bf16.mxu0 0
        %7048 = vmatmul.mubr.bf16.gmra.mxu0 %v6362
        %v7049 = vpop.f32.mrf.mxu0
        %v7050 = vadd.f32 %v6889, %v7049
        %v7051 = vpop.f32.mrf.mxu0
        %v7052 = vpop.f32.mrf.mxu0
        %v7053 = vadd.f32 %v6892, %v7052
        %v7054 = vpop.f32.mrf.mxu0
        %7055 = vmatprep.mubr.bf16.mxu0 0
        %7056 = vmatmul.mubr.bf16.gmra.mxu0 %v6365
        %v7057 = vpop.f32.mrf.mxu0
        %v7058 = vadd.f32 %v6897, %v7057
        %v7059 = vpop.f32.mrf.mxu0
        %v7060 = vpop.f32.mrf.mxu0
        %v7061 = vadd.f32 %v6900, %v7060
        %v7062 = vpop.f32.mrf.mxu0
        %7063 = vmatprep.mubr.bf16.mxu0 0
        %7064 = vmatmul.mubr.bf16.gmra.mxu0 %v6368
        %v7065 = vpop.f32.mrf.mxu0
        %v7066 = vadd.f32 %v6905, %v7065
        %v7067 = vpop.f32.mrf.mxu0
        %v7068 = vpop.f32.mrf.mxu0
        %v7069 = vadd.f32 %v6908, %v7068
        %v7070 = vpop.f32.mrf.mxu0
        %7071 = vmatprep.mubr.bf16.mxu0 0
        %7072 = vmatmul.mubr.bf16.gmra.mxu0 %v6371
        %v7073 = vpop.f32.mrf.mxu0
        %v7074 = vadd.f32 %v6913, %v7073
        %v7075 = vpop.f32.mrf.mxu0
        %v7076 = vpop.f32.mrf.mxu0
        %v7077 = vadd.f32 %v6916, %v7076
        %v7078 = vpop.f32.mrf.mxu0
        %7079 = vmatprep.mubr.bf16.mxu0 0
        %7080 = vmatmul.mubr.bf16.gmra.mxu0 %v6374
        %v7081 = vpop.f32.mrf.mxu0
        %v7082 = vadd.f32 %v6921, %v7081
        %v7083 = vpop.f32.mrf.mxu0
        %v7084 = vpop.f32.mrf.mxu0
        %v7085 = vadd.f32 %v6924, %v7084
        %v7086 = vpop.f32.mrf.mxu0
        %7087 = vmatprep.mubr.bf16.mxu0 0
        %7088 = vmatmul.mubr.bf16.gmra.mxu0 %v6377
        %v7089 = vpop.f32.mrf.mxu0
        %v7090 = vadd.f32 %v6929, %v7089
        %v7091 = vpop.f32.mrf.mxu0
        %v7092 = vpop.f32.mrf.mxu0
        %v7093 = vadd.f32 %v6932, %v7092
        %v7094 = vpop.f32.mrf.mxu0
        %7095 = vdwg.mxu0
        %v7096 = vxor.u32 %v6616, 2147483648
        %v7097 = vxor.u32 %v6620, 2147483648
        %v7098 = vxor.u32 %v6626, 2147483648
        %v7099 = vxor.u32 %v6630, 2147483648
        %v7100 = vxor.u32 %v6636, 2147483648
        %v7101 = vxor.u32 %v6640, 2147483648
        %v7102 = vxor.u32 %v6646, 2147483648
        %v7103 = vxor.u32 %v6650, 2147483648
        %v7104 = vxor.u32 %v6656, 2147483648
        %v7105 = vxor.u32 %v6660, 2147483648
        %v7106 = vxor.u32 %v6666, 2147483648
        %v7107 = vxor.u32 %v6670, 2147483648
        %v7108 = vxor.u32 %v6676, 2147483648
        %v7109 = vxor.u32 %v6680, 2147483648
        %v7110 = vxor.u32 %v6686, 2147483648
        %v7111 = vxor.u32 %v6690, 2147483648
        %v7112 = vxor.u32 %v6696, 2147483648
        %v7113 = vxor.u32 %v6700, 2147483648
        %v7114 = vxor.u32 %v6706, 2147483648
        %v7115 = vxor.u32 %v6710, 2147483648
        %v7116 = vxor.u32 %v6716, 2147483648
        %v7117 = vxor.u32 %v6720, 2147483648
        %v7118 = vxor.u32 %v6726, 2147483648
        %v7119 = vxor.u32 %v6730, 2147483648
        %v7120 = vxor.u32 %v6736, 2147483648
        %v7121 = vxor.u32 %v6740, 2147483648
        %v7122 = vxor.u32 %v6746, 2147483648
        %v7123 = vxor.u32 %v6750, 2147483648
        %v7124 = vxor.u32 %v6756, 2147483648
        %v7125 = vxor.u32 %v6760, 2147483648
        %v7126 = vxor.u32 %v6766, 2147483648
        %v7127 = vxor.u32 %v6770, 2147483648
        %v7128 = vmul.f32 %v7096, 1.442695
        %v7129 = vpow.pop %v7128
        %v7130 = vmul.f32 %v7097, 1.442695
        %v7131 = vpow.pop %v7130
        %v7132 = vmul.f32 %v7098, 1.442695
        %v7133 = vpow.pop %v7132
        %v7134 = vmul.f32 %v7099, 1.442695
        %v7135 = vpow.pop %v7134
        %v7136 = vmul.f32 %v7100, 1.442695
        %v7137 = vpow.pop %v7136
        %v7138 = vmul.f32 %v7101, 1.442695
        %v7139 = vpow.pop %v7138
        %v7140 = vmul.f32 %v7102, 1.442695
        %v7141 = vpow.pop %v7140
        %v7142 = vmul.f32 %v7103, 1.442695
        %v7143 = vpow.pop %v7142
        %v7144 = vmul.f32 %v7104, 1.442695
        %v7145 = vpow.pop %v7144
        %v7146 = vmul.f32 %v7105, 1.442695
        %v7147 = vpow.pop %v7146
        %v7148 = vmul.f32 %v7106, 1.442695
        %v7149 = vpow.pop %v7148
        %v7150 = vmul.f32 %v7107, 1.442695
        %v7151 = vpow.pop %v7150
        %v7152 = vmul.f32 %v7108, 1.442695
        %v7153 = vpow.pop %v7152
        %v7154 = vmul.f32 %v7109, 1.442695
        %v7155 = vpow.pop %v7154
        %v7156 = vmul.f32 %v7110, 1.442695
        %v7157 = vpow.pop %v7156
        %v7158 = vmul.f32 %v7111, 1.442695
        %v7159 = vpow.pop %v7158
        %v7160 = vmul.f32 %v7112, 1.442695
        %v7161 = vpow.pop %v7160
        %v7162 = vmul.f32 %v7113, 1.442695
        %v7163 = vpow.pop %v7162
        %v7164 = vmul.f32 %v7114, 1.442695
        %v7165 = vpow.pop %v7164
        %v7166 = vmul.f32 %v7115, 1.442695
        %v7167 = vpow.pop %v7166
        %v7168 = vmul.f32 %v7116, 1.442695
        %v7169 = vpow.pop %v7168
        %v7170 = vmul.f32 %v7117, 1.442695
        %v7171 = vpow.pop %v7170
        %v7172 = vmul.f32 %v7118, 1.442695
        %v7173 = vpow.pop %v7172
        %v7174 = vmul.f32 %v7119, 1.442695
        %v7175 = vpow.pop %v7174
        %v7176 = vmul.f32 %v7120, 1.442695
        %v7177 = vpow.pop %v7176
        %v7178 = vmul.f32 %v7121, 1.442695
        %v7179 = vpow.pop %v7178
        %v7180 = vmul.f32 %v7122, 1.442695
        %v7181 = vpow.pop %v7180
        %v7182 = vmul.f32 %v7123, 1.442695
        %v7183 = vpow.pop %v7182
        %v7184 = vmul.f32 %v7124, 1.442695
        %v7185 = vpow.pop %v7184
        %v7186 = vmul.f32 %v7125, 1.442695
        %v7187 = vpow.pop %v7186
        %v7188 = vmul.f32 %v7126, 1.442695
        %v7189 = vpow.pop %v7188
        %v7190 = vmul.f32 %v7127, 1.442695
        %v7191 = vpow.pop %v7190
        %v7192 = vadd.f32 %v7129, 1.0
        %v7193 = vadd.f32 %v7131, 1.0
        %v7194 = vadd.f32 %v7133, 1.0
        %v7195 = vadd.f32 %v7135, 1.0
        %v7196 = vadd.f32 %v7137, 1.0
        %v7197 = vadd.f32 %v7139, 1.0
        %v7198 = vadd.f32 %v7141, 1.0
        %v7199 = vadd.f32 %v7143, 1.0
        %v7200 = vadd.f32 %v7145, 1.0
        %v7201 = vadd.f32 %v7147, 1.0
        %v7202 = vadd.f32 %v7149, 1.0
        %v7203 = vadd.f32 %v7151, 1.0
        %v7204 = vadd.f32 %v7153, 1.0
        %v7205 = vadd.f32 %v7155, 1.0
        %v7206 = vadd.f32 %v7157, 1.0
        %v7207 = vadd.f32 %v7159, 1.0
        %v7208 = vadd.f32 %v7161, 1.0
        %v7209 = vadd.f32 %v7163, 1.0
        %v7210 = vadd.f32 %v7165, 1.0
        %v7211 = vadd.f32 %v7167, 1.0
        %v7212 = vadd.f32 %v7169, 1.0
        %v7213 = vadd.f32 %v7171, 1.0
        %v7214 = vadd.f32 %v7173, 1.0
        %v7215 = vadd.f32 %v7175, 1.0
        %v7216 = vadd.f32 %v7177, 1.0
        %v7217 = vadd.f32 %v7179, 1.0
        %v7218 = vadd.f32 %v7181, 1.0
        %v7219 = vadd.f32 %v7183, 1.0
        %v7220 = vadd.f32 %v7185, 1.0
        %v7221 = vadd.f32 %v7187, 1.0
        %v7222 = vadd.f32 %v7189, 1.0
        %v7223 = vadd.f32 %v7191, 1.0
        %v7224 = vrcp.pop %v7192
        %v7225 = vmul.f32 1.0, %v7224
        %v7226 = vrcp.pop %v7193
        %v7227 = vmul.f32 1.0, %v7226
        %v7228 = vrcp.pop %v7194
        %v7229 = vmul.f32 1.0, %v7228
        %v7230 = vrcp.pop %v7195
        %v7231 = vmul.f32 1.0, %v7230
        %v7232 = vrcp.pop %v7196
        %v7233 = vmul.f32 1.0, %v7232
        %v7234 = vrcp.pop %v7197
        %v7235 = vmul.f32 1.0, %v7234
        %v7236 = vrcp.pop %v7198
        %v7237 = vmul.f32 1.0, %v7236
        %v7238 = vrcp.pop %v7199
        %v7239 = vmul.f32 1.0, %v7238
        %v7240 = vrcp.pop %v7200
        %v7241 = vmul.f32 1.0, %v7240
        %v7242 = vrcp.pop %v7201
        %v7243 = vmul.f32 1.0, %v7242
        %v7244 = vrcp.pop %v7202
        %v7245 = vmul.f32 1.0, %v7244
        %v7246 = vrcp.pop %v7203
        %v7247 = vmul.f32 1.0, %v7246
        %v7248 = vrcp.pop %v7204
        %v7249 = vmul.f32 1.0, %v7248
        %v7250 = vrcp.pop %v7205
        %v7251 = vmul.f32 1.0, %v7250
        %v7252 = vrcp.pop %v7206
        %v7253 = vmul.f32 1.0, %v7252
        %v7254 = vrcp.pop %v7207
        %v7255 = vmul.f32 1.0, %v7254
        %v7256 = vrcp.pop %v7208
        %v7257 = vmul.f32 1.0, %v7256
        %v7258 = vrcp.pop %v7209
        %v7259 = vmul.f32 1.0, %v7258
        %v7260 = vrcp.pop %v7210
        %v7261 = vmul.f32 1.0, %v7260
        %v7262 = vrcp.pop %v7211
        %v7263 = vmul.f32 1.0, %v7262
        %v7264 = vrcp.pop %v7212
        %v7265 = vmul.f32 1.0, %v7264
        %v7266 = vrcp.pop %v7213
        %v7267 = vmul.f32 1.0, %v7266
        %v7268 = vrcp.pop %v7214
        %v7269 = vmul.f32 1.0, %v7268
        %v7270 = vrcp.pop %v7215
        %v7271 = vmul.f32 1.0, %v7270
        %v7272 = vrcp.pop %v7216
        %v7273 = vmul.f32 1.0, %v7272
        %v7274 = vrcp.pop %v7217
        %v7275 = vmul.f32 1.0, %v7274
        %v7276 = vrcp.pop %v7218
        %v7277 = vmul.f32 1.0, %v7276
        %v7278 = vrcp.pop %v7219
        %v7279 = vmul.f32 1.0, %v7278
        %v7280 = vrcp.pop %v7220
        %v7281 = vmul.f32 1.0, %v7280
        %v7282 = vrcp.pop %v7221
        %v7283 = vmul.f32 1.0, %v7282
        %v7284 = vrcp.pop %v7222
        %v7285 = vmul.f32 1.0, %v7284
        %v7286 = vrcp.pop %v7223
        %v7287 = vmul.f32 1.0, %v7286
        %v7288 = vtanh.pop %v6618
        %v7289 = vtanh.pop %v6622
        %v7290 = vtanh.pop %v6628
        %v7291 = vtanh.pop %v6632
        %v7292 = vtanh.pop %v6638
        %v7293 = vtanh.pop %v6642
        %v7294 = vtanh.pop %v6648
        %v7295 = vtanh.pop %v6652
        %v7296 = vtanh.pop %v6658
        %v7297 = vtanh.pop %v6662
        %v7298 = vtanh.pop %v6668
        %v7299 = vtanh.pop %v6672
        %v7300 = vtanh.pop %v6678
        %v7301 = vtanh.pop %v6682
        %v7302 = vtanh.pop %v6688
        %v7303 = vtanh.pop %v6692
        %v7304 = vtanh.pop %v6698
        %v7305 = vtanh.pop %v6702
        %v7306 = vtanh.pop %v6708
        %v7307 = vtanh.pop %v6712
        %v7308 = vtanh.pop %v6718
        %v7309 = vtanh.pop %v6722
        %v7310 = vtanh.pop %v6728
        %v7311 = vtanh.pop %v6732
        %v7312 = vtanh.pop %v6738
        %v7313 = vtanh.pop %v6742
        %v7314 = vtanh.pop %v6748
        %v7315 = vtanh.pop %v6752
        %v7316 = vtanh.pop %v6758
        %v7317 = vtanh.pop %v6762
        %v7318 = vtanh.pop %v6768
        %v7319 = vtanh.pop %v6772
        %v7320 = vxor.u32 %v6970, 2147483648
        %v7321 = vxor.u32 %v6973, 2147483648
        %v7322 = vxor.u32 %v6978, 2147483648
        %v7323 = vxor.u32 %v6981, 2147483648
        %v7324 = vxor.u32 %v6986, 2147483648
        %v7325 = vxor.u32 %v6989, 2147483648
        %v7326 = vxor.u32 %v6994, 2147483648
        %v7327 = vxor.u32 %v6997, 2147483648
        %v7328 = vxor.u32 %v7002, 2147483648
        %v7329 = vxor.u32 %v7005, 2147483648
        %v7330 = vxor.u32 %v7010, 2147483648
        %v7331 = vxor.u32 %v7013, 2147483648
        %v7332 = vxor.u32 %v7018, 2147483648
        %v7333 = vxor.u32 %v7021, 2147483648
        %v7334 = vxor.u32 %v7026, 2147483648
        %v7335 = vxor.u32 %v7029, 2147483648
        %v7336 = vxor.u32 %v7034, 2147483648
        %v7337 = vxor.u32 %v7037, 2147483648
        %v7338 = vxor.u32 %v7042, 2147483648
        %v7339 = vxor.u32 %v7045, 2147483648
        %v7340 = vxor.u32 %v7050, 2147483648
        %v7341 = vxor.u32 %v7053, 2147483648
        %v7342 = vxor.u32 %v7058, 2147483648
        %v7343 = vxor.u32 %v7061, 2147483648
        %v7344 = vxor.u32 %v7066, 2147483648
        %v7345 = vxor.u32 %v7069, 2147483648
        %v7346 = vxor.u32 %v7074, 2147483648
        %v7347 = vxor.u32 %v7077, 2147483648
        %v7348 = vxor.u32 %v7082, 2147483648
        %v7349 = vxor.u32 %v7085, 2147483648
        %v7350 = vxor.u32 %v7090, 2147483648
        %v7351 = vxor.u32 %v7093, 2147483648
        %v7352 = vmul.f32 %v7320, 1.442695
        %v7353 = vpow.pop %v7352
        %v7354 = vmul.f32 %v7321, 1.442695
        %v7355 = vpow.pop %v7354
        %v7356 = vmul.f32 %v7322, 1.442695
        %v7357 = vpow.pop %v7356
        %v7358 = vmul.f32 %v7323, 1.442695
        %v7359 = vpow.pop %v7358
        %v7360 = vmul.f32 %v7324, 1.442695
        %v7361 = vpow.pop %v7360
        %v7362 = vmul.f32 %v7325, 1.442695
        %v7363 = vpow.pop %v7362
        %v7364 = vmul.f32 %v7326, 1.442695
        %v7365 = vpow.pop %v7364
        %v7366 = vmul.f32 %v7327, 1.442695
        %v7367 = vpow.pop %v7366
        %v7368 = vmul.f32 %v7328, 1.442695
        %v7369 = vpow.pop %v7368
        %v7370 = vmul.f32 %v7329, 1.442695
        %v7371 = vpow.pop %v7370
        %v7372 = vmul.f32 %v7330, 1.442695
        %v7373 = vpow.pop %v7372
        %v7374 = vmul.f32 %v7331, 1.442695
        %v7375 = vpow.pop %v7374
        %v7376 = vmul.f32 %v7332, 1.442695
        %v7377 = vpow.pop %v7376
        %v7378 = vmul.f32 %v7333, 1.442695
        %v7379 = vpow.pop %v7378
        %v7380 = vmul.f32 %v7334, 1.442695
        %v7381 = vpow.pop %v7380
        %v7382 = vmul.f32 %v7335, 1.442695
        %v7383 = vpow.pop %v7382
        %v7384 = vmul.f32 %v7336, 1.442695
        %v7385 = vpow.pop %v7384
        %v7386 = vmul.f32 %v7337, 1.442695
        %v7387 = vpow.pop %v7386
        %v7388 = vmul.f32 %v7338, 1.442695
        %v7389 = vpow.pop %v7388
        %v7390 = vmul.f32 %v7339, 1.442695
        %v7391 = vpow.pop %v7390
        %v7392 = vmul.f32 %v7340, 1.442695
        %v7393 = vpow.pop %v7392
        %v7394 = vmul.f32 %v7341, 1.442695
        %v7395 = vpow.pop %v7394
        %v7396 = vmul.f32 %v7342, 1.442695
        %v7397 = vpow.pop %v7396
        %v7398 = vmul.f32 %v7343, 1.442695
        %v7399 = vpow.pop %v7398
        %v7400 = vmul.f32 %v7344, 1.442695
        %v7401 = vpow.pop %v7400
        %v7402 = vmul.f32 %v7345, 1.442695
        %v7403 = vpow.pop %v7402
        %v7404 = vmul.f32 %v7346, 1.442695
        %v7405 = vpow.pop %v7404
        %v7406 = vmul.f32 %v7347, 1.442695
        %v7407 = vpow.pop %v7406
        %v7408 = vmul.f32 %v7348, 1.442695
        %v7409 = vpow.pop %v7408
        %v7410 = vmul.f32 %v7349, 1.442695
        %v7411 = vpow.pop %v7410
        %v7412 = vmul.f32 %v7350, 1.442695
        %v7413 = vpow.pop %v7412
        %v7414 = vmul.f32 %v7351, 1.442695
        %v7415 = vpow.pop %v7414
        %v7416 = vadd.f32 %v7353, 1.0
        %v7417 = vadd.f32 %v7355, 1.0
        %v7418 = vadd.f32 %v7357, 1.0
        %v7419 = vadd.f32 %v7359, 1.0
        %v7420 = vadd.f32 %v7361, 1.0
        %v7421 = vadd.f32 %v7363, 1.0
        %v7422 = vadd.f32 %v7365, 1.0
        %v7423 = vadd.f32 %v7367, 1.0
        %v7424 = vadd.f32 %v7369, 1.0
        %v7425 = vadd.f32 %v7371, 1.0
        %v7426 = vadd.f32 %v7373, 1.0
        %v7427 = vadd.f32 %v7375, 1.0
        %v7428 = vadd.f32 %v7377, 1.0
        %v7429 = vadd.f32 %v7379, 1.0
        %v7430 = vadd.f32 %v7381, 1.0
        %v7431 = vadd.f32 %v7383, 1.0
        %v7432 = vadd.f32 %v7385, 1.0
        %v7433 = vadd.f32 %v7387, 1.0
        %v7434 = vadd.f32 %v7389, 1.0
        %v7435 = vadd.f32 %v7391, 1.0
        %v7436 = vadd.f32 %v7393, 1.0
        %v7437 = vadd.f32 %v7395, 1.0
        %v7438 = vadd.f32 %v7397, 1.0
        %v7439 = vadd.f32 %v7399, 1.0
        %v7440 = vadd.f32 %v7401, 1.0
        %v7441 = vadd.f32 %v7403, 1.0
        %v7442 = vadd.f32 %v7405, 1.0
        %v7443 = vadd.f32 %v7407, 1.0
        %v7444 = vadd.f32 %v7409, 1.0
        %v7445 = vadd.f32 %v7411, 1.0
        %v7446 = vadd.f32 %v7413, 1.0
        %v7447 = vadd.f32 %v7415, 1.0
        %v7448 = vrcp.pop %v7416
        %v7449 = vmul.f32 1.0, %v7448
        %v7450 = vrcp.pop %v7417
        %v7451 = vmul.f32 1.0, %v7450
        %v7452 = vrcp.pop %v7418
        %v7453 = vmul.f32 1.0, %v7452
        %v7454 = vrcp.pop %v7419
        %v7455 = vmul.f32 1.0, %v7454
        %v7456 = vrcp.pop %v7420
        %v7457 = vmul.f32 1.0, %v7456
        %v7458 = vrcp.pop %v7421
        %v7459 = vmul.f32 1.0, %v7458
        %v7460 = vrcp.pop %v7422
        %v7461 = vmul.f32 1.0, %v7460
        %v7462 = vrcp.pop %v7423
        %v7463 = vmul.f32 1.0, %v7462
        %v7464 = vrcp.pop %v7424
        %v7465 = vmul.f32 1.0, %v7464
        %v7466 = vrcp.pop %v7425
        %v7467 = vmul.f32 1.0, %v7466
        %v7468 = vrcp.pop %v7426
        %v7469 = vmul.f32 1.0, %v7468
        %v7470 = vrcp.pop %v7427
        %v7471 = vmul.f32 1.0, %v7470
        %v7472 = vrcp.pop %v7428
        %v7473 = vmul.f32 1.0, %v7472
        %v7474 = vrcp.pop %v7429
        %v7475 = vmul.f32 1.0, %v7474
        %v7476 = vrcp.pop %v7430
        %v7477 = vmul.f32 1.0, %v7476
        %v7478 = vrcp.pop %v7431
        %v7479 = vmul.f32 1.0, %v7478
        %v7480 = vrcp.pop %v7432
        %v7481 = vmul.f32 1.0, %v7480
        %v7482 = vrcp.pop %v7433
        %v7483 = vmul.f32 1.0, %v7482
        %v7484 = vrcp.pop %v7434
        %v7485 = vmul.f32 1.0, %v7484
        %v7486 = vrcp.pop %v7435
        %v7487 = vmul.f32 1.0, %v7486
        %v7488 = vrcp.pop %v7436
        %v7489 = vmul.f32 1.0, %v7488
        %v7490 = vrcp.pop %v7437
        %v7491 = vmul.f32 1.0, %v7490
        %v7492 = vrcp.pop %v7438
        %v7493 = vmul.f32 1.0, %v7492
        %v7494 = vrcp.pop %v7439
        %v7495 = vmul.f32 1.0, %v7494
        %v7496 = vrcp.pop %v7440
        %v7497 = vmul.f32 1.0, %v7496
        %v7498 = vrcp.pop %v7441
        %v7499 = vmul.f32 1.0, %v7498
        %v7500 = vrcp.pop %v7442
        %v7501 = vmul.f32 1.0, %v7500
        %v7502 = vrcp.pop %v7443
        %v7503 = vmul.f32 1.0, %v7502
        %v7504 = vrcp.pop %v7444
        %v7505 = vmul.f32 1.0, %v7504
        %v7506 = vrcp.pop %v7445
        %v7507 = vmul.f32 1.0, %v7506
        %v7508 = vrcp.pop %v7446
        %v7509 = vmul.f32 1.0, %v7508
        %v7510 = vrcp.pop %v7447
        %v7511 = vmul.f32 1.0, %v7510
        %v7512 = vmul.f32 %v7225, %v7288
        %v7513 = vmul.f32 %v7227, %v7289
        %v7514 = vmul.f32 %v7229, %v7290
        %v7515 = vmul.f32 %v7231, %v7291
        %v7516 = vmul.f32 %v7233, %v7292
        %v7517 = vmul.f32 %v7235, %v7293
        %v7518 = vmul.f32 %v7237, %v7294
        %v7519 = vmul.f32 %v7239, %v7295
        %v7520 = vmul.f32 %v7241, %v7296
        %v7521 = vmul.f32 %v7243, %v7297
        %v7522 = vmul.f32 %v7245, %v7298
        %v7523 = vmul.f32 %v7247, %v7299
        %v7524 = vmul.f32 %v7249, %v7300
        %v7525 = vmul.f32 %v7251, %v7301
        %v7526 = vmul.f32 %v7253, %v7302
        %v7527 = vmul.f32 %v7255, %v7303
        %v7528 = vmul.f32 %v7257, %v7304
        %v7529 = vmul.f32 %v7259, %v7305
        %v7530 = vmul.f32 %v7261, %v7306
        %v7531 = vmul.f32 %v7263, %v7307
        %v7532 = vmul.f32 %v7265, %v7308
        %v7533 = vmul.f32 %v7267, %v7309
        %v7534 = vmul.f32 %v7269, %v7310
        %v7535 = vmul.f32 %v7271, %v7311
        %v7536 = vmul.f32 %v7273, %v7312
        %v7537 = vmul.f32 %v7275, %v7313
        %v7538 = vmul.f32 %v7277, %v7314
        %v7539 = vmul.f32 %v7279, %v7315
        %v7540 = vmul.f32 %v7281, %v7316
        %v7541 = vmul.f32 %v7283, %v7317
        %v7542 = vmul.f32 %v7285, %v7318
        %v7543 = vmul.f32 %v7287, %v7319
        %v7544 = vtanh.pop %v7512
        %v7545 = vtanh.pop %v7513
        %v7546 = vtanh.pop %v7514
        %v7547 = vtanh.pop %v7515
        %v7548 = vtanh.pop %v7516
        %v7549 = vtanh.pop %v7517
        %v7550 = vtanh.pop %v7518
        %v7551 = vtanh.pop %v7519
        %v7552 = vtanh.pop %v7520
        %v7553 = vtanh.pop %v7521
        %v7554 = vtanh.pop %v7522
        %v7555 = vtanh.pop %v7523
        %v7556 = vtanh.pop %v7524
        %v7557 = vtanh.pop %v7525
        %v7558 = vtanh.pop %v7526
        %v7559 = vtanh.pop %v7527
        %v7560 = vtanh.pop %v7528
        %v7561 = vtanh.pop %v7529
        %v7562 = vtanh.pop %v7530
        %v7563 = vtanh.pop %v7531
        %v7564 = vtanh.pop %v7532
        %v7565 = vtanh.pop %v7533
        %v7566 = vtanh.pop %v7534
        %v7567 = vtanh.pop %v7535
        %v7568 = vtanh.pop %v7536
        %v7569 = vtanh.pop %v7537
        %v7570 = vtanh.pop %v7538
        %v7571 = vtanh.pop %v7539
        %v7572 = vtanh.pop %v7540
        %v7573 = vtanh.pop %v7541
        %v7574 = vtanh.pop %v7542
        %v7575 = vtanh.pop %v7543
        %v7576 = vmul.f32 %v7449, %v7544
        %v7577 = vmul.f32 %v7451, %v7545
        %v7578 = vmul.f32 %v7453, %v7546
        %v7579 = vmul.f32 %v7455, %v7547
        %v7580 = vmul.f32 %v7457, %v7548
        %v7581 = vmul.f32 %v7459, %v7549
        %v7582 = vmul.f32 %v7461, %v7550
        %v7583 = vmul.f32 %v7463, %v7551
        %v7584 = vmul.f32 %v7465, %v7552
        %v7585 = vmul.f32 %v7467, %v7553
        %v7586 = vmul.f32 %v7469, %v7554
        %v7587 = vmul.f32 %v7471, %v7555
        %v7588 = vmul.f32 %v7473, %v7556
        %v7589 = vmul.f32 %v7475, %v7557
        %v7590 = vmul.f32 %v7477, %v7558
        %v7591 = vmul.f32 %v7479, %v7559
        %v7592 = vmul.f32 %v7481, %v7560
        %v7593 = vmul.f32 %v7483, %v7561
        %v7594 = vmul.f32 %v7485, %v7562
        %v7595 = vmul.f32 %v7487, %v7563
        %v7596 = vmul.f32 %v7489, %v7564
        %v7597 = vmul.f32 %v7491, %v7565
        %v7598 = vmul.f32 %v7493, %v7566
        %v7599 = vmul.f32 %v7495, %v7567
        %v7600 = vmul.f32 %v7497, %v7568
        %v7601 = vmul.f32 %v7499, %v7569
        %v7602 = vmul.f32 %v7501, %v7570
        %v7603 = vmul.f32 %v7503, %v7571
        %v7604 = vmul.f32 %v7505, %v7572
        %v7605 = vmul.f32 %v7507, %v7573
        %v7606 = vmul.f32 %v7509, %v7574
        %v7607 = vmul.f32 %v7511, %v7575
        %v7608 = vpack.c.bf16 %v7577, %v7576
        %v7609 = vpack.c.bf16 %v7579, %v7578
        %v7610 = vpack.c.bf16 %v7581, %v7580
        %v7611 = vpack.c.bf16 %v7583, %v7582
        %v7612 = vpack.c.bf16 %v7585, %v7584
        %v7613 = vpack.c.bf16 %v7587, %v7586
        %v7614 = vpack.c.bf16 %v7589, %v7588
        %v7615 = vpack.c.bf16 %v7591, %v7590
        %v7616 = vpack.c.bf16 %v7593, %v7592
        %v7617 = vpack.c.bf16 %v7595, %v7594
        %v7618 = vpack.c.bf16 %v7597, %v7596
        %v7619 = vpack.c.bf16 %v7599, %v7598
        %v7620 = vpack.c.bf16 %v7601, %v7600
        %v7621 = vpack.c.bf16 %v7603, %v7602
        %v7622 = vpack.c.bf16 %v7605, %v7604
        %v7623 = vpack.c.bf16 %v7607, %v7606
        %v7624 = vld [vmem:[%s3] sm:$0xf]
        %v7625 = vld [vmem:[%s3 + $0x4] sm:$0xf]
        %v7626 = vld [vmem:[%s3 + $0x8] sm:$0xf]
        %v7627 = vld [vmem:[%s3 + $0xc] sm:$0xf]
        %v7628 = vld [vmem:[%s3 + $0x10] sm:$0xf]
        %v7629 = vld [vmem:[%s3 + $0x14] sm:$0xf]
        %v7630 = vld [vmem:[%s3 + $0x18] sm:$0xf]
        %v7631 = vld [vmem:[%s3 + $0x1c] sm:$0xf]
        %v7632 = vld [vmem:[%s3 + $0x20] sm:$0xf]
        %v7633 = vld [vmem:[%s3 + $0x24] sm:$0xf]
        %v7634 = vld [vmem:[%s3 + $0x28] sm:$0xf]
        %v7635 = vld [vmem:[%s3 + $0x2c] sm:$0xf]
        %v7636 = vld [vmem:[%s3 + $0x30] sm:$0xf]
        %v7637 = vld [vmem:[%s3 + $0x34] sm:$0xf]
        %v7638 = vld [vmem:[%s3 + $0x38] sm:$0xf]
        %v7639 = vld [vmem:[%s3 + $0x3c] sm:$0xf]
        %v7640 = vld [vmem:[%s4] sm:$0x1]
        %v7642 = vlaneseq
        %v7643 = vshrl.u32 %v7642, 7
        %v7644 = vsub.s32 0, %v7643
        %v7645 = vrot.slane %v7640, %v7644
        %v7663 = vunpack.c.l.b16 %v7624
        %v7664 = vunpack.c.l.b16 %v7625
        %v7665 = vunpack.c.l.b16 %v7626
        %v7666 = vunpack.c.l.b16 %v7627
        %v7667 = vunpack.c.l.b16 %v7628
        %v7668 = vunpack.c.l.b16 %v7629
        %v7669 = vunpack.c.l.b16 %v7630
        %v7670 = vunpack.c.l.b16 %v7631
        %v7671 = vunpack.c.l.b16 %v7632
        %v7672 = vunpack.c.l.b16 %v7633
        %v7673 = vunpack.c.l.b16 %v7634
        %v7674 = vunpack.c.l.b16 %v7635
        %v7675 = vunpack.c.l.b16 %v7636
        %v7676 = vunpack.c.l.b16 %v7637
        %v7677 = vunpack.c.l.b16 %v7638
        %v7678 = vunpack.c.l.b16 %v7639
        %v7679 = vpack.c.b16 %v7664, %v7663
        %v7680 = vpack.c.b16 %v7666, %v7665
        %v7681 = vpack.c.b16 %v7668, %v7667
        %v7682 = vpack.c.b16 %v7670, %v7669
        %v7683 = vpack.c.b16 %v7672, %v7671
        %v7684 = vpack.c.b16 %v7674, %v7673
        %v7685 = vpack.c.b16 %v7676, %v7675
        %v7686 = vpack.c.b16 %v7678, %v7677
        %7695 = vmatprep.subr.bf16.mxu0 0
        %7696 = vmatpush1.bf16.msra.mxu0 %v7686
        %7697 = vmatprep.subr.bf16.mxu0 0
        %7698 = vmatpush1.bf16.msra.mxu0 %v7685
        %7699 = vmatprep.subr.bf16.mxu0 0
        %7700 = vmatpush1.bf16.msra.mxu0 %v7684
        %7701 = vmatprep.subr.bf16.mxu0 0
        %7702 = vmatpush1.bf16.msra.mxu0 %v7683
        %7703 = vmatprep.subr.bf16.mxu0 0
        %7704 = vmatpush1.bf16.msra.mxu0 %v7682
        %7705 = vmatprep.subr.bf16.mxu0 0
        %7706 = vmatpush1.bf16.msra.mxu0 %v7681
        %7707 = vmatprep.subr.bf16.mxu0 0
        %7708 = vmatpush1.bf16.msra.mxu0 %v7680
        %7709 = vmatprep.subr.bf16.mxu0 0
        %7710 = vmatpush1.bf16.msra.mxu0 %v7679
        %7711 = vmatprep.subr.bf16.mxu0 0
        %7712 = vmatpush2.bf16.msra.mxu0 0
        %7713 = vmatprep.subr.bf16.mxu0 0
        %7714 = vmatpush2.bf16.msra.mxu0 0
        %7715 = vmatprep.subr.bf16.mxu0 0
        %7716 = vmatpush2.bf16.msra.mxu0 0
        %7717 = vmatprep.subr.bf16.mxu0 0
        %7718 = vmatpush2.bf16.msra.mxu0 0
        %7719 = vmatprep.subr.bf16.mxu0 0
        %7720 = vmatpush2.bf16.msra.mxu0 0
        %7721 = vmatprep.subr.bf16.mxu0 0
        %7722 = vmatpush2.bf16.msra.mxu0 0
        %7723 = vmatprep.subr.bf16.mxu0 0
        %7724 = vmatpush2.bf16.msra.mxu0 0
        %7725 = vmatprep.subr.bf16.mxu0 0
        %7726 = vmatpush2.bf16.msra.mxu0 0
        %7727 = vmatprep.mubr.bf16.mxu0 0
        %7728 = vmatmul.mubr.bf16.gmra.mxu0 %v7608
        %v7729 = vpop.f32.mrf.mxu0
        %v7730 = vadd.f32 %v7645, %v7729
        %v7731 = vpop.f32.mrf.mxu0
        %v7732 = vpop.f32.mrf.mxu0
        %v7733 = vadd.f32 %v7645, %v7732
        %v7734 = vpop.f32.mrf.mxu0
        %7735 = vmatprep.mubr.bf16.mxu0 0
        %7736 = vmatmul.mubr.bf16.gmra.mxu0 %v7609
        %v7737 = vpop.f32.mrf.mxu0
        %v7738 = vadd.f32 %v7645, %v7737
        %v7739 = vpop.f32.mrf.mxu0
        %v7740 = vpop.f32.mrf.mxu0
        %v7741 = vadd.f32 %v7645, %v7740
        %v7742 = vpop.f32.mrf.mxu0
        %7743 = vmatprep.mubr.bf16.mxu0 0
        %7744 = vmatmul.mubr.bf16.gmra.mxu0 %v7610
        %v7745 = vpop.f32.mrf.mxu0
        %v7746 = vadd.f32 %v7645, %v7745
        %v7747 = vpop.f32.mrf.mxu0
        %v7748 = vpop.f32.mrf.mxu0
        %v7749 = vadd.f32 %v7645, %v7748
        %v7750 = vpop.f32.mrf.mxu0
        %7751 = vmatprep.mubr.bf16.mxu0 0
        %7752 = vmatmul.mubr.bf16.gmra.mxu0 %v7611
        %v7753 = vpop.f32.mrf.mxu0
        %v7754 = vadd.f32 %v7645, %v7753
        %v7755 = vpop.f32.mrf.mxu0
        %v7756 = vpop.f32.mrf.mxu0
        %v7757 = vadd.f32 %v7645, %v7756
        %v7758 = vpop.f32.mrf.mxu0
        %7759 = vmatprep.mubr.bf16.mxu0 0
        %7760 = vmatmul.mubr.bf16.gmra.mxu0 %v7612
        %v7761 = vpop.f32.mrf.mxu0
        %v7762 = vadd.f32 %v7645, %v7761
        %v7763 = vpop.f32.mrf.mxu0
        %v7764 = vpop.f32.mrf.mxu0
        %v7765 = vadd.f32 %v7645, %v7764
        %v7766 = vpop.f32.mrf.mxu0
        %7767 = vmatprep.mubr.bf16.mxu0 0
        %7768 = vmatmul.mubr.bf16.gmra.mxu0 %v7613
        %v7769 = vpop.f32.mrf.mxu0
        %v7770 = vadd.f32 %v7645, %v7769
        %v7771 = vpop.f32.mrf.mxu0
        %v7772 = vpop.f32.mrf.mxu0
        %v7773 = vadd.f32 %v7645, %v7772
        %v7774 = vpop.f32.mrf.mxu0
        %7775 = vmatprep.mubr.bf16.mxu0 0
        %7776 = vmatmul.mubr.bf16.gmra.mxu0 %v7614
        %v7777 = vpop.f32.mrf.mxu0
        %v7778 = vadd.f32 %v7645, %v7777
        %v7779 = vpop.f32.mrf.mxu0
        %v7780 = vpop.f32.mrf.mxu0
        %v7781 = vadd.f32 %v7645, %v7780
        %v7782 = vpop.f32.mrf.mxu0
        %7783 = vmatprep.mubr.bf16.mxu0 0
        %7784 = vmatmul.mubr.bf16.gmra.mxu0 %v7615
        %v7785 = vpop.f32.mrf.mxu0
        %v7786 = vadd.f32 %v7645, %v7785
        %v7787 = vpop.f32.mrf.mxu0
        %v7788 = vpop.f32.mrf.mxu0
        %v7789 = vadd.f32 %v7645, %v7788
        %v7790 = vpop.f32.mrf.mxu0
        %7791 = vmatprep.mubr.bf16.mxu0 0
        %7792 = vmatmul.mubr.bf16.gmra.mxu0 %v7616
        %v7793 = vpop.f32.mrf.mxu0
        %v7794 = vadd.f32 %v7645, %v7793
        %v7795 = vpop.f32.mrf.mxu0
        %v7796 = vpop.f32.mrf.mxu0
        %v7797 = vadd.f32 %v7645, %v7796
        %v7798 = vpop.f32.mrf.mxu0
        %7799 = vmatprep.mubr.bf16.mxu0 0
        %7800 = vmatmul.mubr.bf16.gmra.mxu0 %v7617
        %v7801 = vpop.f32.mrf.mxu0
        %v7802 = vadd.f32 %v7645, %v7801
        %v7803 = vpop.f32.mrf.mxu0
        %v7804 = vpop.f32.mrf.mxu0
        %v7805 = vadd.f32 %v7645, %v7804
        %v7806 = vpop.f32.mrf.mxu0
        %7807 = vmatprep.mubr.bf16.mxu0 0
        %7808 = vmatmul.mubr.bf16.gmra.mxu0 %v7618
        %v7809 = vpop.f32.mrf.mxu0
        %v7810 = vadd.f32 %v7645, %v7809
        %v7811 = vpop.f32.mrf.mxu0
        %v7812 = vpop.f32.mrf.mxu0
        %v7813 = vadd.f32 %v7645, %v7812
        %v7814 = vpop.f32.mrf.mxu0
        %7815 = vmatprep.mubr.bf16.mxu0 0
        %7816 = vmatmul.mubr.bf16.gmra.mxu0 %v7619
        %v7817 = vpop.f32.mrf.mxu0
        %v7818 = vadd.f32 %v7645, %v7817
        %v7819 = vpop.f32.mrf.mxu0
        %v7820 = vpop.f32.mrf.mxu0
        %v7821 = vadd.f32 %v7645, %v7820
        %v7822 = vpop.f32.mrf.mxu0
        %7823 = vmatprep.mubr.bf16.mxu0 0
        %7824 = vmatmul.mubr.bf16.gmra.mxu0 %v7620
        %v7825 = vpop.f32.mrf.mxu0
        %v7826 = vadd.f32 %v7645, %v7825
        %v7827 = vpop.f32.mrf.mxu0
        %v7828 = vpop.f32.mrf.mxu0
        %v7829 = vadd.f32 %v7645, %v7828
        %v7830 = vpop.f32.mrf.mxu0
        %7831 = vmatprep.mubr.bf16.mxu0 0
        %7832 = vmatmul.mubr.bf16.gmra.mxu0 %v7621
        %v7833 = vpop.f32.mrf.mxu0
        %v7834 = vadd.f32 %v7645, %v7833
        %v7835 = vpop.f32.mrf.mxu0
        %v7836 = vpop.f32.mrf.mxu0
        %v7837 = vadd.f32 %v7645, %v7836
        %v7838 = vpop.f32.mrf.mxu0
        %7839 = vmatprep.mubr.bf16.mxu0 0
        %7840 = vmatmul.mubr.bf16.gmra.mxu0 %v7622
        %v7841 = vpop.f32.mrf.mxu0
        %v7842 = vadd.f32 %v7645, %v7841
        %v7843 = vpop.f32.mrf.mxu0
        %v7844 = vpop.f32.mrf.mxu0
        %v7845 = vadd.f32 %v7645, %v7844
        %v7846 = vpop.f32.mrf.mxu0
        %7847 = vmatprep.mubr.bf16.mxu0 0
        %7848 = vmatmul.mubr.bf16.gmra.mxu0 %v7623
        %v7849 = vpop.f32.mrf.mxu0
        %v7850 = vadd.f32 %v7645, %v7849
        %v7851 = vpop.f32.mrf.mxu0
        %v7852 = vpop.f32.mrf.mxu0
        %v7853 = vadd.f32 %v7645, %v7852
        %v7854 = vpop.f32.mrf.mxu0
        %7855 = vdwg.mxu0
        %v7856 = vmax.f32 %v7730, 0.0
        %v7857 = vmax.f32 %v7733, 0.0
        %v7858 = vmax.f32 %v7738, 0.0
        %v7859 = vmax.f32 %v7741, 0.0
        %v7860 = vmax.f32 %v7746, 0.0
        %v7861 = vmax.f32 %v7749, 0.0
        %v7862 = vmax.f32 %v7754, 0.0
        %v7863 = vmax.f32 %v7757, 0.0
        %v7864 = vmax.f32 %v7762, 0.0
        %v7865 = vmax.f32 %v7765, 0.0
        %v7866 = vmax.f32 %v7770, 0.0
        %v7867 = vmax.f32 %v7773, 0.0
        %v7868 = vmax.f32 %v7778, 0.0
        %v7869 = vmax.f32 %v7781, 0.0
        %v7870 = vmax.f32 %v7786, 0.0
        %v7871 = vmax.f32 %v7789, 0.0
        %v7872 = vmax.f32 %v7794, 0.0
        %v7873 = vmax.f32 %v7797, 0.0
        %v7874 = vmax.f32 %v7802, 0.0
        %v7875 = vmax.f32 %v7805, 0.0
        %v7876 = vmax.f32 %v7810, 0.0
        %v7877 = vmax.f32 %v7813, 0.0
        %v7878 = vmax.f32 %v7818, 0.0
        %v7879 = vmax.f32 %v7821, 0.0
        %v7880 = vmax.f32 %v7826, 0.0
        %v7881 = vmax.f32 %v7829, 0.0
        %v7882 = vmax.f32 %v7834, 0.0
        %v7883 = vmax.f32 %v7837, 0.0
        %v7884 = vmax.f32 %v7842, 0.0
        %v7885 = vmax.f32 %v7845, 0.0
        %v7886 = vmax.f32 %v7850, 0.0
        %v7887 = vmax.f32 %v7853, 0.0
        %v7888 = vpack.c.bf16 %v7857, %v7856
        %v7889 = vpack.c.bf16 %v7859, %v7858
        %v7890 = vpack.c.bf16 %v7861, %v7860
        %v7891 = vpack.c.bf16 %v7863, %v7862
        %v7892 = vpack.c.bf16 %v7865, %v7864
        %v7893 = vpack.c.bf16 %v7867, %v7866
        %v7894 = vpack.c.bf16 %v7869, %v7868
        %v7895 = vpack.c.bf16 %v7871, %v7870
        %v7896 = vpack.c.bf16 %v7873, %v7872
        %v7897 = vpack.c.bf16 %v7875, %v7874
        %v7898 = vpack.c.bf16 %v7877, %v7876
        %v7899 = vpack.c.bf16 %v7879, %v7878
        %v7900 = vpack.c.bf16 %v7881, %v7880
        %v7901 = vpack.c.bf16 %v7883, %v7882
        %v7902 = vpack.c.bf16 %v7885, %v7884
        %v7903 = vpack.c.bf16 %v7887, %v7886
        %v7904 = vld [vmem:[%s5] sm:$0xf]
        %v7905 = vld [vmem:[%s5 + $0x4] sm:$0xf]
        %v7906 = vld [vmem:[%s5 + $0x8] sm:$0xf]
        %v7907 = vld [vmem:[%s5 + $0xc] sm:$0xf]
        %v7908 = vld [vmem:[%s5 + $0x10] sm:$0xf]
        %v7909 = vld [vmem:[%s5 + $0x14] sm:$0xf]
        %v7910 = vld [vmem:[%s5 + $0x18] sm:$0xf]
        %v7911 = vld [vmem:[%s5 + $0x1c] sm:$0xf]
        %v7912 = vld [vmem:[%s5 + $0x20] sm:$0xf]
        %v7913 = vld [vmem:[%s5 + $0x24] sm:$0xf]
        %v7914 = vld [vmem:[%s5 + $0x28] sm:$0xf]
        %v7915 = vld [vmem:[%s5 + $0x2c] sm:$0xf]
        %v7916 = vld [vmem:[%s5 + $0x30] sm:$0xf]
        %v7917 = vld [vmem:[%s5 + $0x34] sm:$0xf]
        %v7918 = vld [vmem:[%s5 + $0x38] sm:$0xf]
        %v7919 = vld [vmem:[%s5 + $0x3c] sm:$0xf]
        %v7920 = vld [vmem:[%s6] sm:$0x1]
        %v7922 = vlaneseq
        %v7923 = vshrl.u32 %v7922, 7
        %v7924 = vsub.s32 0, %v7923
        %v7925 = vrot.slane %v7920, %v7924
        %v7943 = vunpack.c.l.b16 %v7904
        %v7944 = vunpack.c.l.b16 %v7905
        %v7945 = vunpack.c.l.b16 %v7906
        %v7946 = vunpack.c.l.b16 %v7907
        %v7947 = vunpack.c.l.b16 %v7908
        %v7948 = vunpack.c.l.b16 %v7909
        %v7949 = vunpack.c.l.b16 %v7910
        %v7950 = vunpack.c.l.b16 %v7911
        %v7951 = vunpack.c.l.b16 %v7912
        %v7952 = vunpack.c.l.b16 %v7913
        %v7953 = vunpack.c.l.b16 %v7914
        %v7954 = vunpack.c.l.b16 %v7915
        %v7955 = vunpack.c.l.b16 %v7916
        %v7956 = vunpack.c.l.b16 %v7917
        %v7957 = vunpack.c.l.b16 %v7918
        %v7958 = vunpack.c.l.b16 %v7919
        %v7959 = vpack.c.b16 %v7944, %v7943
        %v7960 = vpack.c.b16 %v7946, %v7945
        %v7961 = vpack.c.b16 %v7948, %v7947
        %v7962 = vpack.c.b16 %v7950, %v7949
        %v7963 = vpack.c.b16 %v7952, %v7951
        %v7964 = vpack.c.b16 %v7954, %v7953
        %v7965 = vpack.c.b16 %v7956, %v7955
        %v7966 = vpack.c.b16 %v7958, %v7957
        %7975 = vmatprep.subr.bf16.mxu0 0
        %7976 = vmatpush1.bf16.msra.mxu0 %v7966
        %7977 = vmatprep.subr.bf16.mxu0 0
        %7978 = vmatpush1.bf16.msra.mxu0 %v7965
        %7979 = vmatprep.subr.bf16.mxu0 0
        %7980 = vmatpush1.bf16.msra.mxu0 %v7964
        %7981 = vmatprep.subr.bf16.mxu0 0
        %7982 = vmatpush1.bf16.msra.mxu0 %v7963
        %7983 = vmatprep.subr.bf16.mxu0 0
        %7984 = vmatpush1.bf16.msra.mxu0 %v7962
        %7985 = vmatprep.subr.bf16.mxu0 0
        %7986 = vmatpush1.bf16.msra.mxu0 %v7961
        %7987 = vmatprep.subr.bf16.mxu0 0
        %7988 = vmatpush1.bf16.msra.mxu0 %v7960
        %7989 = vmatprep.subr.bf16.mxu0 0
        %7990 = vmatpush1.bf16.msra.mxu0 %v7959
        %7991 = vmatprep.subr.bf16.mxu0 0
        %7992 = vmatpush2.bf16.msra.mxu0 0
        %7993 = vmatprep.subr.bf16.mxu0 0
        %7994 = vmatpush2.bf16.msra.mxu0 0
        %7995 = vmatprep.subr.bf16.mxu0 0
        %7996 = vmatpush2.bf16.msra.mxu0 0
        %7997 = vmatprep.subr.bf16.mxu0 0
        %7998 = vmatpush2.bf16.msra.mxu0 0
        %7999 = vmatprep.subr.bf16.mxu0 0
        %8000 = vmatpush2.bf16.msra.mxu0 0
        %8001 = vmatprep.subr.bf16.mxu0 0
        %8002 = vmatpush2.bf16.msra.mxu0 0
        %8003 = vmatprep.subr.bf16.mxu0 0
        %8004 = vmatpush2.bf16.msra.mxu0 0
        %8005 = vmatprep.subr.bf16.mxu0 0
        %8006 = vmatpush2.bf16.msra.mxu0 0
        %8007 = vmatprep.mubr.bf16.mxu0 0
        %8008 = vmatmul.mubr.bf16.gmra.mxu0 %v7888
        %v8009 = vpop.f32.mrf.mxu0
        %v8010 = vadd.f32 %v7925, %v8009
        %v8011 = vpop.f32.mrf.mxu0
        %v8012 = vpop.f32.mrf.mxu0
        %v8013 = vadd.f32 %v7925, %v8012
        %v8014 = vpop.f32.mrf.mxu0
        %8015 = vmatprep.mubr.bf16.mxu0 0
        %8016 = vmatmul.mubr.bf16.gmra.mxu0 %v7889
        %v8017 = vpop.f32.mrf.mxu0
        %v8018 = vadd.f32 %v7925, %v8017
        %v8019 = vpop.f32.mrf.mxu0
        %v8020 = vpop.f32.mrf.mxu0
        %v8021 = vadd.f32 %v7925, %v8020
        %v8022 = vpop.f32.mrf.mxu0
        %8023 = vmatprep.mubr.bf16.mxu0 0
        %8024 = vmatmul.mubr.bf16.gmra.mxu0 %v7890
        %v8025 = vpop.f32.mrf.mxu0
        %v8026 = vadd.f32 %v7925, %v8025
        %v8027 = vpop.f32.mrf.mxu0
        %v8028 = vpop.f32.mrf.mxu0
        %v8029 = vadd.f32 %v7925, %v8028
        %v8030 = vpop.f32.mrf.mxu0
        %8031 = vmatprep.mubr.bf16.mxu0 0
        %8032 = vmatmul.mubr.bf16.gmra.mxu0 %v7891
        %v8033 = vpop.f32.mrf.mxu0
        %v8034 = vadd.f32 %v7925, %v8033
        %v8035 = vpop.f32.mrf.mxu0
        %v8036 = vpop.f32.mrf.mxu0
        %v8037 = vadd.f32 %v7925, %v8036
        %v8038 = vpop.f32.mrf.mxu0
        %8039 = vmatprep.mubr.bf16.mxu0 0
        %8040 = vmatmul.mubr.bf16.gmra.mxu0 %v7892
        %v8041 = vpop.f32.mrf.mxu0
        %v8042 = vadd.f32 %v7925, %v8041
        %v8043 = vpop.f32.mrf.mxu0
        %v8044 = vpop.f32.mrf.mxu0
        %v8045 = vadd.f32 %v7925, %v8044
        %v8046 = vpop.f32.mrf.mxu0
        %8047 = vmatprep.mubr.bf16.mxu0 0
        %8048 = vmatmul.mubr.bf16.gmra.mxu0 %v7893
        %v8049 = vpop.f32.mrf.mxu0
        %v8050 = vadd.f32 %v7925, %v8049
        %v8051 = vpop.f32.mrf.mxu0
        %v8052 = vpop.f32.mrf.mxu0
        %v8053 = vadd.f32 %v7925, %v8052
        %v8054 = vpop.f32.mrf.mxu0
        %8055 = vmatprep.mubr.bf16.mxu0 0
        %8056 = vmatmul.mubr.bf16.gmra.mxu0 %v7894
        %v8057 = vpop.f32.mrf.mxu0
        %v8058 = vadd.f32 %v7925, %v8057
        %v8059 = vpop.f32.mrf.mxu0
        %v8060 = vpop.f32.mrf.mxu0
        %v8061 = vadd.f32 %v7925, %v8060
        %v8062 = vpop.f32.mrf.mxu0
        %8063 = vmatprep.mubr.bf16.mxu0 0
        %8064 = vmatmul.mubr.bf16.gmra.mxu0 %v7895
        %v8065 = vpop.f32.mrf.mxu0
        %v8066 = vadd.f32 %v7925, %v8065
        %v8067 = vpop.f32.mrf.mxu0
        %v8068 = vpop.f32.mrf.mxu0
        %v8069 = vadd.f32 %v7925, %v8068
        %v8070 = vpop.f32.mrf.mxu0
        %8071 = vmatprep.mubr.bf16.mxu0 0
        %8072 = vmatmul.mubr.bf16.gmra.mxu0 %v7896
        %v8073 = vpop.f32.mrf.mxu0
        %v8074 = vadd.f32 %v7925, %v8073
        %v8075 = vpop.f32.mrf.mxu0
        %v8076 = vpop.f32.mrf.mxu0
        %v8077 = vadd.f32 %v7925, %v8076
        %v8078 = vpop.f32.mrf.mxu0
        %8079 = vmatprep.mubr.bf16.mxu0 0
        %8080 = vmatmul.mubr.bf16.gmra.mxu0 %v7897
        %v8081 = vpop.f32.mrf.mxu0
        %v8082 = vadd.f32 %v7925, %v8081
        %v8083 = vpop.f32.mrf.mxu0
        %v8084 = vpop.f32.mrf.mxu0
        %v8085 = vadd.f32 %v7925, %v8084
        %v8086 = vpop.f32.mrf.mxu0
        %8087 = vmatprep.mubr.bf16.mxu0 0
        %8088 = vmatmul.mubr.bf16.gmra.mxu0 %v7898
        %v8089 = vpop.f32.mrf.mxu0
        %v8090 = vadd.f32 %v7925, %v8089
        %v8091 = vpop.f32.mrf.mxu0
        %v8092 = vpop.f32.mrf.mxu0
        %v8093 = vadd.f32 %v7925, %v8092
        %v8094 = vpop.f32.mrf.mxu0
        %8095 = vmatprep.mubr.bf16.mxu0 0
        %8096 = vmatmul.mubr.bf16.gmra.mxu0 %v7899
        %v8097 = vpop.f32.mrf.mxu0
        %v8098 = vadd.f32 %v7925, %v8097
        %v8099 = vpop.f32.mrf.mxu0
        %v8100 = vpop.f32.mrf.mxu0
        %v8101 = vadd.f32 %v7925, %v8100
        %v8102 = vpop.f32.mrf.mxu0
        %8103 = vmatprep.mubr.bf16.mxu0 0
        %8104 = vmatmul.mubr.bf16.gmra.mxu0 %v7900
        %v8105 = vpop.f32.mrf.mxu0
        %v8106 = vadd.f32 %v7925, %v8105
        %v8107 = vpop.f32.mrf.mxu0
        %v8108 = vpop.f32.mrf.mxu0
        %v8109 = vadd.f32 %v7925, %v8108
        %v8110 = vpop.f32.mrf.mxu0
        %8111 = vmatprep.mubr.bf16.mxu0 0
        %8112 = vmatmul.mubr.bf16.gmra.mxu0 %v7901
        %v8113 = vpop.f32.mrf.mxu0
        %v8114 = vadd.f32 %v7925, %v8113
        %v8115 = vpop.f32.mrf.mxu0
        %v8116 = vpop.f32.mrf.mxu0
        %v8117 = vadd.f32 %v7925, %v8116
        %v8118 = vpop.f32.mrf.mxu0
        %8119 = vmatprep.mubr.bf16.mxu0 0
        %8120 = vmatmul.mubr.bf16.gmra.mxu0 %v7902
        %v8121 = vpop.f32.mrf.mxu0
        %v8122 = vadd.f32 %v7925, %v8121
        %v8123 = vpop.f32.mrf.mxu0
        %v8124 = vpop.f32.mrf.mxu0
        %v8125 = vadd.f32 %v7925, %v8124
        %v8126 = vpop.f32.mrf.mxu0
        %8127 = vmatprep.mubr.bf16.mxu0 0
        %8128 = vmatmul.mubr.bf16.gmra.mxu0 %v7903
        %v8129 = vpop.f32.mrf.mxu0
        %v8130 = vadd.f32 %v7925, %v8129
        %v8131 = vpop.f32.mrf.mxu0
        %v8132 = vpop.f32.mrf.mxu0
        %v8133 = vadd.f32 %v7925, %v8132
        %v8134 = vpop.f32.mrf.mxu0
        %8135 = vdwg.mxu0
        %v8136 = vmax.f32 %v8010, 0.0
        %v8137 = vmax.f32 %v8013, 0.0
        %v8138 = vmax.f32 %v8018, 0.0
        %v8139 = vmax.f32 %v8021, 0.0
        %v8140 = vmax.f32 %v8026, 0.0
        %v8141 = vmax.f32 %v8029, 0.0
        %v8142 = vmax.f32 %v8034, 0.0
        %v8143 = vmax.f32 %v8037, 0.0
        %v8144 = vmax.f32 %v8042, 0.0
        %v8145 = vmax.f32 %v8045, 0.0
        %v8146 = vmax.f32 %v8050, 0.0
        %v8147 = vmax.f32 %v8053, 0.0
        %v8148 = vmax.f32 %v8058, 0.0
        %v8149 = vmax.f32 %v8061, 0.0
        %v8150 = vmax.f32 %v8066, 0.0
        %v8151 = vmax.f32 %v8069, 0.0
        %v8152 = vmax.f32 %v8074, 0.0
        %v8153 = vmax.f32 %v8077, 0.0
        %v8154 = vmax.f32 %v8082, 0.0
        %v8155 = vmax.f32 %v8085, 0.0
        %v8156 = vmax.f32 %v8090, 0.0
        %v8157 = vmax.f32 %v8093, 0.0
        %v8158 = vmax.f32 %v8098, 0.0
        %v8159 = vmax.f32 %v8101, 0.0
        %v8160 = vmax.f32 %v8106, 0.0
        %v8161 = vmax.f32 %v8109, 0.0
        %v8162 = vmax.f32 %v8114, 0.0
        %v8163 = vmax.f32 %v8117, 0.0
        %v8164 = vmax.f32 %v8122, 0.0
        %v8165 = vmax.f32 %v8125, 0.0
        %v8166 = vmax.f32 %v8130, 0.0
        %v8167 = vmax.f32 %v8133, 0.0
        %v8168 = vpack.c.bf16 %v8137, %v8136
        %v8169 = vpack.c.bf16 %v8139, %v8138
        %v8170 = vpack.c.bf16 %v8141, %v8140
        %v8171 = vpack.c.bf16 %v8143, %v8142
        %v8172 = vpack.c.bf16 %v8145, %v8144
        %v8173 = vpack.c.bf16 %v8147, %v8146
        %v8174 = vpack.c.bf16 %v8149, %v8148
        %v8175 = vpack.c.bf16 %v8151, %v8150
        %v8176 = vpack.c.bf16 %v8153, %v8152
        %v8177 = vpack.c.bf16 %v8155, %v8154
        %v8178 = vpack.c.bf16 %v8157, %v8156
        %v8179 = vpack.c.bf16 %v8159, %v8158
        %v8180 = vpack.c.bf16 %v8161, %v8160
        %v8181 = vpack.c.bf16 %v8163, %v8162
        %v8182 = vpack.c.bf16 %v8165, %v8164
        %v8183 = vpack.c.bf16 %v8167, %v8166
        %v8184 = vld [vmem:[%s7] sm:$0xff]
        %v8185 = vld [vmem:[%s7 + $0x8] sm:$0xff]
        %v8186 = vld [vmem:[%s7 + $0x10] sm:$0xff]
        %v8187 = vld [vmem:[%s7 + $0x18] sm:$0xff]
        %v8188 = vld [vmem:[%s7 + $0x20] sm:$0xf]
        %v8189 = vld [vmem:[%s7 + $0x24] sm:$0xff]
        %v8190 = vld [vmem:[%s7 + $0x2c] sm:$0xff]
        %v8191 = vld [vmem:[%s7 + $0x34] sm:$0xff]
        %v8192 = vld [vmem:[%s7 + $0x3c] sm:$0xff]
        %v8193 = vld [vmem:[%s7 + $0x44] sm:$0xf]
        %v8194 = vld [vmem:[%s7 + $0x48] sm:$0xff]
        %v8195 = vld [vmem:[%s7 + $0x50] sm:$0xff]
        %v8196 = vld [vmem:[%s7 + $0x58] sm:$0xff]
        %v8197 = vld [vmem:[%s7 + $0x60] sm:$0xff]
        %v8198 = vld [vmem:[%s7 + $0x68] sm:$0xf]
        %v8199 = vld [vmem:[%s7 + $0x6c] sm:$0xff]
        %v8200 = vld [vmem:[%s7 + $0x74] sm:$0xff]
        %v8201 = vld [vmem:[%s7 + $0x7c] sm:$0xff]
        %v8202 = vld [vmem:[%s7 + $0x84] sm:$0xff]
        %v8203 = vld [vmem:[%s7 + $0x8c] sm:$0xf]
        %v8204 = vld [vmem:[%s7 + $0x90] sm:$0xff]
        %v8205 = vld [vmem:[%s7 + $0x98] sm:$0xff]
        %v8206 = vld [vmem:[%s7 + $0xa0] sm:$0xff]
        %v8207 = vld [vmem:[%s7 + $0xa8] sm:$0xff]
        %v8208 = vld [vmem:[%s7 + $0xb0] sm:$0xf]
        %v8209 = vld [vmem:[%s7 + $0xb4] sm:$0xff]
        %v8210 = vld [vmem:[%s7 + $0xbc] sm:$0xff]
        %v8211 = vld [vmem:[%s7 + $0xc4] sm:$0xff]
        %v8212 = vld [vmem:[%s7 + $0xcc] sm:$0xff]
        %v8213 = vld [vmem:[%s7 + $0xd4] sm:$0xf]
        %v8214 = vld [vmem:[%s7 + $0xd8] sm:$0xff]
        %v8215 = vld [vmem:[%s7 + $0xe0] sm:$0xff]
        %v8216 = vld [vmem:[%s7 + $0xe8] sm:$0xff]
        %v8217 = vld [vmem:[%s7 + $0xf0] sm:$0xff]
        %v8218 = vld [vmem:[%s7 + $0xf8] sm:$0xf]
        %v8219 = vld [vmem:[%s7 + $0xfc] sm:$0xff]
        %v8220 = vld [vmem:[%s7 + $0x104] sm:$0xff]
        %v8221 = vld [vmem:[%s7 + $0x10c] sm:$0xff]
        %v8222 = vld [vmem:[%s7 + $0x114] sm:$0xff]
        %v8223 = vld [vmem:[%s7 + $0x11c] sm:$0xf]
        %v8224 = vld [vmem:[%s7 + $0x120] sm:$0xff]
        %v8225 = vld [vmem:[%s7 + $0x128] sm:$0xff]
        %v8226 = vld [vmem:[%s7 + $0x130] sm:$0xff]
        %v8227 = vld [vmem:[%s7 + $0x138] sm:$0xff]
        %v8228 = vld [vmem:[%s7 + $0x140] sm:$0xf]
        %v8229 = vld [vmem:[%s7 + $0x144] sm:$0xff]
        %v8230 = vld [vmem:[%s7 + $0x14c] sm:$0xff]
        %v8231 = vld [vmem:[%s7 + $0x154] sm:$0xff]
        %v8232 = vld [vmem:[%s7 + $0x15c] sm:$0xff]
        %v8233 = vld [vmem:[%s7 + $0x164] sm:$0xf]
        %v8234 = vld [vmem:[%s7 + $0x168] sm:$0xff]
        %v8235 = vld [vmem:[%s7 + $0x170] sm:$0xff]
        %v8236 = vld [vmem:[%s7 + $0x178] sm:$0xff]
        %v8237 = vld [vmem:[%s7 + $0x180] sm:$0xff]
        %v8238 = vld [vmem:[%s7 + $0x188] sm:$0xf]
        %v8239 = vld [vmem:[%s7 + $0x18c] sm:$0xff]
        %v8240 = vld [vmem:[%s7 + $0x194] sm:$0xff]
        %v8241 = vld [vmem:[%s7 + $0x19c] sm:$0xff]
        %v8242 = vld [vmem:[%s7 + $0x1a4] sm:$0xff]
        %v8243 = vld [vmem:[%s7 + $0x1ac] sm:$0xf]
        %v8244 = vld [vmem:[%s7 + $0x1b0] sm:$0xff]
        %v8245 = vld [vmem:[%s7 + $0x1b8] sm:$0xff]
        %v8246 = vld [vmem:[%s7 + $0x1c0] sm:$0xff]
        %v8247 = vld [vmem:[%s7 + $0x1c8] sm:$0xff]
        %v8248 = vld [vmem:[%s7 + $0x1d0] sm:$0xf]
        %v8249 = vld [vmem:[%s7 + $0x1d4] sm:$0xff]
        %v8250 = vld [vmem:[%s7 + $0x1dc] sm:$0xff]
        %v8251 = vld [vmem:[%s7 + $0x1e4] sm:$0xff]
        %v8252 = vld [vmem:[%s7 + $0x1ec] sm:$0xff]
        %v8253 = vld [vmem:[%s7 + $0x1f4] sm:$0xf]
        %v8254 = vld [vmem:[%s7 + $0x1f8] sm:$0xff]
        %v8255 = vld [vmem:[%s7 + $0x200] sm:$0xff]
        %v8256 = vld [vmem:[%s7 + $0x208] sm:$0xff]
        %v8257 = vld [vmem:[%s7 + $0x210] sm:$0xff]
        %v8258 = vld [vmem:[%s7 + $0x218] sm:$0xf]
        %v8259 = vld [vmem:[%s7 + $0x21c] sm:$0xff]
        %v8260 = vld [vmem:[%s7 + $0x224] sm:$0xff]
        %v8261 = vld [vmem:[%s7 + $0x22c] sm:$0xff]
        %v8262 = vld [vmem:[%s7 + $0x234] sm:$0xff]
        %v8263 = vld [vmem:[%s7 + $0x23c] sm:$0xf]
        %v8264 = vld [vmem:[%s8] sm:$0xff]
        %v8265 = vld [vmem:[%s8 + $0x8] sm:$0x1]
        %v8268 = vlaneseq
        %v8269 = vshrl.u32 %v8268, 7
        %v8270 = vsub.s32 0, %v8269
        %v8271 = vrot.slane %v8264, %v8270
        %v8272 = vlaneseq
        %v8273 = vshrl.u32 %v8272, 7
        %v8274 = vsub.s32 1, %v8273
        %v8275 = vrot.slane %v8264, %v8274
        %v8276 = vlaneseq
        %v8277 = vshrl.u32 %v8276, 7
        %v8278 = vsub.s32 2, %v8277
        %v8279 = vrot.slane %v8264, %v8278
        %v8280 = vlaneseq
        %v8281 = vshrl.u32 %v8280, 7
        %v8282 = vsub.s32 3, %v8281
        %v8283 = vrot.slane %v8264, %v8282
        %v8284 = vlaneseq
        %v8285 = vshrl.u32 %v8284, 7
        %v8286 = vsub.s32 4, %v8285
        %v8287 = vrot.slane %v8264, %v8286
        %v8288 = vlaneseq
        %v8289 = vshrl.u32 %v8288, 7
        %v8290 = vsub.s32 5, %v8289
        %v8291 = vrot.slane %v8264, %v8290
        %v8292 = vlaneseq
        %v8293 = vshrl.u32 %v8292, 7
        %v8294 = vsub.s32 6, %v8293
        %v8295 = vrot.slane %v8264, %v8294
        %v8296 = vlaneseq
        %v8297 = vshrl.u32 %v8296, 7
        %v8298 = vsub.s32 7, %v8297
        %v8299 = vrot.slane %v8264, %v8298
        %v8300 = vlaneseq
        %v8301 = vshrl.u32 %v8300, 7
        %v8302 = vsub.s32 0, %v8301
        %v8303 = vrot.slane %v8265, %v8302
        %v8393 = vunpack.c.l.b16 %v8184
        %v8394 = vunpack.c.h.b16 %v8184
        %v8395 = vunpack.c.l.b16 %v8185
        %v8396 = vunpack.c.h.b16 %v8185
        %v8397 = vunpack.c.l.b16 %v8186
        %v8398 = vunpack.c.h.b16 %v8186
        %v8399 = vunpack.c.l.b16 %v8187
        %v8400 = vunpack.c.h.b16 %v8187
        %v8401 = vunpack.c.l.b16 %v8188
        %v8402 = vunpack.c.l.b16 %v8189
        %v8403 = vunpack.c.h.b16 %v8189
        %v8404 = vunpack.c.l.b16 %v8190
        %v8405 = vunpack.c.h.b16 %v8190
        %v8406 = vunpack.c.l.b16 %v8191
        %v8407 = vunpack.c.h.b16 %v8191
        %v8408 = vunpack.c.l.b16 %v8192
        %v8409 = vunpack.c.h.b16 %v8192
        %v8410 = vunpack.c.l.b16 %v8193
        %v8411 = vunpack.c.l.b16 %v8194
        %v8412 = vunpack.c.h.b16 %v8194
        %v8413 = vunpack.c.l.b16 %v8195
        %v8414 = vunpack.c.h.b16 %v8195
        %v8415 = vunpack.c.l.b16 %v8196
        %v8416 = vunpack.c.h.b16 %v8196
        %v8417 = vunpack.c.l.b16 %v8197
        %v8418 = vunpack.c.h.b16 %v8197
        %v8419 = vunpack.c.l.b16 %v8198
        %v8420 = vunpack.c.l.b16 %v8199
        %v8421 = vunpack.c.h.b16 %v8199
        %v8422 = vunpack.c.l.b16 %v8200
        %v8423 = vunpack.c.h.b16 %v8200
        %v8424 = vunpack.c.l.b16 %v8201
        %v8425 = vunpack.c.h.b16 %v8201
        %v8426 = vunpack.c.l.b16 %v8202
        %v8427 = vunpack.c.h.b16 %v8202
        %v8428 = vunpack.c.l.b16 %v8203
        %v8429 = vunpack.c.l.b16 %v8204
        %v8430 = vunpack.c.h.b16 %v8204
        %v8431 = vunpack.c.l.b16 %v8205
        %v8432 = vunpack.c.h.b16 %v8205
        %v8433 = vunpack.c.l.b16 %v8206
        %v8434 = vunpack.c.h.b16 %v8206
        %v8435 = vunpack.c.l.b16 %v8207
        %v8436 = vunpack.c.h.b16 %v8207
        %v8437 = vunpack.c.l.b16 %v8208
        %v8438 = vunpack.c.l.b16 %v8209
        %v8439 = vunpack.c.h.b16 %v8209
        %v8440 = vunpack.c.l.b16 %v8210
        %v8441 = vunpack.c.h.b16 %v8210
        %v8442 = vunpack.c.l.b16 %v8211
        %v8443 = vunpack.c.h.b16 %v8211
        %v8444 = vunpack.c.l.b16 %v8212
        %v8445 = vunpack.c.h.b16 %v8212
        %v8446 = vunpack.c.l.b16 %v8213
        %v8447 = vunpack.c.l.b16 %v8214
        %v8448 = vunpack.c.h.b16 %v8214
        %v8449 = vunpack.c.l.b16 %v8215
        %v8450 = vunpack.c.h.b16 %v8215
        %v8451 = vunpack.c.l.b16 %v8216
        %v8452 = vunpack.c.h.b16 %v8216
        %v8453 = vunpack.c.l.b16 %v8217
        %v8454 = vunpack.c.h.b16 %v8217
        %v8455 = vunpack.c.l.b16 %v8218
        %v8456 = vunpack.c.l.b16 %v8219
        %v8457 = vunpack.c.h.b16 %v8219
        %v8458 = vunpack.c.l.b16 %v8220
        %v8459 = vunpack.c.h.b16 %v8220
        %v8460 = vunpack.c.l.b16 %v8221
        %v8461 = vunpack.c.h.b16 %v8221
        %v8462 = vunpack.c.l.b16 %v8222
        %v8463 = vunpack.c.h.b16 %v8222
        %v8464 = vunpack.c.l.b16 %v8223
        %v8465 = vunpack.c.l.b16 %v8224
        %v8466 = vunpack.c.h.b16 %v8224
        %v8467 = vunpack.c.l.b16 %v8225
        %v8468 = vunpack.c.h.b16 %v8225
        %v8469 = vunpack.c.l.b16 %v8226
        %v8470 = vunpack.c.h.b16 %v8226
        %v8471 = vunpack.c.l.b16 %v8227
        %v8472 = vunpack.c.h.b16 %v8227
        %v8473 = vunpack.c.l.b16 %v8228
        %v8474 = vunpack.c.l.b16 %v8229
        %v8475 = vunpack.c.h.b16 %v8229
        %v8476 = vunpack.c.l.b16 %v8230
        %v8477 = vunpack.c.h.b16 %v8230
        %v8478 = vunpack.c.l.b16 %v8231
        %v8479 = vunpack.c.h.b16 %v8231
        %v8480 = vunpack.c.l.b16 %v8232
        %v8481 = vunpack.c.h.b16 %v8232
        %v8482 = vunpack.c.l.b16 %v8233
        %v8483 = vunpack.c.l.b16 %v8234
        %v8484 = vunpack.c.h.b16 %v8234
        %v8485 = vunpack.c.l.b16 %v8235
        %v8486 = vunpack.c.h.b16 %v8235
        %v8487 = vunpack.c.l.b16 %v8236
        %v8488 = vunpack.c.h.b16 %v8236
        %v8489 = vunpack.c.l.b16 %v8237
        %v8490 = vunpack.c.h.b16 %v8237
        %v8491 = vunpack.c.l.b16 %v8238
        %v8492 = vunpack.c.l.b16 %v8239
        %v8493 = vunpack.c.h.b16 %v8239
        %v8494 = vunpack.c.l.b16 %v8240
        %v8495 = vunpack.c.h.b16 %v8240
        %v8496 = vunpack.c.l.b16 %v8241
        %v8497 = vunpack.c.h.b16 %v8241
        %v8498 = vunpack.c.l.b16 %v8242
        %v8499 = vunpack.c.h.b16 %v8242
        %v8500 = vunpack.c.l.b16 %v8243
        %v8501 = vunpack.c.l.b16 %v8244
        %v8502 = vunpack.c.h.b16 %v8244
        %v8503 = vunpack.c.l.b16 %v8245
        %v8504 = vunpack.c.h.b16 %v8245
        %v8505 = vunpack.c.l.b16 %v8246
        %v8506 = vunpack.c.h.b16 %v8246
        %v8507 = vunpack.c.l.b16 %v8247
        %v8508 = vunpack.c.h.b16 %v8247
        %v8509 = vunpack.c.l.b16 %v8248
        %v8510 = vunpack.c.l.b16 %v8249
        %v8511 = vunpack.c.h.b16 %v8249
        %v8512 = vunpack.c.l.b16 %v8250
        %v8513 = vunpack.c.h.b16 %v8250
        %v8514 = vunpack.c.l.b16 %v8251
        %v8515 = vunpack.c.h.b16 %v8251
        %v8516 = vunpack.c.l.b16 %v8252
        %v8517 = vunpack.c.h.b16 %v8252
        %v8518 = vunpack.c.l.b16 %v8253
        %v8519 = vunpack.c.l.b16 %v8254
        %v8520 = vunpack.c.h.b16 %v8254
        %v8521 = vunpack.c.l.b16 %v8255
        %v8522 = vunpack.c.h.b16 %v8255
        %v8523 = vunpack.c.l.b16 %v8256
        %v8524 = vunpack.c.h.b16 %v8256
        %v8525 = vunpack.c.l.b16 %v8257
        %v8526 = vunpack.c.h.b16 %v8257
        %v8527 = vunpack.c.l.b16 %v8258
        %v8528 = vunpack.c.l.b16 %v8259
        %v8529 = vunpack.c.h.b16 %v8259
        %v8530 = vunpack.c.l.b16 %v8260
        %v8531 = vunpack.c.h.b16 %v8260
        %v8532 = vunpack.c.l.b16 %v8261
        %v8533 = vunpack.c.h.b16 %v8261
        %v8534 = vunpack.c.l.b16 %v8262
        %v8535 = vunpack.c.h.b16 %v8262
        %v8536 = vunpack.c.l.b16 %v8263
        %v8537 = vpack.c.b16 %v8402, %v8393
        %v8538 = vpack.c.b16 %v8403, %v8394
        %v8539 = vpack.c.b16 %v8404, %v8395
        %v8540 = vpack.c.b16 %v8405, %v8396
        %v8541 = vpack.c.b16 %v8406, %v8397
        %v8542 = vpack.c.b16 %v8407, %v8398
        %v8543 = vpack.c.b16 %v8408, %v8399
        %v8544 = vpack.c.b16 %v8409, %v8400
        %v8545 = vpack.c.b16 %v8410, %v8401
        %v8546 = vpack.c.b16 %v8420, %v8411
        %v8547 = vpack.c.b16 %v8421, %v8412
        %v8548 = vpack.c.b16 %v8422, %v8413
        %v8549 = vpack.c.b16 %v8423, %v8414
        %v8550 = vpack.c.b16 %v8424, %v8415
        %v8551 = vpack.c.b16 %v8425, %v8416
        %v8552 = vpack.c.b16 %v8426, %v8417
        %v8553 = vpack.c.b16 %v8427, %v8418
        %v8554 = vpack.c.b16 %v8428, %v8419
        %v8555 = vpack.c.b16 %v8438, %v8429
        %v8556 = vpack.c.b16 %v8439, %v8430
        %v8557 = vpack.c.b16 %v8440, %v8431
        %v8558 = vpack.c.b16 %v8441, %v8432
        %v8559 = vpack.c.b16 %v8442, %v8433
        %v8560 = vpack.c.b16 %v8443, %v8434
        %v8561 = vpack.c.b16 %v8444, %v8435
        %v8562 = vpack.c.b16 %v8445, %v8436
        %v8563 = vpack.c.b16 %v8446, %v8437
        %v8564 = vpack.c.b16 %v8456, %v8447
        %v8565 = vpack.c.b16 %v8457, %v8448
        %v8566 = vpack.c.b16 %v8458, %v8449
        %v8567 = vpack.c.b16 %v8459, %v8450
        %v8568 = vpack.c.b16 %v8460, %v8451
        %v8569 = vpack.c.b16 %v8461, %v8452
        %v8570 = vpack.c.b16 %v8462, %v8453
        %v8571 = vpack.c.b16 %v8463, %v8454
        %v8572 = vpack.c.b16 %v8464, %v8455
        %v8573 = vpack.c.b16 %v8474, %v8465
        %v8574 = vpack.c.b16 %v8475, %v8466
        %v8575 = vpack.c.b16 %v8476, %v8467
        %v8576 = vpack.c.b16 %v8477, %v8468
        %v8577 = vpack.c.b16 %v8478, %v8469
        %v8578 = vpack.c.b16 %v8479, %v8470
        %v8579 = vpack.c.b16 %v8480, %v8471
        %v8580 = vpack.c.b16 %v8481, %v8472
        %v8581 = vpack.c.b16 %v8482, %v8473
        %v8582 = vpack.c.b16 %v8492, %v8483
        %v8583 = vpack.c.b16 %v8493, %v8484
        %v8584 = vpack.c.b16 %v8494, %v8485
        %v8585 = vpack.c.b16 %v8495, %v8486
        %v8586 = vpack.c.b16 %v8496, %v8487
        %v8587 = vpack.c.b16 %v8497, %v8488
        %v8588 = vpack.c.b16 %v8498, %v8489
        %v8589 = vpack.c.b16 %v8499, %v8490
        %v8590 = vpack.c.b16 %v8500, %v8491
        %v8591 = vpack.c.b16 %v8510, %v8501
        %v8592 = vpack.c.b16 %v8511, %v8502
        %v8593 = vpack.c.b16 %v8512, %v8503
        %v8594 = vpack.c.b16 %v8513, %v8504
        %v8595 = vpack.c.b16 %v8514, %v8505
        %v8596 = vpack.c.b16 %v8515, %v8506
        %v8597 = vpack.c.b16 %v8516, %v8507
        %v8598 = vpack.c.b16 %v8517, %v8508
        %v8599 = vpack.c.b16 %v8518, %v8509
        %v8600 = vpack.c.b16 %v8528, %v8519
        %v8601 = vpack.c.b16 %v8529, %v8520
        %v8602 = vpack.c.b16 %v8530, %v8521
        %v8603 = vpack.c.b16 %v8531, %v8522
        %v8604 = vpack.c.b16 %v8532, %v8523
        %v8605 = vpack.c.b16 %v8533, %v8524
        %v8606 = vpack.c.b16 %v8534, %v8525
        %v8607 = vpack.c.b16 %v8535, %v8526
        %v8608 = vpack.c.b16 %v8536, %v8527
        %8681 = vmatprep.subr.bf16.mxu0 %v8601
        %8682 = vmatpush1.bf16.msra.mxu0 %v8600
        %8683 = vmatprep.subr.bf16.mxu0 %v8592
        %8684 = vmatpush1.bf16.msra.mxu0 %v8591
        %8685 = vmatprep.subr.bf16.mxu0 %v8583
        %8686 = vmatpush1.bf16.msra.mxu0 %v8582
        %8687 = vmatprep.subr.bf16.mxu0 %v8574
        %8688 = vmatpush1.bf16.msra.mxu0 %v8573
        %8689 = vmatprep.subr.bf16.mxu0 %v8565
        %8690 = vmatpush1.bf16.msra.mxu0 %v8564
        %8691 = vmatprep.subr.bf16.mxu0 %v8556
        %8692 = vmatpush1.bf16.msra.mxu0 %v8555
        %8693 = vmatprep.subr.bf16.mxu0 %v8547
        %8694 = vmatpush1.bf16.msra.mxu0 %v8546
        %8695 = vmatprep.subr.bf16.mxu0 %v8538
        %8696 = vmatpush1.bf16.msra.mxu0 %v8537
        %8697 = vmatprep.subr.bf16.mxu0 0
        %8698 = vmatpush2.bf16.msra.mxu0 0
        %8699 = vmatprep.subr.bf16.mxu0 0
        %8700 = vmatpush2.bf16.msra.mxu0 0
        %8701 = vmatprep.subr.bf16.mxu0 0
        %8702 = vmatpush2.bf16.msra.mxu0 0
        %8703 = vmatprep.subr.bf16.mxu0 0
        %8704 = vmatpush2.bf16.msra.mxu0 0
        %8705 = vmatprep.subr.bf16.mxu0 0
        %8706 = vmatpush2.bf16.msra.mxu0 0
        %8707 = vmatprep.subr.bf16.mxu0 0
        %8708 = vmatpush2.bf16.msra.mxu0 0
        %8709 = vmatprep.subr.bf16.mxu0 0
        %8710 = vmatpush2.bf16.msra.mxu0 0
        %8711 = vmatprep.subr.bf16.mxu0 0
        %8712 = vmatpush2.bf16.msra.mxu0 0
        %8713 = vmatprep.mubr.bf16.mxu0 0
        %8714 = vmatmul.mubr.bf16.gmra.mxu0 %v8168
        %v8715 = vpop.f32.mrf.mxu0
        %v8716 = vadd.f32 %v8271, %v8715
        %v8717 = vpop.f32.mrf.mxu0
        %v8718 = vadd.f32 %v8275, %v8717
        %v8719 = vpop.f32.mrf.mxu0
        %v8720 = vadd.f32 %v8271, %v8719
        %v8721 = vpop.f32.mrf.mxu0
        %v8722 = vadd.f32 %v8275, %v8721
        %8723 = vmatprep.mubr.bf16.mxu0 0
        %8724 = vmatmul.mubr.bf16.gmra.mxu0 %v8169
        %v8725 = vpop.f32.mrf.mxu0
        %v8726 = vadd.f32 %v8271, %v8725
        %v8727 = vpop.f32.mrf.mxu0
        %v8728 = vadd.f32 %v8275, %v8727
        %v8729 = vpop.f32.mrf.mxu0
        %v8730 = vadd.f32 %v8271, %v8729
        %v8731 = vpop.f32.mrf.mxu0
        %v8732 = vadd.f32 %v8275, %v8731
        %8733 = vmatprep.mubr.bf16.mxu0 0
        %8734 = vmatmul.mubr.bf16.gmra.mxu0 %v8170
        %v8735 = vpop.f32.mrf.mxu0
        %v8736 = vadd.f32 %v8271, %v8735
        %v8737 = vpop.f32.mrf.mxu0
        %v8738 = vadd.f32 %v8275, %v8737
        %v8739 = vpop.f32.mrf.mxu0
        %v8740 = vadd.f32 %v8271, %v8739
        %v8741 = vpop.f32.mrf.mxu0
        %v8742 = vadd.f32 %v8275, %v8741
        %8743 = vmatprep.mubr.bf16.mxu0 0
        %8744 = vmatmul.mubr.bf16.gmra.mxu0 %v8171
        %v8745 = vpop.f32.mrf.mxu0
        %v8746 = vadd.f32 %v8271, %v8745
        %v8747 = vpop.f32.mrf.mxu0
        %v8748 = vadd.f32 %v8275, %v8747
        %v8749 = vpop.f32.mrf.mxu0
        %v8750 = vadd.f32 %v8271, %v8749
        %v8751 = vpop.f32.mrf.mxu0
        %v8752 = vadd.f32 %v8275, %v8751
        %8753 = vmatprep.mubr.bf16.mxu0 0
        %8754 = vmatmul.mubr.bf16.gmra.mxu0 %v8172
        %v8755 = vpop.f32.mrf.mxu0
        %v8756 = vadd.f32 %v8271, %v8755
        %v8757 = vpop.f32.mrf.mxu0
        %v8758 = vadd.f32 %v8275, %v8757
        %v8759 = vpop.f32.mrf.mxu0
        %v8760 = vadd.f32 %v8271, %v8759
        %v8761 = vpop.f32.mrf.mxu0
        %v8762 = vadd.f32 %v8275, %v8761
        %8763 = vmatprep.mubr.bf16.mxu0 0
        %8764 = vmatmul.mubr.bf16.gmra.mxu0 %v8173
        %v8765 = vpop.f32.mrf.mxu0
        %v8766 = vadd.f32 %v8271, %v8765
        %v8767 = vpop.f32.mrf.mxu0
        %v8768 = vadd.f32 %v8275, %v8767
        %v8769 = vpop.f32.mrf.mxu0
        %v8770 = vadd.f32 %v8271, %v8769
        %v8771 = vpop.f32.mrf.mxu0
        %v8772 = vadd.f32 %v8275, %v8771
        %8773 = vmatprep.mubr.bf16.mxu0 0
        %8774 = vmatmul.mubr.bf16.gmra.mxu0 %v8174
        %v8775 = vpop.f32.mrf.mxu0
        %v8776 = vadd.f32 %v8271, %v8775
        %v8777 = vpop.f32.mrf.mxu0
        %v8778 = vadd.f32 %v8275, %v8777
        %v8779 = vpop.f32.mrf.mxu0
        %v8780 = vadd.f32 %v8271, %v8779
        %v8781 = vpop.f32.mrf.mxu0
        %v8782 = vadd.f32 %v8275, %v8781
        %8783 = vmatprep.mubr.bf16.mxu0 0
        %8784 = vmatmul.mubr.bf16.gmra.mxu0 %v8175
        %v8785 = vpop.f32.mrf.mxu0
        %v8786 = vadd.f32 %v8271, %v8785
        %v8787 = vpop.f32.mrf.mxu0
        %v8788 = vadd.f32 %v8275, %v8787
        %v8789 = vpop.f32.mrf.mxu0
        %v8790 = vadd.f32 %v8271, %v8789
        %v8791 = vpop.f32.mrf.mxu0
        %v8792 = vadd.f32 %v8275, %v8791
        %8793 = vmatprep.mubr.bf16.mxu0 0
        %8794 = vmatmul.mubr.bf16.gmra.mxu0 %v8176
        %v8795 = vpop.f32.mrf.mxu0
        %v8796 = vadd.f32 %v8271, %v8795
        %v8797 = vpop.f32.mrf.mxu0
        %v8798 = vadd.f32 %v8275, %v8797
        %v8799 = vpop.f32.mrf.mxu0
        %v8800 = vadd.f32 %v8271, %v8799
        %v8801 = vpop.f32.mrf.mxu0
        %v8802 = vadd.f32 %v8275, %v8801
        %8803 = vmatprep.mubr.bf16.mxu0 0
        %8804 = vmatmul.mubr.bf16.gmra.mxu0 %v8177
        %v8805 = vpop.f32.mrf.mxu0
        %v8806 = vadd.f32 %v8271, %v8805
        %v8807 = vpop.f32.mrf.mxu0
        %v8808 = vadd.f32 %v8275, %v8807
        %v8809 = vpop.f32.mrf.mxu0
        %v8810 = vadd.f32 %v8271, %v8809
        %v8811 = vpop.f32.mrf.mxu0
        %v8812 = vadd.f32 %v8275, %v8811
        %8813 = vmatprep.mubr.bf16.mxu0 0
        %8814 = vmatmul.mubr.bf16.gmra.mxu0 %v8178
        %v8815 = vpop.f32.mrf.mxu0
        %v8816 = vadd.f32 %v8271, %v8815
        %v8817 = vpop.f32.mrf.mxu0
        %v8818 = vadd.f32 %v8275, %v8817
        %v8819 = vpop.f32.mrf.mxu0
        %v8820 = vadd.f32 %v8271, %v8819
        %v8821 = vpop.f32.mrf.mxu0
        %v8822 = vadd.f32 %v8275, %v8821
        %8823 = vmatprep.mubr.bf16.mxu0 0
        %8824 = vmatmul.mubr.bf16.gmra.mxu0 %v8179
        %v8825 = vpop.f32.mrf.mxu0
        %v8826 = vadd.f32 %v8271, %v8825
        %v8827 = vpop.f32.mrf.mxu0
        %v8828 = vadd.f32 %v8275, %v8827
        %v8829 = vpop.f32.mrf.mxu0
        %v8830 = vadd.f32 %v8271, %v8829
        %v8831 = vpop.f32.mrf.mxu0
        %v8832 = vadd.f32 %v8275, %v8831
        %8833 = vmatprep.mubr.bf16.mxu0 0
        %8834 = vmatmul.mubr.bf16.gmra.mxu0 %v8180
        %v8835 = vpop.f32.mrf.mxu0
        %v8836 = vadd.f32 %v8271, %v8835
        %v8837 = vpop.f32.mrf.mxu0
        %v8838 = vadd.f32 %v8275, %v8837
        %v8839 = vpop.f32.mrf.mxu0
        %v8840 = vadd.f32 %v8271, %v8839
        %v8841 = vpop.f32.mrf.mxu0
        %v8842 = vadd.f32 %v8275, %v8841
        %8843 = vmatprep.mubr.bf16.mxu0 0
        %8844 = vmatmul.mubr.bf16.gmra.mxu0 %v8181
        %v8845 = vpop.f32.mrf.mxu0
        %v8846 = vadd.f32 %v8271, %v8845
        %v8847 = vpop.f32.mrf.mxu0
        %v8848 = vadd.f32 %v8275, %v8847
        %v8849 = vpop.f32.mrf.mxu0
        %v8850 = vadd.f32 %v8271, %v8849
        %v8851 = vpop.f32.mrf.mxu0
        %v8852 = vadd.f32 %v8275, %v8851
        %8853 = vmatprep.mubr.bf16.mxu0 0
        %8854 = vmatmul.mubr.bf16.gmra.mxu0 %v8182
        %v8855 = vpop.f32.mrf.mxu0
        %v8856 = vadd.f32 %v8271, %v8855
        %v8857 = vpop.f32.mrf.mxu0
        %v8858 = vadd.f32 %v8275, %v8857
        %v8859 = vpop.f32.mrf.mxu0
        %v8860 = vadd.f32 %v8271, %v8859
        %v8861 = vpop.f32.mrf.mxu0
        %v8862 = vadd.f32 %v8275, %v8861
        %8863 = vmatprep.mubr.bf16.mxu0 0
        %8864 = vmatmul.mubr.bf16.gmra.mxu0 %v8183
        %v8865 = vpop.f32.mrf.mxu0
        %v8866 = vadd.f32 %v8271, %v8865
        %v8867 = vpop.f32.mrf.mxu0
        %v8868 = vadd.f32 %v8275, %v8867
        %v8869 = vpop.f32.mrf.mxu0
        %v8870 = vadd.f32 %v8271, %v8869
        %v8871 = vpop.f32.mrf.mxu0
        %v8872 = vadd.f32 %v8275, %v8871
        %8873 = vdwg.mxu0
        %8874 = vmatprep.subr.bf16.mxu0 %v8603
        %8875 = vmatpush1.bf16.msra.mxu0 %v8602
        %8876 = vmatprep.subr.bf16.mxu0 %v8594
        %8877 = vmatpush1.bf16.msra.mxu0 %v8593
        %8878 = vmatprep.subr.bf16.mxu0 %v8585
        %8879 = vmatpush1.bf16.msra.mxu0 %v8584
        %8880 = vmatprep.subr.bf16.mxu0 %v8576
        %8881 = vmatpush1.bf16.msra.mxu0 %v8575
        %8882 = vmatprep.subr.bf16.mxu0 %v8567
        %8883 = vmatpush1.bf16.msra.mxu0 %v8566
        %8884 = vmatprep.subr.bf16.mxu0 %v8558
        %8885 = vmatpush1.bf16.msra.mxu0 %v8557
        %8886 = vmatprep.subr.bf16.mxu0 %v8549
        %8887 = vmatpush1.bf16.msra.mxu0 %v8548
        %8888 = vmatprep.subr.bf16.mxu0 %v8540
        %8889 = vmatpush1.bf16.msra.mxu0 %v8539
        %8890 = vmatprep.subr.bf16.mxu0 0
        %8891 = vmatpush2.bf16.msra.mxu0 0
        %8892 = vmatprep.subr.bf16.mxu0 0
        %8893 = vmatpush2.bf16.msra.mxu0 0
        %8894 = vmatprep.subr.bf16.mxu0 0
        %8895 = vmatpush2.bf16.msra.mxu0 0
        %8896 = vmatprep.subr.bf16.mxu0 0
        %8897 = vmatpush2.bf16.msra.mxu0 0
        %8898 = vmatprep.subr.bf16.mxu0 0
        %8899 = vmatpush2.bf16.msra.mxu0 0
        %8900 = vmatprep.subr.bf16.mxu0 0
        %8901 = vmatpush2.bf16.msra.mxu0 0
        %8902 = vmatprep.subr.bf16.mxu0 0
        %8903 = vmatpush2.bf16.msra.mxu0 0
        %8904 = vmatprep.subr.bf16.mxu0 0
        %8905 = vmatpush2.bf16.msra.mxu0 0
        %8906 = vmatprep.mubr.bf16.mxu0 0
        %8907 = vmatmul.mubr.bf16.gmra.mxu0 %v8168
        %v8908 = vpop.f32.mrf.mxu0
        %v8909 = vadd.f32 %v8279, %v8908
        %v8910 = vpop.f32.mrf.mxu0
        %v8911 = vadd.f32 %v8283, %v8910
        %v8912 = vpop.f32.mrf.mxu0
        %v8913 = vadd.f32 %v8279, %v8912
        %v8914 = vpop.f32.mrf.mxu0
        %v8915 = vadd.f32 %v8283, %v8914
        %8916 = vmatprep.mubr.bf16.mxu0 0
        %8917 = vmatmul.mubr.bf16.gmra.mxu0 %v8169
        %v8918 = vpop.f32.mrf.mxu0
        %v8919 = vadd.f32 %v8279, %v8918
        %v8920 = vpop.f32.mrf.mxu0
        %v8921 = vadd.f32 %v8283, %v8920
        %v8922 = vpop.f32.mrf.mxu0
        %v8923 = vadd.f32 %v8279, %v8922
        %v8924 = vpop.f32.mrf.mxu0
        %v8925 = vadd.f32 %v8283, %v8924
        %8926 = vmatprep.mubr.bf16.mxu0 0
        %8927 = vmatmul.mubr.bf16.gmra.mxu0 %v8170
        %v8928 = vpop.f32.mrf.mxu0
        %v8929 = vadd.f32 %v8279, %v8928
        %v8930 = vpop.f32.mrf.mxu0
        %v8931 = vadd.f32 %v8283, %v8930
        %v8932 = vpop.f32.mrf.mxu0
        %v8933 = vadd.f32 %v8279, %v8932
        %v8934 = vpop.f32.mrf.mxu0
        %v8935 = vadd.f32 %v8283, %v8934
        %8936 = vmatprep.mubr.bf16.mxu0 0
        %8937 = vmatmul.mubr.bf16.gmra.mxu0 %v8171
        %v8938 = vpop.f32.mrf.mxu0
        %v8939 = vadd.f32 %v8279, %v8938
        %v8940 = vpop.f32.mrf.mxu0
        %v8941 = vadd.f32 %v8283, %v8940
        %v8942 = vpop.f32.mrf.mxu0
        %v8943 = vadd.f32 %v8279, %v8942
        %v8944 = vpop.f32.mrf.mxu0
        %v8945 = vadd.f32 %v8283, %v8944
        %8946 = vmatprep.mubr.bf16.mxu0 0
        %8947 = vmatmul.mubr.bf16.gmra.mxu0 %v8172
        %v8948 = vpop.f32.mrf.mxu0
        %v8949 = vadd.f32 %v8279, %v8948
        %v8950 = vpop.f32.mrf.mxu0
        %v8951 = vadd.f32 %v8283, %v8950
        %v8952 = vpop.f32.mrf.mxu0
        %v8953 = vadd.f32 %v8279, %v8952
        %v8954 = vpop.f32.mrf.mxu0
        %v8955 = vadd.f32 %v8283, %v8954
        %8956 = vmatprep.mubr.bf16.mxu0 0
        %8957 = vmatmul.mubr.bf16.gmra.mxu0 %v8173
        %v8958 = vpop.f32.mrf.mxu0
        %v8959 = vadd.f32 %v8279, %v8958
        %v8960 = vpop.f32.mrf.mxu0
        %v8961 = vadd.f32 %v8283, %v8960
        %v8962 = vpop.f32.mrf.mxu0
        %v8963 = vadd.f32 %v8279, %v8962
        %v8964 = vpop.f32.mrf.mxu0
        %v8965 = vadd.f32 %v8283, %v8964
        %8966 = vmatprep.mubr.bf16.mxu0 0
        %8967 = vmatmul.mubr.bf16.gmra.mxu0 %v8174
        %v8968 = vpop.f32.mrf.mxu0
        %v8969 = vadd.f32 %v8279, %v8968
        %v8970 = vpop.f32.mrf.mxu0
        %v8971 = vadd.f32 %v8283, %v8970
        %v8972 = vpop.f32.mrf.mxu0
        %v8973 = vadd.f32 %v8279, %v8972
        %v8974 = vpop.f32.mrf.mxu0
        %v8975 = vadd.f32 %v8283, %v8974
        %8976 = vmatprep.mubr.bf16.mxu0 0
        %8977 = vmatmul.mubr.bf16.gmra.mxu0 %v8175
        %v8978 = vpop.f32.mrf.mxu0
        %v8979 = vadd.f32 %v8279, %v8978
        %v8980 = vpop.f32.mrf.mxu0
        %v8981 = vadd.f32 %v8283, %v8980
        %v8982 = vpop.f32.mrf.mxu0
        %v8983 = vadd.f32 %v8279, %v8982
        %v8984 = vpop.f32.mrf.mxu0
        %v8985 = vadd.f32 %v8283, %v8984
        %8986 = vmatprep.mubr.bf16.mxu0 0
        %8987 = vmatmul.mubr.bf16.gmra.mxu0 %v8176
        %v8988 = vpop.f32.mrf.mxu0
        %v8989 = vadd.f32 %v8279, %v8988
        %v8990 = vpop.f32.mrf.mxu0
        %v8991 = vadd.f32 %v8283, %v8990
        %v8992 = vpop.f32.mrf.mxu0
        %v8993 = vadd.f32 %v8279, %v8992
        %v8994 = vpop.f32.mrf.mxu0
        %v8995 = vadd.f32 %v8283, %v8994
        %8996 = vmatprep.mubr.bf16.mxu0 0
        %8997 = vmatmul.mubr.bf16.gmra.mxu0 %v8177
        %v8998 = vpop.f32.mrf.mxu0
        %v8999 = vadd.f32 %v8279, %v8998
        %v9000 = vpop.f32.mrf.mxu0
        %v9001 = vadd.f32 %v8283, %v9000
        %v9002 = vpop.f32.mrf.mxu0
        %v9003 = vadd.f32 %v8279, %v9002
        %v9004 = vpop.f32.mrf.mxu0
        %v9005 = vadd.f32 %v8283, %v9004
        %9006 = vmatprep.mubr.bf16.mxu0 0
        %9007 = vmatmul.mubr.bf16.gmra.mxu0 %v8178
        %v9008 = vpop.f32.mrf.mxu0
        %v9009 = vadd.f32 %v8279, %v9008
        %v9010 = vpop.f32.mrf.mxu0
        %v9011 = vadd.f32 %v8283, %v9010
        %v9012 = vpop.f32.mrf.mxu0
        %v9013 = vadd.f32 %v8279, %v9012
        %v9014 = vpop.f32.mrf.mxu0
        %v9015 = vadd.f32 %v8283, %v9014
        %9016 = vmatprep.mubr.bf16.mxu0 0
        %9017 = vmatmul.mubr.bf16.gmra.mxu0 %v8179
        %v9018 = vpop.f32.mrf.mxu0
        %v9019 = vadd.f32 %v8279, %v9018
        %v9020 = vpop.f32.mrf.mxu0
        %v9021 = vadd.f32 %v8283, %v9020
        %v9022 = vpop.f32.mrf.mxu0
        %v9023 = vadd.f32 %v8279, %v9022
        %v9024 = vpop.f32.mrf.mxu0
        %v9025 = vadd.f32 %v8283, %v9024
        %9026 = vmatprep.mubr.bf16.mxu0 0
        %9027 = vmatmul.mubr.bf16.gmra.mxu0 %v8180
        %v9028 = vpop.f32.mrf.mxu0
        %v9029 = vadd.f32 %v8279, %v9028
        %v9030 = vpop.f32.mrf.mxu0
        %v9031 = vadd.f32 %v8283, %v9030
        %v9032 = vpop.f32.mrf.mxu0
        %v9033 = vadd.f32 %v8279, %v9032
        %v9034 = vpop.f32.mrf.mxu0
        %v9035 = vadd.f32 %v8283, %v9034
        %9036 = vmatprep.mubr.bf16.mxu0 0
        %9037 = vmatmul.mubr.bf16.gmra.mxu0 %v8181
        %v9038 = vpop.f32.mrf.mxu0
        %v9039 = vadd.f32 %v8279, %v9038
        %v9040 = vpop.f32.mrf.mxu0
        %v9041 = vadd.f32 %v8283, %v9040
        %v9042 = vpop.f32.mrf.mxu0
        %v9043 = vadd.f32 %v8279, %v9042
        %v9044 = vpop.f32.mrf.mxu0
        %v9045 = vadd.f32 %v8283, %v9044
        %9046 = vmatprep.mubr.bf16.mxu0 0
        %9047 = vmatmul.mubr.bf16.gmra.mxu0 %v8182
        %v9048 = vpop.f32.mrf.mxu0
        %v9049 = vadd.f32 %v8279, %v9048
        %v9050 = vpop.f32.mrf.mxu0
        %v9051 = vadd.f32 %v8283, %v9050
        %v9052 = vpop.f32.mrf.mxu0
        %v9053 = vadd.f32 %v8279, %v9052
        %v9054 = vpop.f32.mrf.mxu0
        %v9055 = vadd.f32 %v8283, %v9054
        %9056 = vmatprep.mubr.bf16.mxu0 0
        %9057 = vmatmul.mubr.bf16.gmra.mxu0 %v8183
        %v9058 = vpop.f32.mrf.mxu0
        %v9059 = vadd.f32 %v8279, %v9058
        %v9060 = vpop.f32.mrf.mxu0
        %v9061 = vadd.f32 %v8283, %v9060
        %v9062 = vpop.f32.mrf.mxu0
        %v9063 = vadd.f32 %v8279, %v9062
        %v9064 = vpop.f32.mrf.mxu0
        %v9065 = vadd.f32 %v8283, %v9064
        %9066 = vdwg.mxu0
        %9067 = vmatprep.subr.bf16.mxu0 %v8605
        %9068 = vmatpush1.bf16.msra.mxu0 %v8604
        %9069 = vmatprep.subr.bf16.mxu0 %v8596
        %9070 = vmatpush1.bf16.msra.mxu0 %v8595
        %9071 = vmatprep.subr.bf16.mxu0 %v8587
        %9072 = vmatpush1.bf16.msra.mxu0 %v8586
        %9073 = vmatprep.subr.bf16.mxu0 %v8578
        %9074 = vmatpush1.bf16.msra.mxu0 %v8577
        %9075 = vmatprep.subr.bf16.mxu0 %v8569
        %9076 = vmatpush1.bf16.msra.mxu0 %v8568
        %9077 = vmatprep.subr.bf16.mxu0 %v8560
        %9078 = vmatpush1.bf16.msra.mxu0 %v8559
        %9079 = vmatprep.subr.bf16.mxu0 %v8551
        %9080 = vmatpush1.bf16.msra.mxu0 %v8550
        %9081 = vmatprep.subr.bf16.mxu0 %v8542
        %9082 = vmatpush1.bf16.msra.mxu0 %v8541
        %9083 = vmatprep.subr.bf16.mxu0 0
        %9084 = vmatpush2.bf16.msra.mxu0 0
        %9085 = vmatprep.subr.bf16.mxu0 0
        %9086 = vmatpush2.bf16.msra.mxu0 0
        %9087 = vmatprep.subr.bf16.mxu0 0
        %9088 = vmatpush2.bf16.msra.mxu0 0
        %9089 = vmatprep.subr.bf16.mxu0 0
        %9090 = vmatpush2.bf16.msra.mxu0 0
        %9091 = vmatprep.subr.bf16.mxu0 0
        %9092 = vmatpush2.bf16.msra.mxu0 0
        %9093 = vmatprep.subr.bf16.mxu0 0
        %9094 = vmatpush2.bf16.msra.mxu0 0
        %9095 = vmatprep.subr.bf16.mxu0 0
        %9096 = vmatpush2.bf16.msra.mxu0 0
        %9097 = vmatprep.subr.bf16.mxu0 0
        %9098 = vmatpush2.bf16.msra.mxu0 0
        %9099 = vmatprep.mubr.bf16.mxu0 0
        %9100 = vmatmul.mubr.bf16.gmra.mxu0 %v8168
        %v9101 = vpop.f32.mrf.mxu0
        %v9102 = vadd.f32 %v8287, %v9101
        %v9103 = vpop.f32.mrf.mxu0
        %v9104 = vadd.f32 %v8291, %v9103
        %v9105 = vpop.f32.mrf.mxu0
        %v9106 = vadd.f32 %v8287, %v9105
        %v9107 = vpop.f32.mrf.mxu0
        %v9108 = vadd.f32 %v8291, %v9107
        %9109 = vmatprep.mubr.bf16.mxu0 0
        %9110 = vmatmul.mubr.bf16.gmra.mxu0 %v8169
        %v9111 = vpop.f32.mrf.mxu0
        %v9112 = vadd.f32 %v8287, %v9111
        %v9113 = vpop.f32.mrf.mxu0
        %v9114 = vadd.f32 %v8291, %v9113
        %v9115 = vpop.f32.mrf.mxu0
        %v9116 = vadd.f32 %v8287, %v9115
        %v9117 = vpop.f32.mrf.mxu0
        %v9118 = vadd.f32 %v8291, %v9117
        %9119 = vmatprep.mubr.bf16.mxu0 0
        %9120 = vmatmul.mubr.bf16.gmra.mxu0 %v8170
        %v9121 = vpop.f32.mrf.mxu0
        %v9122 = vadd.f32 %v8287, %v9121
        %v9123 = vpop.f32.mrf.mxu0
        %v9124 = vadd.f32 %v8291, %v9123
        %v9125 = vpop.f32.mrf.mxu0
        %v9126 = vadd.f32 %v8287, %v9125
        %v9127 = vpop.f32.mrf.mxu0
        %v9128 = vadd.f32 %v8291, %v9127
        %9129 = vmatprep.mubr.bf16.mxu0 0
        %9130 = vmatmul.mubr.bf16.gmra.mxu0 %v8171
        %v9131 = vpop.f32.mrf.mxu0
        %v9132 = vadd.f32 %v8287, %v9131
        %v9133 = vpop.f32.mrf.mxu0
        %v9134 = vadd.f32 %v8291, %v9133
        %v9135 = vpop.f32.mrf.mxu0
        %v9136 = vadd.f32 %v8287, %v9135
        %v9137 = vpop.f32.mrf.mxu0
        %v9138 = vadd.f32 %v8291, %v9137
        %9139 = vmatprep.mubr.bf16.mxu0 0
        %9140 = vmatmul.mubr.bf16.gmra.mxu0 %v8172
        %v9141 = vpop.f32.mrf.mxu0
        %v9142 = vadd.f32 %v8287, %v9141
        %v9143 = vpop.f32.mrf.mxu0
        %v9144 = vadd.f32 %v8291, %v9143
        %v9145 = vpop.f32.mrf.mxu0
        %v9146 = vadd.f32 %v8287, %v9145
        %v9147 = vpop.f32.mrf.mxu0
        %v9148 = vadd.f32 %v8291, %v9147
        %9149 = vmatprep.mubr.bf16.mxu0 0
        %9150 = vmatmul.mubr.bf16.gmra.mxu0 %v8173
        %v9151 = vpop.f32.mrf.mxu0
        %v9152 = vadd.f32 %v8287, %v9151
        %v9153 = vpop.f32.mrf.mxu0
        %v9154 = vadd.f32 %v8291, %v9153
        %v9155 = vpop.f32.mrf.mxu0
        %v9156 = vadd.f32 %v8287, %v9155
        %v9157 = vpop.f32.mrf.mxu0
        %v9158 = vadd.f32 %v8291, %v9157
        %9159 = vmatprep.mubr.bf16.mxu0 0
        %9160 = vmatmul.mubr.bf16.gmra.mxu0 %v8174
        %v9161 = vpop.f32.mrf.mxu0
        %v9162 = vadd.f32 %v8287, %v9161
        %v9163 = vpop.f32.mrf.mxu0
        %v9164 = vadd.f32 %v8291, %v9163
        %v9165 = vpop.f32.mrf.mxu0
        %v9166 = vadd.f32 %v8287, %v9165
        %v9167 = vpop.f32.mrf.mxu0
        %v9168 = vadd.f32 %v8291, %v9167
        %9169 = vmatprep.mubr.bf16.mxu0 0
        %9170 = vmatmul.mubr.bf16.gmra.mxu0 %v8175
        %v9171 = vpop.f32.mrf.mxu0
        %v9172 = vadd.f32 %v8287, %v9171
        %v9173 = vpop.f32.mrf.mxu0
        %v9174 = vadd.f32 %v8291, %v9173
        %v9175 = vpop.f32.mrf.mxu0
        %v9176 = vadd.f32 %v8287, %v9175
        %v9177 = vpop.f32.mrf.mxu0
        %v9178 = vadd.f32 %v8291, %v9177
        %9179 = vmatprep.mubr.bf16.mxu0 0
        %9180 = vmatmul.mubr.bf16.gmra.mxu0 %v8176
        %v9181 = vpop.f32.mrf.mxu0
        %v9182 = vadd.f32 %v8287, %v9181
        %v9183 = vpop.f32.mrf.mxu0
        %v9184 = vadd.f32 %v8291, %v9183
        %v9185 = vpop.f32.mrf.mxu0
        %v9186 = vadd.f32 %v8287, %v9185
        %v9187 = vpop.f32.mrf.mxu0
        %v9188 = vadd.f32 %v8291, %v9187
        %9189 = vmatprep.mubr.bf16.mxu0 0
        %9190 = vmatmul.mubr.bf16.gmra.mxu0 %v8177
        %v9191 = vpop.f32.mrf.mxu0
        %v9192 = vadd.f32 %v8287, %v9191
        %v9193 = vpop.f32.mrf.mxu0
        %v9194 = vadd.f32 %v8291, %v9193
        %v9195 = vpop.f32.mrf.mxu0
        %v9196 = vadd.f32 %v8287, %v9195
        %v9197 = vpop.f32.mrf.mxu0
        %v9198 = vadd.f32 %v8291, %v9197
        %9199 = vmatprep.mubr.bf16.mxu0 0
        %9200 = vmatmul.mubr.bf16.gmra.mxu0 %v8178
        %v9201 = vpop.f32.mrf.mxu0
        %v9202 = vadd.f32 %v8287, %v9201
        %v9203 = vpop.f32.mrf.mxu0
        %v9204 = vadd.f32 %v8291, %v9203
        %v9205 = vpop.f32.mrf.mxu0
        %v9206 = vadd.f32 %v8287, %v9205
        %v9207 = vpop.f32.mrf.mxu0
        %v9208 = vadd.f32 %v8291, %v9207
        %9209 = vmatprep.mubr.bf16.mxu0 0
        %9210 = vmatmul.mubr.bf16.gmra.mxu0 %v8179
        %v9211 = vpop.f32.mrf.mxu0
        %v9212 = vadd.f32 %v8287, %v9211
        %v9213 = vpop.f32.mrf.mxu0
        %v9214 = vadd.f32 %v8291, %v9213
        %v9215 = vpop.f32.mrf.mxu0
        %v9216 = vadd.f32 %v8287, %v9215
        %v9217 = vpop.f32.mrf.mxu0
        %v9218 = vadd.f32 %v8291, %v9217
        %9219 = vmatprep.mubr.bf16.mxu0 0
        %9220 = vmatmul.mubr.bf16.gmra.mxu0 %v8180
        %v9221 = vpop.f32.mrf.mxu0
        %v9222 = vadd.f32 %v8287, %v9221
        %v9223 = vpop.f32.mrf.mxu0
        %v9224 = vadd.f32 %v8291, %v9223
        %v9225 = vpop.f32.mrf.mxu0
        %v9226 = vadd.f32 %v8287, %v9225
        %v9227 = vpop.f32.mrf.mxu0
        %v9228 = vadd.f32 %v8291, %v9227
        %9229 = vmatprep.mubr.bf16.mxu0 0
        %9230 = vmatmul.mubr.bf16.gmra.mxu0 %v8181
        %v9231 = vpop.f32.mrf.mxu0
        %v9232 = vadd.f32 %v8287, %v9231
        %v9233 = vpop.f32.mrf.mxu0
        %v9234 = vadd.f32 %v8291, %v9233
        %v9235 = vpop.f32.mrf.mxu0
        %v9236 = vadd.f32 %v8287, %v9235
        %v9237 = vpop.f32.mrf.mxu0
        %v9238 = vadd.f32 %v8291, %v9237
        %9239 = vmatprep.mubr.bf16.mxu0 0
        %9240 = vmatmul.mubr.bf16.gmra.mxu0 %v8182
        %v9241 = vpop.f32.mrf.mxu0
        %v9242 = vadd.f32 %v8287, %v9241
        %v9243 = vpop.f32.mrf.mxu0
        %v9244 = vadd.f32 %v8291, %v9243
        %v9245 = vpop.f32.mrf.mxu0
        %v9246 = vadd.f32 %v8287, %v9245
        %v9247 = vpop.f32.mrf.mxu0
        %v9248 = vadd.f32 %v8291, %v9247
        %9249 = vmatprep.mubr.bf16.mxu0 0
        %9250 = vmatmul.mubr.bf16.gmra.mxu0 %v8183
        %v9251 = vpop.f32.mrf.mxu0
        %v9252 = vadd.f32 %v8287, %v9251
        %v9253 = vpop.f32.mrf.mxu0
        %v9254 = vadd.f32 %v8291, %v9253
        %v9255 = vpop.f32.mrf.mxu0
        %v9256 = vadd.f32 %v8287, %v9255
        %v9257 = vpop.f32.mrf.mxu0
        %v9258 = vadd.f32 %v8291, %v9257
        %9259 = vdwg.mxu0
        %9260 = vmatprep.subr.bf16.mxu0 %v8607
        %9261 = vmatpush1.bf16.msra.mxu0 %v8606
        %9262 = vmatprep.subr.bf16.mxu0 %v8598
        %9263 = vmatpush1.bf16.msra.mxu0 %v8597
        %9264 = vmatprep.subr.bf16.mxu0 %v8589
        %9265 = vmatpush1.bf16.msra.mxu0 %v8588
        %9266 = vmatprep.subr.bf16.mxu0 %v8580
        %9267 = vmatpush1.bf16.msra.mxu0 %v8579
        %9268 = vmatprep.subr.bf16.mxu0 %v8571
        %9269 = vmatpush1.bf16.msra.mxu0 %v8570
        %9270 = vmatprep.subr.bf16.mxu0 %v8562
        %9271 = vmatpush1.bf16.msra.mxu0 %v8561
        %9272 = vmatprep.subr.bf16.mxu0 %v8553
        %9273 = vmatpush1.bf16.msra.mxu0 %v8552
        %9274 = vmatprep.subr.bf16.mxu0 %v8544
        %9275 = vmatpush1.bf16.msra.mxu0 %v8543
        %9276 = vmatprep.subr.bf16.mxu0 0
        %9277 = vmatpush2.bf16.msra.mxu0 0
        %9278 = vmatprep.subr.bf16.mxu0 0
        %9279 = vmatpush2.bf16.msra.mxu0 0
        %9280 = vmatprep.subr.bf16.mxu0 0
        %9281 = vmatpush2.bf16.msra.mxu0 0
        %9282 = vmatprep.subr.bf16.mxu0 0
        %9283 = vmatpush2.bf16.msra.mxu0 0
        %9284 = vmatprep.subr.bf16.mxu0 0
        %9285 = vmatpush2.bf16.msra.mxu0 0
        %9286 = vmatprep.subr.bf16.mxu0 0
        %9287 = vmatpush2.bf16.msra.mxu0 0
        %9288 = vmatprep.subr.bf16.mxu0 0
        %9289 = vmatpush2.bf16.msra.mxu0 0
        %9290 = vmatprep.subr.bf16.mxu0 0
        %9291 = vmatpush2.bf16.msra.mxu0 0
        %9292 = vmatprep.mubr.bf16.mxu0 0
        %9293 = vmatmul.mubr.bf16.gmra.mxu0 %v8168
        %v9294 = vpop.f32.mrf.mxu0
        %v9295 = vadd.f32 %v8295, %v9294
        %v9296 = vpop.f32.mrf.mxu0
        %v9297 = vadd.f32 %v8299, %v9296
        %v9298 = vpop.f32.mrf.mxu0
        %v9299 = vadd.f32 %v8295, %v9298
        %v9300 = vpop.f32.mrf.mxu0
        %v9301 = vadd.f32 %v8299, %v9300
        %9302 = vmatprep.mubr.bf16.mxu0 0
        %9303 = vmatmul.mubr.bf16.gmra.mxu0 %v8169
        %v9304 = vpop.f32.mrf.mxu0
        %v9305 = vadd.f32 %v8295, %v9304
        %v9306 = vpop.f32.mrf.mxu0
        %v9307 = vadd.f32 %v8299, %v9306
        %v9308 = vpop.f32.mrf.mxu0
        %v9309 = vadd.f32 %v8295, %v9308
        %v9310 = vpop.f32.mrf.mxu0
        %v9311 = vadd.f32 %v8299, %v9310
        %9312 = vmatprep.mubr.bf16.mxu0 0
        %9313 = vmatmul.mubr.bf16.gmra.mxu0 %v8170
        %v9314 = vpop.f32.mrf.mxu0
        %v9315 = vadd.f32 %v8295, %v9314
        %v9316 = vpop.f32.mrf.mxu0
        %v9317 = vadd.f32 %v8299, %v9316
        %v9318 = vpop.f32.mrf.mxu0
        %v9319 = vadd.f32 %v8295, %v9318
        %v9320 = vpop.f32.mrf.mxu0
        %v9321 = vadd.f32 %v8299, %v9320
        %9322 = vmatprep.mubr.bf16.mxu0 0
        %9323 = vmatmul.mubr.bf16.gmra.mxu0 %v8171
        %v9324 = vpop.f32.mrf.mxu0
        %v9325 = vadd.f32 %v8295, %v9324
        %v9326 = vpop.f32.mrf.mxu0
        %v9327 = vadd.f32 %v8299, %v9326
        %v9328 = vpop.f32.mrf.mxu0
        %v9329 = vadd.f32 %v8295, %v9328
        %v9330 = vpop.f32.mrf.mxu0
        %v9331 = vadd.f32 %v8299, %v9330
        %9332 = vmatprep.mubr.bf16.mxu0 0
        %9333 = vmatmul.mubr.bf16.gmra.mxu0 %v8172
        %v9334 = vpop.f32.mrf.mxu0
        %v9335 = vadd.f32 %v8295, %v9334
        %v9336 = vpop.f32.mrf.mxu0
        %v9337 = vadd.f32 %v8299, %v9336
        %v9338 = vpop.f32.mrf.mxu0
        %v9339 = vadd.f32 %v8295, %v9338
        %v9340 = vpop.f32.mrf.mxu0
        %v9341 = vadd.f32 %v8299, %v9340
        %9342 = vmatprep.mubr.bf16.mxu0 0
        %9343 = vmatmul.mubr.bf16.gmra.mxu0 %v8173
        %v9344 = vpop.f32.mrf.mxu0
        %v9345 = vadd.f32 %v8295, %v9344
        %v9346 = vpop.f32.mrf.mxu0
        %v9347 = vadd.f32 %v8299, %v9346
        %v9348 = vpop.f32.mrf.mxu0
        %v9349 = vadd.f32 %v8295, %v9348
        %v9350 = vpop.f32.mrf.mxu0
        %v9351 = vadd.f32 %v8299, %v9350
        %9352 = vmatprep.mubr.bf16.mxu0 0
        %9353 = vmatmul.mubr.bf16.gmra.mxu0 %v8174
        %v9354 = vpop.f32.mrf.mxu0
        %v9355 = vadd.f32 %v8295, %v9354
        %v9356 = vpop.f32.mrf.mxu0
        %v9357 = vadd.f32 %v8299, %v9356
        %v9358 = vpop.f32.mrf.mxu0
        %v9359 = vadd.f32 %v8295, %v9358
        %v9360 = vpop.f32.mrf.mxu0
        %v9361 = vadd.f32 %v8299, %v9360
        %9362 = vmatprep.mubr.bf16.mxu0 0
        %9363 = vmatmul.mubr.bf16.gmra.mxu0 %v8175
        %v9364 = vpop.f32.mrf.mxu0
        %v9365 = vadd.f32 %v8295, %v9364
        %v9366 = vpop.f32.mrf.mxu0
        %v9367 = vadd.f32 %v8299, %v9366
        %v9368 = vpop.f32.mrf.mxu0
        %v9369 = vadd.f32 %v8295, %v9368
        %v9370 = vpop.f32.mrf.mxu0
        %v9371 = vadd.f32 %v8299, %v9370
        %9372 = vmatprep.mubr.bf16.mxu0 0
        %9373 = vmatmul.mubr.bf16.gmra.mxu0 %v8176
        %v9374 = vpop.f32.mrf.mxu0
        %v9375 = vadd.f32 %v8295, %v9374
        %v9376 = vpop.f32.mrf.mxu0
        %v9377 = vadd.f32 %v8299, %v9376
        %v9378 = vpop.f32.mrf.mxu0
        %v9379 = vadd.f32 %v8295, %v9378
        %v9380 = vpop.f32.mrf.mxu0
        %v9381 = vadd.f32 %v8299, %v9380
        %9382 = vmatprep.mubr.bf16.mxu0 0
        %9383 = vmatmul.mubr.bf16.gmra.mxu0 %v8177
        %v9384 = vpop.f32.mrf.mxu0
        %v9385 = vadd.f32 %v8295, %v9384
        %v9386 = vpop.f32.mrf.mxu0
        %v9387 = vadd.f32 %v8299, %v9386
        %v9388 = vpop.f32.mrf.mxu0
        %v9389 = vadd.f32 %v8295, %v9388
        %v9390 = vpop.f32.mrf.mxu0
        %v9391 = vadd.f32 %v8299, %v9390
        %9392 = vmatprep.mubr.bf16.mxu0 0
        %9393 = vmatmul.mubr.bf16.gmra.mxu0 %v8178
        %v9394 = vpop.f32.mrf.mxu0
        %v9395 = vadd.f32 %v8295, %v9394
        %v9396 = vpop.f32.mrf.mxu0
        %v9397 = vadd.f32 %v8299, %v9396
        %v9398 = vpop.f32.mrf.mxu0
        %v9399 = vadd.f32 %v8295, %v9398
        %v9400 = vpop.f32.mrf.mxu0
        %v9401 = vadd.f32 %v8299, %v9400
        %9402 = vmatprep.mubr.bf16.mxu0 0
        %9403 = vmatmul.mubr.bf16.gmra.mxu0 %v8179
        %v9404 = vpop.f32.mrf.mxu0
        %v9405 = vadd.f32 %v8295, %v9404
        %v9406 = vpop.f32.mrf.mxu0
        %v9407 = vadd.f32 %v8299, %v9406
        %v9408 = vpop.f32.mrf.mxu0
        %v9409 = vadd.f32 %v8295, %v9408
        %v9410 = vpop.f32.mrf.mxu0
        %v9411 = vadd.f32 %v8299, %v9410
        %9412 = vmatprep.mubr.bf16.mxu0 0
        %9413 = vmatmul.mubr.bf16.gmra.mxu0 %v8180
        %v9414 = vpop.f32.mrf.mxu0
        %v9415 = vadd.f32 %v8295, %v9414
        %v9416 = vpop.f32.mrf.mxu0
        %v9417 = vadd.f32 %v8299, %v9416
        %v9418 = vpop.f32.mrf.mxu0
        %v9419 = vadd.f32 %v8295, %v9418
        %v9420 = vpop.f32.mrf.mxu0
        %v9421 = vadd.f32 %v8299, %v9420
        %9422 = vmatprep.mubr.bf16.mxu0 0
        %9423 = vmatmul.mubr.bf16.gmra.mxu0 %v8181
        %v9424 = vpop.f32.mrf.mxu0
        %v9425 = vadd.f32 %v8295, %v9424
        %v9426 = vpop.f32.mrf.mxu0
        %v9427 = vadd.f32 %v8299, %v9426
        %v9428 = vpop.f32.mrf.mxu0
        %v9429 = vadd.f32 %v8295, %v9428
        %v9430 = vpop.f32.mrf.mxu0
        %v9431 = vadd.f32 %v8299, %v9430
        %9432 = vmatprep.mubr.bf16.mxu0 0
        %9433 = vmatmul.mubr.bf16.gmra.mxu0 %v8182
        %v9434 = vpop.f32.mrf.mxu0
        %v9435 = vadd.f32 %v8295, %v9434
        %v9436 = vpop.f32.mrf.mxu0
        %v9437 = vadd.f32 %v8299, %v9436
        %v9438 = vpop.f32.mrf.mxu0
        %v9439 = vadd.f32 %v8295, %v9438
        %v9440 = vpop.f32.mrf.mxu0
        %v9441 = vadd.f32 %v8299, %v9440
        %9442 = vmatprep.mubr.bf16.mxu0 0
        %9443 = vmatmul.mubr.bf16.gmra.mxu0 %v8183
        %v9444 = vpop.f32.mrf.mxu0
        %v9445 = vadd.f32 %v8295, %v9444
        %v9446 = vpop.f32.mrf.mxu0
        %v9447 = vadd.f32 %v8299, %v9446
        %v9448 = vpop.f32.mrf.mxu0
        %v9449 = vadd.f32 %v8295, %v9448
        %v9450 = vpop.f32.mrf.mxu0
        %v9451 = vadd.f32 %v8299, %v9450
        %9452 = vdwg.mxu0
        %9453 = vmatprep.subr.bf16.mxu0 0
        %9454 = vmatpush1.bf16.msra.mxu0 %v8608
        %9455 = vmatprep.subr.bf16.mxu0 0
        %9456 = vmatpush1.bf16.msra.mxu0 %v8599
        %9457 = vmatprep.subr.bf16.mxu0 0
        %9458 = vmatpush1.bf16.msra.mxu0 %v8590
        %9459 = vmatprep.subr.bf16.mxu0 0
        %9460 = vmatpush1.bf16.msra.mxu0 %v8581
        %9461 = vmatprep.subr.bf16.mxu0 0
        %9462 = vmatpush1.bf16.msra.mxu0 %v8572
        %9463 = vmatprep.subr.bf16.mxu0 0
        %9464 = vmatpush1.bf16.msra.mxu0 %v8563
        %9465 = vmatprep.subr.bf16.mxu0 0
        %9466 = vmatpush1.bf16.msra.mxu0 %v8554
        %9467 = vmatprep.subr.bf16.mxu0 0
        %9468 = vmatpush1.bf16.msra.mxu0 %v8545
        %9469 = vmatprep.subr.bf16.mxu0 0
        %9470 = vmatpush2.bf16.msra.mxu0 0
        %9471 = vmatprep.subr.bf16.mxu0 0
        %9472 = vmatpush2.bf16.msra.mxu0 0
        %9473 = vmatprep.subr.bf16.mxu0 0
        %9474 = vmatpush2.bf16.msra.mxu0 0
        %9475 = vmatprep.subr.bf16.mxu0 0
        %9476 = vmatpush2.bf16.msra.mxu0 0
        %9477 = vmatprep.subr.bf16.mxu0 0
        %9478 = vmatpush2.bf16.msra.mxu0 0
        %9479 = vmatprep.subr.bf16.mxu0 0
        %9480 = vmatpush2.bf16.msra.mxu0 0
        %9481 = vmatprep.subr.bf16.mxu0 0
        %9482 = vmatpush2.bf16.msra.mxu0 0
        %9483 = vmatprep.subr.bf16.mxu0 0
        %9484 = vmatpush2.bf16.msra.mxu0 0
        %9485 = vmatprep.mubr.bf16.mxu0 0
        %9486 = vmatmul.mubr.bf16.gmra.mxu0 %v8168
        %v9487 = vpop.f32.mrf.mxu0
        %v9488 = vadd.f32 %v8303, %v9487
        %v9489 = vpop.f32.mrf.mxu0
        %v9490 = vpop.f32.mrf.mxu0
        %v9491 = vadd.f32 %v8303, %v9490
        %v9492 = vpop.f32.mrf.mxu0
        %9493 = vmatprep.mubr.bf16.mxu0 0
        %9494 = vmatmul.mubr.bf16.gmra.mxu0 %v8169
        %v9495 = vpop.f32.mrf.mxu0
        %v9496 = vadd.f32 %v8303, %v9495
        %v9497 = vpop.f32.mrf.mxu0
        %v9498 = vpop.f32.mrf.mxu0
        %v9499 = vadd.f32 %v8303, %v9498
        %v9500 = vpop.f32.mrf.mxu0
        %9501 = vmatprep.mubr.bf16.mxu0 0
        %9502 = vmatmul.mubr.bf16.gmra.mxu0 %v8170
        %v9503 = vpop.f32.mrf.mxu0
        %v9504 = vadd.f32 %v8303, %v9503
        %v9505 = vpop.f32.mrf.mxu0
        %v9506 = vpop.f32.mrf.mxu0
        %v9507 = vadd.f32 %v8303, %v9506
        %v9508 = vpop.f32.mrf.mxu0
        %9509 = vmatprep.mubr.bf16.mxu0 0
        %9510 = vmatmul.mubr.bf16.gmra.mxu0 %v8171
        %v9511 = vpop.f32.mrf.mxu0
        %v9512 = vadd.f32 %v8303, %v9511
        %v9513 = vpop.f32.mrf.mxu0
        %v9514 = vpop.f32.mrf.mxu0
        %v9515 = vadd.f32 %v8303, %v9514
        %v9516 = vpop.f32.mrf.mxu0
        %9517 = vmatprep.mubr.bf16.mxu0 0
        %9518 = vmatmul.mubr.bf16.gmra.mxu0 %v8172
        %v9519 = vpop.f32.mrf.mxu0
        %v9520 = vadd.f32 %v8303, %v9519
        %v9521 = vpop.f32.mrf.mxu0
        %v9522 = vpop.f32.mrf.mxu0
        %v9523 = vadd.f32 %v8303, %v9522
        %v9524 = vpop.f32.mrf.mxu0
        %9525 = vmatprep.mubr.bf16.mxu0 0
        %9526 = vmatmul.mubr.bf16.gmra.mxu0 %v8173
        %v9527 = vpop.f32.mrf.mxu0
        %v9528 = vadd.f32 %v8303, %v9527
        %v9529 = vpop.f32.mrf.mxu0
        %v9530 = vpop.f32.mrf.mxu0
        %v9531 = vadd.f32 %v8303, %v9530
        %v9532 = vpop.f32.mrf.mxu0
        %9533 = vmatprep.mubr.bf16.mxu0 0
        %9534 = vmatmul.mubr.bf16.gmra.mxu0 %v8174
        %v9535 = vpop.f32.mrf.mxu0
        %v9536 = vadd.f32 %v8303, %v9535
        %v9537 = vpop.f32.mrf.mxu0
        %v9538 = vpop.f32.mrf.mxu0
        %v9539 = vadd.f32 %v8303, %v9538
        %v9540 = vpop.f32.mrf.mxu0
        %9541 = vmatprep.mubr.bf16.mxu0 0
        %9542 = vmatmul.mubr.bf16.gmra.mxu0 %v8175
        %v9543 = vpop.f32.mrf.mxu0
        %v9544 = vadd.f32 %v8303, %v9543
        %v9545 = vpop.f32.mrf.mxu0
        %v9546 = vpop.f32.mrf.mxu0
        %v9547 = vadd.f32 %v8303, %v9546
        %v9548 = vpop.f32.mrf.mxu0
        %9549 = vmatprep.mubr.bf16.mxu0 0
        %9550 = vmatmul.mubr.bf16.gmra.mxu0 %v8176
        %v9551 = vpop.f32.mrf.mxu0
        %v9552 = vadd.f32 %v8303, %v9551
        %v9553 = vpop.f32.mrf.mxu0
        %v9554 = vpop.f32.mrf.mxu0
        %v9555 = vadd.f32 %v8303, %v9554
        %v9556 = vpop.f32.mrf.mxu0
        %9557 = vmatprep.mubr.bf16.mxu0 0
        %9558 = vmatmul.mubr.bf16.gmra.mxu0 %v8177
        %v9559 = vpop.f32.mrf.mxu0
        %v9560 = vadd.f32 %v8303, %v9559
        %v9561 = vpop.f32.mrf.mxu0
        %v9562 = vpop.f32.mrf.mxu0
        %v9563 = vadd.f32 %v8303, %v9562
        %v9564 = vpop.f32.mrf.mxu0
        %9565 = vmatprep.mubr.bf16.mxu0 0
        %9566 = vmatmul.mubr.bf16.gmra.mxu0 %v8178
        %v9567 = vpop.f32.mrf.mxu0
        %v9568 = vadd.f32 %v8303, %v9567
        %v9569 = vpop.f32.mrf.mxu0
        %v9570 = vpop.f32.mrf.mxu0
        %v9571 = vadd.f32 %v8303, %v9570
        %v9572 = vpop.f32.mrf.mxu0
        %9573 = vmatprep.mubr.bf16.mxu0 0
        %9574 = vmatmul.mubr.bf16.gmra.mxu0 %v8179
        %v9575 = vpop.f32.mrf.mxu0
        %v9576 = vadd.f32 %v8303, %v9575
        %v9577 = vpop.f32.mrf.mxu0
        %v9578 = vpop.f32.mrf.mxu0
        %v9579 = vadd.f32 %v8303, %v9578
        %v9580 = vpop.f32.mrf.mxu0
        %9581 = vmatprep.mubr.bf16.mxu0 0
        %9582 = vmatmul.mubr.bf16.gmra.mxu0 %v8180
        %v9583 = vpop.f32.mrf.mxu0
        %v9584 = vadd.f32 %v8303, %v9583
        %v9585 = vpop.f32.mrf.mxu0
        %v9586 = vpop.f32.mrf.mxu0
        %v9587 = vadd.f32 %v8303, %v9586
        %v9588 = vpop.f32.mrf.mxu0
        %9589 = vmatprep.mubr.bf16.mxu0 0
        %9590 = vmatmul.mubr.bf16.gmra.mxu0 %v8181
        %v9591 = vpop.f32.mrf.mxu0
        %v9592 = vadd.f32 %v8303, %v9591
        %v9593 = vpop.f32.mrf.mxu0
        %v9594 = vpop.f32.mrf.mxu0
        %v9595 = vadd.f32 %v8303, %v9594
        %v9596 = vpop.f32.mrf.mxu0
        %9597 = vmatprep.mubr.bf16.mxu0 0
        %9598 = vmatmul.mubr.bf16.gmra.mxu0 %v8182
        %v9599 = vpop.f32.mrf.mxu0
        %v9600 = vadd.f32 %v8303, %v9599
        %v9601 = vpop.f32.mrf.mxu0
        %v9602 = vpop.f32.mrf.mxu0
        %v9603 = vadd.f32 %v8303, %v9602
        %v9604 = vpop.f32.mrf.mxu0
        %9605 = vmatprep.mubr.bf16.mxu0 0
        %9606 = vmatmul.mubr.bf16.gmra.mxu0 %v8183
        %v9607 = vpop.f32.mrf.mxu0
        %v9608 = vadd.f32 %v8303, %v9607
        %v9609 = vpop.f32.mrf.mxu0
        %v9610 = vpop.f32.mrf.mxu0
        %v9611 = vadd.f32 %v8303, %v9610
        %v9612 = vpop.f32.mrf.mxu0
        %9613 = vdwg.mxu0
        %v9614 = vxor.u32 %v8716, 2147483648
        %v9615 = vxor.u32 %v8718, 2147483648
        %v9616 = vxor.u32 %v8909, 2147483648
        %v9617 = vxor.u32 %v8720, 2147483648
        %v9618 = vxor.u32 %v8722, 2147483648
        %v9619 = vxor.u32 %v8913, 2147483648
        %v9620 = vxor.u32 %v8726, 2147483648
        %v9621 = vxor.u32 %v8728, 2147483648
        %v9622 = vxor.u32 %v8919, 2147483648
        %v9623 = vxor.u32 %v8730, 2147483648
        %v9624 = vxor.u32 %v8732, 2147483648
        %v9625 = vxor.u32 %v8923, 2147483648
        %v9626 = vxor.u32 %v8736, 2147483648
        %v9627 = vxor.u32 %v8738, 2147483648
        %v9628 = vxor.u32 %v8929, 2147483648
        %v9629 = vxor.u32 %v8740, 2147483648
        %v9630 = vxor.u32 %v8742, 2147483648
        %v9631 = vxor.u32 %v8933, 2147483648
        %v9632 = vxor.u32 %v8746, 2147483648
        %v9633 = vxor.u32 %v8748, 2147483648
        %v9634 = vxor.u32 %v8939, 2147483648
        %v9635 = vxor.u32 %v8750, 2147483648
        %v9636 = vxor.u32 %v8752, 2147483648
        %v9637 = vxor.u32 %v8943, 2147483648
        %v9638 = vxor.u32 %v8756, 2147483648
        %v9639 = vxor.u32 %v8758, 2147483648
        %v9640 = vxor.u32 %v8949, 2147483648
        %v9641 = vxor.u32 %v8760, 2147483648
        %v9642 = vxor.u32 %v8762, 2147483648
        %v9643 = vxor.u32 %v8953, 2147483648
        %v9644 = vxor.u32 %v8766, 2147483648
        %v9645 = vxor.u32 %v8768, 2147483648
        %v9646 = vxor.u32 %v8959, 2147483648
        %v9647 = vxor.u32 %v8770, 2147483648
        %v9648 = vxor.u32 %v8772, 2147483648
        %v9649 = vxor.u32 %v8963, 2147483648
        %v9650 = vxor.u32 %v8776, 2147483648
        %v9651 = vxor.u32 %v8778, 2147483648
        %v9652 = vxor.u32 %v8969, 2147483648
        %v9653 = vxor.u32 %v8780, 2147483648
        %v9654 = vxor.u32 %v8782, 2147483648
        %v9655 = vxor.u32 %v8973, 2147483648
        %v9656 = vxor.u32 %v8786, 2147483648
        %v9657 = vxor.u32 %v8788, 2147483648
        %v9658 = vxor.u32 %v8979, 2147483648
        %v9659 = vxor.u32 %v8790, 2147483648
        %v9660 = vxor.u32 %v8792, 2147483648
        %v9661 = vxor.u32 %v8983, 2147483648
        %v9662 = vxor.u32 %v8796, 2147483648
        %v9663 = vxor.u32 %v8798, 2147483648
        %v9664 = vxor.u32 %v8989, 2147483648
        %v9665 = vxor.u32 %v8800, 2147483648
        %v9666 = vxor.u32 %v8802, 2147483648
        %v9667 = vxor.u32 %v8993, 2147483648
        %v9668 = vxor.u32 %v8806, 2147483648
        %v9669 = vxor.u32 %v8808, 2147483648
        %v9670 = vxor.u32 %v8999, 2147483648
        %v9671 = vxor.u32 %v8810, 2147483648
        %v9672 = vxor.u32 %v8812, 2147483648
        %v9673 = vxor.u32 %v9003, 2147483648
        %v9674 = vxor.u32 %v8816, 2147483648
        %v9675 = vxor.u32 %v8818, 2147483648
        %v9676 = vxor.u32 %v9009, 2147483648
        %v9677 = vxor.u32 %v8820, 2147483648
        %v9678 = vxor.u32 %v8822, 2147483648
        %v9679 = vxor.u32 %v9013, 2147483648
        %v9680 = vxor.u32 %v8826, 2147483648
        %v9681 = vxor.u32 %v8828, 2147483648
        %v9682 = vxor.u32 %v9019, 2147483648
        %v9683 = vxor.u32 %v8830, 2147483648
        %v9684 = vxor.u32 %v8832, 2147483648
        %v9685 = vxor.u32 %v9023, 2147483648
        %v9686 = vxor.u32 %v8836, 2147483648
        %v9687 = vxor.u32 %v8838, 2147483648
        %v9688 = vxor.u32 %v9029, 2147483648
        %v9689 = vxor.u32 %v8840, 2147483648
        %v9690 = vxor.u32 %v8842, 2147483648
        %v9691 = vxor.u32 %v9033, 2147483648
        %v9692 = vxor.u32 %v8846, 2147483648
        %v9693 = vxor.u32 %v8848, 2147483648
        %v9694 = vxor.u32 %v9039, 2147483648
        %v9695 = vxor.u32 %v8850, 2147483648
        %v9696 = vxor.u32 %v8852, 2147483648
        %v9697 = vxor.u32 %v9043, 2147483648
        %v9698 = vxor.u32 %v8856, 2147483648
        %v9699 = vxor.u32 %v8858, 2147483648
        %v9700 = vxor.u32 %v9049, 2147483648
        %v9701 = vxor.u32 %v8860, 2147483648
        %v9702 = vxor.u32 %v8862, 2147483648
        %v9703 = vxor.u32 %v9053, 2147483648
        %v9704 = vxor.u32 %v8866, 2147483648
        %v9705 = vxor.u32 %v8868, 2147483648
        %v9706 = vxor.u32 %v9059, 2147483648
        %v9707 = vxor.u32 %v8870, 2147483648
        %v9708 = vxor.u32 %v8872, 2147483648
        %v9709 = vxor.u32 %v9063, 2147483648
        %v9710 = vmul.f32 %v9614, 1.442695
        %v9711 = vpow.pop %v9710
        %v9712 = vmul.f32 %v9615, 1.442695
        %v9713 = vpow.pop %v9712
        %v9714 = vmul.f32 %v9616, 1.442695
        %v9715 = vpow.pop %v9714
        %v9716 = vmul.f32 %v9617, 1.442695
        %v9717 = vpow.pop %v9716
        %v9718 = vmul.f32 %v9618, 1.442695
        %v9719 = vpow.pop %v9718
        %v9720 = vmul.f32 %v9619, 1.442695
        %v9721 = vpow.pop %v9720
        %v9722 = vmul.f32 %v9620, 1.442695
        %v9723 = vpow.pop %v9722
        %v9724 = vmul.f32 %v9621, 1.442695
        %v9725 = vpow.pop %v9724
        %v9726 = vmul.f32 %v9622, 1.442695
        %v9727 = vpow.pop %v9726
        %v9728 = vmul.f32 %v9623, 1.442695
        %v9729 = vpow.pop %v9728
        %v9730 = vmul.f32 %v9624, 1.442695
        %v9731 = vpow.pop %v9730
        %v9732 = vmul.f32 %v9625, 1.442695
        %v9733 = vpow.pop %v9732
        %v9734 = vmul.f32 %v9626, 1.442695
        %v9735 = vpow.pop %v9734
        %v9736 = vmul.f32 %v9627, 1.442695
        %v9737 = vpow.pop %v9736
        %v9738 = vmul.f32 %v9628, 1.442695
        %v9739 = vpow.pop %v9738
        %v9740 = vmul.f32 %v9629, 1.442695
        %v9741 = vpow.pop %v9740
        %v9742 = vmul.f32 %v9630, 1.442695
        %v9743 = vpow.pop %v9742
        %v9744 = vmul.f32 %v9631, 1.442695
        %v9745 = vpow.pop %v9744
        %v9746 = vmul.f32 %v9632, 1.442695
        %v9747 = vpow.pop %v9746
        %v9748 = vmul.f32 %v9633, 1.442695
        %v9749 = vpow.pop %v9748
        %v9750 = vmul.f32 %v9634, 1.442695
        %v9751 = vpow.pop %v9750
        %v9752 = vmul.f32 %v9635, 1.442695
        %v9753 = vpow.pop %v9752
        %v9754 = vmul.f32 %v9636, 1.442695
        %v9755 = vpow.pop %v9754
        %v9756 = vmul.f32 %v9637, 1.442695
        %v9757 = vpow.pop %v9756
        %v9758 = vmul.f32 %v9638, 1.442695
        %v9759 = vpow.pop %v9758
        %v9760 = vmul.f32 %v9639, 1.442695
        %v9761 = vpow.pop %v9760
        %v9762 = vmul.f32 %v9640, 1.442695
        %v9763 = vpow.pop %v9762
        %v9764 = vmul.f32 %v9641, 1.442695
        %v9765 = vpow.pop %v9764
        %v9766 = vmul.f32 %v9642, 1.442695
        %v9767 = vpow.pop %v9766
        %v9768 = vmul.f32 %v9643, 1.442695
        %v9769 = vpow.pop %v9768
        %v9770 = vmul.f32 %v9644, 1.442695
        %v9771 = vpow.pop %v9770
        %v9772 = vmul.f32 %v9645, 1.442695
        %v9773 = vpow.pop %v9772
        %v9774 = vmul.f32 %v9646, 1.442695
        %v9775 = vpow.pop %v9774
        %v9776 = vmul.f32 %v9647, 1.442695
        %v9777 = vpow.pop %v9776
        %v9778 = vmul.f32 %v9648, 1.442695
        %v9779 = vpow.pop %v9778
        %v9780 = vmul.f32 %v9649, 1.442695
        %v9781 = vpow.pop %v9780
        %v9782 = vmul.f32 %v9650, 1.442695
        %v9783 = vpow.pop %v9782
        %v9784 = vmul.f32 %v9651, 1.442695
        %v9785 = vpow.pop %v9784
        %v9786 = vmul.f32 %v9652, 1.442695
        %v9787 = vpow.pop %v9786
        %v9788 = vmul.f32 %v9653, 1.442695
        %v9789 = vpow.pop %v9788
        %v9790 = vmul.f32 %v9654, 1.442695
        %v9791 = vpow.pop %v9790
        %v9792 = vmul.f32 %v9655, 1.442695
        %v9793 = vpow.pop %v9792
        %v9794 = vmul.f32 %v9656, 1.442695
        %v9795 = vpow.pop %v9794
        %v9796 = vmul.f32 %v9657, 1.442695
        %v9797 = vpow.pop %v9796
        %v9798 = vmul.f32 %v9658, 1.442695
        %v9799 = vpow.pop %v9798
        %v9800 = vmul.f32 %v9659, 1.442695
        %v9801 = vpow.pop %v9800
        %v9802 = vmul.f32 %v9660, 1.442695
        %v9803 = vpow.pop %v9802
        %v9804 = vmul.f32 %v9661, 1.442695
        %v9805 = vpow.pop %v9804
        %v9806 = vmul.f32 %v9662, 1.442695
        %v9807 = vpow.pop %v9806
        %v9808 = vmul.f32 %v9663, 1.442695
        %v9809 = vpow.pop %v9808
        %v9810 = vmul.f32 %v9664, 1.442695
        %v9811 = vpow.pop %v9810
        %v9812 = vmul.f32 %v9665, 1.442695
        %v9813 = vpow.pop %v9812
        %v9814 = vmul.f32 %v9666, 1.442695
        %v9815 = vpow.pop %v9814
        %v9816 = vmul.f32 %v9667, 1.442695
        %v9817 = vpow.pop %v9816
        %v9818 = vmul.f32 %v9668, 1.442695
        %v9819 = vpow.pop %v9818
        %v9820 = vmul.f32 %v9669, 1.442695
        %v9821 = vpow.pop %v9820
        %v9822 = vmul.f32 %v9670, 1.442695
        %v9823 = vpow.pop %v9822
        %v9824 = vmul.f32 %v9671, 1.442695
        %v9825 = vpow.pop %v9824
        %v9826 = vmul.f32 %v9672, 1.442695
        %v9827 = vpow.pop %v9826
        %v9828 = vmul.f32 %v9673, 1.442695
        %v9829 = vpow.pop %v9828
        %v9830 = vmul.f32 %v9674, 1.442695
        %v9831 = vpow.pop %v9830
        %v9832 = vmul.f32 %v9675, 1.442695
        %v9833 = vpow.pop %v9832
        %v9834 = vmul.f32 %v9676, 1.442695
        %v9835 = vpow.pop %v9834
        %v9836 = vmul.f32 %v9677, 1.442695
        %v9837 = vpow.pop %v9836
        %v9838 = vmul.f32 %v9678, 1.442695
        %v9839 = vpow.pop %v9838
        %v9840 = vmul.f32 %v9679, 1.442695
        %v9841 = vpow.pop %v9840
        %v9842 = vmul.f32 %v9680, 1.442695
        %v9843 = vpow.pop %v9842
        %v9844 = vmul.f32 %v9681, 1.442695
        %v9845 = vpow.pop %v9844
        %v9846 = vmul.f32 %v9682, 1.442695
        %v9847 = vpow.pop %v9846
        %v9848 = vmul.f32 %v9683, 1.442695
        %v9849 = vpow.pop %v9848
        %v9850 = vmul.f32 %v9684, 1.442695
        %v9851 = vpow.pop %v9850
        %v9852 = vmul.f32 %v9685, 1.442695
        %v9853 = vpow.pop %v9852
        %v9854 = vmul.f32 %v9686, 1.442695
        %v9855 = vpow.pop %v9854
        %v9856 = vmul.f32 %v9687, 1.442695
        %v9857 = vpow.pop %v9856
        %v9858 = vmul.f32 %v9688, 1.442695
        %v9859 = vpow.pop %v9858
        %v9860 = vmul.f32 %v9689, 1.442695
        %v9861 = vpow.pop %v9860
        %v9862 = vmul.f32 %v9690, 1.442695
        %v9863 = vpow.pop %v9862
        %v9864 = vmul.f32 %v9691, 1.442695
        %v9865 = vpow.pop %v9864
        %v9866 = vmul.f32 %v9692, 1.442695
        %v9867 = vpow.pop %v9866
        %v9868 = vmul.f32 %v9693, 1.442695
        %v9869 = vpow.pop %v9868
        %v9870 = vmul.f32 %v9694, 1.442695
        %v9871 = vpow.pop %v9870
        %v9872 = vmul.f32 %v9695, 1.442695
        %v9873 = vpow.pop %v9872
        %v9874 = vmul.f32 %v9696, 1.442695
        %v9875 = vpow.pop %v9874
        %v9876 = vmul.f32 %v9697, 1.442695
        %v9877 = vpow.pop %v9876
        %v9878 = vmul.f32 %v9698, 1.442695
        %v9879 = vpow.pop %v9878
        %v9880 = vmul.f32 %v9699, 1.442695
        %v9881 = vpow.pop %v9880
        %v9882 = vmul.f32 %v9700, 1.442695
        %v9883 = vpow.pop %v9882
        %v9884 = vmul.f32 %v9701, 1.442695
        %v9885 = vpow.pop %v9884
        %v9886 = vmul.f32 %v9702, 1.442695
        %v9887 = vpow.pop %v9886
        %v9888 = vmul.f32 %v9703, 1.442695
        %v9889 = vpow.pop %v9888
        %v9890 = vmul.f32 %v9704, 1.442695
        %v9891 = vpow.pop %v9890
        %v9892 = vmul.f32 %v9705, 1.442695
        %v9893 = vpow.pop %v9892
        %v9894 = vmul.f32 %v9706, 1.442695
        %v9895 = vpow.pop %v9894
        %v9896 = vmul.f32 %v9707, 1.442695
        %v9897 = vpow.pop %v9896
        %v9898 = vmul.f32 %v9708, 1.442695
        %v9899 = vpow.pop %v9898
        %v9900 = vmul.f32 %v9709, 1.442695
        %v9901 = vpow.pop %v9900
        %v9902 = vadd.f32 %v9711, 1.0
        %v9903 = vadd.f32 %v9713, 1.0
        %v9904 = vadd.f32 %v9715, 1.0
        %v9905 = vadd.f32 %v9717, 1.0
        %v9906 = vadd.f32 %v9719, 1.0
        %v9907 = vadd.f32 %v9721, 1.0
        %v9908 = vadd.f32 %v9723, 1.0
        %v9909 = vadd.f32 %v9725, 1.0
        %v9910 = vadd.f32 %v9727, 1.0
        %v9911 = vadd.f32 %v9729, 1.0
        %v9912 = vadd.f32 %v9731, 1.0
        %v9913 = vadd.f32 %v9733, 1.0
        %v9914 = vadd.f32 %v9735, 1.0
        %v9915 = vadd.f32 %v9737, 1.0
        %v9916 = vadd.f32 %v9739, 1.0
        %v9917 = vadd.f32 %v9741, 1.0
        %v9918 = vadd.f32 %v9743, 1.0
        %v9919 = vadd.f32 %v9745, 1.0
        %v9920 = vadd.f32 %v9747, 1.0
        %v9921 = vadd.f32 %v9749, 1.0
        %v9922 = vadd.f32 %v9751, 1.0
        %v9923 = vadd.f32 %v9753, 1.0
        %v9924 = vadd.f32 %v9755, 1.0
        %v9925 = vadd.f32 %v9757, 1.0
        %v9926 = vadd.f32 %v9759, 1.0
        %v9927 = vadd.f32 %v9761, 1.0
        %v9928 = vadd.f32 %v9763, 1.0
        %v9929 = vadd.f32 %v9765, 1.0
        %v9930 = vadd.f32 %v9767, 1.0
        %v9931 = vadd.f32 %v9769, 1.0
        %v9932 = vadd.f32 %v9771, 1.0
        %v9933 = vadd.f32 %v9773, 1.0
        %v9934 = vadd.f32 %v9775, 1.0
        %v9935 = vadd.f32 %v9777, 1.0
        %v9936 = vadd.f32 %v9779, 1.0
        %v9937 = vadd.f32 %v9781, 1.0
        %v9938 = vadd.f32 %v9783, 1.0
        %v9939 = vadd.f32 %v9785, 1.0
        %v9940 = vadd.f32 %v9787, 1.0
        %v9941 = vadd.f32 %v9789, 1.0
        %v9942 = vadd.f32 %v9791, 1.0
        %v9943 = vadd.f32 %v9793, 1.0
        %v9944 = vadd.f32 %v9795, 1.0
        %v9945 = vadd.f32 %v9797, 1.0
        %v9946 = vadd.f32 %v9799, 1.0
        %v9947 = vadd.f32 %v9801, 1.0
        %v9948 = vadd.f32 %v9803, 1.0
        %v9949 = vadd.f32 %v9805, 1.0
        %v9950 = vadd.f32 %v9807, 1.0
        %v9951 = vadd.f32 %v9809, 1.0
        %v9952 = vadd.f32 %v9811, 1.0
        %v9953 = vadd.f32 %v9813, 1.0
        %v9954 = vadd.f32 %v9815, 1.0
        %v9955 = vadd.f32 %v9817, 1.0
        %v9956 = vadd.f32 %v9819, 1.0
        %v9957 = vadd.f32 %v9821, 1.0
        %v9958 = vadd.f32 %v9823, 1.0
        %v9959 = vadd.f32 %v9825, 1.0
        %v9960 = vadd.f32 %v9827, 1.0
        %v9961 = vadd.f32 %v9829, 1.0
        %v9962 = vadd.f32 %v9831, 1.0
        %v9963 = vadd.f32 %v9833, 1.0
        %v9964 = vadd.f32 %v9835, 1.0
        %v9965 = vadd.f32 %v9837, 1.0
        %v9966 = vadd.f32 %v9839, 1.0
        %v9967 = vadd.f32 %v9841, 1.0
        %v9968 = vadd.f32 %v9843, 1.0
        %v9969 = vadd.f32 %v9845, 1.0
        %v9970 = vadd.f32 %v9847, 1.0
        %v9971 = vadd.f32 %v9849, 1.0
        %v9972 = vadd.f32 %v9851, 1.0
        %v9973 = vadd.f32 %v9853, 1.0
        %v9974 = vadd.f32 %v9855, 1.0
        %v9975 = vadd.f32 %v9857, 1.0
        %v9976 = vadd.f32 %v9859, 1.0
        %v9977 = vadd.f32 %v9861, 1.0
        %v9978 = vadd.f32 %v9863, 1.0
        %v9979 = vadd.f32 %v9865, 1.0
        %v9980 = vadd.f32 %v9867, 1.0
        %v9981 = vadd.f32 %v9869, 1.0
        %v9982 = vadd.f32 %v9871, 1.0
        %v9983 = vadd.f32 %v9873, 1.0
        %v9984 = vadd.f32 %v9875, 1.0
        %v9985 = vadd.f32 %v9877, 1.0
        %v9986 = vadd.f32 %v9879, 1.0
        %v9987 = vadd.f32 %v9881, 1.0
        %v9988 = vadd.f32 %v9883, 1.0
        %v9989 = vadd.f32 %v9885, 1.0
        %v9990 = vadd.f32 %v9887, 1.0
        %v9991 = vadd.f32 %v9889, 1.0
        %v9992 = vadd.f32 %v9891, 1.0
        %v9993 = vadd.f32 %v9893, 1.0
        %v9994 = vadd.f32 %v9895, 1.0
        %v9995 = vadd.f32 %v9897, 1.0
        %v9996 = vadd.f32 %v9899, 1.0
        %v9997 = vadd.f32 %v9901, 1.0
        %v9998 = vrcp.pop %v9902
        %v9999 = vmul.f32 1.0, %v9998
        %v10000 = vrcp.pop %v9903
        %v10001 = vmul.f32 1.0, %v10000
        %v10002 = vrcp.pop %v9904
        %v10003 = vmul.f32 1.0, %v10002
        %v10004 = vrcp.pop %v9905
        %v10005 = vmul.f32 1.0, %v10004
        %v10006 = vrcp.pop %v9906
        %v10007 = vmul.f32 1.0, %v10006
        %v10008 = vrcp.pop %v9907
        %v10009 = vmul.f32 1.0, %v10008
        %v10010 = vrcp.pop %v9908
        %v10011 = vmul.f32 1.0, %v10010
        %v10012 = vrcp.pop %v9909
        %v10013 = vmul.f32 1.0, %v10012
        %v10014 = vrcp.pop %v9910
        %v10015 = vmul.f32 1.0, %v10014
        %v10016 = vrcp.pop %v9911
        %v10017 = vmul.f32 1.0, %v10016
        %v10018 = vrcp.pop %v9912
        %v10019 = vmul.f32 1.0, %v10018
        %v10020 = vrcp.pop %v9913
        %v10021 = vmul.f32 1.0, %v10020
        %v10022 = vrcp.pop %v9914
        %v10023 = vmul.f32 1.0, %v10022
        %v10024 = vrcp.pop %v9915
        %v10025 = vmul.f32 1.0, %v10024
        %v10026 = vrcp.pop %v9916
        %v10027 = vmul.f32 1.0, %v10026
        %v10028 = vrcp.pop %v9917
        %v10029 = vmul.f32 1.0, %v10028
        %v10030 = vrcp.pop %v9918
        %v10031 = vmul.f32 1.0, %v10030
        %v10032 = vrcp.pop %v9919
        %v10033 = vmul.f32 1.0, %v10032
        %v10034 = vrcp.pop %v9920
        %v10035 = vmul.f32 1.0, %v10034
        %v10036 = vrcp.pop %v9921
        %v10037 = vmul.f32 1.0, %v10036
        %v10038 = vrcp.pop %v9922
        %v10039 = vmul.f32 1.0, %v10038
        %v10040 = vrcp.pop %v9923
        %v10041 = vmul.f32 1.0, %v10040
        %v10042 = vrcp.pop %v9924
        %v10043 = vmul.f32 1.0, %v10042
        %v10044 = vrcp.pop %v9925
        %v10045 = vmul.f32 1.0, %v10044
        %v10046 = vrcp.pop %v9926
        %v10047 = vmul.f32 1.0, %v10046
        %v10048 = vrcp.pop %v9927
        %v10049 = vmul.f32 1.0, %v10048
        %v10050 = vrcp.pop %v9928
        %v10051 = vmul.f32 1.0, %v10050
        %v10052 = vrcp.pop %v9929
        %v10053 = vmul.f32 1.0, %v10052
        %v10054 = vrcp.pop %v9930
        %v10055 = vmul.f32 1.0, %v10054
        %v10056 = vrcp.pop %v9931
        %v10057 = vmul.f32 1.0, %v10056
        %v10058 = vrcp.pop %v9932
        %v10059 = vmul.f32 1.0, %v10058
        %v10060 = vrcp.pop %v9933
        %v10061 = vmul.f32 1.0, %v10060
        %v10062 = vrcp.pop %v9934
        %v10063 = vmul.f32 1.0, %v10062
        %v10064 = vrcp.pop %v9935
        %v10065 = vmul.f32 1.0, %v10064
        %v10066 = vrcp.pop %v9936
        %v10067 = vmul.f32 1.0, %v10066
        %v10068 = vrcp.pop %v9937
        %v10069 = vmul.f32 1.0, %v10068
        %v10070 = vrcp.pop %v9938
        %v10071 = vmul.f32 1.0, %v10070
        %v10072 = vrcp.pop %v9939
        %v10073 = vmul.f32 1.0, %v10072
        %v10074 = vrcp.pop %v9940
        %v10075 = vmul.f32 1.0, %v10074
        %v10076 = vrcp.pop %v9941
        %v10077 = vmul.f32 1.0, %v10076
        %v10078 = vrcp.pop %v9942
        %v10079 = vmul.f32 1.0, %v10078
        %v10080 = vrcp.pop %v9943
        %v10081 = vmul.f32 1.0, %v10080
        %v10082 = vrcp.pop %v9944
        %v10083 = vmul.f32 1.0, %v10082
        %v10084 = vrcp.pop %v9945
        %v10085 = vmul.f32 1.0, %v10084
        %v10086 = vrcp.pop %v9946
        %v10087 = vmul.f32 1.0, %v10086
        %v10088 = vrcp.pop %v9947
        %v10089 = vmul.f32 1.0, %v10088
        %v10090 = vrcp.pop %v9948
        %v10091 = vmul.f32 1.0, %v10090
        %v10092 = vrcp.pop %v9949
        %v10093 = vmul.f32 1.0, %v10092
        %v10094 = vrcp.pop %v9950
        %v10095 = vmul.f32 1.0, %v10094
        %v10096 = vrcp.pop %v9951
        %v10097 = vmul.f32 1.0, %v10096
        %v10098 = vrcp.pop %v9952
        %v10099 = vmul.f32 1.0, %v10098
        %v10100 = vrcp.pop %v9953
        %v10101 = vmul.f32 1.0, %v10100
        %v10102 = vrcp.pop %v9954
        %v10103 = vmul.f32 1.0, %v10102
        %v10104 = vrcp.pop %v9955
        %v10105 = vmul.f32 1.0, %v10104
        %v10106 = vrcp.pop %v9956
        %v10107 = vmul.f32 1.0, %v10106
        %v10108 = vrcp.pop %v9957
        %v10109 = vmul.f32 1.0, %v10108
        %v10110 = vrcp.pop %v9958
        %v10111 = vmul.f32 1.0, %v10110
        %v10112 = vrcp.pop %v9959
        %v10113 = vmul.f32 1.0, %v10112
        %v10114 = vrcp.pop %v9960
        %v10115 = vmul.f32 1.0, %v10114
        %v10116 = vrcp.pop %v9961
        %v10117 = vmul.f32 1.0, %v10116
        %v10118 = vrcp.pop %v9962
        %v10119 = vmul.f32 1.0, %v10118
        %v10120 = vrcp.pop %v9963
        %v10121 = vmul.f32 1.0, %v10120
        %v10122 = vrcp.pop %v9964
        %v10123 = vmul.f32 1.0, %v10122
        %v10124 = vrcp.pop %v9965
        %v10125 = vmul.f32 1.0, %v10124
        %v10126 = vrcp.pop %v9966
        %v10127 = vmul.f32 1.0, %v10126
        %v10128 = vrcp.pop %v9967
        %v10129 = vmul.f32 1.0, %v10128
        %v10130 = vrcp.pop %v9968
        %v10131 = vmul.f32 1.0, %v10130
        %v10132 = vrcp.pop %v9969
        %v10133 = vmul.f32 1.0, %v10132
        %v10134 = vrcp.pop %v9970
        %v10135 = vmul.f32 1.0, %v10134
        %v10136 = vrcp.pop %v9971
        %v10137 = vmul.f32 1.0, %v10136
        %v10138 = vrcp.pop %v9972
        %v10139 = vmul.f32 1.0, %v10138
        %v10140 = vrcp.pop %v9973
        %v10141 = vmul.f32 1.0, %v10140
        %v10142 = vrcp.pop %v9974
        %v10143 = vmul.f32 1.0, %v10142
        %v10144 = vrcp.pop %v9975
        %v10145 = vmul.f32 1.0, %v10144
        %v10146 = vrcp.pop %v9976
        %v10147 = vmul.f32 1.0, %v10146
        %v10148 = vrcp.pop %v9977
        %v10149 = vmul.f32 1.0, %v10148
        %v10150 = vrcp.pop %v9978
        %v10151 = vmul.f32 1.0, %v10150
        %v10152 = vrcp.pop %v9979
        %v10153 = vmul.f32 1.0, %v10152
        %v10154 = vrcp.pop %v9980
        %v10155 = vmul.f32 1.0, %v10154
        %v10156 = vrcp.pop %v9981
        %v10157 = vmul.f32 1.0, %v10156
        %v10158 = vrcp.pop %v9982
        %v10159 = vmul.f32 1.0, %v10158
        %v10160 = vrcp.pop %v9983
        %v10161 = vmul.f32 1.0, %v10160
        %v10162 = vrcp.pop %v9984
        %v10163 = vmul.f32 1.0, %v10162
        %v10164 = vrcp.pop %v9985
        %v10165 = vmul.f32 1.0, %v10164
        %v10166 = vrcp.pop %v9986
        %v10167 = vmul.f32 1.0, %v10166
        %v10168 = vrcp.pop %v9987
        %v10169 = vmul.f32 1.0, %v10168
        %v10170 = vrcp.pop %v9988
        %v10171 = vmul.f32 1.0, %v10170
        %v10172 = vrcp.pop %v9989
        %v10173 = vmul.f32 1.0, %v10172
        %v10174 = vrcp.pop %v9990
        %v10175 = vmul.f32 1.0, %v10174
        %v10176 = vrcp.pop %v9991
        %v10177 = vmul.f32 1.0, %v10176
        %v10178 = vrcp.pop %v9992
        %v10179 = vmul.f32 1.0, %v10178
        %v10180 = vrcp.pop %v9993
        %v10181 = vmul.f32 1.0, %v10180
        %v10182 = vrcp.pop %v9994
        %v10183 = vmul.f32 1.0, %v10182
        %v10184 = vrcp.pop %v9995
        %v10185 = vmul.f32 1.0, %v10184
        %v10186 = vrcp.pop %v9996
        %v10187 = vmul.f32 1.0, %v10186
        %v10188 = vrcp.pop %v9997
        %v10189 = vmul.f32 1.0, %v10188
        %v10190 = vtanh.pop %v8911
        %v10191 = vtanh.pop %v9102
        %v10192 = vtanh.pop %v9104
        %v10193 = vtanh.pop %v8915
        %v10194 = vtanh.pop %v9106
        %v10195 = vtanh.pop %v9108
        %v10196 = vtanh.pop %v8921
        %v10197 = vtanh.pop %v9112
        %v10198 = vtanh.pop %v9114
        %v10199 = vtanh.pop %v8925
        %v10200 = vtanh.pop %v9116
        %v10201 = vtanh.pop %v9118
        %v10202 = vtanh.pop %v8931
        %v10203 = vtanh.pop %v9122
        %v10204 = vtanh.pop %v9124
        %v10205 = vtanh.pop %v8935
        %v10206 = vtanh.pop %v9126
        %v10207 = vtanh.pop %v9128
        %v10208 = vtanh.pop %v8941
        %v10209 = vtanh.pop %v9132
        %v10210 = vtanh.pop %v9134
        %v10211 = vtanh.pop %v8945
        %v10212 = vtanh.pop %v9136
        %v10213 = vtanh.pop %v9138
        %v10214 = vtanh.pop %v8951
        %v10215 = vtanh.pop %v9142
        %v10216 = vtanh.pop %v9144
        %v10217 = vtanh.pop %v8955
        %v10218 = vtanh.pop %v9146
        %v10219 = vtanh.pop %v9148
        %v10220 = vtanh.pop %v8961
        %v10221 = vtanh.pop %v9152
        %v10222 = vtanh.pop %v9154
        %v10223 = vtanh.pop %v8965
        %v10224 = vtanh.pop %v9156
        %v10225 = vtanh.pop %v9158
        %v10226 = vtanh.pop %v8971
        %v10227 = vtanh.pop %v9162
        %v10228 = vtanh.pop %v9164
        %v10229 = vtanh.pop %v8975
        %v10230 = vtanh.pop %v9166
        %v10231 = vtanh.pop %v9168
        %v10232 = vtanh.pop %v8981
        %v10233 = vtanh.pop %v9172
        %v10234 = vtanh.pop %v9174
        %v10235 = vtanh.pop %v8985
        %v10236 = vtanh.pop %v9176
        %v10237 = vtanh.pop %v9178
        %v10238 = vtanh.pop %v8991
        %v10239 = vtanh.pop %v9182
        %v10240 = vtanh.pop %v9184
        %v10241 = vtanh.pop %v8995
        %v10242 = vtanh.pop %v9186
        %v10243 = vtanh.pop %v9188
        %v10244 = vtanh.pop %v9001
        %v10245 = vtanh.pop %v9192
        %v10246 = vtanh.pop %v9194
        %v10247 = vtanh.pop %v9005
        %v10248 = vtanh.pop %v9196
        %v10249 = vtanh.pop %v9198
        %v10250 = vtanh.pop %v9011
        %v10251 = vtanh.pop %v9202
        %v10252 = vtanh.pop %v9204
        %v10253 = vtanh.pop %v9015
        %v10254 = vtanh.pop %v9206
        %v10255 = vtanh.pop %v9208
        %v10256 = vtanh.pop %v9021
        %v10257 = vtanh.pop %v9212
        %v10258 = vtanh.pop %v9214
        %v10259 = vtanh.pop %v9025
        %v10260 = vtanh.pop %v9216
        %v10261 = vtanh.pop %v9218
        %v10262 = vtanh.pop %v9031
        %v10263 = vtanh.pop %v9222
        %v10264 = vtanh.pop %v9224
        %v10265 = vtanh.pop %v9035
        %v10266 = vtanh.pop %v9226
        %v10267 = vtanh.pop %v9228
        %v10268 = vtanh.pop %v9041
        %v10269 = vtanh.pop %v9232
        %v10270 = vtanh.pop %v9234
        %v10271 = vtanh.pop %v9045
        %v10272 = vtanh.pop %v9236
        %v10273 = vtanh.pop %v9238
        %v10274 = vtanh.pop %v9051
        %v10275 = vtanh.pop %v9242
        %v10276 = vtanh.pop %v9244
        %v10277 = vtanh.pop %v9055
        %v10278 = vtanh.pop %v9246
        %v10279 = vtanh.pop %v9248
        %v10280 = vtanh.pop %v9061
        %v10281 = vtanh.pop %v9252
        %v10282 = vtanh.pop %v9254
        %v10283 = vtanh.pop %v9065
        %v10284 = vtanh.pop %v9256
        %v10285 = vtanh.pop %v9258
        %v10286 = vxor.u32 %v9295, 2147483648
        %v10287 = vxor.u32 %v9297, 2147483648
        %v10288 = vxor.u32 %v9488, 2147483648
        %v10289 = vxor.u32 %v9299, 2147483648
        %v10290 = vxor.u32 %v9301, 2147483648
        %v10291 = vxor.u32 %v9491, 2147483648
        %v10292 = vxor.u32 %v9305, 2147483648
        %v10293 = vxor.u32 %v9307, 2147483648
        %v10294 = vxor.u32 %v9496, 2147483648
        %v10295 = vxor.u32 %v9309, 2147483648
        %v10296 = vxor.u32 %v9311, 2147483648
        %v10297 = vxor.u32 %v9499, 2147483648
        %v10298 = vxor.u32 %v9315, 2147483648
        %v10299 = vxor.u32 %v9317, 2147483648
        %v10300 = vxor.u32 %v9504, 2147483648
        %v10301 = vxor.u32 %v9319, 2147483648
        %v10302 = vxor.u32 %v9321, 2147483648
        %v10303 = vxor.u32 %v9507, 2147483648
        %v10304 = vxor.u32 %v9325, 2147483648
        %v10305 = vxor.u32 %v9327, 2147483648
        %v10306 = vxor.u32 %v9512, 2147483648
        %v10307 = vxor.u32 %v9329, 2147483648
        %v10308 = vxor.u32 %v9331, 2147483648
        %v10309 = vxor.u32 %v9515, 2147483648
        %v10310 = vxor.u32 %v9335, 2147483648
        %v10311 = vxor.u32 %v9337, 2147483648
        %v10312 = vxor.u32 %v9520, 2147483648
        %v10313 = vxor.u32 %v9339, 2147483648
        %v10314 = vxor.u32 %v9341, 2147483648
        %v10315 = vxor.u32 %v9523, 2147483648
        %v10316 = vxor.u32 %v9345, 2147483648
        %v10317 = vxor.u32 %v9347, 2147483648
        %v10318 = vxor.u32 %v9528, 2147483648
        %v10319 = vxor.u32 %v9349, 2147483648
        %v10320 = vxor.u32 %v9351, 2147483648
        %v10321 = vxor.u32 %v9531, 2147483648
        %v10322 = vxor.u32 %v9355, 2147483648
        %v10323 = vxor.u32 %v9357, 2147483648
        %v10324 = vxor.u32 %v9536, 2147483648
        %v10325 = vxor.u32 %v9359, 2147483648
        %v10326 = vxor.u32 %v9361, 2147483648
        %v10327 = vxor.u32 %v9539, 2147483648
        %v10328 = vxor.u32 %v9365, 2147483648
        %v10329 = vxor.u32 %v9367, 2147483648
        %v10330 = vxor.u32 %v9544, 2147483648
        %v10331 = vxor.u32 %v9369, 2147483648
        %v10332 = vxor.u32 %v9371, 2147483648
        %v10333 = vxor.u32 %v9547, 2147483648
        %v10334 = vxor.u32 %v9375, 2147483648
        %v10335 = vxor.u32 %v9377, 2147483648
        %v10336 = vxor.u32 %v9552, 2147483648
        %v10337 = vxor.u32 %v9379, 2147483648
        %v10338 = vxor.u32 %v9381, 2147483648
        %v10339 = vxor.u32 %v9555, 2147483648
        %v10340 = vxor.u32 %v9385, 2147483648
        %v10341 = vxor.u32 %v9387, 2147483648
        %v10342 = vxor.u32 %v9560, 2147483648
        %v10343 = vxor.u32 %v9389, 2147483648
        %v10344 = vxor.u32 %v9391, 2147483648
        %v10345 = vxor.u32 %v9563, 2147483648
        %v10346 = vxor.u32 %v9395, 2147483648
        %v10347 = vxor.u32 %v9397, 2147483648
        %v10348 = vxor.u32 %v9568, 2147483648
        %v10349 = vxor.u32 %v9399, 2147483648
        %v10350 = vxor.u32 %v9401, 2147483648
        %v10351 = vxor.u32 %v9571, 2147483648
        %v10352 = vxor.u32 %v9405, 2147483648
        %v10353 = vxor.u32 %v9407, 2147483648
        %v10354 = vxor.u32 %v9576, 2147483648
        %v10355 = vxor.u32 %v9409, 2147483648
        %v10356 = vxor.u32 %v9411, 2147483648
        %v10357 = vxor.u32 %v9579, 2147483648
        %v10358 = vxor.u32 %v9415, 2147483648
        %v10359 = vxor.u32 %v9417, 2147483648
        %v10360 = vxor.u32 %v9584, 2147483648
        %v10361 = vxor.u32 %v9419, 2147483648
        %v10362 = vxor.u32 %v9421, 2147483648
        %v10363 = vxor.u32 %v9587, 2147483648
        %v10364 = vxor.u32 %v9425, 2147483648
        %v10365 = vxor.u32 %v9427, 2147483648
        %v10366 = vxor.u32 %v9592, 2147483648
        %v10367 = vxor.u32 %v9429, 2147483648
        %v10368 = vxor.u32 %v9431, 2147483648
        %v10369 = vxor.u32 %v9595, 2147483648
        %v10370 = vxor.u32 %v9435, 2147483648
        %v10371 = vxor.u32 %v9437, 2147483648
        %v10372 = vxor.u32 %v9600, 2147483648
        %v10373 = vxor.u32 %v9439, 2147483648
        %v10374 = vxor.u32 %v9441, 2147483648
        %v10375 = vxor.u32 %v9603, 2147483648
        %v10376 = vxor.u32 %v9445, 2147483648
        %v10377 = vxor.u32 %v9447, 2147483648
        %v10378 = vxor.u32 %v9608, 2147483648
        %v10379 = vxor.u32 %v9449, 2147483648
        %v10380 = vxor.u32 %v9451, 2147483648
        %v10381 = vxor.u32 %v9611, 2147483648
        %v10382 = vmul.f32 %v10286, 1.442695
        %v10383 = vpow.pop %v10382
        %v10384 = vmul.f32 %v10287, 1.442695
        %v10385 = vpow.pop %v10384
        %v10386 = vmul.f32 %v10288, 1.442695
        %v10387 = vpow.pop %v10386
        %v10388 = vmul.f32 %v10289, 1.442695
        %v10389 = vpow.pop %v10388
        %v10390 = vmul.f32 %v10290, 1.442695
        %v10391 = vpow.pop %v10390
        %v10392 = vmul.f32 %v10291, 1.442695
        %v10393 = vpow.pop %v10392
        %v10394 = vmul.f32 %v10292, 1.442695
        %v10395 = vpow.pop %v10394
        %v10396 = vmul.f32 %v10293, 1.442695
        %v10397 = vpow.pop %v10396
        %v10398 = vmul.f32 %v10294, 1.442695
        %v10399 = vpow.pop %v10398
        %v10400 = vmul.f32 %v10295, 1.442695
        %v10401 = vpow.pop %v10400
        %v10402 = vmul.f32 %v10296, 1.442695
        %v10403 = vpow.pop %v10402
        %v10404 = vmul.f32 %v10297, 1.442695
        %v10405 = vpow.pop %v10404
        %v10406 = vmul.f32 %v10298, 1.442695
        %v10407 = vpow.pop %v10406
        %v10408 = vmul.f32 %v10299, 1.442695
        %v10409 = vpow.pop %v10408
        %v10410 = vmul.f32 %v10300, 1.442695
        %v10411 = vpow.pop %v10410
        %v10412 = vmul.f32 %v10301, 1.442695
        %v10413 = vpow.pop %v10412
        %v10414 = vmul.f32 %v10302, 1.442695
        %v10415 = vpow.pop %v10414
        %v10416 = vmul.f32 %v10303, 1.442695
        %v10417 = vpow.pop %v10416
        %v10418 = vmul.f32 %v10304, 1.442695
        %v10419 = vpow.pop %v10418
        %v10420 = vmul.f32 %v10305, 1.442695
        %v10421 = vpow.pop %v10420
        %v10422 = vmul.f32 %v10306, 1.442695
        %v10423 = vpow.pop %v10422
        %v10424 = vmul.f32 %v10307, 1.442695
        %v10425 = vpow.pop %v10424
        %v10426 = vmul.f32 %v10308, 1.442695
        %v10427 = vpow.pop %v10426
        %v10428 = vmul.f32 %v10309, 1.442695
        %v10429 = vpow.pop %v10428
        %v10430 = vmul.f32 %v10310, 1.442695
        %v10431 = vpow.pop %v10430
        %v10432 = vmul.f32 %v10311, 1.442695
        %v10433 = vpow.pop %v10432
        %v10434 = vmul.f32 %v10312, 1.442695
        %v10435 = vpow.pop %v10434
        %v10436 = vmul.f32 %v10313, 1.442695
        %v10437 = vpow.pop %v10436
        %v10438 = vmul.f32 %v10314, 1.442695
        %v10439 = vpow.pop %v10438
        %v10440 = vmul.f32 %v10315, 1.442695
        %v10441 = vpow.pop %v10440
        %v10442 = vmul.f32 %v10316, 1.442695
        %v10443 = vpow.pop %v10442
        %v10444 = vmul.f32 %v10317, 1.442695
        %v10445 = vpow.pop %v10444
        %v10446 = vmul.f32 %v10318, 1.442695
        %v10447 = vpow.pop %v10446
        %v10448 = vmul.f32 %v10319, 1.442695
        %v10449 = vpow.pop %v10448
        %v10450 = vmul.f32 %v10320, 1.442695
        %v10451 = vpow.pop %v10450
        %v10452 = vmul.f32 %v10321, 1.442695
        %v10453 = vpow.pop %v10452
        %v10454 = vmul.f32 %v10322, 1.442695
        %v10455 = vpow.pop %v10454
        %v10456 = vmul.f32 %v10323, 1.442695
        %v10457 = vpow.pop %v10456
        %v10458 = vmul.f32 %v10324, 1.442695
        %v10459 = vpow.pop %v10458
        %v10460 = vmul.f32 %v10325, 1.442695
        %v10461 = vpow.pop %v10460
        %v10462 = vmul.f32 %v10326, 1.442695
        %v10463 = vpow.pop %v10462
        %v10464 = vmul.f32 %v10327, 1.442695
        %v10465 = vpow.pop %v10464
        %v10466 = vmul.f32 %v10328, 1.442695
        %v10467 = vpow.pop %v10466
        %v10468 = vmul.f32 %v10329, 1.442695
        %v10469 = vpow.pop %v10468
        %v10470 = vmul.f32 %v10330, 1.442695
        %v10471 = vpow.pop %v10470
        %v10472 = vmul.f32 %v10331, 1.442695
        %v10473 = vpow.pop %v10472
        %v10474 = vmul.f32 %v10332, 1.442695
        %v10475 = vpow.pop %v10474
        %v10476 = vmul.f32 %v10333, 1.442695
        %v10477 = vpow.pop %v10476
        %v10478 = vmul.f32 %v10334, 1.442695
        %v10479 = vpow.pop %v10478
        %v10480 = vmul.f32 %v10335, 1.442695
        %v10481 = vpow.pop %v10480
        %v10482 = vmul.f32 %v10336, 1.442695
        %v10483 = vpow.pop %v10482
        %v10484 = vmul.f32 %v10337, 1.442695
        %v10485 = vpow.pop %v10484
        %v10486 = vmul.f32 %v10338, 1.442695
        %v10487 = vpow.pop %v10486
        %v10488 = vmul.f32 %v10339, 1.442695
        %v10489 = vpow.pop %v10488
        %v10490 = vmul.f32 %v10340, 1.442695
        %v10491 = vpow.pop %v10490
        %v10492 = vmul.f32 %v10341, 1.442695
        %v10493 = vpow.pop %v10492
        %v10494 = vmul.f32 %v10342, 1.442695
        %v10495 = vpow.pop %v10494
        %v10496 = vmul.f32 %v10343, 1.442695
        %v10497 = vpow.pop %v10496
        %v10498 = vmul.f32 %v10344, 1.442695
        %v10499 = vpow.pop %v10498
        %v10500 = vmul.f32 %v10345, 1.442695
        %v10501 = vpow.pop %v10500
        %v10502 = vmul.f32 %v10346, 1.442695
        %v10503 = vpow.pop %v10502
        %v10504 = vmul.f32 %v10347, 1.442695
        %v10505 = vpow.pop %v10504
        %v10506 = vmul.f32 %v10348, 1.442695
        %v10507 = vpow.pop %v10506
        %v10508 = vmul.f32 %v10349, 1.442695
        %v10509 = vpow.pop %v10508
        %v10510 = vmul.f32 %v10350, 1.442695
        %v10511 = vpow.pop %v10510
        %v10512 = vmul.f32 %v10351, 1.442695
        %v10513 = vpow.pop %v10512
        %v10514 = vmul.f32 %v10352, 1.442695
        %v10515 = vpow.pop %v10514
        %v10516 = vmul.f32 %v10353, 1.442695
        %v10517 = vpow.pop %v10516
        %v10518 = vmul.f32 %v10354, 1.442695
        %v10519 = vpow.pop %v10518
        %v10520 = vmul.f32 %v10355, 1.442695
        %v10521 = vpow.pop %v10520
        %v10522 = vmul.f32 %v10356, 1.442695
        %v10523 = vpow.pop %v10522
        %v10524 = vmul.f32 %v10357, 1.442695
        %v10525 = vpow.pop %v10524
        %v10526 = vmul.f32 %v10358, 1.442695
        %v10527 = vpow.pop %v10526
        %v10528 = vmul.f32 %v10359, 1.442695
        %v10529 = vpow.pop %v10528
        %v10530 = vmul.f32 %v10360, 1.442695
        %v10531 = vpow.pop %v10530
        %v10532 = vmul.f32 %v10361, 1.442695
        %v10533 = vpow.pop %v10532
        %v10534 = vmul.f32 %v10362, 1.442695
        %v10535 = vpow.pop %v10534
        %v10536 = vmul.f32 %v10363, 1.442695
        %v10537 = vpow.pop %v10536
        %v10538 = vmul.f32 %v10364, 1.442695
        %v10539 = vpow.pop %v10538
        %v10540 = vmul.f32 %v10365, 1.442695
        %v10541 = vpow.pop %v10540
        %v10542 = vmul.f32 %v10366, 1.442695
        %v10543 = vpow.pop %v10542
        %v10544 = vmul.f32 %v10367, 1.442695
        %v10545 = vpow.pop %v10544
        %v10546 = vmul.f32 %v10368, 1.442695
        %v10547 = vpow.pop %v10546
        %v10548 = vmul.f32 %v10369, 1.442695
        %v10549 = vpow.pop %v10548
        %v10550 = vmul.f32 %v10370, 1.442695
        %v10551 = vpow.pop %v10550
        %v10552 = vmul.f32 %v10371, 1.442695
        %v10553 = vpow.pop %v10552
        %v10554 = vmul.f32 %v10372, 1.442695
        %v10555 = vpow.pop %v10554
        %v10556 = vmul.f32 %v10373, 1.442695
        %v10557 = vpow.pop %v10556
        %v10558 = vmul.f32 %v10374, 1.442695
        %v10559 = vpow.pop %v10558
        %v10560 = vmul.f32 %v10375, 1.442695
        %v10561 = vpow.pop %v10560
        %v10562 = vmul.f32 %v10376, 1.442695
        %v10563 = vpow.pop %v10562
        %v10564 = vmul.f32 %v10377, 1.442695
        %v10565 = vpow.pop %v10564
        %v10566 = vmul.f32 %v10378, 1.442695
        %v10567 = vpow.pop %v10566
        %v10568 = vmul.f32 %v10379, 1.442695
        %v10569 = vpow.pop %v10568
        %v10570 = vmul.f32 %v10380, 1.442695
        %v10571 = vpow.pop %v10570
        %v10572 = vmul.f32 %v10381, 1.442695
        %v10573 = vpow.pop %v10572
        %v10574 = vadd.f32 %v10383, 1.0
        %v10575 = vadd.f32 %v10385, 1.0
        %v10576 = vadd.f32 %v10387, 1.0
        %v10577 = vadd.f32 %v10389, 1.0
        %v10578 = vadd.f32 %v10391, 1.0
        %v10579 = vadd.f32 %v10393, 1.0
        %v10580 = vadd.f32 %v10395, 1.0
        %v10581 = vadd.f32 %v10397, 1.0
        %v10582 = vadd.f32 %v10399, 1.0
        %v10583 = vadd.f32 %v10401, 1.0
        %v10584 = vadd.f32 %v10403, 1.0
        %v10585 = vadd.f32 %v10405, 1.0
        %v10586 = vadd.f32 %v10407, 1.0
        %v10587 = vadd.f32 %v10409, 1.0
        %v10588 = vadd.f32 %v10411, 1.0
        %v10589 = vadd.f32 %v10413, 1.0
        %v10590 = vadd.f32 %v10415, 1.0
        %v10591 = vadd.f32 %v10417, 1.0
        %v10592 = vadd.f32 %v10419, 1.0
        %v10593 = vadd.f32 %v10421, 1.0
        %v10594 = vadd.f32 %v10423, 1.0
        %v10595 = vadd.f32 %v10425, 1.0
        %v10596 = vadd.f32 %v10427, 1.0
        %v10597 = vadd.f32 %v10429, 1.0
        %v10598 = vadd.f32 %v10431, 1.0
        %v10599 = vadd.f32 %v10433, 1.0
        %v10600 = vadd.f32 %v10435, 1.0
        %v10601 = vadd.f32 %v10437, 1.0
        %v10602 = vadd.f32 %v10439, 1.0
        %v10603 = vadd.f32 %v10441, 1.0
        %v10604 = vadd.f32 %v10443, 1.0
        %v10605 = vadd.f32 %v10445, 1.0
        %v10606 = vadd.f32 %v10447, 1.0
        %v10607 = vadd.f32 %v10449, 1.0
        %v10608 = vadd.f32 %v10451, 1.0
        %v10609 = vadd.f32 %v10453, 1.0
        %v10610 = vadd.f32 %v10455, 1.0
        %v10611 = vadd.f32 %v10457, 1.0
        %v10612 = vadd.f32 %v10459, 1.0
        %v10613 = vadd.f32 %v10461, 1.0
        %v10614 = vadd.f32 %v10463, 1.0
        %v10615 = vadd.f32 %v10465, 1.0
        %v10616 = vadd.f32 %v10467, 1.0
        %v10617 = vadd.f32 %v10469, 1.0
        %v10618 = vadd.f32 %v10471, 1.0
        %v10619 = vadd.f32 %v10473, 1.0
        %v10620 = vadd.f32 %v10475, 1.0
        %v10621 = vadd.f32 %v10477, 1.0
        %v10622 = vadd.f32 %v10479, 1.0
        %v10623 = vadd.f32 %v10481, 1.0
        %v10624 = vadd.f32 %v10483, 1.0
        %v10625 = vadd.f32 %v10485, 1.0
        %v10626 = vadd.f32 %v10487, 1.0
        %v10627 = vadd.f32 %v10489, 1.0
        %v10628 = vadd.f32 %v10491, 1.0
        %v10629 = vadd.f32 %v10493, 1.0
        %v10630 = vadd.f32 %v10495, 1.0
        %v10631 = vadd.f32 %v10497, 1.0
        %v10632 = vadd.f32 %v10499, 1.0
        %v10633 = vadd.f32 %v10501, 1.0
        %v10634 = vadd.f32 %v10503, 1.0
        %v10635 = vadd.f32 %v10505, 1.0
        %v10636 = vadd.f32 %v10507, 1.0
        %v10637 = vadd.f32 %v10509, 1.0
        %v10638 = vadd.f32 %v10511, 1.0
        %v10639 = vadd.f32 %v10513, 1.0
        %v10640 = vadd.f32 %v10515, 1.0
        %v10641 = vadd.f32 %v10517, 1.0
        %v10642 = vadd.f32 %v10519, 1.0
        %v10643 = vadd.f32 %v10521, 1.0
        %v10644 = vadd.f32 %v10523, 1.0
        %v10645 = vadd.f32 %v10525, 1.0
        %v10646 = vadd.f32 %v10527, 1.0
        %v10647 = vadd.f32 %v10529, 1.0
        %v10648 = vadd.f32 %v10531, 1.0
        %v10649 = vadd.f32 %v10533, 1.0
        %v10650 = vadd.f32 %v10535, 1.0
        %v10651 = vadd.f32 %v10537, 1.0
        %v10652 = vadd.f32 %v10539, 1.0
        %v10653 = vadd.f32 %v10541, 1.0
        %v10654 = vadd.f32 %v10543, 1.0
        %v10655 = vadd.f32 %v10545, 1.0
        %v10656 = vadd.f32 %v10547, 1.0
        %v10657 = vadd.f32 %v10549, 1.0
        %v10658 = vadd.f32 %v10551, 1.0
        %v10659 = vadd.f32 %v10553, 1.0
        %v10660 = vadd.f32 %v10555, 1.0
        %v10661 = vadd.f32 %v10557, 1.0
        %v10662 = vadd.f32 %v10559, 1.0
        %v10663 = vadd.f32 %v10561, 1.0
        %v10664 = vadd.f32 %v10563, 1.0
        %v10665 = vadd.f32 %v10565, 1.0
        %v10666 = vadd.f32 %v10567, 1.0
        %v10667 = vadd.f32 %v10569, 1.0
        %v10668 = vadd.f32 %v10571, 1.0
        %v10669 = vadd.f32 %v10573, 1.0
        %v10670 = vrcp.pop %v10574
        %v10671 = vmul.f32 1.0, %v10670
        %v10672 = vrcp.pop %v10575
        %v10673 = vmul.f32 1.0, %v10672
        %v10674 = vrcp.pop %v10576
        %v10675 = vmul.f32 1.0, %v10674
        %v10676 = vrcp.pop %v10577
        %v10677 = vmul.f32 1.0, %v10676
        %v10678 = vrcp.pop %v10578
        %v10679 = vmul.f32 1.0, %v10678
        %v10680 = vrcp.pop %v10579
        %v10681 = vmul.f32 1.0, %v10680
        %v10682 = vrcp.pop %v10580
        %v10683 = vmul.f32 1.0, %v10682
        %v10684 = vrcp.pop %v10581
        %v10685 = vmul.f32 1.0, %v10684
        %v10686 = vrcp.pop %v10582
        %v10687 = vmul.f32 1.0, %v10686
        %v10688 = vrcp.pop %v10583
        %v10689 = vmul.f32 1.0, %v10688
        %v10690 = vrcp.pop %v10584
        %v10691 = vmul.f32 1.0, %v10690
        %v10692 = vrcp.pop %v10585
        %v10693 = vmul.f32 1.0, %v10692
        %v10694 = vrcp.pop %v10586
        %v10695 = vmul.f32 1.0, %v10694
        %v10696 = vrcp.pop %v10587
        %v10697 = vmul.f32 1.0, %v10696
        %v10698 = vrcp.pop %v10588
        %v10699 = vmul.f32 1.0, %v10698
        %v10700 = vrcp.pop %v10589
        %v10701 = vmul.f32 1.0, %v10700
        %v10702 = vrcp.pop %v10590
        %v10703 = vmul.f32 1.0, %v10702
        %v10704 = vrcp.pop %v10591
        %v10705 = vmul.f32 1.0, %v10704
        %v10706 = vrcp.pop %v10592
        %v10707 = vmul.f32 1.0, %v10706
        %v10708 = vrcp.pop %v10593
        %v10709 = vmul.f32 1.0, %v10708
        %v10710 = vrcp.pop %v10594
        %v10711 = vmul.f32 1.0, %v10710
        %v10712 = vrcp.pop %v10595
        %v10713 = vmul.f32 1.0, %v10712
        %v10714 = vrcp.pop %v10596
        %v10715 = vmul.f32 1.0, %v10714
        %v10716 = vrcp.pop %v10597
        %v10717 = vmul.f32 1.0, %v10716
        %v10718 = vrcp.pop %v10598
        %v10719 = vmul.f32 1.0, %v10718
        %v10720 = vrcp.pop %v10599
        %v10721 = vmul.f32 1.0, %v10720
        %v10722 = vrcp.pop %v10600
        %v10723 = vmul.f32 1.0, %v10722
        %v10724 = vrcp.pop %v10601
        %v10725 = vmul.f32 1.0, %v10724
        %v10726 = vrcp.pop %v10602
        %v10727 = vmul.f32 1.0, %v10726
        %v10728 = vrcp.pop %v10603
        %v10729 = vmul.f32 1.0, %v10728
        %v10730 = vrcp.pop %v10604
        %v10731 = vmul.f32 1.0, %v10730
        %v10732 = vrcp.pop %v10605
        %v10733 = vmul.f32 1.0, %v10732
        %v10734 = vrcp.pop %v10606
        %v10735 = vmul.f32 1.0, %v10734
        %v10736 = vrcp.pop %v10607
        %v10737 = vmul.f32 1.0, %v10736
        %v10738 = vrcp.pop %v10608
        %v10739 = vmul.f32 1.0, %v10738
        %v10740 = vrcp.pop %v10609
        %v10741 = vmul.f32 1.0, %v10740
        %v10742 = vrcp.pop %v10610
        %v10743 = vmul.f32 1.0, %v10742
        %v10744 = vrcp.pop %v10611
        %v10745 = vmul.f32 1.0, %v10744
        %v10746 = vrcp.pop %v10612
        %v10747 = vmul.f32 1.0, %v10746
        %v10748 = vrcp.pop %v10613
        %v10749 = vmul.f32 1.0, %v10748
        %v10750 = vrcp.pop %v10614
        %v10751 = vmul.f32 1.0, %v10750
        %v10752 = vrcp.pop %v10615
        %v10753 = vmul.f32 1.0, %v10752
        %v10754 = vrcp.pop %v10616
        %v10755 = vmul.f32 1.0, %v10754
        %v10756 = vrcp.pop %v10617
        %v10757 = vmul.f32 1.0, %v10756
        %v10758 = vrcp.pop %v10618
        %v10759 = vmul.f32 1.0, %v10758
        %v10760 = vrcp.pop %v10619
        %v10761 = vmul.f32 1.0, %v10760
        %v10762 = vrcp.pop %v10620
        %v10763 = vmul.f32 1.0, %v10762
        %v10764 = vrcp.pop %v10621
        %v10765 = vmul.f32 1.0, %v10764
        %v10766 = vrcp.pop %v10622
        %v10767 = vmul.f32 1.0, %v10766
        %v10768 = vrcp.pop %v10623
        %v10769 = vmul.f32 1.0, %v10768
        %v10770 = vrcp.pop %v10624
        %v10771 = vmul.f32 1.0, %v10770
        %v10772 = vrcp.pop %v10625
        %v10773 = vmul.f32 1.0, %v10772
        %v10774 = vrcp.pop %v10626
        %v10775 = vmul.f32 1.0, %v10774
        %v10776 = vrcp.pop %v10627
        %v10777 = vmul.f32 1.0, %v10776
        %v10778 = vrcp.pop %v10628
        %v10779 = vmul.f32 1.0, %v10778
        %v10780 = vrcp.pop %v10629
        %v10781 = vmul.f32 1.0, %v10780
        %v10782 = vrcp.pop %v10630
        %v10783 = vmul.f32 1.0, %v10782
        %v10784 = vrcp.pop %v10631
        %v10785 = vmul.f32 1.0, %v10784
        %v10786 = vrcp.pop %v10632
        %v10787 = vmul.f32 1.0, %v10786
        %v10788 = vrcp.pop %v10633
        %v10789 = vmul.f32 1.0, %v10788
        %v10790 = vrcp.pop %v10634
        %v10791 = vmul.f32 1.0, %v10790
        %v10792 = vrcp.pop %v10635
        %v10793 = vmul.f32 1.0, %v10792
        %v10794 = vrcp.pop %v10636
        %v10795 = vmul.f32 1.0, %v10794
        %v10796 = vrcp.pop %v10637
        %v10797 = vmul.f32 1.0, %v10796
        %v10798 = vrcp.pop %v10638
        %v10799 = vmul.f32 1.0, %v10798
        %v10800 = vrcp.pop %v10639
        %v10801 = vmul.f32 1.0, %v10800
        %v10802 = vrcp.pop %v10640
        %v10803 = vmul.f32 1.0, %v10802
        %v10804 = vrcp.pop %v10641
        %v10805 = vmul.f32 1.0, %v10804
        %v10806 = vrcp.pop %v10642
        %v10807 = vmul.f32 1.0, %v10806
        %v10808 = vrcp.pop %v10643
        %v10809 = vmul.f32 1.0, %v10808
        %v10810 = vrcp.pop %v10644
        %v10811 = vmul.f32 1.0, %v10810
        %v10812 = vrcp.pop %v10645
        %v10813 = vmul.f32 1.0, %v10812
        %v10814 = vrcp.pop %v10646
        %v10815 = vmul.f32 1.0, %v10814
        %v10816 = vrcp.pop %v10647
        %v10817 = vmul.f32 1.0, %v10816
        %v10818 = vrcp.pop %v10648
        %v10819 = vmul.f32 1.0, %v10818
        %v10820 = vrcp.pop %v10649
        %v10821 = vmul.f32 1.0, %v10820
        %v10822 = vrcp.pop %v10650
        %v10823 = vmul.f32 1.0, %v10822
        %v10824 = vrcp.pop %v10651
        %v10825 = vmul.f32 1.0, %v10824
        %v10826 = vrcp.pop %v10652
        %v10827 = vmul.f32 1.0, %v10826
        %v10828 = vrcp.pop %v10653
        %v10829 = vmul.f32 1.0, %v10828
        %v10830 = vrcp.pop %v10654
        %v10831 = vmul.f32 1.0, %v10830
        %v10832 = vrcp.pop %v10655
        %v10833 = vmul.f32 1.0, %v10832
        %v10834 = vrcp.pop %v10656
        %v10835 = vmul.f32 1.0, %v10834
        %v10836 = vrcp.pop %v10657
        %v10837 = vmul.f32 1.0, %v10836
        %v10838 = vrcp.pop %v10658
        %v10839 = vmul.f32 1.0, %v10838
        %v10840 = vrcp.pop %v10659
        %v10841 = vmul.f32 1.0, %v10840
        %v10842 = vrcp.pop %v10660
        %v10843 = vmul.f32 1.0, %v10842
        %v10844 = vrcp.pop %v10661
        %v10845 = vmul.f32 1.0, %v10844
        %v10846 = vrcp.pop %v10662
        %v10847 = vmul.f32 1.0, %v10846
        %v10848 = vrcp.pop %v10663
        %v10849 = vmul.f32 1.0, %v10848
        %v10850 = vrcp.pop %v10664
        %v10851 = vmul.f32 1.0, %v10850
        %v10852 = vrcp.pop %v10665
        %v10853 = vmul.f32 1.0, %v10852
        %v10854 = vrcp.pop %v10666
        %v10855 = vmul.f32 1.0, %v10854
        %v10856 = vrcp.pop %v10667
        %v10857 = vmul.f32 1.0, %v10856
        %v10858 = vrcp.pop %v10668
        %v10859 = vmul.f32 1.0, %v10858
        %v10860 = vrcp.pop %v10669
        %v10861 = vmul.f32 1.0, %v10860
        %v10862 = vmul.f32 %v9999, %v10190
        %v10863 = vmul.f32 %v10001, %v10191
        %v10864 = vmul.f32 %v10003, %v10192
        %v10865 = vmul.f32 %v10005, %v10193
        %v10866 = vmul.f32 %v10007, %v10194
        %v10867 = vmul.f32 %v10009, %v10195
        %v10868 = vmul.f32 %v10011, %v10196
        %v10869 = vmul.f32 %v10013, %v10197
        %v10870 = vmul.f32 %v10015, %v10198
        %v10871 = vmul.f32 %v10017, %v10199
        %v10872 = vmul.f32 %v10019, %v10200
        %v10873 = vmul.f32 %v10021, %v10201
        %v10874 = vmul.f32 %v10023, %v10202
        %v10875 = vmul.f32 %v10025, %v10203
        %v10876 = vmul.f32 %v10027, %v10204
        %v10877 = vmul.f32 %v10029, %v10205
        %v10878 = vmul.f32 %v10031, %v10206
        %v10879 = vmul.f32 %v10033, %v10207
        %v10880 = vmul.f32 %v10035, %v10208
        %v10881 = vmul.f32 %v10037, %v10209
        %v10882 = vmul.f32 %v10039, %v10210
        %v10883 = vmul.f32 %v10041, %v10211
        %v10884 = vmul.f32 %v10043, %v10212
        %v10885 = vmul.f32 %v10045, %v10213
        %v10886 = vmul.f32 %v10047, %v10214
        %v10887 = vmul.f32 %v10049, %v10215
        %v10888 = vmul.f32 %v10051, %v10216
        %v10889 = vmul.f32 %v10053, %v10217
        %v10890 = vmul.f32 %v10055, %v10218
        %v10891 = vmul.f32 %v10057, %v10219
        %v10892 = vmul.f32 %v10059, %v10220
        %v10893 = vmul.f32 %v10061, %v10221
        %v10894 = vmul.f32 %v10063, %v10222
        %v10895 = vmul.f32 %v10065, %v10223
        %v10896 = vmul.f32 %v10067, %v10224
        %v10897 = vmul.f32 %v10069, %v10225
        %v10898 = vmul.f32 %v10071, %v10226
        %v10899 = vmul.f32 %v10073, %v10227
        %v10900 = vmul.f32 %v10075, %v10228
        %v10901 = vmul.f32 %v10077, %v10229
        %v10902 = vmul.f32 %v10079, %v10230
        %v10903 = vmul.f32 %v10081, %v10231
        %v10904 = vmul.f32 %v10083, %v10232
        %v10905 = vmul.f32 %v10085, %v10233
        %v10906 = vmul.f32 %v10087, %v10234
        %v10907 = vmul.f32 %v10089, %v10235
        %v10908 = vmul.f32 %v10091, %v10236
        %v10909 = vmul.f32 %v10093, %v10237
        %v10910 = vmul.f32 %v10095, %v10238
        %v10911 = vmul.f32 %v10097, %v10239
        %v10912 = vmul.f32 %v10099, %v10240
        %v10913 = vmul.f32 %v10101, %v10241
        %v10914 = vmul.f32 %v10103, %v10242
        %v10915 = vmul.f32 %v10105, %v10243
        %v10916 = vmul.f32 %v10107, %v10244
        %v10917 = vmul.f32 %v10109, %v10245
        %v10918 = vmul.f32 %v10111, %v10246
        %v10919 = vmul.f32 %v10113, %v10247
        %v10920 = vmul.f32 %v10115, %v10248
        %v10921 = vmul.f32 %v10117, %v10249
        %v10922 = vmul.f32 %v10119, %v10250
        %v10923 = vmul.f32 %v10121, %v10251
        %v10924 = vmul.f32 %v10123, %v10252
        %v10925 = vmul.f32 %v10125, %v10253
        %v10926 = vmul.f32 %v10127, %v10254
        %v10927 = vmul.f32 %v10129, %v10255
        %v10928 = vmul.f32 %v10131, %v10256
        %v10929 = vmul.f32 %v10133, %v10257
        %v10930 = vmul.f32 %v10135, %v10258
        %v10931 = vmul.f32 %v10137, %v10259
        %v10932 = vmul.f32 %v10139, %v10260
        %v10933 = vmul.f32 %v10141, %v10261
        %v10934 = vmul.f32 %v10143, %v10262
        %v10935 = vmul.f32 %v10145, %v10263
        %v10936 = vmul.f32 %v10147, %v10264
        %v10937 = vmul.f32 %v10149, %v10265
        %v10938 = vmul.f32 %v10151, %v10266
        %v10939 = vmul.f32 %v10153, %v10267
        %v10940 = vmul.f32 %v10155, %v10268
        %v10941 = vmul.f32 %v10157, %v10269
        %v10942 = vmul.f32 %v10159, %v10270
        %v10943 = vmul.f32 %v10161, %v10271
        %v10944 = vmul.f32 %v10163, %v10272
        %v10945 = vmul.f32 %v10165, %v10273
        %v10946 = vmul.f32 %v10167, %v10274
        %v10947 = vmul.f32 %v10169, %v10275
        %v10948 = vmul.f32 %v10171, %v10276
        %v10949 = vmul.f32 %v10173, %v10277
        %v10950 = vmul.f32 %v10175, %v10278
        %v10951 = vmul.f32 %v10177, %v10279
        %v10952 = vmul.f32 %v10179, %v10280
        %v10953 = vmul.f32 %v10181, %v10281
        %v10954 = vmul.f32 %v10183, %v10282
        %v10955 = vmul.f32 %v10185, %v10283
        %v10956 = vmul.f32 %v10187, %v10284
        %v10957 = vmul.f32 %v10189, %v10285
        %v10958 = vtanh.pop %v10862
        %v10959 = vtanh.pop %v10863
        %v10960 = vtanh.pop %v10864
        %v10961 = vtanh.pop %v10865
        %v10962 = vtanh.pop %v10866
        %v10963 = vtanh.pop %v10867
        %v10964 = vtanh.pop %v10868
        %v10965 = vtanh.pop %v10869
        %v10966 = vtanh.pop %v10870
        %v10967 = vtanh.pop %v10871
        %v10968 = vtanh.pop %v10872
        %v10969 = vtanh.pop %v10873
        %v10970 = vtanh.pop %v10874
        %v10971 = vtanh.pop %v10875
        %v10972 = vtanh.pop %v10876
        %v10973 = vtanh.pop %v10877
        %v10974 = vtanh.pop %v10878
        %v10975 = vtanh.pop %v10879
        %v10976 = vtanh.pop %v10880
        %v10977 = vtanh.pop %v10881
        %v10978 = vtanh.pop %v10882
        %v10979 = vtanh.pop %v10883
        %v10980 = vtanh.pop %v10884
        %v10981 = vtanh.pop %v10885
        %v10982 = vtanh.pop %v10886
        %v10983 = vtanh.pop %v10887
        %v10984 = vtanh.pop %v10888
        %v10985 = vtanh.pop %v10889
        %v10986 = vtanh.pop %v10890
        %v10987 = vtanh.pop %v10891
        %v10988 = vtanh.pop %v10892
        %v10989 = vtanh.pop %v10893
        %v10990 = vtanh.pop %v10894
        %v10991 = vtanh.pop %v10895
        %v10992 = vtanh.pop %v10896
        %v10993 = vtanh.pop %v10897
        %v10994 = vtanh.pop %v10898
        %v10995 = vtanh.pop %v10899
        %v10996 = vtanh.pop %v10900
        %v10997 = vtanh.pop %v10901
        %v10998 = vtanh.pop %v10902
        %v10999 = vtanh.pop %v10903
        %v11000 = vtanh.pop %v10904
        %v11001 = vtanh.pop %v10905
        %v11002 = vtanh.pop %v10906
        %v11003 = vtanh.pop %v10907
        %v11004 = vtanh.pop %v10908
        %v11005 = vtanh.pop %v10909
        %v11006 = vtanh.pop %v10910
        %v11007 = vtanh.pop %v10911
        %v11008 = vtanh.pop %v10912
        %v11009 = vtanh.pop %v10913
        %v11010 = vtanh.pop %v10914
        %v11011 = vtanh.pop %v10915
        %v11012 = vtanh.pop %v10916
        %v11013 = vtanh.pop %v10917
        %v11014 = vtanh.pop %v10918
        %v11015 = vtanh.pop %v10919
        %v11016 = vtanh.pop %v10920
        %v11017 = vtanh.pop %v10921
        %v11018 = vtanh.pop %v10922
        %v11019 = vtanh.pop %v10923
        %v11020 = vtanh.pop %v10924
        %v11021 = vtanh.pop %v10925
        %v11022 = vtanh.pop %v10926
        %v11023 = vtanh.pop %v10927
        %v11024 = vtanh.pop %v10928
        %v11025 = vtanh.pop %v10929
        %v11026 = vtanh.pop %v10930
        %v11027 = vtanh.pop %v10931
        %v11028 = vtanh.pop %v10932
        %v11029 = vtanh.pop %v10933
        %v11030 = vtanh.pop %v10934
        %v11031 = vtanh.pop %v10935
        %v11032 = vtanh.pop %v10936
        %v11033 = vtanh.pop %v10937
        %v11034 = vtanh.pop %v10938
        %v11035 = vtanh.pop %v10939
        %v11036 = vtanh.pop %v10940
        %v11037 = vtanh.pop %v10941
        %v11038 = vtanh.pop %v10942
        %v11039 = vtanh.pop %v10943
        %v11040 = vtanh.pop %v10944
        %v11041 = vtanh.pop %v10945
        %v11042 = vtanh.pop %v10946
        %v11043 = vtanh.pop %v10947
        %v11044 = vtanh.pop %v10948
        %v11045 = vtanh.pop %v10949
        %v11046 = vtanh.pop %v10950
        %v11047 = vtanh.pop %v10951
        %v11048 = vtanh.pop %v10952
        %v11049 = vtanh.pop %v10953
        %v11050 = vtanh.pop %v10954
        %v11051 = vtanh.pop %v10955
        %v11052 = vtanh.pop %v10956
        %v11053 = vtanh.pop %v10957
        %v11054 = vmul.f32 %v10671, %v10958
        %v11055 = vmul.f32 %v10673, %v10959
        %v11056 = vmul.f32 %v10675, %v10960
        %v11057 = vmul.f32 %v10677, %v10961
        %v11058 = vmul.f32 %v10679, %v10962
        %v11059 = vmul.f32 %v10681, %v10963
        %v11060 = vmul.f32 %v10683, %v10964
        %v11061 = vmul.f32 %v10685, %v10965
        %v11062 = vmul.f32 %v10687, %v10966
        %v11063 = vmul.f32 %v10689, %v10967
        %v11064 = vmul.f32 %v10691, %v10968
        %v11065 = vmul.f32 %v10693, %v10969
        %v11066 = vmul.f32 %v10695, %v10970
        %v11067 = vmul.f32 %v10697, %v10971
        %v11068 = vmul.f32 %v10699, %v10972
        %v11069 = vmul.f32 %v10701, %v10973
        %v11070 = vmul.f32 %v10703, %v10974
        %v11071 = vmul.f32 %v10705, %v10975
        %v11072 = vmul.f32 %v10707, %v10976
        %v11073 = vmul.f32 %v10709, %v10977
        %v11074 = vmul.f32 %v10711, %v10978
        %v11075 = vmul.f32 %v10713, %v10979
        %v11076 = vmul.f32 %v10715, %v10980
        %v11077 = vmul.f32 %v10717, %v10981
        %v11078 = vmul.f32 %v10719, %v10982
        %v11079 = vmul.f32 %v10721, %v10983
        %v11080 = vmul.f32 %v10723, %v10984
        %v11081 = vmul.f32 %v10725, %v10985
        %v11082 = vmul.f32 %v10727, %v10986
        %v11083 = vmul.f32 %v10729, %v10987
        %v11084 = vmul.f32 %v10731, %v10988
        %v11085 = vmul.f32 %v10733, %v10989
        %v11086 = vmul.f32 %v10735, %v10990
        %v11087 = vmul.f32 %v10737, %v10991
        %v11088 = vmul.f32 %v10739, %v10992
        %v11089 = vmul.f32 %v10741, %v10993
        %v11090 = vmul.f32 %v10743, %v10994
        %v11091 = vmul.f32 %v10745, %v10995
        %v11092 = vmul.f32 %v10747, %v10996
        %v11093 = vmul.f32 %v10749, %v10997
        %v11094 = vmul.f32 %v10751, %v10998
        %v11095 = vmul.f32 %v10753, %v10999
        %v11096 = vmul.f32 %v10755, %v11000
        %v11097 = vmul.f32 %v10757, %v11001
        %v11098 = vmul.f32 %v10759, %v11002
        %v11099 = vmul.f32 %v10761, %v11003
        %v11100 = vmul.f32 %v10763, %v11004
        %v11101 = vmul.f32 %v10765, %v11005
        %v11102 = vmul.f32 %v10767, %v11006
        %v11103 = vmul.f32 %v10769, %v11007
        %v11104 = vmul.f32 %v10771, %v11008
        %v11105 = vmul.f32 %v10773, %v11009
        %v11106 = vmul.f32 %v10775, %v11010
        %v11107 = vmul.f32 %v10777, %v11011
        %v11108 = vmul.f32 %v10779, %v11012
        %v11109 = vmul.f32 %v10781, %v11013
        %v11110 = vmul.f32 %v10783, %v11014
        %v11111 = vmul.f32 %v10785, %v11015
        %v11112 = vmul.f32 %v10787, %v11016
        %v11113 = vmul.f32 %v10789, %v11017
        %v11114 = vmul.f32 %v10791, %v11018
        %v11115 = vmul.f32 %v10793, %v11019
        %v11116 = vmul.f32 %v10795, %v11020
        %v11117 = vmul.f32 %v10797, %v11021
        %v11118 = vmul.f32 %v10799, %v11022
        %v11119 = vmul.f32 %v10801, %v11023
        %v11120 = vmul.f32 %v10803, %v11024
        %v11121 = vmul.f32 %v10805, %v11025
        %v11122 = vmul.f32 %v10807, %v11026
        %v11123 = vmul.f32 %v10809, %v11027
        %v11124 = vmul.f32 %v10811, %v11028
        %v11125 = vmul.f32 %v10813, %v11029
        %v11126 = vmul.f32 %v10815, %v11030
        %v11127 = vmul.f32 %v10817, %v11031
        %v11128 = vmul.f32 %v10819, %v11032
        %v11129 = vmul.f32 %v10821, %v11033
        %v11130 = vmul.f32 %v10823, %v11034
        %v11131 = vmul.f32 %v10825, %v11035
        %v11132 = vmul.f32 %v10827, %v11036
        %v11133 = vmul.f32 %v10829, %v11037
        %v11134 = vmul.f32 %v10831, %v11038
        %v11135 = vmul.f32 %v10833, %v11039
        %v11136 = vmul.f32 %v10835, %v11040
        %v11137 = vmul.f32 %v10837, %v11041
        %v11138 = vmul.f32 %v10839, %v11042
        %v11139 = vmul.f32 %v10841, %v11043
        %v11140 = vmul.f32 %v10843, %v11044
        %v11141 = vmul.f32 %v10845, %v11045
        %v11142 = vmul.f32 %v10847, %v11046
        %v11143 = vmul.f32 %v10849, %v11047
        %v11144 = vmul.f32 %v10851, %v11048
        %v11145 = vmul.f32 %v10853, %v11049
        %v11146 = vmul.f32 %v10855, %v11050
        %v11147 = vmul.f32 %v10857, %v11051
        %v11148 = vmul.f32 %v10859, %v11052
        %v11149 = vmul.f32 %v10861, %v11053
        %11150 = vst [vmem:[%s328 + $0x300] sm:$0xff] %v11054
        %11151 = vst [vmem:[%s328 + $0x308] sm:$0xff] %v11055
        %11152 = vst [vmem:[%s328 + $0x310] sm:$0xff] %v11056
        %11153 = vst [vmem:[%s328 + $0x318] sm:$0xff] %v11057
        %11154 = vst [vmem:[%s328 + $0x320] sm:$0xff] %v11058
        %11155 = vst [vmem:[%s328 + $0x328] sm:$0xff] %v11059
        %11156 = vst [vmem:[%s328 + $0x330] sm:$0xff] %v11060
        %11157 = vst [vmem:[%s328 + $0x338] sm:$0xff] %v11061
        %11158 = vst [vmem:[%s328 + $0x340] sm:$0xff] %v11062
        %11159 = vst [vmem:[%s328 + $0x348] sm:$0xff] %v11063
        %11160 = vst [vmem:[%s328 + $0x350] sm:$0xff] %v11064
        %11161 = vst [vmem:[%s328 + $0x358] sm:$0xff] %v11065
        %11162 = vst [vmem:[%s328 + $0x360] sm:$0xff] %v11066
        %11163 = vst [vmem:[%s328 + $0x368] sm:$0xff] %v11067
        %11164 = vst [vmem:[%s328 + $0x370] sm:$0xff] %v11068
        %11165 = vst [vmem:[%s328 + $0x378] sm:$0xff] %v11069
        %11166 = vst [vmem:[%s328 + $0x380] sm:$0xff] %v11070
        %11167 = vst [vmem:[%s328 + $0x388] sm:$0xff] %v11071
        %11168 = vst [vmem:[%s328 + $0x390] sm:$0xff] %v11072
        %11169 = vst [vmem:[%s328 + $0x398] sm:$0xff] %v11073
        %11170 = vst [vmem:[%s328 + $0x3a0] sm:$0xff] %v11074
        %11171 = vst [vmem:[%s328 + $0x3a8] sm:$0xff] %v11075
        %11172 = vst [vmem:[%s328 + $0x3b0] sm:$0xff] %v11076
        %11173 = vst [vmem:[%s328 + $0x3b8] sm:$0xff] %v11077
        %11174 = vst [vmem:[%s328 + $0x3c0] sm:$0xff] %v11078
        %11175 = vst [vmem:[%s328 + $0x3c8] sm:$0xff] %v11079
        %11176 = vst [vmem:[%s328 + $0x3d0] sm:$0xff] %v11080
        %11177 = vst [vmem:[%s328 + $0x3d8] sm:$0xff] %v11081
        %11178 = vst [vmem:[%s328 + $0x3e0] sm:$0xff] %v11082
        %11179 = vst [vmem:[%s328 + $0x3e8] sm:$0xff] %v11083
        %11180 = vst [vmem:[%s328 + $0x3f0] sm:$0xff] %v11084
        %11181 = vst [vmem:[%s328 + $0x3f8] sm:$0xff] %v11085
        %11182 = vst [vmem:[%s328 + $0x400] sm:$0xff] %v11086
        %11183 = vst [vmem:[%s328 + $0x408] sm:$0xff] %v11087
        %11184 = vst [vmem:[%s328 + $0x410] sm:$0xff] %v11088
        %11185 = vst [vmem:[%s328 + $0x418] sm:$0xff] %v11089
        %11186 = vst [vmem:[%s328 + $0x420] sm:$0xff] %v11090
        %11187 = vst [vmem:[%s328 + $0x428] sm:$0xff] %v11091
        %11188 = vst [vmem:[%s328 + $0x430] sm:$0xff] %v11092
        %11189 = vst [vmem:[%s328 + $0x438] sm:$0xff] %v11093
        %11190 = vst [vmem:[%s328 + $0x440] sm:$0xff] %v11094
        %11191 = vst [vmem:[%s328 + $0x448] sm:$0xff] %v11095
        %11192 = vst [vmem:[%s328 + $0x450] sm:$0xff] %v11096
        %11193 = vst [vmem:[%s328 + $0x458] sm:$0xff] %v11097
        %11194 = vst [vmem:[%s328 + $0x460] sm:$0xff] %v11098
        %11195 = vst [vmem:[%s328 + $0x468] sm:$0xff] %v11099
        %11196 = vst [vmem:[%s328 + $0x470] sm:$0xff] %v11100
        %11197 = vst [vmem:[%s328 + $0x478] sm:$0xff] %v11101
        %11198 = vst [vmem:[%s328 + $0x480] sm:$0xff] %v11102
        %11199 = vst [vmem:[%s328 + $0x488] sm:$0xff] %v11103
        %11200 = vst [vmem:[%s328 + $0x490] sm:$0xff] %v11104
        %11201 = vst [vmem:[%s328 + $0x498] sm:$0xff] %v11105
        %11202 = vst [vmem:[%s328 + $0x4a0] sm:$0xff] %v11106
        %11203 = vst [vmem:[%s328 + $0x4a8] sm:$0xff] %v11107
        %11204 = vst [vmem:[%s328 + $0x4b0] sm:$0xff] %v11108
        %11205 = vst [vmem:[%s328 + $0x4b8] sm:$0xff] %v11109
        %11206 = vst [vmem:[%s328 + $0x4c0] sm:$0xff] %v11110
        %11207 = vst [vmem:[%s328 + $0x4c8] sm:$0xff] %v11111
        %11208 = vst [vmem:[%s328 + $0x4d0] sm:$0xff] %v11112
        %11209 = vst [vmem:[%s328 + $0x4d8] sm:$0xff] %v11113
        %11210 = vst [vmem:[%s328 + $0x4e0] sm:$0xff] %v11114
        %11211 = vst [vmem:[%s328 + $0x4e8] sm:$0xff] %v11115
        %11212 = vst [vmem:[%s328 + $0x4f0] sm:$0xff] %v11116
        %11213 = vst [vmem:[%s328 + $0x4f8] sm:$0xff] %v11117
        %11214 = vst [vmem:[%s328 + $0x500] sm:$0xff] %v11118
        %11215 = vst [vmem:[%s328 + $0x508] sm:$0xff] %v11119
        %11216 = vst [vmem:[%s328 + $0x510] sm:$0xff] %v11120
        %11217 = vst [vmem:[%s328 + $0x518] sm:$0xff] %v11121
        %11218 = vst [vmem:[%s328 + $0x520] sm:$0xff] %v11122
        %11219 = vst [vmem:[%s328 + $0x528] sm:$0xff] %v11123
        %11220 = vst [vmem:[%s328 + $0x530] sm:$0xff] %v11124
        %11221 = vst [vmem:[%s328 + $0x538] sm:$0xff] %v11125
        %11222 = vst [vmem:[%s328 + $0x540] sm:$0xff] %v11126
        %11223 = vst [vmem:[%s328 + $0x548] sm:$0xff] %v11127
        %11224 = vst [vmem:[%s328 + $0x550] sm:$0xff] %v11128
        %11225 = vst [vmem:[%s328 + $0x558] sm:$0xff] %v11129
        %11226 = vst [vmem:[%s328 + $0x560] sm:$0xff] %v11130
        %11227 = vst [vmem:[%s328 + $0x568] sm:$0xff] %v11131
        %11228 = vst [vmem:[%s328 + $0x570] sm:$0xff] %v11132
        %11229 = vst [vmem:[%s328 + $0x578] sm:$0xff] %v11133
        %11230 = vst [vmem:[%s328 + $0x580] sm:$0xff] %v11134
        %11231 = vst [vmem:[%s328 + $0x588] sm:$0xff] %v11135
        %11232 = vst [vmem:[%s328 + $0x590] sm:$0xff] %v11136
        %11233 = vst [vmem:[%s328 + $0x598] sm:$0xff] %v11137
        %11234 = vst [vmem:[%s328 + $0x5a0] sm:$0xff] %v11138
        %11235 = vst [vmem:[%s328 + $0x5a8] sm:$0xff] %v11139
        %11236 = vst [vmem:[%s328 + $0x5b0] sm:$0xff] %v11140
        %11237 = vst [vmem:[%s328 + $0x5b8] sm:$0xff] %v11141
        %11238 = vst [vmem:[%s328 + $0x5c0] sm:$0xff] %v11142
        %11239 = vst [vmem:[%s328 + $0x5c8] sm:$0xff] %v11143
        %11240 = vst [vmem:[%s328 + $0x5d0] sm:$0xff] %v11144
        %11241 = vst [vmem:[%s328 + $0x5d8] sm:$0xff] %v11145
        %11242 = vst [vmem:[%s328 + $0x5e0] sm:$0xff] %v11146
        %11243 = vst [vmem:[%s328 + $0x5e8] sm:$0xff] %v11147
        %11244 = vst [vmem:[%s328 + $0x5f0] sm:$0xff] %v11148
        %11245 = vst [vmem:[%s328 + $0x5f8] sm:$0xff] %v11149
        %s11246 = sand.u32 %s225, 1
        %s11247 = scalar_lea.sflag [#allocation3], %s11246
        %s11248 = sand.u32 %s225, 1
        %s11249 = smul.addr %s11248, 1536
        %s11250 = scalar_lea.vmem [#allocation2], %s11249
        // Predicated region
        $region57: #{tpu_custom_call.1} parent=55 // pred_check
          %p11251 = pneg %p235
        $region58: #{tpu_custom_call.1} parent=55 // pred_check_branch
          %11253 = sbr.rel (%p11251) target = $region60
        $region59: #{tpu_custom_call.1} parent=55 // pred_region
          %s11254 = smul.u32 64, %s23
          %s11256 = ssub.s32 24576, 24576
          %11257 = vsyncadd %s11247, %s11256
          %s11258 = smul.addr %s11254, 3
          %s11259 = smul.addr %s11258, 128
          %s11260 = scalar_lea.hbm %s9, %s11259
          %s11261 = sshll.u32 %s11250, 4
          %s11262 = int_to_ptr.vmem [resolvable:$true] %s11261
          %11267 = dma.vmem_to_hbm [thread:$0]  %s11262, 24576, %s11260, %s11247, 384, 384, 24
        $region60: #{tpu_custom_call.1} parent=55 // pred_fallthru
          _
      $region56: #{tpu_custom_call.1} parent=5 // pred_fallthru
        _
      %p11268 = scmp.le.s32.totalorder 2, %s18
      // Predicated region
      $region61: #{tpu_custom_call.1} parent=5 // pred_check
        %p11269 = pneg %p11268
      $region62: #{tpu_custom_call.1} parent=5 // pred_check_branch
        %11271 = sbr.rel (%p11269) target = $region64
      $region63: #{tpu_custom_call.1} parent=5 // pred_region
        %s11272 = ssub.s32 %s18, 2
        // Predicated region
        $region65: #{tpu_custom_call.1} parent=63 // pred_check
          %p11273 = pneg %p241
        $region66: #{tpu_custom_call.1} parent=63 // pred_check_branch
          %11275 = sbr.rel (%p11273) target = $region68
        $region67: #{tpu_custom_call.1} parent=63 // pred_region
          %s11276 = sand.u32 %s226, 1
          %s11277 = scalar_lea.sflag [#allocation3], %s11276
          %s11278 = sand.u32 %s226, 1
          %s11279 = smul.addr %s11278, 1536
          %s11280 = scalar_lea.vmem [#allocation2], %s11279
          %11281 = dma.done %s11277, 24576
        $region68: #{tpu_custom_call.1} parent=63 // pred_fallthru
          _
      $region64: #{tpu_custom_call.1} parent=5 // pred_fallthru
        _
    $region6: #{tpu_custom_call.1} parent=1 // loop_footer
      %s22 = sadd.s32 1, %s18
    $region7: #{tpu_custom_call.1} parent=1 // loop_footer_branch
      %17 = sbr.rel target = $region3
    $region8: #{tpu_custom_call.1} parent=1 // loop_exit
      _
    %11282 = vsyncpa [#allocation3], 1
    %s11283 = scalar_lea.sflag [#allocation3], 1
    %11284 = vsyncpa %s11283, 1

</llo_original>
